<compile_context>
chip_gen: v5e
topology: v5e:2x2
jax: 0.10.0
libtpu: 0.0.40
codegen_flags: <defaults>
</compile_context>

<pallas_src>
import jax
import jax.numpy as jnp
from jax import lax
from jax.experimental import pallas as pl
from jax.experimental.pallas import tpu as pltpu

# ---------------- config (small shapes consistent with the module) ----------------
GLYPH_SIZE = 16
HIDDEN_SIZE = 32
MAX_SEQLEN = 8
EMBED_DIM = 32
NUM_HIDDEN_LAYERS = 1          # CustomLSTM source not given; one layer implemented
INIT_COND_DIM = 32
USE_EMBED_WORD = True
COND_MODALITY = "img_text"
IMG_FEAT_DIM = 512

_PATCH_SC = 256                # single-channel decoder layout (16 patches * 16 pixels)
_PATCH_DIM = 768               # 3-channel decoder output per image (3 * 256)
_DEC_HID = (GLYPH_SIZE // 4) * (GLYPH_SIZE // 4) * 64    # 1024


# ---------------------------------- Pallas kernels ---------------------------------
def _img_encdec_l1_kernel(p_ref, tgt_ref,
                          w1_ref, b1_ref, w2_ref, b2_ref, w3_ref, b3_ref,
                          dw1_ref, db1_ref, dw2_ref, db2_ref,
                          feat_ref, rc_ref, loss_ref):
    """Fused image encoder + decoder + L1 partial for one tile of T images.

    p_ref  : (T*4, 64)  bf16  conv2-position patches; cols = [sub-patch d][4x4 pixels].
    tgt_ref: (T, 256)   f32   single-channel L1 target, cols = [patch p][pixel px].
    w1     : (64, 256)  bf16  conv1 weight, RGB-folded, block-diagonal over d.
    w2     : (256, 128) bf16  conv2 weight (dense, d-major rows).
    w3     : (128, 512) bf16  pooled-feature -> 512 projection.
    dw1    : (512,1024) bf16  decoder hidden.   dw2: (1024, 768) bf16 block-diagonal
                              per-patch projection, channel-major output columns.
    feat_ref: (T, 512) f32   rc_ref: (T, 768) f32   loss_ref: (1, 8, 128) f32.
    """
    t4 = p_ref.shape[0]
    T = t4 // 4

    # conv1 (+relu) and conv2 (+relu): two lane-dense matmuls, K=64 and K=256.
    h1 = jnp.maximum(
        jnp.dot(p_ref[...], w1_ref[...], preferred_element_type=jnp.float32)
        + b1_ref[...], 0.0)                                              # (T*4, 256)
    h2 = jnp.maximum(
        jnp.dot(h1.astype(jnp.bfloat16), w2_ref[...],
                preferred_element_type=jnp.float32) + b2_ref[...], 0.0)  # (T*4, 128)

    # global mean pool over the 2x2 conv2 grid, then 128 -> 512 projection.
    pooled = jnp.mean(h2.reshape(T, 4, 128), axis=1)                     # (T, 128)
    feat = jnp.dot(pooled.astype(jnp.bfloat16), w3_ref[...],
                   preferred_element_type=jnp.float32) + b3_ref[...]     # (T, 512)
    feat_ref[...] = feat.astype(feat_ref.dtype)

    # decoder + L1 on the in-VMEM feature (no HBM round trip of feat).
    hd = jnp.maximum(
        jnp.dot(feat.astype(jnp.bfloat16), dw1_ref[...],
                preferred_element_type=jnp.float32) + db1_ref[...], 0.0)  # (T, 1024)
    rc = jax.nn.sigmoid(
        jnp.dot(hd.astype(jnp.bfloat16), dw2_ref[...],
                preferred_element_type=jnp.float32) + db2_ref[...])       # (T, 768)
    rc_ref[...] = rc.astype(rc_ref.dtype)

    # L1 partial: three lane-aligned 256-lane compares vs the single-channel target.
    tgt = tgt_ref[...]
    part = (jnp.sum(jnp.abs(tgt - rc[:, 0 * _PATCH_SC:1 * _PATCH_SC]))
            + jnp.sum(jnp.abs(tgt - rc[:, 1 * _PATCH_SC:2 * _PATCH_SC]))
            + jnp.sum(jnp.abs(tgt - rc[:, 2 * _PATCH_SC:3 * _PATCH_SC])))
    loss_ref[...] = jnp.broadcast_to(part, loss_ref.shape)


def _lstm_kernel(x_ref, wih_ref, whh_ref, b_ref, h0_ref, c0_ref, o_ref):
    """Single-layer LSTM. x_ref: (S*B, D) time-major, o_ref: (S*B, H) time-major.

    The input projection (D=576) is hoisted out of the recurrence as a single MXU
    matmul; the unrolled time loop only does h @ W_hh (32x128) + elementwise work.
    """
    B = h0_ref.shape[0]
    H = h0_ref.shape[1]
    S = x_ref.shape[0] // B

    # Loop-invariant input projection + bias: one well-shaped matmul.
    gx = jnp.dot(x_ref[...].astype(jnp.bfloat16), wih_ref[...],
                 preferred_element_type=jnp.float32) + b_ref[...]         # (S*B, 4H)

    h = h0_ref[...]
    c = c0_ref[...]
    hs = []
    for t in range(S):                                   # unrolled, S is small & static
        gates = gx[t * B:(t + 1) * B, :] + jnp.dot(
            h, whh_ref[...], preferred_element_type=jnp.float32)          # (B, 4H)
        # sigmoid over the full 4H = 128-lane vreg, tanh only on the 32-lane g slice:
        # halves EUP work on the serial recurrence chain.
        sg = jax.nn.sigmoid(gates)
        i_g = sg[:, 0 * H:1 * H]
        f_g = sg[:, 1 * H:2 * H]
        o_g = sg[:, 3 * H:4 * H]
        g_g = jnp.tanh(gates[:, 2 * H:3 * H])
        c = f_g * c + i_g * g_g
        h = o_g * jnp.tanh(c)
        hs.append(h)
    # Single unmasked (S*B, H) store instead of S masked sub-sublane stores.
    o_ref[...] = jnp.concatenate(hs, axis=0)


# --------------------------------- JAX glue (layout) --------------------------------
def _pick_tile(n):
    """Images per grid step: multiple of 8, <= 256, dividing n; grid_n >= 2 when
    possible so both v7x TensorCores get work."""
    if n % 8 != 0:
        return n                                    # tiny / odd N: single step
    cap = min(256, max(8, (n // 2) // 8 * 8)) if n >= 16 else n
    tile = cap
    while n % tile != 0:
        tile -= 8
    return tile


def _encoder_patches(x_img):
    """(N, 16, 16) glyph -> (N*4, 64) patches for the fused encoder.

    Rows = (image n, conv2 row I, conv2 col J); cols = [sub-patch d=di*2+dj][kr*4+kc].
    """
    N = x_img.shape[0]
    xh = x_img.reshape(N, 2, 2, 4, 2, 2, 4)              # (n, I, di, kr, J, dj, kc)
    xh = jnp.transpose(xh, (0, 1, 4, 2, 5, 3, 6))        # (n, I, J, di, dj, kr, kc)
    return xh.reshape(N * 4, 64)


def _decoder_layout_target(x_img):
    """(N, 16, 16) glyph -> (N, 256) single-channel L1 target in decoder column order
    [patch p=pr*4+pc][pixel px=kr*4+kc]."""
    N = x_img.shape[0]
    xp = x_img.reshape(N, 4, 4, 4, 4)                    # (n, pr, kr, pc, kc)
    xp = jnp.transpose(xp, (0, 1, 3, 2, 4))              # (n, pr, pc, kr, kc)
    return xp.reshape(N, _PATCH_SC)


def _unpatchify_nchw(rc_flat, g):
    """(N, 768) channel-major decoder output -> (N, 3, g, g) NCHW image."""
    N = rc_flat.shape[0]
    rc = rc_flat.reshape(N, 3, 4, 4, 4, 4)               # (n, c, pr, pc, kr, kc)
    rc = jnp.transpose(rc, (0, 1, 2, 4, 3, 5))           # (n, c, pr, kr, pc, kc)
    return rc.reshape(N, 3, g, g)


# ------------------------------------ forward ---------------------------------------
def condition_encoder_forward(prep, imgs_glyph, embeds_char, embeds_word, text_len):
    B = imgs_glyph.shape[0]
    g, S, H = GLYPH_SIZE, MAX_SEQLEN, HIDDEN_SIZE
    N = B * S

    # imgs_glyph: (B, g, S*g) -> (B*S, g, g) single-channel glyphs
    # (matches torch reshape/permute; the 3-channel repeat is folded into enc_w1).
    x = imgs_glyph.reshape(B, g, S, g)
    x = jnp.transpose(x, (0, 2, 1, 3)).reshape(N, g, g).astype(jnp.float32)

    tile = _pick_tile(N)
    grid_n = N // tile

    # ---------------- fused image encoder + decoder + L1 ----------------
    p2 = _encoder_patches(x).astype(jnp.bfloat16)                         # (N*4, 64)
    tgt = _decoder_layout_target(x)                                       # (N, 256)
    imgs_feat, rc_flat, loss_part = pl.pallas_call(
        _img_encdec_l1_kernel,
        out_shape=(jax.ShapeDtypeStruct((N, IMG_FEAT_DIM), jnp.float32),
                   jax.ShapeDtypeStruct((N, _PATCH_DIM), jnp.float32),
                   jax.ShapeDtypeStruct((grid_n, 8, 128), jnp.float32)),
        grid=(grid_n,),
        in_specs=[
            pl.BlockSpec((tile * 4, 64), lambda i: (i, 0)),
            pl.BlockSpec((tile, _PATCH_SC), lambda i: (i, 0)),
            pl.BlockSpec((64, 256), lambda i: (0, 0)),
            pl.BlockSpec((1, 256), lambda i: (0, 0)),
            pl.BlockSpec((256, 128), lambda i: (0, 0)),
            pl.BlockSpec((1, 128), lambda i: (0, 0)),
            pl.BlockSpec((128, IMG_FEAT_DIM), lambda i: (0, 0)),
            pl.BlockSpec((1, IMG_FEAT_DIM), lambda i: (0, 0)),
            pl.BlockSpec((IMG_FEAT_DIM, _DEC_HID), lambda i: (0, 0)),
            pl.BlockSpec((1, _DEC_HID), lambda i: (0, 0)),
            pl.BlockSpec((_DEC_HID, _PATCH_DIM), lambda i: (0, 0)),
            pl.BlockSpec((1, _PATCH_DIM), lambda i: (0, 0)),
        ],
        out_specs=(pl.BlockSpec((tile, IMG_FEAT_DIM), lambda i: (i, 0)),
                   pl.BlockSpec((tile, _PATCH_DIM), lambda i: (i, 0)),
                   pl.BlockSpec((1, 8, 128), lambda i: (i, 0, 0))),
        compiler_params=pltpu.CompilerParams(
            dimension_semantics=("parallel",),
            # Cheap insurance (relevant mostly on v5e's 16 MiB default scoped VMEM).
            vmem_limit_bytes=32 * 1024 * 1024),
    )(p2, tgt,
      prep["enc_w1_bd"], prep["enc_b1_t"], prep["enc_w2d"], prep["enc_b2"],
      prep["enc_w3"], prep["enc_b3"],
      prep["dec_w1"], prep["dec_b1"], prep["dec_w2_bd"], prep["dec_b2_bd"])

    rec_res = {
        "img": _unpatchify_nchw(rc_flat, g),                              # (N, 3, g, g) NCHW
        "l1_loss": jnp.sum(loss_part[:, 0, 0]) / jnp.float32(N * _PATCH_DIM),
    }

    # ---------------- LSTM over [img_feat | text] ----------------
    imgs_feat_bs = imgs_feat.reshape(B, S, IMG_FEAT_DIM)
    if USE_EMBED_WORD:
        embeds_text = jnp.concatenate([embeds_char, embeds_word], -1)
    else:
        embeds_text = embeds_char
    if COND_MODALITY == "img_text":
        lstm_input = jnp.concatenate([imgs_feat_bs, embeds_text], -1)
    elif COND_MODALITY == "img":
        lstm_input = imgs_feat_bs
    else:
        lstm_input = embeds_text
    D = lstm_input.shape[-1]
    x_tb = jnp.transpose(lstm_input, (1, 0, 2)).reshape(S * B, D).astype(jnp.float32)

    # init_cond == zeros  =>  h0 = tanh(0 @ W + b) = tanh(b); zero-input matmuls elided.
    h0 = jnp.broadcast_to(jnp.tanh(prep["init_h_b"]), (B, H)).astype(jnp.float32)
    c0 = jnp.broadcast_to(jnp.tanh(prep["init_c_b"]), (B, H)).astype(jnp.float32)

    out_tb = pl.pallas_call(
        _lstm_kernel,
        out_shape=jax.ShapeDtypeStruct((S * B, H), jnp.float32),
        grid=(1,),
        in_specs=[
            pl.BlockSpec((S * B, D), lambda i: (0, 0)),
            pl.BlockSpec((D, 4 * H), lambda i: (0, 0)),
            pl.BlockSpec((H, 4 * H), lambda i: (0, 0)),
            pl.BlockSpec((1, 4 * H), lambda i: (0, 0)),
            pl.BlockSpec((B, H), lambda i: (0, 0)),
            pl.BlockSpec((B, H), lambda i: (0, 0)),
        ],
        out_specs=pl.BlockSpec((S * B, H), lambda i: (0, 0)),
        compiler_params=pltpu.CompilerParams(dimension_semantics=("arbitrary",)),
    )(x_tb, prep["lstm_wih"], prep["lstm_whh"], prep["lstm_b"], h0, c0)
    cond_feat = jnp.transpose(out_tb.reshape(S, B, H), (1, 0, 2))         # (B, S, H)

    # TODO(synk): CustomLSTM source not provided; pack_padded_sequence-style masking of
    # steps beyond text_len is not replicated (cond_feat_last is unaffected).
    idx = (text_len - 1).astype(jnp.int32)
    text_len_ = jnp.broadcast_to(idx[:, None, None], (B, 1, H))
    cond_feat_last = jnp.take_along_axis(cond_feat, text_len_, axis=1)[:, 0, :]
    return cond_feat, cond_feat_last, text_len_, rec_res


# ----------------------------------- parameters -------------------------------------
def init_params(key):
    def w(k, shape, fan_in):
        return jax.random.normal(k, shape, jnp.float32) / jnp.sqrt(jnp.float32(fan_in))

    ks = jax.random.split(key, 9)
    H = HIDDEN_SIZE
    text_in = 2 * EMBED_DIM if USE_EMBED_WORD else EMBED_DIM
    if COND_MODALITY == "img_text":
        lstm_in = text_in + IMG_FEAT_DIM
    elif COND_MODALITY == "img":
        lstm_in = IMG_FEAT_DIM
    else:
        lstm_in = text_in

    return {
        "enc_w1": w(ks[0], (4 * 4 * 3, 64), 48),          # 3-channel conv1 (folded later)
        "enc_b1": jnp.zeros((1, 64), jnp.float32),
        "enc_w2": w(ks[1], (2 * 2 * 64, 128), 256),
        "enc_b2": jnp.zeros((1, 128), jnp.float32),
        "enc_w3": w(ks[2], (128, IMG_FEAT_DIM), 128),
        "enc_b3": jnp.zeros((1, IMG_FEAT_DIM), jnp.float32),
        "dec_w1": w(ks[3], (IMG_FEAT_DIM, _DEC_HID), IMG_FEAT_DIM),
        "dec_b1": jnp.zeros((1, _DEC_HID), jnp.float32),
        "dec_w2": w(ks[4], (64, 4 * 4 * 3), 64),          # cols = [pixel px][channel c]
        "dec_b2": jnp.zeros((1, 4 * 4 * 3), jnp.float32),
        "lstm_wih": w(ks[5], (lstm_in, 4 * H), lstm_in),
        "lstm_whh": w(ks[6], (H, 4 * H), H),
        "lstm_b": jnp.zeros((1, 4 * H), jnp.float32),
        # init_h_w / init_c_w are mathematically dead: init_cond == 0 => tanh(bias).
        "init_h_w": w(ks[7], (INIT_COND_DIM, H), INIT_COND_DIM),
        "init_h_b": jnp.zeros((1, H), jnp.float32),
        "init_c_w": w(ks[8], (INIT_COND_DIM, H), INIT_COND_DIM),
        "init_c_b": jnp.zeros((1, H), jnp.float32),
    }


def prepare_params(params):
    """One-time kernel-ready rewrite of the parameters (done outside jit)."""
    bf = jnp.bfloat16

    # conv1: fold the 3 identical RGB channels (x@[Wr;Wg;Wb] == x@(Wr+Wg+Wb)), then make
    # it block-diagonal over the 4 conv2 sub-patches -> conv1+conv2 are two dense matmuls.
    enc_w1f = params["enc_w1"].reshape(16, 3, 64).sum(axis=1)                 # (16, 64)
    eye4 = jnp.eye(4, dtype=jnp.float32)
    enc_w1_bd = jnp.einsum("de,kj->dkej", eye4, enc_w1f).reshape(64, 256)     # (64, 256)
    enc_b1_t = jnp.tile(params["enc_b1"], (1, 4))                             # (1, 256)
    enc_w2d = params["enc_w2"]                                                # (256, 128) d-major

    # Decoder per-patch projection: block-diagonal with CHANNEL-MAJOR output columns
    # (col = c*256 + patch*16 + pixel) so the in-kernel L1 slices are lane-aligned and
    # the target only needs the single-channel glyph.
    eye16 = jnp.eye(16, dtype=jnp.float32)
    dw2 = params["dec_w2"].reshape(64, 16, 3)                                 # (k, px, c)
    dec_w2_bd = jnp.einsum("pq,kxc->pkcqx", eye16, dw2).reshape(_DEC_HID, _PATCH_DIM)
    db2 = params["dec_b2"].reshape(16, 3)                                     # (px, c)
    dec_b2_bd = jnp.broadcast_to(db2.T[:, None, :], (3, 16, 16)).reshape(1, _PATCH_DIM)

    return {
        "enc_w1_bd": enc_w1_bd.astype(bf),
        "enc_b1_t": enc_b1_t,
        "enc_w2d": enc_w2d.astype(bf),
        "enc_b2": params["enc_b2"],
        "enc_w3": params["enc_w3"].astype(bf),
        "enc_b3": params["enc_b3"],
        "dec_w1": params["dec_w1"].astype(bf),
        "dec_b1": params["dec_b1"],
        "dec_w2_bd": dec_w2_bd.astype(bf),
        "dec_b2_bd": dec_b2_bd,
        "lstm_wih": params["lstm_wih"].astype(bf),
        "lstm_whh": params["lstm_whh"],        # recurrence stays f32
        "lstm_b": params["lstm_b"],
        "init_h_b": params["init_h_b"],
        "init_c_b": params["init_c_b"],
    }


# --------------------------------------- main ----------------------------------------
if __name__ == "__main__":
    key = jax.random.PRNGKey(0)
    kp, k1, k2, k3 = jax.random.split(key, 4)
    params = init_params(kp)
    prep = prepare_params(params)

    B = 2
    imgs_glyph = jax.random.uniform(k1, (B, GLYPH_SIZE, MAX_SEQLEN * GLYPH_SIZE), jnp.float32)
    embeds_char = jax.random.normal(k2, (B, MAX_SEQLEN, EMBED_DIM), jnp.float32)
    embeds_word = jax.random.normal(k3, (B, MAX_SEQLEN, EMBED_DIM), jnp.float32)
    text_len = jnp.array([5, 8], jnp.int32)

    fwd = jax.jit(condition_encoder_forward)
    cond_feat, cond_feat_last, text_len_, rec_res = fwd(
        prep, imgs_glyph, embeds_char, embeds_word, text_len)
    jax.block_until_ready((cond_feat, cond_feat_last, text_len_, rec_res))

    assert cond_feat.shape == (B, MAX_SEQLEN, HIDDEN_SIZE)
    assert cond_feat_last.shape == (B, HIDDEN_SIZE)
    assert text_len_.shape == (B, 1, HIDDEN_SIZE)
    assert rec_res["img"].shape == (B * MAX_SEQLEN, 3, GLYPH_SIZE, GLYPH_SIZE)
    assert rec_res["l1_loss"].shape == ()
    assert bool(jnp.isfinite(rec_res["l1_loss"]))
    assert bool(jnp.all(jnp.isfinite(cond_feat)))
    assert bool(jnp.all(jnp.isfinite(rec_res["img"])))

    print("KERNEL_OK")
</pallas_src>

<mosaic_0001>
module attributes {stable_mosaic.version = 11 : i64} {
  func.func @_img_encdec_l1_kernel(%arg0: i32, %arg1: memref<32x64xbf16, #tpu.memory_space<vmem>>, %arg2: memref<8x256xf32, #tpu.memory_space<vmem>>, %arg3: memref<64x256xbf16, #tpu.memory_space<vmem>>, %arg4: memref<1x256xf32, #tpu.memory_space<vmem>>, %arg5: memref<256x128xbf16, #tpu.memory_space<vmem>>, %arg6: memref<1x128xf32, #tpu.memory_space<vmem>>, %arg7: memref<128x512xbf16, #tpu.memory_space<vmem>>, %arg8: memref<1x512xf32, #tpu.memory_space<vmem>>, %arg9: memref<512x1024xbf16, #tpu.memory_space<vmem>>, %arg10: memref<1x1024xf32, #tpu.memory_space<vmem>>, %arg11: memref<1024x768xbf16, #tpu.memory_space<vmem>>, %arg12: memref<1x768xf32, #tpu.memory_space<vmem>>, %arg13: memref<8x512xf32, #tpu.memory_space<vmem>>, %arg14: memref<8x768xf32, #tpu.memory_space<vmem>>, %arg15: memref<1x8x128xf32, #tpu.memory_space<vmem>>) attributes {dimension_semantics = [#tpu.dimension_semantics<parallel>], iteration_bounds = array<i64: 2>, scalar_prefetch = 0 : i64, scratch_operands = 0 : i64, tpu.core_type = #tpu.core_type<tc>, window_params = [{transform_indices = @transform_0, window_bounds = array<i64: 32, 64>}, {transform_indices = @transform_1, window_bounds = array<i64: 8, 256>}, {pipeline_mode = #tpu.pipeline_mode<synchronous>, transform_indices = @transform_2, window_bounds = array<i64: 64, 256>}, {pipeline_mode = #tpu.pipeline_mode<synchronous>, transform_indices = @transform_3, window_bounds = array<i64: 1, 256>}, {pipeline_mode = #tpu.pipeline_mode<synchronous>, transform_indices = @transform_4, window_bounds = array<i64: 256, 128>}, {pipeline_mode = #tpu.pipeline_mode<synchronous>, transform_indices = @transform_5, window_bounds = array<i64: 1, 128>}, {pipeline_mode = #tpu.pipeline_mode<synchronous>, transform_indices = @transform_6, window_bounds = array<i64: 128, 512>}, {pipeline_mode = #tpu.pipeline_mode<synchronous>, transform_indices = @transform_7, window_bounds = array<i64: 1, 512>}, {pipeline_mode = #tpu.pipeline_mode<synchronous>, transform_indices = @transform_8, window_bounds = array<i64: 512, 1024>}, {pipeline_mode = #tpu.pipeline_mode<synchronous>, transform_indices = @transform_9, window_bounds = array<i64: 1, 1024>}, {pipeline_mode = #tpu.pipeline_mode<synchronous>, transform_indices = @transform_10, window_bounds = array<i64: 1024, 768>}, {pipeline_mode = #tpu.pipeline_mode<synchronous>, transform_indices = @transform_11, window_bounds = array<i64: 1, 768>}, {transform_indices = @transform_12, window_bounds = array<i64: 8, 512>}, {transform_indices = @transform_13, window_bounds = array<i64: 8, 768>}, {transform_indices = @transform_14, window_bounds = array<i64: 1, 8, 128>}]} {
    %c0 = arith.constant 0 : index
    %c0_0 = arith.constant 0 : index
    %0 = vector.load %arg1[%c0, %c0_0] : memref<32x64xbf16, #tpu.memory_space<vmem>>, vector<32x64xbf16>
    %c0_1 = arith.constant 0 : index
    %c0_2 = arith.constant 0 : index
    %1 = vector.load %arg3[%c0_1, %c0_2] : memref<64x256xbf16, #tpu.memory_space<vmem>>, vector<64x256xbf16>
    %cst = arith.constant dense<0.000000e+00> : vector<32x256xf32>
    %2 = tpu.matmul %0, %1, %cst {dimension_numbers = #tpu.dot_dimension_numbers<[1], [0], [0], [1], [0, 0, 1, 1], [], []>} : vector<32x64xbf16>, vector<64x256xbf16>, vector<32x256xf32> -> vector<32x256xf32>
    %c0_3 = arith.constant 0 : index
    %c0_4 = arith.constant 0 : index
    %3 = vector.load %arg4[%c0_3, %c0_4] : memref<1x256xf32, #tpu.memory_space<vmem>>, vector<1x256xf32>
    %4 = vector.broadcast %3 : vector<1x256xf32> to vector<32x256xf32>
    %5 = arith.addf %2, %4 : vector<32x256xf32>
    %cst_5 = arith.constant 0.000000e+00 : f32
    %6 = vector.broadcast %cst_5 : f32 to vector<32x256xf32>
    %7 = arith.maximumf %5, %6 : vector<32x256xf32>
    %8 = arith.truncf %7 : vector<32x256xf32> to vector<32x256xbf16>
    %c0_6 = arith.constant 0 : index
    %c0_7 = arith.constant 0 : index
    %9 = vector.load %arg5[%c0_6, %c0_7] : memref<256x128xbf16, #tpu.memory_space<vmem>>, vector<256x128xbf16>
    %cst_8 = arith.constant dense<0.000000e+00> : vector<32x128xf32>
    %10 = tpu.matmul %8, %9, %cst_8 {dimension_numbers = #tpu.dot_dimension_numbers<[1], [0], [0], [1], [0, 0, 1, 1], [], []>} : vector<32x256xbf16>, vector<256x128xbf16>, vector<32x128xf32> -> vector<32x128xf32>
    %c0_9 = arith.constant 0 : index
    %c0_10 = arith.constant 0 : index
    %11 = vector.load %arg6[%c0_9, %c0_10] : memref<1x128xf32, #tpu.memory_space<vmem>>, vector<1x128xf32>
    %12 = vector.broadcast %11 : vector<1x128xf32> to vector<32x128xf32>
    %13 = arith.addf %10, %12 : vector<32x128xf32>
    %cst_11 = arith.constant 0.000000e+00 : f32
    %14 = vector.broadcast %cst_11 : f32 to vector<32x128xf32>
    %15 = arith.maximumf %13, %14 : vector<32x128xf32>
    %16 = vector.shape_cast %15 : vector<32x128xf32> to vector<8x4x128xf32>
    %cst_12 = arith.constant dense<0.000000e+00> : vector<8x128xf32>
    %17 = vector.multi_reduction <add>, %16, %cst_12 [1] : vector<8x4x128xf32> to vector<8x128xf32>
    %cst_13 = arith.constant 4.000000e+00 : f32
    %18 = vector.broadcast %cst_13 : f32 to vector<8x128xf32>
    %19 = arith.divf %17, %18 : vector<8x128xf32>
    %20 = arith.truncf %19 : vector<8x128xf32> to vector<8x128xbf16>
    %c0_14 = arith.constant 0 : index
    %c0_15 = arith.constant 0 : index
    %21 = vector.load %arg7[%c0_14, %c0_15] : memref<128x512xbf16, #tpu.memory_space<vmem>>, vector<128x512xbf16>
    %cst_16 = arith.constant dense<0.000000e+00> : vector<8x512xf32>
    %22 = tpu.matmul %20, %21, %cst_16 {dimension_numbers = #tpu.dot_dimension_numbers<[1], [0], [0], [1], [0, 0, 1, 1], [], []>} : vector<8x128xbf16>, vector<128x512xbf16>, vector<8x512xf32> -> vector<8x512xf32>
    %c0_17 = arith.constant 0 : index
    %c0_18 = arith.constant 0 : index
    %23 = vector.load %arg8[%c0_17, %c0_18] : memref<1x512xf32, #tpu.memory_space<vmem>>, vector<1x512xf32>
    %24 = vector.broadcast %23 : vector<1x512xf32> to vector<8x512xf32>
    %25 = arith.addf %22, %24 : vector<8x512xf32>
    %c0_19 = arith.constant 0 : index
    %c0_20 = arith.constant 0 : index
    %26 = vector.load %arg13[%c0_19, %c0_20] : memref<8x512xf32, #tpu.memory_space<vmem>>, vector<8x512xf32>
    tpu.vector_store %arg13[%c0_19, %c0_20], %25 {strides = array<i32>} : memref<8x512xf32, #tpu.memory_space<vmem>>, vector<8x512xf32>,
    %27 = arith.truncf %25 : vector<8x512xf32> to vector<8x512xbf16>
    %c0_21 = arith.constant 0 : index
    %c0_22 = arith.constant 0 : index
    %28 = vector.load %arg9[%c0_21, %c0_22] : memref<512x1024xbf16, #tpu.memory_space<vmem>>, vector<512x1024xbf16>
    %cst_23 = arith.constant dense<0.000000e+00> : vector<8x1024xf32>
    %29 = tpu.matmul %27, %28, %cst_23 {dimension_numbers = #tpu.dot_dimension_numbers<[1], [0], [0], [1], [0, 0, 1, 1], [], []>} : vector<8x512xbf16>, vector<512x1024xbf16>, vector<8x1024xf32> -> vector<8x1024xf32>
    %c0_24 = arith.constant 0 : index
    %c0_25 = arith.constant 0 : index
    %30 = vector.load %arg10[%c0_24, %c0_25] : memref<1x1024xf32, #tpu.memory_space<vmem>>, vector<1x1024xf32>
    %31 = vector.broadcast %30 : vector<1x1024xf32> to vector<8x1024xf32>
    %32 = arith.addf %29, %31 : vector<8x1024xf32>
    %cst_26 = arith.constant 0.000000e+00 : f32
    %33 = vector.broadcast %cst_26 : f32 to vector<8x1024xf32>
    %34 = arith.maximumf %32, %33 : vector<8x1024xf32>
    %35 = arith.truncf %34 : vector<8x1024xf32> to vector<8x1024xbf16>
    %c0_27 = arith.constant 0 : index
    %c0_28 = arith.constant 0 : index
    %36 = vector.load %arg11[%c0_27, %c0_28] : memref<1024x768xbf16, #tpu.memory_space<vmem>>, vector<1024x768xbf16>
    %cst_29 = arith.constant dense<0.000000e+00> : vector<8x768xf32>
    %37 = tpu.matmul %35, %36, %cst_29 {dimension_numbers = #tpu.dot_dimension_numbers<[1], [0], [0], [1], [0, 0, 1, 1], [], []>} : vector<8x1024xbf16>, vector<1024x768xbf16>, vector<8x768xf32> -> vector<8x768xf32>
    %c0_30 = arith.constant 0 : index
    %c0_31 = arith.constant 0 : index
    %38 = vector.load %arg12[%c0_30, %c0_31] : memref<1x768xf32, #tpu.memory_space<vmem>>, vector<1x768xf32>
    %39 = vector.broadcast %38 : vector<1x768xf32> to vector<8x768xf32>
    %40 = arith.addf %37, %39 : vector<8x768xf32>
    %41 = arith.negf %40 : vector<8x768xf32>
    %42 = math.exp %41 : vector<8x768xf32>
    %cst_32 = arith.constant 1.000000e+00 : f32
    %43 = vector.broadcast %cst_32 : f32 to vector<8x768xf32>
    %44 = arith.addf %43, %42 : vector<8x768xf32>
    %45 = arith.divf %43, %44 : vector<8x768xf32>
    %c0_33 = arith.constant 0 : index
    %c0_34 = arith.constant 0 : index
    %46 = vector.load %arg14[%c0_33, %c0_34] : memref<8x768xf32, #tpu.memory_space<vmem>>, vector<8x768xf32>
    tpu.vector_store %arg14[%c0_33, %c0_34], %45 {strides = array<i32>} : memref<8x768xf32, #tpu.memory_space<vmem>>, vector<8x768xf32>,
    %c0_35 = arith.constant 0 : index
    %c0_36 = arith.constant 0 : index
    %47 = vector.load %arg2[%c0_35, %c0_36] : memref<8x256xf32, #tpu.memory_space<vmem>>, vector<8x256xf32>
    %48 = vector.extract_strided_slice %45 {offsets = [0, 0], sizes = [8, 256], strides = [1, 1]} : vector<8x768xf32> to vector<8x256xf32>
    %49 = arith.subf %47, %48 : vector<8x256xf32>
    %50 = math.absf %49 : vector<8x256xf32>
    %51 = vector.shape_cast %50 : vector<8x256xf32> to vector<1x8x256xf32>
    %cst_37 = arith.constant dense<0.000000e+00> : vector<1xf32>
    %52 = vector.multi_reduction <add>, %51, %cst_37 [1, 2] : vector<1x8x256xf32> to vector<1xf32>
    %53 = vector.shape_cast %52 : vector<1xf32> to vector<1x1x1xf32>
    %54 = vector.extract %53[0, 0, 0] : f32 from vector<1x1x1xf32>
    %55 = vector.extract_strided_slice %45 {offsets = [0, 256], sizes = [8, 256], strides = [1, 1]} : vector<8x768xf32> to vector<8x256xf32>
    %56 = arith.subf %47, %55 : vector<8x256xf32>
    %57 = math.absf %56 : vector<8x256xf32>
    %58 = vector.shape_cast %57 : vector<8x256xf32> to vector<1x8x256xf32>
    %cst_38 = arith.constant dense<0.000000e+00> : vector<1xf32>
    %59 = vector.multi_reduction <add>, %58, %cst_38 [1, 2] : vector<1x8x256xf32> to vector<1xf32>
    %60 = vector.shape_cast %59 : vector<1xf32> to vector<1x1x1xf32>
    %61 = vector.extract %60[0, 0, 0] : f32 from vector<1x1x1xf32>
    %62 = arith.addf %54, %61 : f32
    %63 = vector.extract_strided_slice %45 {offsets = [0, 512], sizes = [8, 256], strides = [1, 1]} : vector<8x768xf32> to vector<8x256xf32>
    %64 = arith.subf %47, %63 : vector<8x256xf32>
    %65 = math.absf %64 : vector<8x256xf32>
    %66 = vector.shape_cast %65 : vector<8x256xf32> to vector<1x8x256xf32>
    %cst_39 = arith.constant dense<0.000000e+00> : vector<1xf32>
    %67 = vector.multi_reduction <add>, %66, %cst_39 [1, 2] : vector<1x8x256xf32> to vector<1xf32>
    %68 = vector.shape_cast %67 : vector<1xf32> to vector<1x1x1xf32>
    %69 = vector.extract %68[0, 0, 0] : f32 from vector<1x1x1xf32>
    %70 = arith.addf %62, %69 : f32
    %71 = vector.broadcast %70 : f32 to vector<1x8x128xf32>
    %c0_40 = arith.constant 0 : index
    %c0_41 = arith.constant 0 : index
    %c0_42 = arith.constant 0 : index
    %72 = vector.load %arg15[%c0_40, %c0_41, %c0_42] : memref<1x8x128xf32, #tpu.memory_space<vmem>>, vector<1x8x128xf32>
    tpu.vector_store %arg15[%c0_40, %c0_41, %c0_42], %71 {strides = array<i32>} : memref<1x8x128xf32, #tpu.memory_space<vmem>>, vector<1x8x128xf32>,
    return
  }
  func.func @transform_0(%arg0: i32) -> (i32, i32) {
    %c0_i32 = arith.constant 0 : i32
    %c0_i32_0 = arith.constant 0 : i32
    return %arg0, %c0_i32 : i32, i32
  }
  func.func @transform_1(%arg0: i32) -> (i32, i32) {
    %c0_i32 = arith.constant 0 : i32
    %c0_i32_0 = arith.constant 0 : i32
    return %arg0, %c0_i32 : i32, i32
  }
  func.func @transform_2(%arg0: i32) -> (i32, i32) {
    %c0_i32 = arith.constant 0 : i32
    %c0_i32_0 = arith.constant 0 : i32
    %c0_i32_1 = arith.constant 0 : i32
    return %c0_i32, %c0_i32_0 : i32, i32
  }
  func.func @transform_3(%arg0: i32) -> (i32, i32) {
    %c0_i32 = arith.constant 0 : i32
    %c0_i32_0 = arith.constant 0 : i32
    %c0_i32_1 = arith.constant 0 : i32
    return %c0_i32, %c0_i32_0 : i32, i32
  }
  func.func @transform_4(%arg0: i32) -> (i32, i32) {
    %c0_i32 = arith.constant 0 : i32
    %c0_i32_0 = arith.constant 0 : i32
    %c0_i32_1 = arith.constant 0 : i32
    return %c0_i32, %c0_i32_0 : i32, i32
  }
  func.func @transform_5(%arg0: i32) -> (i32, i32) {
    %c0_i32 = arith.constant 0 : i32
    %c0_i32_0 = arith.constant 0 : i32
    %c0_i32_1 = arith.constant 0 : i32
    return %c0_i32, %c0_i32_0 : i32, i32
  }
  func.func @transform_6(%arg0: i32) -> (i32, i32) {
    %c0_i32 = arith.constant 0 : i32
    %c0_i32_0 = arith.constant 0 : i32
    %c0_i32_1 = arith.constant 0 : i32
    return %c0_i32, %c0_i32_0 : i32, i32
  }
  func.func @transform_7(%arg0: i32) -> (i32, i32) {
    %c0_i32 = arith.constant 0 : i32
    %c0_i32_0 = arith.constant 0 : i32
    %c0_i32_1 = arith.constant 0 : i32
    return %c0_i32, %c0_i32_0 : i32, i32
  }
  func.func @transform_8(%arg0: i32) -> (i32, i32) {
    %c0_i32 = arith.constant 0 : i32
    %c0_i32_0 = arith.constant 0 : i32
    %c0_i32_1 = arith.constant 0 : i32
    return %c0_i32, %c0_i32_0 : i32, i32
  }
  func.func @transform_9(%arg0: i32) -> (i32, i32) {
    %c0_i32 = arith.constant 0 : i32
    %c0_i32_0 = arith.constant 0 : i32
    %c0_i32_1 = arith.constant 0 : i32
    return %c0_i32, %c0_i32_0 : i32, i32
  }
  func.func @transform_10(%arg0: i32) -> (i32, i32) {
    %c0_i32 = arith.constant 0 : i32
    %c0_i32_0 = arith.constant 0 : i32
    %c0_i32_1 = arith.constant 0 : i32
    return %c0_i32, %c0_i32_0 : i32, i32
  }
  func.func @transform_11(%arg0: i32) -> (i32, i32) {
    %c0_i32 = arith.constant 0 : i32
    %c0_i32_0 = arith.constant 0 : i32
    %c0_i32_1 = arith.constant 0 : i32
    return %c0_i32, %c0_i32_0 : i32, i32
  }
  func.func @transform_12(%arg0: i32) -> (i32, i32) {
    %c0_i32 = arith.constant 0 : i32
    %c0_i32_0 = arith.constant 0 : i32
    return %arg0, %c0_i32 : i32, i32
  }
  func.func @transform_13(%arg0: i32) -> (i32, i32) {
    %c0_i32 = arith.constant 0 : i32
    %c0_i32_0 = arith.constant 0 : i32
    return %arg0, %c0_i32 : i32, i32
  }
  func.func @transform_14(%arg0: i32) -> (i32, i32, i32) {
    %c0_i32 = arith.constant 0 : i32
    %c0_i32_0 = arith.constant 0 : i32
    %c0_i32_1 = arith.constant 0 : i32
    return %arg0, %c0_i32, %c0_i32_0 : i32, i32, i32
  }
}

module attributes {stable_mosaic.version = 11 : i64} {
  func.func @_lstm_kernel(%arg0: i32, %arg1: memref<16x576xf32, #tpu.memory_space<vmem>>, %arg2: memref<576x128xbf16, #tpu.memory_space<vmem>>, %arg3: memref<32x128xf32, #tpu.memory_space<vmem>>, %arg4: memref<1x128xf32, #tpu.memory_space<vmem>>, %arg5: memref<2x32xf32, #tpu.memory_space<vmem>>, %arg6: memref<2x32xf32, #tpu.memory_space<vmem>>, %arg7: memref<16x32xf32, #tpu.memory_space<vmem>>) attributes {dimension_semantics = [#tpu.dimension_semantics<arbitrary>], iteration_bounds = array<i64: 1>, scalar_prefetch = 0 : i64, scratch_operands = 0 : i64, tpu.core_type = #tpu.core_type<tc>, window_params = [{pipeline_mode = #tpu.pipeline_mode<synchronous>, transform_indices = @transform_0, window_bounds = array<i64: 16, 576>}, {pipeline_mode = #tpu.pipeline_mode<synchronous>, transform_indices = @transform_1, window_bounds = array<i64: 576, 128>}, {pipeline_mode = #tpu.pipeline_mode<synchronous>, transform_indices = @transform_2, window_bounds = array<i64: 32, 128>}, {pipeline_mode = #tpu.pipeline_mode<synchronous>, transform_indices = @transform_3, window_bounds = array<i64: 1, 128>}, {pipeline_mode = #tpu.pipeline_mode<synchronous>, transform_indices = @transform_4, window_bounds = array<i64: 2, 32>}, {pipeline_mode = #tpu.pipeline_mode<synchronous>, transform_indices = @transform_5, window_bounds = array<i64: 2, 32>}, {pipeline_mode = #tpu.pipeline_mode<synchronous>, transform_indices = @transform_6, window_bounds = array<i64: 16, 32>}]} {
    %c0 = arith.constant 0 : index
    %c0_0 = arith.constant 0 : index
    %0 = vector.load %arg1[%c0, %c0_0] : memref<16x576xf32, #tpu.memory_space<vmem>>, vector<16x576xf32>
    %1 = arith.truncf %0 : vector<16x576xf32> to vector<16x576xbf16>
    %c0_1 = arith.constant 0 : index
    %c0_2 = arith.constant 0 : index
    %2 = vector.load %arg2[%c0_1, %c0_2] : memref<576x128xbf16, #tpu.memory_space<vmem>>, vector<576x128xbf16>
    %cst = arith.constant dense<0.000000e+00> : vector<16x128xf32>
    %3 = tpu.matmul %1, %2, %cst {dimension_numbers = #tpu.dot_dimension_numbers<[1], [0], [0], [1], [0, 0, 1, 1], [], []>} : vector<16x576xbf16>, vector<576x128xbf16>, vector<16x128xf32> -> vector<16x128xf32>
    %c0_3 = arith.constant 0 : index
    %c0_4 = arith.constant 0 : index
    %4 = vector.load %arg4[%c0_3, %c0_4] : memref<1x128xf32, #tpu.memory_space<vmem>>, vector<1x128xf32>
    %5 = vector.broadcast %4 : vector<1x128xf32> to vector<16x128xf32>
    %6 = arith.addf %3, %5 : vector<16x128xf32>
    %c0_5 = arith.constant 0 : index
    %c0_6 = arith.constant 0 : index
    %7 = vector.load %arg5[%c0_5, %c0_6] : memref<2x32xf32, #tpu.memory_space<vmem>>, vector<2x32xf32>
    %c0_7 = arith.constant 0 : index
    %c0_8 = arith.constant 0 : index
    %8 = vector.load %arg6[%c0_7, %c0_8] : memref<2x32xf32, #tpu.memory_space<vmem>>, vector<2x32xf32>
    %9 = vector.extract_strided_slice %6 {offsets = [0, 0], sizes = [2, 128], strides = [1, 1]} : vector<16x128xf32> to vector<2x128xf32>
    %c0_9 = arith.constant 0 : index
    %c0_10 = arith.constant 0 : index
    %10 = vector.load %arg3[%c0_9, %c0_10] : memref<32x128xf32, #tpu.memory_space<vmem>>, vector<32x128xf32>
    %cst_11 = arith.constant dense<0.000000e+00> : vector<2x128xf32>
    %11 = tpu.matmul %7, %10, %cst_11 {dimension_numbers = #tpu.dot_dimension_numbers<[1], [0], [0], [1], [0, 0, 1, 1], [], []>} : vector<2x32xf32>, vector<32x128xf32>, vector<2x128xf32> -> vector<2x128xf32>
    %12 = arith.addf %9, %11 : vector<2x128xf32>
    %13 = arith.negf %12 : vector<2x128xf32>
    %14 = math.exp %13 : vector<2x128xf32>
    %cst_12 = arith.constant 1.000000e+00 : f32
    %15 = vector.broadcast %cst_12 : f32 to vector<2x128xf32>
    %16 = arith.addf %15, %14 : vector<2x128xf32>
    %17 = arith.divf %15, %16 : vector<2x128xf32>
    %18 = vector.extract_strided_slice %17 {offsets = [0, 0], sizes = [2, 32], strides = [1, 1]} : vector<2x128xf32> to vector<2x32xf32>
    %19 = vector.extract_strided_slice %17 {offsets = [0, 32], sizes = [2, 32], strides = [1, 1]} : vector<2x128xf32> to vector<2x32xf32>
    %20 = vector.extract_strided_slice %17 {offsets = [0, 96], sizes = [2, 32], strides = [1, 1]} : vector<2x128xf32> to vector<2x32xf32>
    %21 = vector.extract_strided_slice %12 {offsets = [0, 64], sizes = [2, 32], strides = [1, 1]} : vector<2x128xf32> to vector<2x32xf32>
    %22 = math.tanh %21 : vector<2x32xf32>
    %23 = arith.mulf %19, %8 : vector<2x32xf32>
    %24 = arith.mulf %18, %22 : vector<2x32xf32>
    %25 = arith.addf %23, %24 : vector<2x32xf32>
    %26 = math.tanh %25 : vector<2x32xf32>
    %27 = arith.mulf %20, %26 : vector<2x32xf32>
    %28 = vector.extract_strided_slice %6 {offsets = [2, 0], sizes = [2, 128], strides = [1, 1]} : vector<16x128xf32> to vector<2x128xf32>
    %c0_13 = arith.constant 0 : index
    %c0_14 = arith.constant 0 : index
    %29 = vector.load %arg3[%c0_13, %c0_14] : memref<32x128xf32, #tpu.memory_space<vmem>>, vector<32x128xf32>
    %cst_15 = arith.constant dense<0.000000e+00> : vector<2x128xf32>
    %30 = tpu.matmul %27, %29, %cst_15 {dimension_numbers = #tpu.dot_dimension_numbers<[1], [0], [0], [1], [0, 0, 1, 1], [], []>} : vector<2x32xf32>, vector<32x128xf32>, vector<2x128xf32> -> vector<2x128xf32>
    %31 = arith.addf %28, %30 : vector<2x128xf32>
    %32 = arith.negf %31 : vector<2x128xf32>
    %33 = math.exp %32 : vector<2x128xf32>
    %cst_16 = arith.constant 1.000000e+00 : f32
    %34 = vector.broadcast %cst_16 : f32 to vector<2x128xf32>
    %35 = arith.addf %34, %33 : vector<2x128xf32>
    %36 = arith.divf %34, %35 : vector<2x128xf32>
    %37 = vector.extract_strided_slice %36 {offsets = [0, 0], sizes = [2, 32], strides = [1, 1]} : vector<2x128xf32> to vector<2x32xf32>
    %38 = vector.extract_strided_slice %36 {offsets = [0, 32], sizes = [2, 32], strides = [1, 1]} : vector<2x128xf32> to vector<2x32xf32>
    %39 = vector.extract_strided_slice %36 {offsets = [0, 96], sizes = [2, 32], strides = [1, 1]} : vector<2x128xf32> to vector<2x32xf32>
    %40 = vector.extract_strided_slice %31 {offsets = [0, 64], sizes = [2, 32], strides = [1, 1]} : vector<2x128xf32> to vector<2x32xf32>
    %41 = math.tanh %40 : vector<2x32xf32>
    %42 = arith.mulf %38, %25 : vector<2x32xf32>
    %43 = arith.mulf %37, %41 : vector<2x32xf32>
    %44 = arith.addf %42, %43 : vector<2x32xf32>
    %45 = math.tanh %44 : vector<2x32xf32>
    %46 = arith.mulf %39, %45 : vector<2x32xf32>
    %47 = vector.extract_strided_slice %6 {offsets = [4, 0], sizes = [2, 128], strides = [1, 1]} : vector<16x128xf32> to vector<2x128xf32>
    %c0_17 = arith.constant 0 : index
    %c0_18 = arith.constant 0 : index
    %48 = vector.load %arg3[%c0_17, %c0_18] : memref<32x128xf32, #tpu.memory_space<vmem>>, vector<32x128xf32>
    %cst_19 = arith.constant dense<0.000000e+00> : vector<2x128xf32>
    %49 = tpu.matmul %46, %48, %cst_19 {dimension_numbers = #tpu.dot_dimension_numbers<[1], [0], [0], [1], [0, 0, 1, 1], [], []>} : vector<2x32xf32>, vector<32x128xf32>, vector<2x128xf32> -> vector<2x128xf32>
    %50 = arith.addf %47, %49 : vector<2x128xf32>
    %51 = arith.negf %50 : vector<2x128xf32>
    %52 = math.exp %51 : vector<2x128xf32>
    %cst_20 = arith.constant 1.000000e+00 : f32
    %53 = vector.broadcast %cst_20 : f32 to vector<2x128xf32>
    %54 = arith.addf %53, %52 : vector<2x128xf32>
    %55 = arith.divf %53, %54 : vector<2x128xf32>
    %56 = vector.extract_strided_slice %55 {offsets = [0, 0], sizes = [2, 32], strides = [1, 1]} : vector<2x128xf32> to vector<2x32xf32>
    %57 = vector.extract_strided_slice %55 {offsets = [0, 32], sizes = [2, 32], strides = [1, 1]} : vector<2x128xf32> to vector<2x32xf32>
    %58 = vector.extract_strided_slice %55 {offsets = [0, 96], sizes = [2, 32], strides = [1, 1]} : vector<2x128xf32> to vector<2x32xf32>
    %59 = vector.extract_strided_slice %50 {offsets = [0, 64], sizes = [2, 32], strides = [1, 1]} : vector<2x128xf32> to vector<2x32xf32>
    %60 = math.tanh %59 : vector<2x32xf32>
    %61 = arith.mulf %57, %44 : vector<2x32xf32>
    %62 = arith.mulf %56, %60 : vector<2x32xf32>
    %63 = arith.addf %61, %62 : vector<2x32xf32>
    %64 = math.tanh %63 : vector<2x32xf32>
    %65 = arith.mulf %58, %64 : vector<2x32xf32>
    %66 = vector.extract_strided_slice %6 {offsets = [6, 0], sizes = [2, 128], strides = [1, 1]} : vector<16x128xf32> to vector<2x128xf32>
    %c0_21 = arith.constant 0 : index
    %c0_22 = arith.constant 0 : index
    %67 = vector.load %arg3[%c0_21, %c0_22] : memref<32x128xf32, #tpu.memory_space<vmem>>, vector<32x128xf32>
    %cst_23 = arith.constant dense<0.000000e+00> : vector<2x128xf32>
    %68 = tpu.matmul %65, %67, %cst_23 {dimension_numbers = #tpu.dot_dimension_numbers<[1], [0], [0], [1], [0, 0, 1, 1], [], []>} : vector<2x32xf32>, vector<32x128xf32>, vector<2x128xf32> -> vector<2x128xf32>
    %69 = arith.addf %66, %68 : vector<2x128xf32>
    %70 = arith.negf %69 : vector<2x128xf32>
    %71 = math.exp %70 : vector<2x128xf32>
    %cst_24 = arith.constant 1.000000e+00 : f32
    %72 = vector.broadcast %cst_24 : f32 to vector<2x128xf32>
    %73 = arith.addf %72, %71 : vector<2x128xf32>
    %74 = arith.divf %72, %73 : vector<2x128xf32>
    %75 = vector.extract_strided_slice %74 {offsets = [0, 0], sizes = [2, 32], strides = [1, 1]} : vector<2x128xf32> to vector<2x32xf32>
    %76 = vector.extract_strided_slice %74 {offsets = [0, 32], sizes = [2, 32], strides = [1, 1]} : vector<2x128xf32> to vector<2x32xf32>
    %77 = vector.extract_strided_slice %74 {offsets = [0, 96], sizes = [2, 32], strides = [1, 1]} : vector<2x128xf32> to vector<2x32xf32>
    %78 = vector.extract_strided_slice %69 {offsets = [0, 64], sizes = [2, 32], strides = [1, 1]} : vector<2x128xf32> to vector<2x32xf32>
    %79 = math.tanh %78 : vector<2x32xf32>
    %80 = arith.mulf %76, %63 : vector<2x32xf32>
    %81 = arith.mulf %75, %79 : vector<2x32xf32>
    %82 = arith.addf %80, %81 : vector<2x32xf32>
    %83 = math.tanh %82 : vector<2x32xf32>
    %84 = arith.mulf %77, %83 : vector<2x32xf32>
    %85 = vector.extract_strided_slice %6 {offsets = [8, 0], sizes = [2, 128], strides = [1, 1]} : vector<16x128xf32> to vector<2x128xf32>
    %c0_25 = arith.constant 0 : index
    %c0_26 = arith.constant 0 : index
    %86 = vector.load %arg3[%c0_25, %c0_26] : memref<32x128xf32, #tpu.memory_space<vmem>>, vector<32x128xf32>
    %cst_27 = arith.constant dense<0.000000e+00> : vector<2x128xf32>
    %87 = tpu.matmul %84, %86, %cst_27 {dimension_numbers = #tpu.dot_dimension_numbers<[1], [0], [0], [1], [0, 0, 1, 1], [], []>} : vector<2x32xf32>, vector<32x128xf32>, vector<2x128xf32> -> vector<2x128xf32>
    %88 = arith.addf %85, %87 : vector<2x128xf32>
    %89 = arith.negf %88 : vector<2x128xf32>
    %90 = math.exp %89 : vector<2x128xf32>
    %cst_28 = arith.constant 1.000000e+00 : f32
    %91 = vector.broadcast %cst_28 : f32 to vector<2x128xf32>
    %92 = arith.addf %91, %90 : vector<2x128xf32>
    %93 = arith.divf %91, %92 : vector<2x128xf32>
    %94 = vector.extract_strided_slice %93 {offsets = [0, 0], sizes = [2, 32], strides = [1, 1]} : vector<2x128xf32> to vector<2x32xf32>
    %95 = vector.extract_strided_slice %93 {offsets = [0, 32], sizes = [2, 32], strides = [1, 1]} : vector<2x128xf32> to vector<2x32xf32>
    %96 = vector.extract_strided_slice %93 {offsets = [0, 96], sizes = [2, 32], strides = [1, 1]} : vector<2x128xf32> to vector<2x32xf32>
    %97 = vector.extract_strided_slice %88 {offsets = [0, 64], sizes = [2, 32], strides = [1, 1]} : vector<2x128xf32> to vector<2x32xf32>
    %98 = math.tanh %97 : vector<2x32xf32>
    %99 = arith.mulf %95, %82 : vector<2x32xf32>
    %100 = arith.mulf %94, %98 : vector<2x32xf32>
    %101 = arith.addf %99, %100 : vector<2x32xf32>
    %102 = math.tanh %101 : vector<2x32xf32>
    %103 = arith.mulf %96, %102 : vector<2x32xf32>
    %104 = vector.extract_strided_slice %6 {offsets = [10, 0], sizes = [2, 128], strides = [1, 1]} : vector<16x128xf32> to vector<2x128xf32>
    %c0_29 = arith.constant 0 : index
    %c0_30 = arith.constant 0 : index
    %105 = vector.load %arg3[%c0_29, %c0_30] : memref<32x128xf32, #tpu.memory_space<vmem>>, vector<32x128xf32>
    %cst_31 = arith.constant dense<0.000000e+00> : vector<2x128xf32>
    %106 = tpu.matmul %103, %105, %cst_31 {dimension_numbers = #tpu.dot_dimension_numbers<[1], [0], [0], [1], [0, 0, 1, 1], [], []>} : vector<2x32xf32>, vector<32x128xf32>, vector<2x128xf32> -> vector<2x128xf32>
    %107 = arith.addf %104, %106 : vector<2x128xf32>
    %108 = arith.negf %107 : vector<2x128xf32>
    %109 = math.exp %108 : vector<2x128xf32>
    %cst_32 = arith.constant 1.000000e+00 : f32
    %110 = vector.broadcast %cst_32 : f32 to vector<2x128xf32>
    %111 = arith.addf %110, %109 : vector<2x128xf32>
    %112 = arith.divf %110, %111 : vector<2x128xf32>
    %113 = vector.extract_strided_slice %112 {offsets = [0, 0], sizes = [2, 32], strides = [1, 1]} : vector<2x128xf32> to vector<2x32xf32>
    %114 = vector.extract_strided_slice %112 {offsets = [0, 32], sizes = [2, 32], strides = [1, 1]} : vector<2x128xf32> to vector<2x32xf32>
    %115 = vector.extract_strided_slice %112 {offsets = [0, 96], sizes = [2, 32], strides = [1, 1]} : vector<2x128xf32> to vector<2x32xf32>
    %116 = vector.extract_strided_slice %107 {offsets = [0, 64], sizes = [2, 32], strides = [1, 1]} : vector<2x128xf32> to vector<2x32xf32>
    %117 = math.tanh %116 : vector<2x32xf32>
    %118 = arith.mulf %114, %101 : vector<2x32xf32>
    %119 = arith.mulf %113, %117 : vector<2x32xf32>
    %120 = arith.addf %118, %119 : vector<2x32xf32>
    %121 = math.tanh %120 : vector<2x32xf32>
    %122 = arith.mulf %115, %121 : vector<2x32xf32>
    %123 = vector.extract_strided_slice %6 {offsets = [12, 0], sizes = [2, 128], strides = [1, 1]} : vector<16x128xf32> to vector<2x128xf32>
    %c0_33 = arith.constant 0 : index
    %c0_34 = arith.constant 0 : index
    %124 = vector.load %arg3[%c0_33, %c0_34] : memref<32x128xf32, #tpu.memory_space<vmem>>, vector<32x128xf32>
    %cst_35 = arith.constant dense<0.000000e+00> : vector<2x128xf32>
    %125 = tpu.matmul %122, %124, %cst_35 {dimension_numbers = #tpu.dot_dimension_numbers<[1], [0], [0], [1], [0, 0, 1, 1], [], []>} : vector<2x32xf32>, vector<32x128xf32>, vector<2x128xf32> -> vector<2x128xf32>
    %126 = arith.addf %123, %125 : vector<2x128xf32>
    %127 = arith.negf %126 : vector<2x128xf32>
    %128 = math.exp %127 : vector<2x128xf32>
    %cst_36 = arith.constant 1.000000e+00 : f32
    %129 = vector.broadcast %cst_36 : f32 to vector<2x128xf32>
    %130 = arith.addf %129, %128 : vector<2x128xf32>
    %131 = arith.divf %129, %130 : vector<2x128xf32>
    %132 = vector.extract_strided_slice %131 {offsets = [0, 0], sizes = [2, 32], strides = [1, 1]} : vector<2x128xf32> to vector<2x32xf32>
    %133 = vector.extract_strided_slice %131 {offsets = [0, 32], sizes = [2, 32], strides = [1, 1]} : vector<2x128xf32> to vector<2x32xf32>
    %134 = vector.extract_strided_slice %131 {offsets = [0, 96], sizes = [2, 32], strides = [1, 1]} : vector<2x128xf32> to vector<2x32xf32>
    %135 = vector.extract_strided_slice %126 {offsets = [0, 64], sizes = [2, 32], strides = [1, 1]} : vector<2x128xf32> to vector<2x32xf32>
    %136 = math.tanh %135 : vector<2x32xf32>
    %137 = arith.mulf %133, %120 : vector<2x32xf32>
    %138 = arith.mulf %132, %136 : vector<2x32xf32>
    %139 = arith.addf %137, %138 : vector<2x32xf32>
    %140 = math.tanh %139 : vector<2x32xf32>
    %141 = arith.mulf %134, %140 : vector<2x32xf32>
    %142 = vector.extract_strided_slice %6 {offsets = [14, 0], sizes = [2, 128], strides = [1, 1]} : vector<16x128xf32> to vector<2x128xf32>
    %c0_37 = arith.constant 0 : index
    %c0_38 = arith.constant 0 : index
    %143 = vector.load %arg3[%c0_37, %c0_38] : memref<32x128xf32, #tpu.memory_space<vmem>>, vector<32x128xf32>
    %cst_39 = arith.constant dense<0.000000e+00> : vector<2x128xf32>
    %144 = tpu.matmul %141, %143, %cst_39 {dimension_numbers = #tpu.dot_dimension_numbers<[1], [0], [0], [1], [0, 0, 1, 1], [], []>} : vector<2x32xf32>, vector<32x128xf32>, vector<2x128xf32> -> vector<2x128xf32>
    %145 = arith.addf %142, %144 : vector<2x128xf32>
    %146 = arith.negf %145 : vector<2x128xf32>
    %147 = math.exp %146 : vector<2x128xf32>
    %cst_40 = arith.constant 1.000000e+00 : f32
    %148 = vector.broadcast %cst_40 : f32 to vector<2x128xf32>
    %149 = arith.addf %148, %147 : vector<2x128xf32>
    %150 = arith.divf %148, %149 : vector<2x128xf32>
    %151 = vector.extract_strided_slice %150 {offsets = [0, 0], sizes = [2, 32], strides = [1, 1]} : vector<2x128xf32> to vector<2x32xf32>
    %152 = vector.extract_strided_slice %150 {offsets = [0, 32], sizes = [2, 32], strides = [1, 1]} : vector<2x128xf32> to vector<2x32xf32>
    %153 = vector.extract_strided_slice %150 {offsets = [0, 96], sizes = [2, 32], strides = [1, 1]} : vector<2x128xf32> to vector<2x32xf32>
    %154 = vector.extract_strided_slice %145 {offsets = [0, 64], sizes = [2, 32], strides = [1, 1]} : vector<2x128xf32> to vector<2x32xf32>
    %155 = math.tanh %154 : vector<2x32xf32>
    %156 = arith.mulf %152, %139 : vector<2x32xf32>
    %157 = arith.mulf %151, %155 : vector<2x32xf32>
    %158 = arith.addf %156, %157 : vector<2x32xf32>
    %159 = math.tanh %158 : vector<2x32xf32>
    %160 = arith.mulf %153, %159 : vector<2x32xf32>
    %161 = tpu.concatenate %27, %46, %65, %84, %103, %122, %141, %160 in 0 : vector<2x32xf32>, vector<2x32xf32>, vector<2x32xf32>, vector<2x32xf32>, vector<2x32xf32>, vector<2x32xf32>, vector<2x32xf32>, vector<2x32xf32> -> vector<16x32xf32>
    %c0_41 = arith.constant 0 : index
    %c0_42 = arith.constant 0 : index
    %162 = vector.load %arg7[%c0_41, %c0_42] : memref<16x32xf32, #tpu.memory_space<vmem>>, vector<16x32xf32>
    tpu.vector_store %arg7[%c0_41, %c0_42], %161 {strides = array<i32>} : memref<16x32xf32, #tpu.memory_space<vmem>>, vector<16x32xf32>,
    return
  }
  func.func @transform_0(%arg0: i32) -> (i32, i32) {
    %c0_i32 = arith.constant 0 : i32
    %c0_i32_0 = arith.constant 0 : i32
    %c0_i32_1 = arith.constant 0 : i32
    return %c0_i32, %c0_i32_0 : i32, i32
  }
  func.func @transform_1(%arg0: i32) -> (i32, i32) {
    %c0_i32 = arith.constant 0 : i32
    %c0_i32_0 = arith.constant 0 : i32
    %c0_i32_1 = arith.constant 0 : i32
    return %c0_i32, %c0_i32_0 : i32, i32
  }
  func.func @transform_2(%arg0: i32) -> (i32, i32) {
    %c0_i32 = arith.constant 0 : i32
    %c0_i32_0 = arith.constant 0 : i32
    %c0_i32_1 = arith.constant 0 : i32
    return %c0_i32, %c0_i32_0 : i32, i32
  }
  func.func @transform_3(%arg0: i32) -> (i32, i32) {
    %c0_i32 = arith.constant 0 : i32
    %c0_i32_0 = arith.constant 0 : i32
    %c0_i32_1 = arith.constant 0 : i32
    return %c0_i32, %c0_i32_0 : i32, i32
  }
  func.func @transform_4(%arg0: i32) -> (i32, i32) {
    %c0_i32 = arith.constant 0 : i32
    %c0_i32_0 = arith.constant 0 : i32
    %c0_i32_1 = arith.constant 0 : i32
    return %c0_i32, %c0_i32_0 : i32, i32
  }
  func.func @transform_5(%arg0: i32) -> (i32, i32) {
    %c0_i32 = arith.constant 0 : i32
    %c0_i32_0 = arith.constant 0 : i32
    %c0_i32_1 = arith.constant 0 : i32
    return %c0_i32, %c0_i32_0 : i32, i32
  }
  func.func @transform_6(%arg0: i32) -> (i32, i32) {
    %c0_i32 = arith.constant 0 : i32
    %c0_i32_0 = arith.constant 0 : i32
    %c0_i32_1 = arith.constant 0 : i32
    return %c0_i32, %c0_i32_0 : i32, i32
  }
}

</mosaic_0001>

<llo_original>
// kernel: condition_encoder_forward.3
$region0: #{condition_encoder_forward.3}
  #allocation0 [shape = 'u32[]', space=smem, size = 0x4, offset = 0x4, fixed_abs, tag = 'smem constant byte address 0x4 - core index']
  #allocation1 [shape = 'u32[72,128]{1,0:T(1,128)}', space=vmem, size = 0x9000, scoped, tag = 'internal scratch']
  %s0 = inlined_call_operand.vmem [shape: f32[16,576], index: 0, kind: input, shape index: {}]
  %s1 = inlined_call_operand.vmem [shape: bf16[576,128], index: 1, kind: input, shape index: {}]
  %s2 = inlined_call_operand.vmem [shape: f32[32,128], index: 2, kind: input, shape index: {}]
  %s3 = inlined_call_operand.vmem [shape: f32[1,128], index: 3, kind: input, shape index: {}]
  %s4 = inlined_call_operand.vmem [shape: f32[2,32], index: 4, kind: input, shape index: {}]
  %s5 = inlined_call_operand.vmem [shape: f32[2,32], index: 5, kind: input, shape index: {}]
  %s6 = inlined_call_operand.vmem [shape: f32[16,32], index: 6, kind: output, shape index: {}]
  %s7 = sld [smem:[#allocation0]]
  $region34: #{condition_encoder_forward.3} parent=0
    _
  %s9 = ssub.s32 1, %s7
  %s10 = scalar_select 0, %s9, %s7
  // Predicated region
  $region2: #{condition_encoder_forward.3} parent=0 // pred_check
    _
  $region3: #{condition_encoder_forward.3} parent=0 // pred_check_branch
    %12 = sbr.rel (0) target = $region5
  $region4: #{condition_encoder_forward.3} parent=0 // pred_region
    _
  $region5: #{condition_encoder_forward.3} parent=0 // pred_fallthru
    _
  // Predicated region
  $region6: #{condition_encoder_forward.3} parent=0 // pred_check
    _
  $region7: #{condition_encoder_forward.3} parent=0 // pred_check_branch
    %14 = sbr.rel (0) target = $region9
  $region8: #{condition_encoder_forward.3} parent=0 // pred_region
    _
  $region9: #{condition_encoder_forward.3} parent=0 // pred_fallthru
    _
  // Predicated region
  $region10: #{condition_encoder_forward.3} parent=0 // pred_check
    _
  $region11: #{condition_encoder_forward.3} parent=0 // pred_check_branch
    %16 = sbr.rel (0) target = $region13
  $region12: #{condition_encoder_forward.3} parent=0 // pred_region
    _
  $region13: #{condition_encoder_forward.3} parent=0 // pred_fallthru
    _
  // Predicated region
  $region14: #{condition_encoder_forward.3} parent=0 // pred_check
    _
  $region15: #{condition_encoder_forward.3} parent=0 // pred_check_branch
    %18 = sbr.rel (0) target = $region17
  $region16: #{condition_encoder_forward.3} parent=0 // pred_region
    _
  $region17: #{condition_encoder_forward.3} parent=0 // pred_fallthru
    _
  // Predicated region
  $region18: #{condition_encoder_forward.3} parent=0 // pred_check
    _
  $region19: #{condition_encoder_forward.3} parent=0 // pred_check_branch
    %20 = sbr.rel (0) target = $region21
  $region20: #{condition_encoder_forward.3} parent=0 // pred_region
    _
  $region21: #{condition_encoder_forward.3} parent=0 // pred_fallthru
    _
  // Predicated region
  $region22: #{condition_encoder_forward.3} parent=0 // pred_check
    _
  $region23: #{condition_encoder_forward.3} parent=0 // pred_check_branch
    %22 = sbr.rel (0) target = $region25
  $region24: #{condition_encoder_forward.3} parent=0 // pred_region
    _
  $region25: #{condition_encoder_forward.3} parent=0 // pred_fallthru
    _
  %v24 = vld [vmem:[%s0] sm:$0xff]
  %v25 = vld [vmem:[%s0 + $0x8] sm:$0xff]
  %v26 = vld [vmem:[%s0 + $0x10] sm:$0xff]
  %v27 = vld [vmem:[%s0 + $0x18] sm:$0xff]
  %v28 = vld [vmem:[%s0 + $0x20] sm:$0xff]
  %v29 = vld [vmem:[%s0 + $0x28] sm:$0xff]
  %v30 = vld [vmem:[%s0 + $0x30] sm:$0xff]
  %v31 = vld [vmem:[%s0 + $0x38] sm:$0xff]
  %v32 = vld [vmem:[%s0 + $0x40] sm:$0xff]
  %v33 = vld [vmem:[%s0 + $0x48] sm:$0xff]
  %v34 = vpack.c.bf16 %v29, %v24
  %v35 = vpack.c.bf16 %v30, %v25
  %v36 = vpack.c.bf16 %v31, %v26
  %v37 = vpack.c.bf16 %v32, %v27
  %v38 = vpack.c.bf16 %v33, %v28
  %v39 = vld [vmem:[%s1] sm:$0xf]
  %v40 = vld [vmem:[%s1 + $0x4] sm:$0xf]
  %v41 = vld [vmem:[%s1 + $0x8] sm:$0xf]
  %v42 = vld [vmem:[%s1 + $0xc] sm:$0xf]
  %v43 = vld [vmem:[%s1 + $0x10] sm:$0xf]
  %v44 = vld [vmem:[%s1 + $0x14] sm:$0xf]
  %v45 = vld [vmem:[%s1 + $0x18] sm:$0xf]
  %v46 = vld [vmem:[%s1 + $0x1c] sm:$0xf]
  %v47 = vld [vmem:[%s1 + $0x20] sm:$0xf]
  %v48 = vld [vmem:[%s1 + $0x24] sm:$0xf]
  %v49 = vld [vmem:[%s1 + $0x28] sm:$0xf]
  %v50 = vld [vmem:[%s1 + $0x2c] sm:$0xf]
  %v51 = vld [vmem:[%s1 + $0x30] sm:$0xf]
  %v52 = vld [vmem:[%s1 + $0x34] sm:$0xf]
  %v53 = vld [vmem:[%s1 + $0x38] sm:$0xf]
  %v54 = vld [vmem:[%s1 + $0x3c] sm:$0xf]
  %v55 = vld [vmem:[%s1 + $0x40] sm:$0xf]
  %v56 = vld [vmem:[%s1 + $0x44] sm:$0xf]
  %v57 = vld [vmem:[%s1 + $0x48] sm:$0xf]
  %v58 = vld [vmem:[%s1 + $0x4c] sm:$0xf]
  %v59 = vld [vmem:[%s1 + $0x50] sm:$0xf]
  %v60 = vld [vmem:[%s1 + $0x54] sm:$0xf]
  %v61 = vld [vmem:[%s1 + $0x58] sm:$0xf]
  %v62 = vld [vmem:[%s1 + $0x5c] sm:$0xf]
  %v63 = vld [vmem:[%s1 + $0x60] sm:$0xf]
  %v64 = vld [vmem:[%s1 + $0x64] sm:$0xf]
  %v65 = vld [vmem:[%s1 + $0x68] sm:$0xf]
  %v66 = vld [vmem:[%s1 + $0x6c] sm:$0xf]
  %v67 = vld [vmem:[%s1 + $0x70] sm:$0xf]
  %v68 = vld [vmem:[%s1 + $0x74] sm:$0xf]
  %v69 = vld [vmem:[%s1 + $0x78] sm:$0xf]
  %v70 = vld [vmem:[%s1 + $0x7c] sm:$0xf]
  %v71 = vld [vmem:[%s1 + $0x80] sm:$0xf]
  %v72 = vld [vmem:[%s1 + $0x84] sm:$0xf]
  %v73 = vld [vmem:[%s1 + $0x88] sm:$0xf]
  %v74 = vld [vmem:[%s1 + $0x8c] sm:$0xf]
  %v75 = vld [vmem:[%s1 + $0x90] sm:$0xf]
  %v76 = vld [vmem:[%s1 + $0x94] sm:$0xf]
  %v77 = vld [vmem:[%s1 + $0x98] sm:$0xf]
  %v78 = vld [vmem:[%s1 + $0x9c] sm:$0xf]
  %v79 = vld [vmem:[%s1 + $0xa0] sm:$0xf]
  %v80 = vld [vmem:[%s1 + $0xa4] sm:$0xf]
  %v81 = vld [vmem:[%s1 + $0xa8] sm:$0xf]
  %v82 = vld [vmem:[%s1 + $0xac] sm:$0xf]
  %v83 = vld [vmem:[%s1 + $0xb0] sm:$0xf]
  %v84 = vld [vmem:[%s1 + $0xb4] sm:$0xf]
  %v85 = vld [vmem:[%s1 + $0xb8] sm:$0xf]
  %v86 = vld [vmem:[%s1 + $0xbc] sm:$0xf]
  %v87 = vld [vmem:[%s1 + $0xc0] sm:$0xf]
  %v88 = vld [vmem:[%s1 + $0xc4] sm:$0xf]
  %v89 = vld [vmem:[%s1 + $0xc8] sm:$0xf]
  %v90 = vld [vmem:[%s1 + $0xcc] sm:$0xf]
  %v91 = vld [vmem:[%s1 + $0xd0] sm:$0xf]
  %v92 = vld [vmem:[%s1 + $0xd4] sm:$0xf]
  %v93 = vld [vmem:[%s1 + $0xd8] sm:$0xf]
  %v94 = vld [vmem:[%s1 + $0xdc] sm:$0xf]
  %v95 = vld [vmem:[%s1 + $0xe0] sm:$0xf]
  %v96 = vld [vmem:[%s1 + $0xe4] sm:$0xf]
  %v97 = vld [vmem:[%s1 + $0xe8] sm:$0xf]
  %v98 = vld [vmem:[%s1 + $0xec] sm:$0xf]
  %v99 = vld [vmem:[%s1 + $0xf0] sm:$0xf]
  %v100 = vld [vmem:[%s1 + $0xf4] sm:$0xf]
  %v101 = vld [vmem:[%s1 + $0xf8] sm:$0xf]
  %v102 = vld [vmem:[%s1 + $0xfc] sm:$0xf]
  %v103 = vld [vmem:[%s1 + $0x100] sm:$0xf]
  %v104 = vld [vmem:[%s1 + $0x104] sm:$0xf]
  %v105 = vld [vmem:[%s1 + $0x108] sm:$0xf]
  %v106 = vld [vmem:[%s1 + $0x10c] sm:$0xf]
  %v107 = vld [vmem:[%s1 + $0x110] sm:$0xf]
  %v108 = vld [vmem:[%s1 + $0x114] sm:$0xf]
  %v109 = vld [vmem:[%s1 + $0x118] sm:$0xf]
  %v110 = vld [vmem:[%s1 + $0x11c] sm:$0xf]
  %v111 = vld [vmem:[%s3] sm:$0x1]
  %v113 = vperm.slane %v111, 0
  %v187 = vunpack.c.l.b16 %v39
  %v188 = vunpack.c.l.b16 %v40
  %v189 = vunpack.c.l.b16 %v41
  %v190 = vunpack.c.l.b16 %v42
  %v191 = vunpack.c.l.b16 %v43
  %v192 = vunpack.c.l.b16 %v44
  %v193 = vunpack.c.l.b16 %v45
  %v194 = vunpack.c.l.b16 %v46
  %v195 = vunpack.c.l.b16 %v47
  %v196 = vunpack.c.l.b16 %v48
  %v197 = vunpack.c.l.b16 %v49
  %v198 = vunpack.c.l.b16 %v50
  %v199 = vunpack.c.l.b16 %v51
  %v200 = vunpack.c.l.b16 %v52
  %v201 = vunpack.c.l.b16 %v53
  %v202 = vunpack.c.l.b16 %v54
  %v203 = vunpack.c.l.b16 %v55
  %v204 = vunpack.c.l.b16 %v56
  %v205 = vunpack.c.l.b16 %v57
  %v206 = vunpack.c.l.b16 %v58
  %v207 = vunpack.c.l.b16 %v59
  %v208 = vunpack.c.l.b16 %v60
  %v209 = vunpack.c.l.b16 %v61
  %v210 = vunpack.c.l.b16 %v62
  %v211 = vunpack.c.l.b16 %v63
  %v212 = vunpack.c.l.b16 %v64
  %v213 = vunpack.c.l.b16 %v65
  %v214 = vunpack.c.l.b16 %v66
  %v215 = vunpack.c.l.b16 %v67
  %v216 = vunpack.c.l.b16 %v68
  %v217 = vunpack.c.l.b16 %v69
  %v218 = vunpack.c.l.b16 %v70
  %v219 = vunpack.c.l.b16 %v71
  %v220 = vunpack.c.l.b16 %v72
  %v221 = vunpack.c.l.b16 %v73
  %v222 = vunpack.c.l.b16 %v74
  %v223 = vunpack.c.l.b16 %v75
  %v224 = vunpack.c.l.b16 %v76
  %v225 = vunpack.c.l.b16 %v77
  %v226 = vunpack.c.l.b16 %v78
  %v227 = vunpack.c.l.b16 %v79
  %v228 = vunpack.c.l.b16 %v80
  %v229 = vunpack.c.l.b16 %v81
  %v230 = vunpack.c.l.b16 %v82
  %v231 = vunpack.c.l.b16 %v83
  %v232 = vunpack.c.l.b16 %v84
  %v233 = vunpack.c.l.b16 %v85
  %v234 = vunpack.c.l.b16 %v86
  %v235 = vunpack.c.l.b16 %v87
  %v236 = vunpack.c.l.b16 %v88
  %v237 = vunpack.c.l.b16 %v89
  %v238 = vunpack.c.l.b16 %v90
  %v239 = vunpack.c.l.b16 %v91
  %v240 = vunpack.c.l.b16 %v92
  %v241 = vunpack.c.l.b16 %v93
  %v242 = vunpack.c.l.b16 %v94
  %v243 = vunpack.c.l.b16 %v95
  %v244 = vunpack.c.l.b16 %v96
  %v245 = vunpack.c.l.b16 %v97
  %v246 = vunpack.c.l.b16 %v98
  %v247 = vunpack.c.l.b16 %v99
  %v248 = vunpack.c.l.b16 %v100
  %v249 = vunpack.c.l.b16 %v101
  %v250 = vunpack.c.l.b16 %v102
  %v251 = vunpack.c.l.b16 %v103
  %v252 = vunpack.c.l.b16 %v104
  %v253 = vunpack.c.l.b16 %v105
  %v254 = vunpack.c.l.b16 %v106
  %v255 = vunpack.c.l.b16 %v107
  %v256 = vunpack.c.l.b16 %v108
  %v257 = vunpack.c.l.b16 %v109
  %v258 = vunpack.c.l.b16 %v110
  %v259 = vpack.c.b16 %v188, %v187
  %v260 = vpack.c.b16 %v190, %v189
  %v261 = vpack.c.b16 %v192, %v191
  %v262 = vpack.c.b16 %v194, %v193
  %v263 = vpack.c.b16 %v196, %v195
  %v264 = vpack.c.b16 %v198, %v197
  %v265 = vpack.c.b16 %v200, %v199
  %v266 = vpack.c.b16 %v202, %v201
  %v267 = vpack.c.b16 %v204, %v203
  %v268 = vpack.c.b16 %v206, %v205
  %v269 = vpack.c.b16 %v208, %v207
  %v270 = vpack.c.b16 %v210, %v209
  %v271 = vpack.c.b16 %v212, %v211
  %v272 = vpack.c.b16 %v214, %v213
  %v273 = vpack.c.b16 %v216, %v215
  %v274 = vpack.c.b16 %v218, %v217
  %v275 = vpack.c.b16 %v220, %v219
  %v276 = vpack.c.b16 %v222, %v221
  %v277 = vpack.c.b16 %v224, %v223
  %v278 = vpack.c.b16 %v226, %v225
  %v279 = vpack.c.b16 %v228, %v227
  %v280 = vpack.c.b16 %v230, %v229
  %v281 = vpack.c.b16 %v232, %v231
  %v282 = vpack.c.b16 %v234, %v233
  %v283 = vpack.c.b16 %v236, %v235
  %v284 = vpack.c.b16 %v238, %v237
  %v285 = vpack.c.b16 %v240, %v239
  %v286 = vpack.c.b16 %v242, %v241
  %v287 = vpack.c.b16 %v244, %v243
  %v288 = vpack.c.b16 %v246, %v245
  %v289 = vpack.c.b16 %v248, %v247
  %v290 = vpack.c.b16 %v250, %v249
  %v291 = vpack.c.b16 %v252, %v251
  %v292 = vpack.c.b16 %v254, %v253
  %v293 = vpack.c.b16 %v256, %v255
  %v294 = vpack.c.b16 %v258, %v257
  %vm331 = vcmask 523264
  %v333 = vsel %vm331, %v38, 0
  %335 = vmatpush.bf16.msra.mxu0 %v266
  %336 = vmatpush.bf16.msra.mxu0 %v265
  %337 = vmatpush.bf16.msra.mxu0 %v264
  %338 = vmatpush.bf16.msra.mxu0 %v263
  %339 = vmatpush.bf16.msra.mxu0 %v262
  %340 = vmatpush.bf16.msra.mxu0 %v261
  %341 = vmatpush.bf16.msra.mxu0 %v260
  %342 = vmatpush.bf16.msra.mxu0 %v259
  %343 = vmatmul.bf16.gmra.mxu0 %v34
  %v344 = vpop.f32.mrf.mxu0
  %v345 = vadd.f32 %v113, %v344
  %v346 = vpop.f32.mrf.mxu0
  %v347 = vadd.f32 %v113, %v346
  %348 = vdwg.mxu0
  %349 = vmatpush.bf16.msra.mxu0 %v274
  %350 = vmatpush.bf16.msra.mxu0 %v273
  %351 = vmatpush.bf16.msra.mxu0 %v272
  %352 = vmatpush.bf16.msra.mxu0 %v271
  %353 = vmatpush.bf16.msra.mxu0 %v270
  %354 = vmatpush.bf16.msra.mxu0 %v269
  %355 = vmatpush.bf16.msra.mxu0 %v268
  %356 = vmatpush.bf16.msra.mxu0 %v267
  %357 = vmatmul.bf16.gmra.mxu0 %v35
  %v358 = vpop.f32.mrf.mxu0
  %v359 = vadd.f32 %v345, %v358
  %v360 = vpop.f32.mrf.mxu0
  %v361 = vadd.f32 %v347, %v360
  %362 = vdwg.mxu0
  %363 = vmatpush.bf16.msra.mxu0 %v282
  %364 = vmatpush.bf16.msra.mxu0 %v281
  %365 = vmatpush.bf16.msra.mxu0 %v280
  %366 = vmatpush.bf16.msra.mxu0 %v279
  %367 = vmatpush.bf16.msra.mxu0 %v278
  %368 = vmatpush.bf16.msra.mxu0 %v277
  %369 = vmatpush.bf16.msra.mxu0 %v276
  %370 = vmatpush.bf16.msra.mxu0 %v275
  %371 = vmatmul.bf16.gmra.mxu0 %v36
  %v372 = vpop.f32.mrf.mxu0
  %v373 = vadd.f32 %v359, %v372
  %v374 = vpop.f32.mrf.mxu0
  %v375 = vadd.f32 %v361, %v374
  %376 = vdwg.mxu0
  %377 = vmatpush.bf16.msra.mxu0 %v290
  %378 = vmatpush.bf16.msra.mxu0 %v289
  %379 = vmatpush.bf16.msra.mxu0 %v288
  %380 = vmatpush.bf16.msra.mxu0 %v287
  %381 = vmatpush.bf16.msra.mxu0 %v286
  %382 = vmatpush.bf16.msra.mxu0 %v285
  %383 = vmatpush.bf16.msra.mxu0 %v284
  %384 = vmatpush.bf16.msra.mxu0 %v283
  %385 = vmatmul.bf16.gmra.mxu0 %v37
  %v386 = vpop.f32.mrf.mxu0
  %v387 = vadd.f32 %v373, %v386
  %v388 = vpop.f32.mrf.mxu0
  %v389 = vadd.f32 %v375, %v388
  %390 = vdwg.mxu0
  %391 = vmatpush.bf16.msra.mxu0 0
  %392 = vmatpush.bf16.msra.mxu0 0
  %393 = vmatpush.bf16.msra.mxu0 0
  %394 = vmatpush.bf16.msra.mxu0 0
  %395 = vmatpush.bf16.msra.mxu0 %v294
  %396 = vmatpush.bf16.msra.mxu0 %v293
  %397 = vmatpush.bf16.msra.mxu0 %v292
  %398 = vmatpush.bf16.msra.mxu0 %v291
  %399 = vmatmul.bf16.gmra.mxu0 %v333
  %v400 = vpop.f32.mrf.mxu0
  %v401 = vadd.f32 %v387, %v400
  %v402 = vpop.f32.mrf.mxu0
  %v403 = vadd.f32 %v389, %v402
  %404 = vdwg.mxu0
  %v405 = vld [vmem:[%s4] sm:$0x3]
  %v406 = vld [vmem:[%s5] sm:$0x3]
  %v407 = vld [vmem:[%s2] sm:$0xff]
  %v408 = vld [vmem:[%s2 + $0x8] sm:$0xff]
  %v409 = vld [vmem:[%s2 + $0x10] sm:$0xff]
  %v410 = vld [vmem:[%s2 + $0x18] sm:$0xff]
  %vm411 = vcmask 261120
  %v413 = vsel %vm411, %v405, 0
  %415 = vmatpush.msra.mxu0 0.0
  %416 = vmatpush.msra.mxu0 0.0
  %417 = vmatpush.msra.mxu0 0.0
  %418 = vmatpush.msra.mxu0 0.0
  %419 = vmatpush.msra.mxu0 0.0
  %420 = vmatpush.msra.mxu0 0.0
  %421 = vmatpush.msra.mxu0 0.0
  %422 = vmatpush.msra.mxu0 0.0
  %423 = vmatpush.msra.mxu0 0.0
  %424 = vmatpush.msra.mxu0 0.0
  %425 = vmatpush.msra.mxu0 0.0
  %426 = vmatpush.msra.mxu0 0.0
  %427 = vmatpush.msra.mxu0 %v410
  %428 = vmatpush.msra.mxu0 %v409
  %429 = vmatpush.msra.mxu0 %v408
  %430 = vmatpush.msra.mxu0 %v407
  %431 = vmatmul.f32.gmra.mxu0 %v413
  %v432 = vpop.f32.mrf.mxu0
  %v433 = vadd.f32 0.0, %v432
  %434 = vdwg.mxu0
  %v435 = vadd.f32 %v401, %v433
  %v436 = vxor.u32 %v435, 2147483648
  %v437 = vmul.f32 %v436, 1.442695
  %v438 = vpow.pop %v437
  %v439 = vadd.f32 %v438, 1.0
  %v440 = vrcp.pop %v439
  %v441 = vmul.f32 %v439, %v440
  %v442 = vsub.f32 1.0, %v441
  %v443 = vmul.f32 %v440, %v442
  %v444 = vadd.f32 %v440, %v443
  %vm445 = vweird.f32 %v439
  %vm446 = vweird.f32 %v440
  %vm447 = vmor %vm445, %vm446
  %v448 = vsel %vm447, %v440, %v444
  %v449 = vand.u32 2147483647, %v439
  %vm450 = vcmp.eq.f32.partialorder %v449, 8.507059e+37
  %v451 = vand.u32 %v439, 2147483648
  %v452 = vor.u32 1.1754944e-38, %v451
  %v453 = vsel %vm450, %v452, %v448
  %v454 = vmul.f32 1.0, %v453
  %v455 = vtanh.pop %v435
  %457 = vrot.lane.b32.xlu0 %v406, 32
  %v458 = vpop.permute.xlu0 %457
  %v460 = vmul.f32 %v454, %v458
  %462 = vrot.lane.b32.xlu0 %v455, 64
  %v463 = vpop.permute.xlu0 %462
  %v465 = vmul.f32 %v454, %v463
  %467 = vrot.lane.b32.xlu0 %v465, 32
  %v468 = vpop.permute.xlu0 %467
  %v470 = vadd.f32 %v460, %v468
  %v471 = vtanh.pop %v470
  %473 = vrot.lane.b32.xlu0 %v471, 64
  %v474 = vpop.permute.xlu0 %473
  %v476 = vmul.f32 %v454, %v474
  %478 = vrot.lane.b32.xlu0 %v476, 32
  %v479 = vpop.permute.xlu0 %478
  %v480 = vsel %vm411, %v479, 0
  %482 = vmatpush.msra.mxu0 0.0
  %483 = vmatpush.msra.mxu0 0.0
  %484 = vmatpush.msra.mxu0 0.0
  %485 = vmatpush.msra.mxu0 0.0
  %486 = vmatpush.msra.mxu0 0.0
  %487 = vmatpush.msra.mxu0 0.0
  %488 = vmatpush.msra.mxu0 0.0
  %489 = vmatpush.msra.mxu0 0.0
  %490 = vmatpush.msra.mxu0 0.0
  %491 = vmatpush.msra.mxu0 0.0
  %492 = vmatpush.msra.mxu0 0.0
  %493 = vmatpush.msra.mxu0 0.0
  %494 = vmatpush.msra.mxu0 %v410
  %495 = vmatpush.msra.mxu0 %v409
  %496 = vmatpush.msra.mxu0 %v408
  %497 = vmatpush.msra.mxu0 %v407
  %498 = vmatmul.f32.gmra.mxu0 %v480
  %v499 = vpop.f32.mrf.mxu0
  %v500 = vadd.f32 0.0, %v499
  %501 = vdwg.mxu0
  %v503 = vrot.slane %v500, 6
  %v505 = vadd.f32 %v401, %v503
  %v506 = vxor.u32 %v505, 2147483648
  %v507 = vmul.f32 %v506, 1.442695
  %v508 = vpow.pop %v507
  %v509 = vadd.f32 %v508, 1.0
  %v510 = vrcp.pop %v509
  %v511 = vmul.f32 %v509, %v510
  %v512 = vsub.f32 1.0, %v511
  %v513 = vmul.f32 %v510, %v512
  %v514 = vadd.f32 %v510, %v513
  %vm515 = vweird.f32 %v509
  %vm516 = vweird.f32 %v510
  %vm517 = vmor %vm515, %vm516
  %v518 = vsel %vm517, %v510, %v514
  %v519 = vand.u32 2147483647, %v509
  %vm520 = vcmp.eq.f32.partialorder %v519, 8.507059e+37
  %v521 = vand.u32 %v509, 2147483648
  %v522 = vor.u32 1.1754944e-38, %v521
  %v523 = vsel %vm520, %v522, %v518
  %v524 = vmul.f32 1.0, %v523
  %v525 = vtanh.pop %v505
  %v527 = vrot.slane %v470, 6
  %v529 = vmul.f32 %v524, %v527
  %531 = vrot.lane.b32.xlu0 %v525, 64
  %v532 = vpop.permute.xlu0 %531
  %v534 = vmul.f32 %v524, %v532
  %536 = vrot.lane.b32.xlu0 %v534, 32
  %v537 = vpop.permute.xlu0 %536
  %v539 = vadd.f32 %v529, %v537
  %v540 = vtanh.pop %v539
  %542 = vrot.lane.b32.xlu0 %v540, 64
  %v543 = vpop.permute.xlu0 %542
  %v545 = vmul.f32 %v524, %v543
  %v547 = vrot.slane %v545, 2
  %548 = vrot.lane.b32.xlu0 %v547, 32
  %v549 = vpop.permute.xlu0 %548
  %v550 = vsel %vm411, %v549, 0
  %552 = vmatpush.msra.mxu0 0.0
  %553 = vmatpush.msra.mxu0 0.0
  %554 = vmatpush.msra.mxu0 0.0
  %555 = vmatpush.msra.mxu0 0.0
  %556 = vmatpush.msra.mxu0 0.0
  %557 = vmatpush.msra.mxu0 0.0
  %558 = vmatpush.msra.mxu0 0.0
  %559 = vmatpush.msra.mxu0 0.0
  %560 = vmatpush.msra.mxu0 0.0
  %561 = vmatpush.msra.mxu0 0.0
  %562 = vmatpush.msra.mxu0 0.0
  %563 = vmatpush.msra.mxu0 0.0
  %564 = vmatpush.msra.mxu0 %v410
  %565 = vmatpush.msra.mxu0 %v409
  %566 = vmatpush.msra.mxu0 %v408
  %567 = vmatpush.msra.mxu0 %v407
  %568 = vmatmul.f32.gmra.mxu0 %v550
  %v569 = vpop.f32.mrf.mxu0
  %v570 = vadd.f32 0.0, %v569
  %571 = vdwg.mxu0
  %v573 = vrot.slane %v570, 4
  %v575 = vadd.f32 %v401, %v573
  %v576 = vxor.u32 %v575, 2147483648
  %v577 = vmul.f32 %v576, 1.442695
  %v578 = vpow.pop %v577
  %v579 = vadd.f32 %v578, 1.0
  %v580 = vrcp.pop %v579
  %v581 = vmul.f32 %v579, %v580
  %v582 = vsub.f32 1.0, %v581
  %v583 = vmul.f32 %v580, %v582
  %v584 = vadd.f32 %v580, %v583
  %vm585 = vweird.f32 %v579
  %vm586 = vweird.f32 %v580
  %vm587 = vmor %vm585, %vm586
  %v588 = vsel %vm587, %v580, %v584
  %v589 = vand.u32 2147483647, %v579
  %vm590 = vcmp.eq.f32.partialorder %v589, 8.507059e+37
  %v591 = vand.u32 %v579, 2147483648
  %v592 = vor.u32 1.1754944e-38, %v591
  %v593 = vsel %vm590, %v592, %v588
  %v594 = vmul.f32 1.0, %v593
  %v595 = vtanh.pop %v575
  %v597 = vrot.slane %v539, 6
  %v599 = vmul.f32 %v594, %v597
  %601 = vrot.lane.b32.xlu0 %v595, 64
  %v602 = vpop.permute.xlu0 %601
  %v604 = vmul.f32 %v594, %v602
  %606 = vrot.lane.b32.xlu0 %v604, 32
  %v607 = vpop.permute.xlu0 %606
  %v609 = vadd.f32 %v599, %v607
  %v610 = vtanh.pop %v609
  %612 = vrot.lane.b32.xlu0 %v610, 64
  %v613 = vpop.permute.xlu0 %612
  %v615 = vmul.f32 %v594, %v613
  %v617 = vrot.slane %v615, 4
  %618 = vrot.lane.b32.xlu0 %v617, 32
  %v619 = vpop.permute.xlu0 %618
  %v620 = vsel %vm411, %v619, 0
  %622 = vmatpush.msra.mxu0 0.0
  %623 = vmatpush.msra.mxu0 0.0
  %624 = vmatpush.msra.mxu0 0.0
  %625 = vmatpush.msra.mxu0 0.0
  %626 = vmatpush.msra.mxu0 0.0
  %627 = vmatpush.msra.mxu0 0.0
  %628 = vmatpush.msra.mxu0 0.0
  %629 = vmatpush.msra.mxu0 0.0
  %630 = vmatpush.msra.mxu0 0.0
  %631 = vmatpush.msra.mxu0 0.0
  %632 = vmatpush.msra.mxu0 0.0
  %633 = vmatpush.msra.mxu0 0.0
  %634 = vmatpush.msra.mxu0 %v410
  %635 = vmatpush.msra.mxu0 %v409
  %636 = vmatpush.msra.mxu0 %v408
  %637 = vmatpush.msra.mxu0 %v407
  %638 = vmatmul.f32.gmra.mxu0 %v620
  %v639 = vpop.f32.mrf.mxu0
  %v640 = vadd.f32 0.0, %v639
  %641 = vdwg.mxu0
  %v643 = vrot.slane %v640, 2
  %v645 = vadd.f32 %v401, %v643
  %v646 = vxor.u32 %v645, 2147483648
  %v647 = vmul.f32 %v646, 1.442695
  %v648 = vpow.pop %v647
  %v649 = vadd.f32 %v648, 1.0
  %v650 = vrcp.pop %v649
  %v651 = vmul.f32 %v649, %v650
  %v652 = vsub.f32 1.0, %v651
  %v653 = vmul.f32 %v650, %v652
  %v654 = vadd.f32 %v650, %v653
  %vm655 = vweird.f32 %v649
  %vm656 = vweird.f32 %v650
  %vm657 = vmor %vm655, %vm656
  %v658 = vsel %vm657, %v650, %v654
  %v659 = vand.u32 2147483647, %v649
  %vm660 = vcmp.eq.f32.partialorder %v659, 8.507059e+37
  %v661 = vand.u32 %v649, 2147483648
  %v662 = vor.u32 1.1754944e-38, %v661
  %v663 = vsel %vm660, %v662, %v658
  %v664 = vmul.f32 1.0, %v663
  %v665 = vtanh.pop %v645
  %v667 = vrot.slane %v609, 6
  %v669 = vmul.f32 %v664, %v667
  %671 = vrot.lane.b32.xlu0 %v665, 64
  %v672 = vpop.permute.xlu0 %671
  %v674 = vmul.f32 %v664, %v672
  %676 = vrot.lane.b32.xlu0 %v674, 32
  %v677 = vpop.permute.xlu0 %676
  %v679 = vadd.f32 %v669, %v677
  %v680 = vtanh.pop %v679
  %682 = vrot.lane.b32.xlu0 %v680, 64
  %v683 = vpop.permute.xlu0 %682
  %v685 = vmul.f32 %v664, %v683
  %v687 = vrot.slane %v685, 6
  %688 = vrot.lane.b32.xlu0 %v687, 32
  %v689 = vpop.permute.xlu0 %688
  %v690 = vsel %vm411, %v689, 0
  %692 = vmatpush.msra.mxu0 0.0
  %693 = vmatpush.msra.mxu0 0.0
  %694 = vmatpush.msra.mxu0 0.0
  %695 = vmatpush.msra.mxu0 0.0
  %696 = vmatpush.msra.mxu0 0.0
  %697 = vmatpush.msra.mxu0 0.0
  %698 = vmatpush.msra.mxu0 0.0
  %699 = vmatpush.msra.mxu0 0.0
  %700 = vmatpush.msra.mxu0 0.0
  %701 = vmatpush.msra.mxu0 0.0
  %702 = vmatpush.msra.mxu0 0.0
  %703 = vmatpush.msra.mxu0 0.0
  %704 = vmatpush.msra.mxu0 %v410
  %705 = vmatpush.msra.mxu0 %v409
  %706 = vmatpush.msra.mxu0 %v408
  %707 = vmatpush.msra.mxu0 %v407
  %708 = vmatmul.f32.gmra.mxu0 %v690
  %v709 = vpop.f32.mrf.mxu0
  %v710 = vadd.f32 0.0, %v709
  %711 = vdwg.mxu0
  %v712 = vadd.f32 %v403, %v710
  %v713 = vxor.u32 %v712, 2147483648
  %v714 = vmul.f32 %v713, 1.442695
  %v715 = vpow.pop %v714
  %v716 = vadd.f32 %v715, 1.0
  %v717 = vrcp.pop %v716
  %v718 = vmul.f32 %v716, %v717
  %v719 = vsub.f32 1.0, %v718
  %v720 = vmul.f32 %v717, %v719
  %v721 = vadd.f32 %v717, %v720
  %vm722 = vweird.f32 %v716
  %vm723 = vweird.f32 %v717
  %vm724 = vmor %vm722, %vm723
  %v725 = vsel %vm724, %v717, %v721
  %v726 = vand.u32 2147483647, %v716
  %vm727 = vcmp.eq.f32.partialorder %v726, 8.507059e+37
  %v728 = vand.u32 %v716, 2147483648
  %v729 = vor.u32 1.1754944e-38, %v728
  %v730 = vsel %vm727, %v729, %v725
  %v731 = vmul.f32 1.0, %v730
  %v732 = vtanh.pop %v712
  %v734 = vrot.slane %v679, 6
  %v736 = vmul.f32 %v731, %v734
  %738 = vrot.lane.b32.xlu0 %v732, 64
  %v739 = vpop.permute.xlu0 %738
  %v741 = vmul.f32 %v731, %v739
  %743 = vrot.lane.b32.xlu0 %v741, 32
  %v744 = vpop.permute.xlu0 %743
  %v746 = vadd.f32 %v736, %v744
  %v747 = vtanh.pop %v746
  %749 = vrot.lane.b32.xlu0 %v747, 64
  %v750 = vpop.permute.xlu0 %749
  %v752 = vmul.f32 %v731, %v750
  %754 = vrot.lane.b32.xlu0 %v752, 32
  %v755 = vpop.permute.xlu0 %754
  %v756 = vsel %vm411, %v755, 0
  %758 = vmatpush.msra.mxu0 0.0
  %759 = vmatpush.msra.mxu0 0.0
  %760 = vmatpush.msra.mxu0 0.0
  %761 = vmatpush.msra.mxu0 0.0
  %762 = vmatpush.msra.mxu0 0.0
  %763 = vmatpush.msra.mxu0 0.0
  %764 = vmatpush.msra.mxu0 0.0
  %765 = vmatpush.msra.mxu0 0.0
  %766 = vmatpush.msra.mxu0 0.0
  %767 = vmatpush.msra.mxu0 0.0
  %768 = vmatpush.msra.mxu0 0.0
  %769 = vmatpush.msra.mxu0 0.0
  %770 = vmatpush.msra.mxu0 %v410
  %771 = vmatpush.msra.mxu0 %v409
  %772 = vmatpush.msra.mxu0 %v408
  %773 = vmatpush.msra.mxu0 %v407
  %774 = vmatmul.f32.gmra.mxu0 %v756
  %v775 = vpop.f32.mrf.mxu0
  %v776 = vadd.f32 0.0, %v775
  %777 = vdwg.mxu0
  %v779 = vrot.slane %v776, 6
  %v781 = vadd.f32 %v403, %v779
  %v782 = vxor.u32 %v781, 2147483648
  %v783 = vmul.f32 %v782, 1.442695
  %v784 = vpow.pop %v783
  %v785 = vadd.f32 %v784, 1.0
  %v786 = vrcp.pop %v785
  %v787 = vmul.f32 %v785, %v786
  %v788 = vsub.f32 1.0, %v787
  %v789 = vmul.f32 %v786, %v788
  %v790 = vadd.f32 %v786, %v789
  %vm791 = vweird.f32 %v785
  %vm792 = vweird.f32 %v786
  %vm793 = vmor %vm791, %vm792
  %v794 = vsel %vm793, %v786, %v790
  %v795 = vand.u32 2147483647, %v785
  %vm796 = vcmp.eq.f32.partialorder %v795, 8.507059e+37
  %v797 = vand.u32 %v785, 2147483648
  %v798 = vor.u32 1.1754944e-38, %v797
  %v799 = vsel %vm796, %v798, %v794
  %v800 = vmul.f32 1.0, %v799
  %v801 = vtanh.pop %v781
  %v803 = vrot.slane %v746, 6
  %v805 = vmul.f32 %v800, %v803
  %807 = vrot.lane.b32.xlu0 %v801, 64
  %v808 = vpop.permute.xlu0 %807
  %v810 = vmul.f32 %v800, %v808
  %812 = vrot.lane.b32.xlu0 %v810, 32
  %v813 = vpop.permute.xlu0 %812
  %v815 = vadd.f32 %v805, %v813
  %v816 = vtanh.pop %v815
  %818 = vrot.lane.b32.xlu0 %v816, 64
  %v819 = vpop.permute.xlu0 %818
  %v821 = vmul.f32 %v800, %v819
  %v823 = vrot.slane %v821, 2
  %824 = vrot.lane.b32.xlu0 %v823, 32
  %v825 = vpop.permute.xlu0 %824
  %v826 = vsel %vm411, %v825, 0
  %828 = vmatpush.msra.mxu0 0.0
  %829 = vmatpush.msra.mxu0 0.0
  %830 = vmatpush.msra.mxu0 0.0
  %831 = vmatpush.msra.mxu0 0.0
  %832 = vmatpush.msra.mxu0 0.0
  %833 = vmatpush.msra.mxu0 0.0
  %834 = vmatpush.msra.mxu0 0.0
  %835 = vmatpush.msra.mxu0 0.0
  %836 = vmatpush.msra.mxu0 0.0
  %837 = vmatpush.msra.mxu0 0.0
  %838 = vmatpush.msra.mxu0 0.0
  %839 = vmatpush.msra.mxu0 0.0
  %840 = vmatpush.msra.mxu0 %v410
  %841 = vmatpush.msra.mxu0 %v409
  %842 = vmatpush.msra.mxu0 %v408
  %843 = vmatpush.msra.mxu0 %v407
  %844 = vmatmul.f32.gmra.mxu0 %v826
  %v845 = vpop.f32.mrf.mxu0
  %v846 = vadd.f32 0.0, %v845
  %847 = vdwg.mxu0
  %v849 = vrot.slane %v846, 4
  %v851 = vadd.f32 %v403, %v849
  %v852 = vxor.u32 %v851, 2147483648
  %v853 = vmul.f32 %v852, 1.442695
  %v854 = vpow.pop %v853
  %v855 = vadd.f32 %v854, 1.0
  %v856 = vrcp.pop %v855
  %v857 = vmul.f32 %v855, %v856
  %v858 = vsub.f32 1.0, %v857
  %v859 = vmul.f32 %v856, %v858
  %v860 = vadd.f32 %v856, %v859
  %vm861 = vweird.f32 %v855
  %vm862 = vweird.f32 %v856
  %vm863 = vmor %vm861, %vm862
  %v864 = vsel %vm863, %v856, %v860
  %v865 = vand.u32 2147483647, %v855
  %vm866 = vcmp.eq.f32.partialorder %v865, 8.507059e+37
  %v867 = vand.u32 %v855, 2147483648
  %v868 = vor.u32 1.1754944e-38, %v867
  %v869 = vsel %vm866, %v868, %v864
  %v870 = vmul.f32 1.0, %v869
  %v871 = vtanh.pop %v851
  %v873 = vrot.slane %v815, 6
  %v875 = vmul.f32 %v870, %v873
  %877 = vrot.lane.b32.xlu0 %v871, 64
  %v878 = vpop.permute.xlu0 %877
  %v880 = vmul.f32 %v870, %v878
  %882 = vrot.lane.b32.xlu0 %v880, 32
  %v883 = vpop.permute.xlu0 %882
  %v885 = vadd.f32 %v875, %v883
  %v886 = vtanh.pop %v885
  %888 = vrot.lane.b32.xlu0 %v886, 64
  %v889 = vpop.permute.xlu0 %888
  %v891 = vmul.f32 %v870, %v889
  %v893 = vrot.slane %v891, 4
  %894 = vrot.lane.b32.xlu0 %v893, 32
  %v895 = vpop.permute.xlu0 %894
  %v896 = vsel %vm411, %v895, 0
  %898 = vmatpush.msra.mxu0 0.0
  %899 = vmatpush.msra.mxu0 0.0
  %900 = vmatpush.msra.mxu0 0.0
  %901 = vmatpush.msra.mxu0 0.0
  %902 = vmatpush.msra.mxu0 0.0
  %903 = vmatpush.msra.mxu0 0.0
  %904 = vmatpush.msra.mxu0 0.0
  %905 = vmatpush.msra.mxu0 0.0
  %906 = vmatpush.msra.mxu0 0.0
  %907 = vmatpush.msra.mxu0 0.0
  %908 = vmatpush.msra.mxu0 0.0
  %909 = vmatpush.msra.mxu0 0.0
  %910 = vmatpush.msra.mxu0 %v410
  %911 = vmatpush.msra.mxu0 %v409
  %912 = vmatpush.msra.mxu0 %v408
  %913 = vmatpush.msra.mxu0 %v407
  %914 = vmatmul.f32.gmra.mxu0 %v896
  %v915 = vpop.f32.mrf.mxu0
  %v916 = vadd.f32 0.0, %v915
  %917 = vdwg.mxu0
  %v919 = vrot.slane %v916, 2
  %v921 = vadd.f32 %v403, %v919
  %v922 = vxor.u32 %v921, 2147483648
  %v923 = vmul.f32 %v922, 1.442695
  %v924 = vpow.pop %v923
  %v925 = vadd.f32 %v924, 1.0
  %v926 = vrcp.pop %v925
  %v927 = vmul.f32 %v925, %v926
  %v928 = vsub.f32 1.0, %v927
  %v929 = vmul.f32 %v926, %v928
  %v930 = vadd.f32 %v926, %v929
  %vm931 = vweird.f32 %v925
  %vm932 = vweird.f32 %v926
  %vm933 = vmor %vm931, %vm932
  %v934 = vsel %vm933, %v926, %v930
  %v935 = vand.u32 2147483647, %v925
  %vm936 = vcmp.eq.f32.partialorder %v935, 8.507059e+37
  %v937 = vand.u32 %v925, 2147483648
  %v938 = vor.u32 1.1754944e-38, %v937
  %v939 = vsel %vm936, %v938, %v934
  %v940 = vmul.f32 1.0, %v939
  %v941 = vtanh.pop %v921
  %v943 = vrot.slane %v885, 6
  %v945 = vmul.f32 %v940, %v943
  %947 = vrot.lane.b32.xlu0 %v941, 64
  %v948 = vpop.permute.xlu0 %947
  %v950 = vmul.f32 %v940, %v948
  %952 = vrot.lane.b32.xlu0 %v950, 32
  %v953 = vpop.permute.xlu0 %952
  %v955 = vadd.f32 %v945, %v953
  %v956 = vtanh.pop %v955
  %958 = vrot.lane.b32.xlu0 %v956, 64
  %v959 = vpop.permute.xlu0 %958
  %v961 = vmul.f32 %v940, %v959
  %vm962 = vcmask 1041408
  %v963 = vsel %vm962, %v476, %v545
  %vm964 = vcmask 1043456
  %v965 = vsel %vm964, %v963, %v615
  %vm966 = vcmask 1045504
  %v967 = vsel %vm966, %v965, %v685
  %v968 = vsel %vm962, %v752, %v821
  %v969 = vsel %vm964, %v968, %v891
  %v970 = vsel %vm966, %v969, %v961
  %973 = vrot.lane.b32.xlu0 %v967, 32
  %v974 = vpop.permute.xlu0 %973
  %975 = vrot.lane.b32.xlu0 %v970, 32
  %v976 = vpop.permute.xlu0 %975
  %979 = vst.msk [vmem:[%s6] sm:$0xff] %vm411, %v974
  %980 = vst.msk [vmem:[%s6 + $0x8] sm:$0xff] %vm411, %v976
  // Predicated region
  $region26: #{condition_encoder_forward.3} parent=0 // pred_check
    _
  $region27: #{condition_encoder_forward.3} parent=0 // pred_check_branch
    %982 = sbr.rel (0) target = $region29
  $region28: #{condition_encoder_forward.3} parent=0 // pred_region
    _
  $region29: #{condition_encoder_forward.3} parent=0 // pred_fallthru
    _
  // Predicated region
  $region30: #{condition_encoder_forward.3} parent=0 // pred_check
    _
  $region31: #{condition_encoder_forward.3} parent=0 // pred_check_branch
    %984 = sbr.rel (0) target = $region33
  $region32: #{condition_encoder_forward.3} parent=0 // pred_region
    _
  $region33: #{condition_encoder_forward.3} parent=0 // pred_fallthru
    _

// kernel: condition_encoder_forward.2
$region0: #{condition_encoder_forward.2}
  #allocation0 [shape = 'u32[]', space=smem, size = 0x4, offset = 0x4, fixed_abs, tag = 'smem constant byte address 0x4 - core index']
  #allocation1 [shape = 'u32[72,128]{1,0:T(1,128)}', space=vmem, size = 0x9000, scoped, tag = 'internal scratch']
  %s0 = inlined_call_operand.vmem [shape: bf16[64,64], index: 0, kind: input, shape index: {}]
  %s1 = inlined_call_operand.vmem [shape: f32[16,256], index: 1, kind: input, shape index: {}]
  %s2 = inlined_call_operand.vmem [shape: bf16[64,256], index: 2, kind: input, shape index: {}]
  %s3 = inlined_call_operand.vmem [shape: f32[1,256], index: 3, kind: input, shape index: {}]
  %s4 = inlined_call_operand.vmem [shape: bf16[256,128], index: 4, kind: input, shape index: {}]
  %s5 = inlined_call_operand.vmem [shape: f32[1,128], index: 5, kind: input, shape index: {}]
  %s6 = inlined_call_operand.vmem [shape: bf16[128,512], index: 6, kind: input, shape index: {}]
  %s7 = inlined_call_operand.vmem [shape: f32[1,512], index: 7, kind: input, shape index: {}]
  %s8 = inlined_call_operand.hbm [shape: bf16[512,1024], index: 8, kind: input, shape index: {}]
  %s9 = inlined_call_operand.vmem [shape: f32[1,1024], index: 9, kind: input, shape index: {}]
  %s10 = inlined_call_operand.vmem [shape: bf16[1024,768], index: 10, kind: input, shape index: {}]
  %s11 = inlined_call_operand.vmem [shape: f32[1,768], index: 11, kind: input, shape index: {}]
  %s12 = inlined_call_operand.vmem [shape: f32[16,512], index: 12, kind: output, shape index: {0}]
  %s13 = inlined_call_operand.vmem [shape: f32[16,768], index: 13, kind: output, shape index: {1}]
  %s14 = inlined_call_operand.vmem [shape: f32[2,8,128], index: 14, kind: output, shape index: {2}]
  %15 = xla_tuple %s12, %s13, %s14
  %s16 = sld [smem:[#allocation0]]
  $region101: #{condition_encoder_forward.2} parent=0
    _
  %s18 = ssub.s32 1, %s16
  %s19 = scalar_select 0, %s18, %s16
  $region1: #{condition_encoder_forward.2} parent=0
    #allocation2 [shape = 'u8[1048576]{0}', space=vmem, size = 0x100000, scoped, tag = 'input window, operand 8, single buffered']
    #allocation3 [shape = 's32[2]{0}', space=sflag, size = 0x8, scoped, tag = 'scoped memory for condition_encoder_forward.2']
    %20 = vsyncpa [#allocation3], 0
    loop: start=0, step=1, limit=4
    $region2: #{condition_encoder_forward.2} parent=1 // loop_pre_header
      _
    $region3: #{condition_encoder_forward.2} parent=1 // loop_header
      %s22 = sphi 0, %s26
      %p23 = scmp.ge.s32.totalorder %s22, 4
      %s32 = sphi 0, %s34
      %s35 = sphi 0, %s32
      %s36 = sphi 0, %s35
      %s52 = sphi 0, %s36
      %s58 = sphi 0, %s60
      %s61 = sphi 0, %s58
      %s62 = sphi 0, %s61
      %s78 = sphi 0, %s62
      %s82 = sphi 0, %s82
      %s84 = sphi 0, %s82
      %s85 = sphi 0, %s84
      %s99 = sphi 0, %s85
      %s103 = sphi 0, %s103
      %s105 = sphi 0, %s103
      %s106 = sphi 0, %s105
      %s120 = sphi 0, %s106
      %s124 = sphi 0, %s124
      %s126 = sphi 0, %s124
      %s127 = sphi 0, %s126
      %s141 = sphi 0, %s127
      %s145 = sphi 0, %s145
      %s147 = sphi 0, %s145
      %s148 = sphi 0, %s147
      %s162 = sphi 0, %s148
      %s166 = sphi 0, %s166
      %s168 = sphi 0, %s166
      %s169 = sphi 0, %s168
      %s183 = sphi 0, %s169
      %s187 = sphi 0, %s187
      %s189 = sphi 0, %s187
      %s190 = sphi 0, %s189
      %s204 = sphi 0, %s190
      %s208 = sphi 0, %s208
      %s210 = sphi 0, %s208
      %s211 = sphi 0, %s210
      %s225 = sphi 0, %s211
      %s229 = sphi 0, %s229
      %s231 = sphi 0, %s229
      %s232 = sphi 0, %s231
      %s246 = sphi 0, %s232
      %s250 = sphi 0, %s250
      %s252 = sphi 0, %s250
      %s253 = sphi 0, %s252
      %s267 = sphi 0, %s253
      %s271 = sphi 0, %s271
      %s273 = sphi 0, %s271
      %s274 = sphi 0, %s273
      %s288 = sphi 0, %s274
      %s294 = sphi 0, %s296
      %s297 = sphi 0, %s294
      %s298 = sphi 0, %s297
      %s314 = sphi 0, %s298
      %s320 = sphi 0, %s322
      %s323 = sphi 0, %s320
      %s324 = sphi 0, %s323
      %s340 = sphi 0, %s324
      %s346 = sphi 0, %s348
      %s349 = sphi 0, %s346
      %s350 = sphi 0, %s349
      %s366 = sphi 0, %s350
    $region4: #{condition_encoder_forward.2} parent=1 // loop_header_branch
      %25 = sbr.rel (%p23) target = $region8
    $region5: #{condition_encoder_forward.2} parent=1 // loop_body
      %s27 = ssub.s32 %s22, 1
      %s28 = ssub.s32 %s22, 2
      %s29 = sadd.s32 %s22, 1
      %s30 = ssub.s32 %s22, %s29
      %p31 = scmp.eq.s32.totalorder %s30, 0
      %s33 = sadd.s32 %s32, 1
      %s34 = scalar_select %p31, %s32, %s33
      %p37 = pneg %p31
      %p38 = scmp.eq.s32.totalorder %s22, 1
      %p39 = por %p37, %p38
      %p40 = scmp.ne.s32.totalorder %s32, %s35
      %p41 = scmp.eq.s32.totalorder %s22, 0
      %p42 = por %p40, %p41
      %p43 = scmp.ne.s32.totalorder %s32, %s35
      %p44 = scmp.eq.s32.totalorder %s27, 1
      %p45 = por %p43, %p44
      %p46 = scmp.ne.s32.totalorder %s35, %s36
      %p47 = scmp.eq.s32.totalorder %s27, 0
      %p48 = por %p46, %p47
      %p49 = scmp.ne.s32.totalorder %s35, %s36
      %p50 = scmp.eq.s32.totalorder %s28, 1
      %p51 = por %p49, %p50
      %p53 = scmp.ne.s32.totalorder %s36, %s52
      %p54 = scmp.eq.s32.totalorder %s28, 0
      %p55 = por %p53, %p54
      %s56 = ssub.s32 %s22, %s29
      %p57 = scmp.eq.s32.totalorder %s56, 0
      %s59 = sadd.s32 %s58, 1
      %s60 = scalar_select %p57, %s58, %s59
      %p63 = pneg %p57
      %p64 = scmp.eq.s32.totalorder %s22, 1
      %p65 = por %p63, %p64
      %p66 = scmp.ne.s32.totalorder %s58, %s61
      %p67 = scmp.eq.s32.totalorder %s22, 0
      %p68 = por %p66, %p67
      %p69 = scmp.ne.s32.totalorder %s58, %s61
      %p70 = scmp.eq.s32.totalorder %s27, 1
      %p71 = por %p69, %p70
      %p72 = scmp.ne.s32.totalorder %s61, %s62
      %p73 = scmp.eq.s32.totalorder %s27, 0
      %p74 = por %p72, %p73
      %p75 = scmp.ne.s32.totalorder %s61, %s62
      %p76 = scmp.eq.s32.totalorder %s28, 1
      %p77 = por %p75, %p76
      %p79 = scmp.ne.s32.totalorder %s62, %s78
      %p80 = scmp.eq.s32.totalorder %s28, 0
      %p81 = por %p79, %p80
      %s83 = sadd.s32 %s82, 1
      %p86 = scmp.eq.s32.totalorder %s22, 1
      %p87 = scmp.ne.s32.totalorder %s82, %s84
      %p88 = scmp.eq.s32.totalorder %s22, 0
      %p89 = por %p87, %p88
      %p90 = scmp.ne.s32.totalorder %s82, %s84
      %p91 = scmp.eq.s32.totalorder %s27, 1
      %p92 = por %p90, %p91
      %p93 = scmp.ne.s32.totalorder %s84, %s85
      %p94 = scmp.eq.s32.totalorder %s27, 0
      %p95 = por %p93, %p94
      %p96 = scmp.ne.s32.totalorder %s84, %s85
      %p97 = scmp.eq.s32.totalorder %s28, 1
      %p98 = por %p96, %p97
      %p100 = scmp.ne.s32.totalorder %s85, %s99
      %p101 = scmp.eq.s32.totalorder %s28, 0
      %p102 = por %p100, %p101
      %s104 = sadd.s32 %s103, 1
      %p107 = scmp.eq.s32.totalorder %s22, 1
      %p108 = scmp.ne.s32.totalorder %s103, %s105
      %p109 = scmp.eq.s32.totalorder %s22, 0
      %p110 = por %p108, %p109
      %p111 = scmp.ne.s32.totalorder %s103, %s105
      %p112 = scmp.eq.s32.totalorder %s27, 1
      %p113 = por %p111, %p112
      %p114 = scmp.ne.s32.totalorder %s105, %s106
      %p115 = scmp.eq.s32.totalorder %s27, 0
      %p116 = por %p114, %p115
      %p117 = scmp.ne.s32.totalorder %s105, %s106
      %p118 = scmp.eq.s32.totalorder %s28, 1
      %p119 = por %p117, %p118
      %p121 = scmp.ne.s32.totalorder %s106, %s120
      %p122 = scmp.eq.s32.totalorder %s28, 0
      %p123 = por %p121, %p122
      %s125 = sadd.s32 %s124, 1
      %p128 = scmp.eq.s32.totalorder %s22, 1
      %p129 = scmp.ne.s32.totalorder %s124, %s126
      %p130 = scmp.eq.s32.totalorder %s22, 0
      %p131 = por %p129, %p130
      %p132 = scmp.ne.s32.totalorder %s124, %s126
      %p133 = scmp.eq.s32.totalorder %s27, 1
      %p134 = por %p132, %p133
      %p135 = scmp.ne.s32.totalorder %s126, %s127
      %p136 = scmp.eq.s32.totalorder %s27, 0
      %p137 = por %p135, %p136
      %p138 = scmp.ne.s32.totalorder %s126, %s127
      %p139 = scmp.eq.s32.totalorder %s28, 1
      %p140 = por %p138, %p139
      %p142 = scmp.ne.s32.totalorder %s127, %s141
      %p143 = scmp.eq.s32.totalorder %s28, 0
      %p144 = por %p142, %p143
      %s146 = sadd.s32 %s145, 1
      %p149 = scmp.eq.s32.totalorder %s22, 1
      %p150 = scmp.ne.s32.totalorder %s145, %s147
      %p151 = scmp.eq.s32.totalorder %s22, 0
      %p152 = por %p150, %p151
      %p153 = scmp.ne.s32.totalorder %s145, %s147
      %p154 = scmp.eq.s32.totalorder %s27, 1
      %p155 = por %p153, %p154
      %p156 = scmp.ne.s32.totalorder %s147, %s148
      %p157 = scmp.eq.s32.totalorder %s27, 0
      %p158 = por %p156, %p157
      %p159 = scmp.ne.s32.totalorder %s147, %s148
      %p160 = scmp.eq.s32.totalorder %s28, 1
      %p161 = por %p159, %p160
      %p163 = scmp.ne.s32.totalorder %s148, %s162
      %p164 = scmp.eq.s32.totalorder %s28, 0
      %p165 = por %p163, %p164
      %s167 = sadd.s32 %s166, 1
      %p170 = scmp.eq.s32.totalorder %s22, 1
      %p171 = scmp.ne.s32.totalorder %s166, %s168
      %p172 = scmp.eq.s32.totalorder %s22, 0
      %p173 = por %p171, %p172
      %p174 = scmp.ne.s32.totalorder %s166, %s168
      %p175 = scmp.eq.s32.totalorder %s27, 1
      %p176 = por %p174, %p175
      %p177 = scmp.ne.s32.totalorder %s168, %s169
      %p178 = scmp.eq.s32.totalorder %s27, 0
      %p179 = por %p177, %p178
      %p180 = scmp.ne.s32.totalorder %s168, %s169
      %p181 = scmp.eq.s32.totalorder %s28, 1
      %p182 = por %p180, %p181
      %p184 = scmp.ne.s32.totalorder %s169, %s183
      %p185 = scmp.eq.s32.totalorder %s28, 0
      %p186 = por %p184, %p185
      %s188 = sadd.s32 %s187, 1
      %p191 = scmp.eq.s32.totalorder %s22, 1
      %p192 = scmp.ne.s32.totalorder %s187, %s189
      %p193 = scmp.eq.s32.totalorder %s22, 0
      %p194 = por %p192, %p193
      %p195 = scmp.ne.s32.totalorder %s187, %s189
      %p196 = scmp.eq.s32.totalorder %s27, 1
      %p197 = por %p195, %p196
      %p198 = scmp.ne.s32.totalorder %s189, %s190
      %p199 = scmp.eq.s32.totalorder %s27, 0
      %p200 = por %p198, %p199
      %p201 = scmp.ne.s32.totalorder %s189, %s190
      %p202 = scmp.eq.s32.totalorder %s28, 1
      %p203 = por %p201, %p202
      %p205 = scmp.ne.s32.totalorder %s190, %s204
      %p206 = scmp.eq.s32.totalorder %s28, 0
      %p207 = por %p205, %p206
      %s209 = sadd.s32 %s208, 1
      %p212 = scmp.eq.s32.totalorder %s22, 1
      %p213 = scmp.ne.s32.totalorder %s208, %s210
      %p214 = scmp.eq.s32.totalorder %s22, 0
      %p215 = por %p213, %p214
      %p216 = scmp.ne.s32.totalorder %s208, %s210
      %p217 = scmp.eq.s32.totalorder %s27, 1
      %p218 = por %p216, %p217
      %p219 = scmp.ne.s32.totalorder %s210, %s211
      %p220 = scmp.eq.s32.totalorder %s27, 0
      %p221 = por %p219, %p220
      %p222 = scmp.ne.s32.totalorder %s210, %s211
      %p223 = scmp.eq.s32.totalorder %s28, 1
      %p224 = por %p222, %p223
      %p226 = scmp.ne.s32.totalorder %s211, %s225
      %p227 = scmp.eq.s32.totalorder %s28, 0
      %p228 = por %p226, %p227
      %s230 = sadd.s32 %s229, 1
      %p233 = scmp.eq.s32.totalorder %s22, 1
      %p234 = scmp.ne.s32.totalorder %s229, %s231
      %p235 = scmp.eq.s32.totalorder %s22, 0
      %p236 = por %p234, %p235
      %p237 = scmp.ne.s32.totalorder %s229, %s231
      %p238 = scmp.eq.s32.totalorder %s27, 1
      %p239 = por %p237, %p238
      %p240 = scmp.ne.s32.totalorder %s231, %s232
      %p241 = scmp.eq.s32.totalorder %s27, 0
      %p242 = por %p240, %p241
      %p243 = scmp.ne.s32.totalorder %s231, %s232
      %p244 = scmp.eq.s32.totalorder %s28, 1
      %p245 = por %p243, %p244
      %p247 = scmp.ne.s32.totalorder %s232, %s246
      %p248 = scmp.eq.s32.totalorder %s28, 0
      %p249 = por %p247, %p248
      %s251 = sadd.s32 %s250, 1
      %p254 = scmp.eq.s32.totalorder %s22, 1
      %p255 = scmp.ne.s32.totalorder %s250, %s252
      %p256 = scmp.eq.s32.totalorder %s22, 0
      %p257 = por %p255, %p256
      %p258 = scmp.ne.s32.totalorder %s250, %s252
      %p259 = scmp.eq.s32.totalorder %s27, 1
      %p260 = por %p258, %p259
      %p261 = scmp.ne.s32.totalorder %s252, %s253
      %p262 = scmp.eq.s32.totalorder %s27, 0
      %p263 = por %p261, %p262
      %p264 = scmp.ne.s32.totalorder %s252, %s253
      %p265 = scmp.eq.s32.totalorder %s28, 1
      %p266 = por %p264, %p265
      %p268 = scmp.ne.s32.totalorder %s253, %s267
      %p269 = scmp.eq.s32.totalorder %s28, 0
      %p270 = por %p268, %p269
      %s272 = sadd.s32 %s271, 1
      %p275 = scmp.eq.s32.totalorder %s22, 1
      %p276 = scmp.ne.s32.totalorder %s271, %s273
      %p277 = scmp.eq.s32.totalorder %s22, 0
      %p278 = por %p276, %p277
      %p279 = scmp.ne.s32.totalorder %s271, %s273
      %p280 = scmp.eq.s32.totalorder %s27, 1
      %p281 = por %p279, %p280
      %p282 = scmp.ne.s32.totalorder %s273, %s274
      %p283 = scmp.eq.s32.totalorder %s27, 0
      %p284 = por %p282, %p283
      %p285 = scmp.ne.s32.totalorder %s273, %s274
      %p286 = scmp.eq.s32.totalorder %s28, 1
      %p287 = por %p285, %p286
      %p289 = scmp.ne.s32.totalorder %s274, %s288
      %p290 = scmp.eq.s32.totalorder %s28, 0
      %p291 = por %p289, %p290
      %s292 = ssub.s32 %s22, %s29
      %p293 = scmp.eq.s32.totalorder %s292, 0
      %s295 = sadd.s32 %s294, 1
      %s296 = scalar_select %p293, %s294, %s295
      %p299 = pneg %p293
      %p300 = scmp.eq.s32.totalorder %s22, 1
      %p301 = por %p299, %p300
      %p302 = scmp.ne.s32.totalorder %s294, %s297
      %p303 = scmp.eq.s32.totalorder %s22, 0
      %p304 = por %p302, %p303
      %p305 = scmp.ne.s32.totalorder %s294, %s297
      %p306 = scmp.eq.s32.totalorder %s27, 1
      %p307 = por %p305, %p306
      %p308 = scmp.ne.s32.totalorder %s297, %s298
      %p309 = scmp.eq.s32.totalorder %s27, 0
      %p310 = por %p308, %p309
      %p311 = scmp.ne.s32.totalorder %s297, %s298
      %p312 = scmp.eq.s32.totalorder %s28, 1
      %p313 = por %p311, %p312
      %p315 = scmp.ne.s32.totalorder %s298, %s314
      %p316 = scmp.eq.s32.totalorder %s28, 0
      %p317 = por %p315, %p316
      %s318 = ssub.s32 %s22, %s29
      %p319 = scmp.eq.s32.totalorder %s318, 0
      %s321 = sadd.s32 %s320, 1
      %s322 = scalar_select %p319, %s320, %s321
      %p325 = pneg %p319
      %p326 = scmp.eq.s32.totalorder %s22, 1
      %p327 = por %p325, %p326
      %p328 = scmp.ne.s32.totalorder %s320, %s323
      %p329 = scmp.eq.s32.totalorder %s22, 0
      %p330 = por %p328, %p329
      %p331 = scmp.ne.s32.totalorder %s320, %s323
      %p332 = scmp.eq.s32.totalorder %s27, 1
      %p333 = por %p331, %p332
      %p334 = scmp.ne.s32.totalorder %s323, %s324
      %p335 = scmp.eq.s32.totalorder %s27, 0
      %p336 = por %p334, %p335
      %p337 = scmp.ne.s32.totalorder %s323, %s324
      %p338 = scmp.eq.s32.totalorder %s28, 1
      %p339 = por %p337, %p338
      %p341 = scmp.ne.s32.totalorder %s324, %s340
      %p342 = scmp.eq.s32.totalorder %s28, 0
      %p343 = por %p341, %p342
      %s344 = ssub.s32 %s22, %s29
      %p345 = scmp.eq.s32.totalorder %s344, 0
      %s347 = sadd.s32 %s346, 1
      %s348 = scalar_select %p345, %s346, %s347
      %p351 = pneg %p345
      %p352 = scmp.eq.s32.totalorder %s22, 1
      %p353 = por %p351, %p352
      %p354 = scmp.ne.s32.totalorder %s346, %s349
      %p355 = scmp.eq.s32.totalorder %s22, 0
      %p356 = por %p354, %p355
      %p357 = scmp.ne.s32.totalorder %s346, %s349
      %p358 = scmp.eq.s32.totalorder %s27, 1
      %p359 = por %p357, %p358
      %p360 = scmp.ne.s32.totalorder %s349, %s350
      %p361 = scmp.eq.s32.totalorder %s27, 0
      %p362 = por %p360, %p361
      %p363 = scmp.ne.s32.totalorder %s349, %s350
      %p364 = scmp.eq.s32.totalorder %s28, 1
      %p365 = por %p363, %p364
      %p367 = scmp.ne.s32.totalorder %s350, %s366
      %p368 = scmp.eq.s32.totalorder %s28, 0
      %p369 = por %p367, %p368
      %p370 = scmp.le.s32.totalorder 1, %s22
      %p371 = scmp.lt.s32.totalorder %s22, 3
      %p372 = pnand %p370, %p371
      %p373 = pneg %p372
      // Predicated region
      $region9: #{condition_encoder_forward.2} parent=5 // pred_check
        _
      $region10: #{condition_encoder_forward.2} parent=5 // pred_check_branch
        %375 = sbr.rel (%p372) target = $region12
      $region11: #{condition_encoder_forward.2} parent=5 // pred_region
        %s376 = ssub.s32 %s22, 1
        // Predicated region
        $region13: #{condition_encoder_forward.2} parent=11 // pred_check
          %p377 = pneg %p95
        $region14: #{condition_encoder_forward.2} parent=11 // pred_check_branch
          %379 = sbr.rel (%p377) target = $region16
        $region15: #{condition_encoder_forward.2} parent=11 // pred_region
          _
        $region16: #{condition_encoder_forward.2} parent=11 // pred_fallthru
          _
        // Predicated region
        $region17: #{condition_encoder_forward.2} parent=11 // pred_check
          %p380 = pneg %p116
        $region18: #{condition_encoder_forward.2} parent=11 // pred_check_branch
          %382 = sbr.rel (%p380) target = $region20
        $region19: #{condition_encoder_forward.2} parent=11 // pred_region
          _
        $region20: #{condition_encoder_forward.2} parent=11 // pred_fallthru
          _
        // Predicated region
        $region21: #{condition_encoder_forward.2} parent=11 // pred_check
          %p383 = pneg %p137
        $region22: #{condition_encoder_forward.2} parent=11 // pred_check_branch
          %385 = sbr.rel (%p383) target = $region24
        $region23: #{condition_encoder_forward.2} parent=11 // pred_region
          _
        $region24: #{condition_encoder_forward.2} parent=11 // pred_fallthru
          _
        // Predicated region
        $region25: #{condition_encoder_forward.2} parent=11 // pred_check
          %p386 = pneg %p158
        $region26: #{condition_encoder_forward.2} parent=11 // pred_check_branch
          %388 = sbr.rel (%p386) target = $region28
        $region27: #{condition_encoder_forward.2} parent=11 // pred_region
          _
        $region28: #{condition_encoder_forward.2} parent=11 // pred_fallthru
          _
        // Predicated region
        $region29: #{condition_encoder_forward.2} parent=11 // pred_check
          %p389 = pneg %p179
        $region30: #{condition_encoder_forward.2} parent=11 // pred_check_branch
          %391 = sbr.rel (%p389) target = $region32
        $region31: #{condition_encoder_forward.2} parent=11 // pred_region
          _
        $region32: #{condition_encoder_forward.2} parent=11 // pred_fallthru
          _
        // Predicated region
        $region33: #{condition_encoder_forward.2} parent=11 // pred_check
          %p392 = pneg %p200
        $region34: #{condition_encoder_forward.2} parent=11 // pred_check_branch
          %394 = sbr.rel (%p392) target = $region36
        $region35: #{condition_encoder_forward.2} parent=11 // pred_region
          _
        $region36: #{condition_encoder_forward.2} parent=11 // pred_fallthru
          _
        // Predicated region
        $region37: #{condition_encoder_forward.2} parent=11 // pred_check
          %p395 = pneg %p221
        $region38: #{condition_encoder_forward.2} parent=11 // pred_check_branch
          %397 = sbr.rel (%p395) target = $region40
        $region39: #{condition_encoder_forward.2} parent=11 // pred_region
          %399 = vsyncadd [#allocation3], 0
          %s400 = sshll.u32 %s8, 4
          %s401 = int_to_ptr.hbm [resolvable:$true] %s400
          %s402 = sshll.u32 [#allocation2], 4
          %s403 = int_to_ptr.vmem [resolvable:$true] %s402
          %408 = dma.hbm_to_vmem [thread:$0]  %s401, 32768, %s403, [#allocation3], 512, 512, 32
        $region40: #{condition_encoder_forward.2} parent=11 // pred_fallthru
          _
        // Predicated region
        $region41: #{condition_encoder_forward.2} parent=11 // pred_check
          %p409 = pneg %p242
        $region42: #{condition_encoder_forward.2} parent=11 // pred_check_branch
          %411 = sbr.rel (%p409) target = $region44
        $region43: #{condition_encoder_forward.2} parent=11 // pred_region
          _
        $region44: #{condition_encoder_forward.2} parent=11 // pred_fallthru
          _
        // Predicated region
        $region45: #{condition_encoder_forward.2} parent=11 // pred_check
          %p412 = pneg %p263
        $region46: #{condition_encoder_forward.2} parent=11 // pred_check_branch
          %414 = sbr.rel (%p412) target = $region48
        $region47: #{condition_encoder_forward.2} parent=11 // pred_region
          _
        $region48: #{condition_encoder_forward.2} parent=11 // pred_fallthru
          _
        // Predicated region
        $region49: #{condition_encoder_forward.2} parent=11 // pred_check
          %p415 = pneg %p284
        $region50: #{condition_encoder_forward.2} parent=11 // pred_check_branch
          %417 = sbr.rel (%p415) target = $region52
        $region51: #{condition_encoder_forward.2} parent=11 // pred_region
          _
        $region52: #{condition_encoder_forward.2} parent=11 // pred_fallthru
          _
      $region12: #{condition_encoder_forward.2} parent=5 // pred_fallthru
        _
      %p418 = scmp.lt.s32.totalorder %s22, 2
      // Predicated region
      $region53: #{condition_encoder_forward.2} parent=5 // pred_check
        %p419 = pneg %p418
      $region54: #{condition_encoder_forward.2} parent=5 // pred_check_branch
        %421 = sbr.rel (%p419) target = $region56
      $region55: #{condition_encoder_forward.2} parent=5 // pred_region
        // Predicated region
        $region57: #{condition_encoder_forward.2} parent=55 // pred_check
          %p422 = pneg %p42
        $region58: #{condition_encoder_forward.2} parent=55 // pred_check_branch
          %424 = sbr.rel (%p422) target = $region60
        $region59: #{condition_encoder_forward.2} parent=55 // pred_region
          %s425 = smul.u32 4, %s22
          %p426 = scmp.lt.s32.totalorder %s425, 7
          %s427 = scalar_select %p426, %s425, 7
          %s428 = smul.addr %s427, 4
          %s429 = scalar_lea.vmem %s0, %s428
          %s430 = smul.u32 4, %s22
        $region60: #{condition_encoder_forward.2} parent=55 // pred_fallthru
          _
        // Predicated region
        $region61: #{condition_encoder_forward.2} parent=55 // pred_check
          %p431 = pneg %p68
        $region62: #{condition_encoder_forward.2} parent=55 // pred_check_branch
          %433 = sbr.rel (%p431) target = $region64
        $region63: #{condition_encoder_forward.2} parent=55 // pred_region
          %p434 = scmp.lt.s32.totalorder %s22, 1
          %s435 = scalar_select %p434, %s22, 1
          %s436 = smul.addr %s435, 2
          %s437 = smul.addr %s436, 8
          %s438 = scalar_lea.vmem %s1, %s437
        $region64: #{condition_encoder_forward.2} parent=55 // pred_fallthru
          _
      $region56: #{condition_encoder_forward.2} parent=5 // pred_fallthru
        _
      %p439 = scmp.le.s32.totalorder 1, %s22
      %p440 = scmp.lt.s32.totalorder %s22, 3
      %p441 = pnand %p439, %p440
      %p442 = pneg %p441
      // Predicated region
      $region65: #{condition_encoder_forward.2} parent=5 // pred_check
        _
      $region66: #{condition_encoder_forward.2} parent=5 // pred_check_branch
        %444 = sbr.rel (%p441) target = $region68
      $region67: #{condition_encoder_forward.2} parent=5 // pred_region
        %s445 = ssub.s32 %s22, 1
        // Predicated region
        $region69: #{condition_encoder_forward.2} parent=67 // pred_check
          %p446 = pneg %p221
        $region70: #{condition_encoder_forward.2} parent=67 // pred_check_branch
          %448 = sbr.rel (%p446) target = $region72
        $region71: #{condition_encoder_forward.2} parent=67 // pred_region
          %450 = dma.done [#allocation3], 32768
        $region72: #{condition_encoder_forward.2} parent=67 // pred_fallthru
          _
        %s451 = smul.u32 4, %s27
        %p452 = scmp.lt.s32.totalorder %s451, 7
        %s453 = scalar_select %p452, %s451, 7
        %s454 = smul.addr %s453, 4
        %s455 = scalar_lea.vmem %s0, %s454
        %p456 = pneg %p48
        %p457 = pneg %p45
        %p458 = scmp.lt.s32.totalorder %s27, 1
        %s459 = scalar_select %p458, %s27, 1
        %s460 = smul.addr %s459, 2
        %s461 = smul.addr %s460, 8
        %s462 = scalar_lea.vmem %s1, %s461
        %p463 = pneg %p74
        %p464 = pneg %p71
        %p465 = pneg %p95
        %p466 = pneg %p92
        %p467 = pneg %p116
        %p468 = pneg %p113
        %p469 = pneg %p137
        %p470 = pneg %p134
        %p471 = pneg %p158
        %p472 = pneg %p155
        %p473 = pneg %p179
        %p474 = pneg %p176
        %p475 = pneg %p200
        %p476 = pneg %p197
        %p477 = pneg %p221
        %p478 = pneg %p218
        %p479 = pneg %p242
        %p480 = pneg %p239
        %p481 = pneg %p263
        %p482 = pneg %p260
        %p483 = pneg %p284
        %p484 = pneg %p281
        %p485 = pneg %p310
        %p486 = pneg %p307
        %p487 = scmp.lt.s32.totalorder %s27, 1
        %s488 = scalar_select %p487, %s27, 1
        %s489 = smul.addr %s488, 4
        %s490 = smul.addr %s489, 8
        %s491 = scalar_lea.vmem %s12, %s490
        %p492 = pneg %p336
        %p493 = pneg %p333
        %p494 = scmp.lt.s32.totalorder %s27, 1
        %s495 = scalar_select %p494, %s27, 1
        %s496 = smul.addr %s495, 6
        %s497 = smul.addr %s496, 8
        %s498 = scalar_lea.vmem %s13, %s497
        %p499 = pneg %p362
        %p500 = pneg %p359
        %p501 = scmp.lt.s32.totalorder %s27, 1
        %s502 = scalar_select %p501, %s27, 1
        %s503 = smul.addr %s502, 8
        %s504 = scalar_lea.vmem %s14, %s503
        %s505 = smul.u32 4, %s27
        %p506 = scmp.lt.s32.totalorder %s505, 7
        %s507 = scalar_select %p506, %s505, 7
        %s508 = smul.addr %s507, 4
        %s509 = scalar_lea.vmem %s0, %s508
        %s510 = smul.u32 4, %s27
        %p511 = scmp.lt.s32.totalorder %s27, 1
        %s512 = scalar_select %p511, %s27, 1
        %s513 = smul.addr %s512, 2
        %s514 = smul.addr %s513, 8
        %s515 = scalar_lea.vmem %s1, %s514
        %p516 = scmp.lt.s32.totalorder %s27, 1
        %s517 = scalar_select %p516, %s27, 1
        %s518 = smul.addr %s517, 4
        %s519 = smul.addr %s518, 8
        %s520 = scalar_lea.vmem %s12, %s519
        %p521 = scmp.lt.s32.totalorder %s27, 1
        %s522 = scalar_select %p521, %s27, 1
        %s523 = smul.addr %s522, 6
        %s524 = smul.addr %s523, 8
        %s525 = scalar_lea.vmem %s13, %s524
        %p526 = scmp.lt.s32.totalorder %s27, 1
        %s527 = scalar_select %p526, %s27, 1
        %s528 = smul.addr %s527, 8
        %s529 = scalar_lea.vmem %s14, %s528
        %v531 = vld [vmem:[%s509] sm:$0xf]
        %v532 = vld [vmem:[%s509 + $0x4] sm:$0xf]
        %v533 = vld [vmem:[%s509 + $0x8] sm:$0xf]
        %v534 = vld [vmem:[%s509 + $0xc] sm:$0xf]
        %v535 = vld [vmem:[%s2] sm:$0xff]
        %v536 = vld [vmem:[%s2 + $0x8] sm:$0xff]
        %v537 = vld [vmem:[%s2 + $0x10] sm:$0xff]
        %v538 = vld [vmem:[%s2 + $0x18] sm:$0xff]
        %v539 = vld [vmem:[%s2 + $0x20] sm:$0xff]
        %v540 = vld [vmem:[%s2 + $0x28] sm:$0xff]
        %v541 = vld [vmem:[%s2 + $0x30] sm:$0xff]
        %v542 = vld [vmem:[%s2 + $0x38] sm:$0xff]
        %v543 = vld [vmem:[%s3] sm:$0x3]
        %v545 = vperm.slane %v543, 0
        %v546 = vperm.slane %v543, 1
        %v553 = vunpack.c.l.b16 %v531
        %v554 = vunpack.c.l.b16 %v532
        %v555 = vunpack.c.l.b16 %v533
        %v556 = vunpack.c.l.b16 %v534
        %v557 = vpack.c.b16 %v554, %v553
        %v558 = vpack.c.b16 %v556, %v555
        %v567 = vunpack.c.l.b16 %v535
        %v568 = vunpack.c.h.b16 %v535
        %v569 = vunpack.c.l.b16 %v536
        %v570 = vunpack.c.h.b16 %v536
        %v571 = vunpack.c.l.b16 %v537
        %v572 = vunpack.c.h.b16 %v537
        %v573 = vunpack.c.l.b16 %v538
        %v574 = vunpack.c.h.b16 %v538
        %v575 = vunpack.c.l.b16 %v539
        %v576 = vunpack.c.h.b16 %v539
        %v577 = vunpack.c.l.b16 %v540
        %v578 = vunpack.c.h.b16 %v540
        %v579 = vunpack.c.l.b16 %v541
        %v580 = vunpack.c.h.b16 %v541
        %v581 = vunpack.c.l.b16 %v542
        %v582 = vunpack.c.h.b16 %v542
        %v583 = vpack.c.b16 %v569, %v567
        %v584 = vpack.c.b16 %v570, %v568
        %v585 = vpack.c.b16 %v573, %v571
        %v586 = vpack.c.b16 %v574, %v572
        %v587 = vpack.c.b16 %v577, %v575
        %v588 = vpack.c.b16 %v578, %v576
        %v589 = vpack.c.b16 %v581, %v579
        %v590 = vpack.c.b16 %v582, %v580
        %vm599 = vcmask 523264
        %v601 = vsel %vm599, %v557, 0
        %v604 = vsel %vm599, %v558, 0
        %606 = vmatpush.bf16.msra.mxu0 0
        %607 = vmatpush.bf16.msra.mxu0 0
        %608 = vmatpush.bf16.msra.mxu0 0
        %609 = vmatpush.bf16.msra.mxu0 0
        %610 = vmatpush.bf16.msra.mxu0 %v589
        %611 = vmatpush.bf16.msra.mxu0 %v587
        %612 = vmatpush.bf16.msra.mxu0 %v585
        %613 = vmatpush.bf16.msra.mxu0 %v583
        %614 = vmatmul.bf16.gmra.mxu0 %v601
        %v615 = vpop.f32.mrf.mxu0
        %v616 = vadd.f32 %v545, %v615
        %v617 = vpop.f32.mrf.mxu0
        %v618 = vadd.f32 %v545, %v617
        %619 = vmatmul.bf16.gmra.mxu0 %v604
        %v620 = vpop.f32.mrf.mxu0
        %v621 = vadd.f32 %v545, %v620
        %v622 = vpop.f32.mrf.mxu0
        %v623 = vadd.f32 %v545, %v622
        %624 = vdwg.mxu0
        %625 = vmatpush.bf16.msra.mxu0 0
        %626 = vmatpush.bf16.msra.mxu0 0
        %627 = vmatpush.bf16.msra.mxu0 0
        %628 = vmatpush.bf16.msra.mxu0 0
        %629 = vmatpush.bf16.msra.mxu0 %v590
        %630 = vmatpush.bf16.msra.mxu0 %v588
        %631 = vmatpush.bf16.msra.mxu0 %v586
        %632 = vmatpush.bf16.msra.mxu0 %v584
        %633 = vmatmul.bf16.gmra.mxu0 %v601
        %v634 = vpop.f32.mrf.mxu0
        %v635 = vadd.f32 %v546, %v634
        %v636 = vpop.f32.mrf.mxu0
        %v637 = vadd.f32 %v546, %v636
        %638 = vmatmul.bf16.gmra.mxu0 %v604
        %v639 = vpop.f32.mrf.mxu0
        %v640 = vadd.f32 %v546, %v639
        %v641 = vpop.f32.mrf.mxu0
        %v642 = vadd.f32 %v546, %v641
        %643 = vdwg.mxu0
        %v644 = vmax.f32 %v616, 0.0
        %v645 = vmax.f32 %v635, 0.0
        %v646 = vmax.f32 %v618, 0.0
        %v647 = vmax.f32 %v637, 0.0
        %v648 = vmax.f32 %v621, 0.0
        %v649 = vmax.f32 %v640, 0.0
        %v650 = vmax.f32 %v623, 0.0
        %v651 = vmax.f32 %v642, 0.0
        %v652 = vpack.c.bf16 %v646, %v644
        %v653 = vpack.c.bf16 %v647, %v645
        %v654 = vpack.c.bf16 %v650, %v648
        %v655 = vpack.c.bf16 %v651, %v649
        %v656 = vld [vmem:[%s4] sm:$0xf]
        %v657 = vld [vmem:[%s4 + $0x4] sm:$0xf]
        %v658 = vld [vmem:[%s4 + $0x8] sm:$0xf]
        %v659 = vld [vmem:[%s4 + $0xc] sm:$0xf]
        %v660 = vld [vmem:[%s4 + $0x10] sm:$0xf]
        %v661 = vld [vmem:[%s4 + $0x14] sm:$0xf]
        %v662 = vld [vmem:[%s4 + $0x18] sm:$0xf]
        %v663 = vld [vmem:[%s4 + $0x1c] sm:$0xf]
        %v664 = vld [vmem:[%s4 + $0x20] sm:$0xf]
        %v665 = vld [vmem:[%s4 + $0x24] sm:$0xf]
        %v666 = vld [vmem:[%s4 + $0x28] sm:$0xf]
        %v667 = vld [vmem:[%s4 + $0x2c] sm:$0xf]
        %v668 = vld [vmem:[%s4 + $0x30] sm:$0xf]
        %v669 = vld [vmem:[%s4 + $0x34] sm:$0xf]
        %v670 = vld [vmem:[%s4 + $0x38] sm:$0xf]
        %v671 = vld [vmem:[%s4 + $0x3c] sm:$0xf]
        %v672 = vld [vmem:[%s4 + $0x40] sm:$0xf]
        %v673 = vld [vmem:[%s4 + $0x44] sm:$0xf]
        %v674 = vld [vmem:[%s4 + $0x48] sm:$0xf]
        %v675 = vld [vmem:[%s4 + $0x4c] sm:$0xf]
        %v676 = vld [vmem:[%s4 + $0x50] sm:$0xf]
        %v677 = vld [vmem:[%s4 + $0x54] sm:$0xf]
        %v678 = vld [vmem:[%s4 + $0x58] sm:$0xf]
        %v679 = vld [vmem:[%s4 + $0x5c] sm:$0xf]
        %v680 = vld [vmem:[%s4 + $0x60] sm:$0xf]
        %v681 = vld [vmem:[%s4 + $0x64] sm:$0xf]
        %v682 = vld [vmem:[%s4 + $0x68] sm:$0xf]
        %v683 = vld [vmem:[%s4 + $0x6c] sm:$0xf]
        %v684 = vld [vmem:[%s4 + $0x70] sm:$0xf]
        %v685 = vld [vmem:[%s4 + $0x74] sm:$0xf]
        %v686 = vld [vmem:[%s4 + $0x78] sm:$0xf]
        %v687 = vld [vmem:[%s4 + $0x7c] sm:$0xf]
        %v688 = vld [vmem:[%s5] sm:$0x1]
        %v690 = vperm.slane %v688, 0
        %v724 = vunpack.c.l.b16 %v656
        %v725 = vunpack.c.l.b16 %v657
        %v726 = vunpack.c.l.b16 %v658
        %v727 = vunpack.c.l.b16 %v659
        %v728 = vunpack.c.l.b16 %v660
        %v729 = vunpack.c.l.b16 %v661
        %v730 = vunpack.c.l.b16 %v662
        %v731 = vunpack.c.l.b16 %v663
        %v732 = vunpack.c.l.b16 %v664
        %v733 = vunpack.c.l.b16 %v665
        %v734 = vunpack.c.l.b16 %v666
        %v735 = vunpack.c.l.b16 %v667
        %v736 = vunpack.c.l.b16 %v668
        %v737 = vunpack.c.l.b16 %v669
        %v738 = vunpack.c.l.b16 %v670
        %v739 = vunpack.c.l.b16 %v671
        %v740 = vunpack.c.l.b16 %v672
        %v741 = vunpack.c.l.b16 %v673
        %v742 = vunpack.c.l.b16 %v674
        %v743 = vunpack.c.l.b16 %v675
        %v744 = vunpack.c.l.b16 %v676
        %v745 = vunpack.c.l.b16 %v677
        %v746 = vunpack.c.l.b16 %v678
        %v747 = vunpack.c.l.b16 %v679
        %v748 = vunpack.c.l.b16 %v680
        %v749 = vunpack.c.l.b16 %v681
        %v750 = vunpack.c.l.b16 %v682
        %v751 = vunpack.c.l.b16 %v683
        %v752 = vunpack.c.l.b16 %v684
        %v753 = vunpack.c.l.b16 %v685
        %v754 = vunpack.c.l.b16 %v686
        %v755 = vunpack.c.l.b16 %v687
        %v756 = vpack.c.b16 %v725, %v724
        %v757 = vpack.c.b16 %v727, %v726
        %v758 = vpack.c.b16 %v729, %v728
        %v759 = vpack.c.b16 %v731, %v730
        %v760 = vpack.c.b16 %v733, %v732
        %v761 = vpack.c.b16 %v735, %v734
        %v762 = vpack.c.b16 %v737, %v736
        %v763 = vpack.c.b16 %v739, %v738
        %v764 = vpack.c.b16 %v741, %v740
        %v765 = vpack.c.b16 %v743, %v742
        %v766 = vpack.c.b16 %v745, %v744
        %v767 = vpack.c.b16 %v747, %v746
        %v768 = vpack.c.b16 %v749, %v748
        %v769 = vpack.c.b16 %v751, %v750
        %v770 = vpack.c.b16 %v753, %v752
        %v771 = vpack.c.b16 %v755, %v754
        %788 = vmatpush.bf16.msra.mxu0 %v763
        %789 = vmatpush.bf16.msra.mxu0 %v762
        %790 = vmatpush.bf16.msra.mxu0 %v761
        %791 = vmatpush.bf16.msra.mxu0 %v760
        %792 = vmatpush.bf16.msra.mxu0 %v759
        %793 = vmatpush.bf16.msra.mxu0 %v758
        %794 = vmatpush.bf16.msra.mxu0 %v757
        %795 = vmatpush.bf16.msra.mxu0 %v756
        %796 = vmatmul.bf16.gmra.mxu0 %v652
        %v797 = vpop.f32.mrf.mxu0
        %v798 = vadd.f32 %v690, %v797
        %v799 = vpop.f32.mrf.mxu0
        %v800 = vadd.f32 %v690, %v799
        %801 = vmatmul.bf16.gmra.mxu0 %v654
        %v802 = vpop.f32.mrf.mxu0
        %v803 = vadd.f32 %v690, %v802
        %v804 = vpop.f32.mrf.mxu0
        %v805 = vadd.f32 %v690, %v804
        %806 = vdwg.mxu0
        %807 = vmatpush.bf16.msra.mxu0 %v771
        %808 = vmatpush.bf16.msra.mxu0 %v770
        %809 = vmatpush.bf16.msra.mxu0 %v769
        %810 = vmatpush.bf16.msra.mxu0 %v768
        %811 = vmatpush.bf16.msra.mxu0 %v767
        %812 = vmatpush.bf16.msra.mxu0 %v766
        %813 = vmatpush.bf16.msra.mxu0 %v765
        %814 = vmatpush.bf16.msra.mxu0 %v764
        %815 = vmatmul.bf16.gmra.mxu0 %v653
        %v816 = vpop.f32.mrf.mxu0
        %v817 = vadd.f32 %v798, %v816
        %v818 = vpop.f32.mrf.mxu0
        %v819 = vadd.f32 %v800, %v818
        %820 = vmatmul.bf16.gmra.mxu0 %v655
        %v821 = vpop.f32.mrf.mxu0
        %v822 = vadd.f32 %v803, %v821
        %v823 = vpop.f32.mrf.mxu0
        %v824 = vadd.f32 %v805, %v823
        %825 = vdwg.mxu0
        %v826 = vmax.f32 %v817, 0.0
        %v827 = vmax.f32 %v819, 0.0
        %v828 = vmax.f32 %v822, 0.0
        %v829 = vmax.f32 %v824, 0.0
        %v834 = vrot.slane %v826, 4
        %v835 = vrot.slane %v827, 4
        %v836 = vrot.slane %v828, 4
        %v837 = vrot.slane %v829, 4
        %vm842 = vcmask 1043456
        %v843 = vsel %vm842, %v826, 0.0
        %v844 = vrot.slane %v843, 4
        %v845 = vadd.f32 %v843, %v844
        %v846 = vrot.slane %v845, 2
        %v847 = vadd.f32 %v845, %v846
        %v848 = vrot.slane %v847, 1
        %v849 = vadd.f32 %v847, %v848
        %v850 = vsel %vm842, %v834, 0.0
        %v851 = vrot.slane %v850, 4
        %v852 = vadd.f32 %v850, %v851
        %v853 = vrot.slane %v852, 2
        %v854 = vadd.f32 %v852, %v853
        %v855 = vrot.slane %v854, 1
        %v856 = vadd.f32 %v854, %v855
        %v857 = vsel %vm842, %v827, 0.0
        %v858 = vrot.slane %v857, 4
        %v859 = vadd.f32 %v857, %v858
        %v860 = vrot.slane %v859, 2
        %v861 = vadd.f32 %v859, %v860
        %v862 = vrot.slane %v861, 1
        %v863 = vadd.f32 %v861, %v862
        %v864 = vsel %vm842, %v835, 0.0
        %v865 = vrot.slane %v864, 4
        %v866 = vadd.f32 %v864, %v865
        %v867 = vrot.slane %v866, 2
        %v868 = vadd.f32 %v866, %v867
        %v869 = vrot.slane %v868, 1
        %v870 = vadd.f32 %v868, %v869
        %v871 = vsel %vm842, %v828, 0.0
        %v872 = vrot.slane %v871, 4
        %v873 = vadd.f32 %v871, %v872
        %v874 = vrot.slane %v873, 2
        %v875 = vadd.f32 %v873, %v874
        %v876 = vrot.slane %v875, 1
        %v877 = vadd.f32 %v875, %v876
        %v878 = vsel %vm842, %v836, 0.0
        %v879 = vrot.slane %v878, 4
        %v880 = vadd.f32 %v878, %v879
        %v881 = vrot.slane %v880, 2
        %v882 = vadd.f32 %v880, %v881
        %v883 = vrot.slane %v882, 1
        %v884 = vadd.f32 %v882, %v883
        %v885 = vsel %vm842, %v829, 0.0
        %v886 = vrot.slane %v885, 4
        %v887 = vadd.f32 %v885, %v886
        %v888 = vrot.slane %v887, 2
        %v889 = vadd.f32 %v887, %v888
        %v890 = vrot.slane %v889, 1
        %v891 = vadd.f32 %v889, %v890
        %v892 = vsel %vm842, %v837, 0.0
        %v893 = vrot.slane %v892, 4
        %v894 = vadd.f32 %v892, %v893
        %v895 = vrot.slane %v894, 2
        %v896 = vadd.f32 %v894, %v895
        %v897 = vrot.slane %v896, 1
        %v898 = vadd.f32 %v896, %v897
        %v899 = vrcp.pop 4.0
        %v900 = vmul.f32 4.0, %v899
        %v901 = vsub.f32 1.0, %v900
        %v902 = vmul.f32 %v899, %v901
        %v903 = vadd.f32 %v899, %v902
        %vm904 = vweird.f32 %v899
        %v905 = vsel %vm904, %v899, %v903
        %v906 = vmul.f32 %v849, %v905
        %v907 = vmul.f32 %v856, %v905
        %v908 = vmul.f32 %v863, %v905
        %v909 = vmul.f32 %v870, %v905
        %v910 = vmul.f32 %v877, %v905
        %v911 = vmul.f32 %v884, %v905
        %v912 = vmul.f32 %v891, %v905
        %v913 = vmul.f32 %v898, %v905
        %v914 = vpack.c.bf16 %v906, %v906
        %v915 = vpack.c.bf16 %v907, %v907
        %v916 = vpack.c.bf16 %v908, %v908
        %v917 = vpack.c.bf16 %v909, %v909
        %v918 = vpack.c.bf16 %v910, %v910
        %v919 = vpack.c.bf16 %v911, %v911
        %v920 = vpack.c.bf16 %v912, %v912
        %v921 = vpack.c.bf16 %v913, %v913
        %v922 = vld [vmem:[%s6] sm:$0xff]
        %v923 = vld [vmem:[%s6 + $0x8] sm:$0xff]
        %v924 = vld [vmem:[%s6 + $0x10] sm:$0xff]
        %v925 = vld [vmem:[%s6 + $0x18] sm:$0xff]
        %v926 = vld [vmem:[%s6 + $0x20] sm:$0xff]
        %v927 = vld [vmem:[%s6 + $0x28] sm:$0xff]
        %v928 = vld [vmem:[%s6 + $0x30] sm:$0xff]
        %v929 = vld [vmem:[%s6 + $0x38] sm:$0xff]
        %v930 = vld [vmem:[%s6 + $0x40] sm:$0xff]
        %v931 = vld [vmem:[%s6 + $0x48] sm:$0xff]
        %v932 = vld [vmem:[%s6 + $0x50] sm:$0xff]
        %v933 = vld [vmem:[%s6 + $0x58] sm:$0xff]
        %v934 = vld [vmem:[%s6 + $0x60] sm:$0xff]
        %v935 = vld [vmem:[%s6 + $0x68] sm:$0xff]
        %v936 = vld [vmem:[%s6 + $0x70] sm:$0xff]
        %v937 = vld [vmem:[%s6 + $0x78] sm:$0xff]
        %v938 = vld [vmem:[%s6 + $0x80] sm:$0xff]
        %v939 = vld [vmem:[%s6 + $0x88] sm:$0xff]
        %v940 = vld [vmem:[%s6 + $0x90] sm:$0xff]
        %v941 = vld [vmem:[%s6 + $0x98] sm:$0xff]
        %v942 = vld [vmem:[%s6 + $0xa0] sm:$0xff]
        %v943 = vld [vmem:[%s6 + $0xa8] sm:$0xff]
        %v944 = vld [vmem:[%s6 + $0xb0] sm:$0xff]
        %v945 = vld [vmem:[%s6 + $0xb8] sm:$0xff]
        %v946 = vld [vmem:[%s6 + $0xc0] sm:$0xff]
        %v947 = vld [vmem:[%s6 + $0xc8] sm:$0xff]
        %v948 = vld [vmem:[%s6 + $0xd0] sm:$0xff]
        %v949 = vld [vmem:[%s6 + $0xd8] sm:$0xff]
        %v950 = vld [vmem:[%s6 + $0xe0] sm:$0xff]
        %v951 = vld [vmem:[%s6 + $0xe8] sm:$0xff]
        %v952 = vld [vmem:[%s6 + $0xf0] sm:$0xff]
        %v953 = vld [vmem:[%s6 + $0xf8] sm:$0xff]
        %v954 = vld [vmem:[%s7] sm:$0xf]
        %v956 = vperm.slane %v954, 0
        %v957 = vperm.slane %v954, 1
        %v958 = vperm.slane %v954, 2
        %v959 = vperm.slane %v954, 3
        %v972 = vunpack.c.l.b16 %v914
        %v973 = vunpack.c.l.b16 %v915
        %v974 = vunpack.c.l.b16 %v916
        %v975 = vunpack.c.l.b16 %v917
        %v976 = vunpack.c.l.b16 %v918
        %v977 = vunpack.c.l.b16 %v919
        %v978 = vunpack.c.l.b16 %v920
        %v979 = vunpack.c.l.b16 %v921
        %vm980 = vcmask 1041409
        %v981 = vsel %vm980, %v973, %v972
        %vm982 = vcmask 1042434
        %v983 = vsel %vm982, %v974, %v981
        %vm984 = vcmask 1043459
        %v985 = vsel %vm984, %v975, %v983
        %vm986 = vcmask 1044484
        %v987 = vsel %vm986, %v976, %v985
        %vm988 = vcmask 1045509
        %v989 = vsel %vm988, %v977, %v987
        %vm990 = vcmask 1046534
        %v991 = vsel %vm990, %v978, %v989
        %vm992 = vcmask 1047559
        %v993 = vsel %vm992, %v979, %v991
        %v994 = vpack.c.b16 %v993, %v993
        %v1028 = vunpack.c.l.b16 %v922
        %v1029 = vunpack.c.h.b16 %v922
        %v1030 = vunpack.c.l.b16 %v923
        %v1031 = vunpack.c.h.b16 %v923
        %v1032 = vunpack.c.l.b16 %v924
        %v1033 = vunpack.c.h.b16 %v924
        %v1034 = vunpack.c.l.b16 %v925
        %v1035 = vunpack.c.h.b16 %v925
        %v1036 = vunpack.c.l.b16 %v926
        %v1037 = vunpack.c.h.b16 %v926
        %v1038 = vunpack.c.l.b16 %v927
        %v1039 = vunpack.c.h.b16 %v927
        %v1040 = vunpack.c.l.b16 %v928
        %v1041 = vunpack.c.h.b16 %v928
        %v1042 = vunpack.c.l.b16 %v929
        %v1043 = vunpack.c.h.b16 %v929
        %v1044 = vunpack.c.l.b16 %v930
        %v1045 = vunpack.c.h.b16 %v930
        %v1046 = vunpack.c.l.b16 %v931
        %v1047 = vunpack.c.h.b16 %v931
        %v1048 = vunpack.c.l.b16 %v932
        %v1049 = vunpack.c.h.b16 %v932
        %v1050 = vunpack.c.l.b16 %v933
        %v1051 = vunpack.c.h.b16 %v933
        %v1052 = vunpack.c.l.b16 %v934
        %v1053 = vunpack.c.h.b16 %v934
        %v1054 = vunpack.c.l.b16 %v935
        %v1055 = vunpack.c.h.b16 %v935
        %v1056 = vunpack.c.l.b16 %v936
        %v1057 = vunpack.c.h.b16 %v936
        %v1058 = vunpack.c.l.b16 %v937
        %v1059 = vunpack.c.h.b16 %v937
        %v1060 = vunpack.c.l.b16 %v938
        %v1061 = vunpack.c.h.b16 %v938
        %v1062 = vunpack.c.l.b16 %v939
        %v1063 = vunpack.c.h.b16 %v939
        %v1064 = vunpack.c.l.b16 %v940
        %v1065 = vunpack.c.h.b16 %v940
        %v1066 = vunpack.c.l.b16 %v941
        %v1067 = vunpack.c.h.b16 %v941
        %v1068 = vunpack.c.l.b16 %v942
        %v1069 = vunpack.c.h.b16 %v942
        %v1070 = vunpack.c.l.b16 %v943
        %v1071 = vunpack.c.h.b16 %v943
        %v1072 = vunpack.c.l.b16 %v944
        %v1073 = vunpack.c.h.b16 %v944
        %v1074 = vunpack.c.l.b16 %v945
        %v1075 = vunpack.c.h.b16 %v945
        %v1076 = vunpack.c.l.b16 %v946
        %v1077 = vunpack.c.h.b16 %v946
        %v1078 = vunpack.c.l.b16 %v947
        %v1079 = vunpack.c.h.b16 %v947
        %v1080 = vunpack.c.l.b16 %v948
        %v1081 = vunpack.c.h.b16 %v948
        %v1082 = vunpack.c.l.b16 %v949
        %v1083 = vunpack.c.h.b16 %v949
        %v1084 = vunpack.c.l.b16 %v950
        %v1085 = vunpack.c.h.b16 %v950
        %v1086 = vunpack.c.l.b16 %v951
        %v1087 = vunpack.c.h.b16 %v951
        %v1088 = vunpack.c.l.b16 %v952
        %v1089 = vunpack.c.h.b16 %v952
        %v1090 = vunpack.c.l.b16 %v953
        %v1091 = vunpack.c.h.b16 %v953
        %v1092 = vpack.c.b16 %v1032, %v1028
        %v1093 = vpack.c.b16 %v1033, %v1029
        %v1094 = vpack.c.b16 %v1034, %v1030
        %v1095 = vpack.c.b16 %v1035, %v1031
        %v1096 = vpack.c.b16 %v1040, %v1036
        %v1097 = vpack.c.b16 %v1041, %v1037
        %v1098 = vpack.c.b16 %v1042, %v1038
        %v1099 = vpack.c.b16 %v1043, %v1039
        %v1100 = vpack.c.b16 %v1048, %v1044
        %v1101 = vpack.c.b16 %v1049, %v1045
        %v1102 = vpack.c.b16 %v1050, %v1046
        %v1103 = vpack.c.b16 %v1051, %v1047
        %v1104 = vpack.c.b16 %v1056, %v1052
        %v1105 = vpack.c.b16 %v1057, %v1053
        %v1106 = vpack.c.b16 %v1058, %v1054
        %v1107 = vpack.c.b16 %v1059, %v1055
        %v1108 = vpack.c.b16 %v1064, %v1060
        %v1109 = vpack.c.b16 %v1065, %v1061
        %v1110 = vpack.c.b16 %v1066, %v1062
        %v1111 = vpack.c.b16 %v1067, %v1063
        %v1112 = vpack.c.b16 %v1072, %v1068
        %v1113 = vpack.c.b16 %v1073, %v1069
        %v1114 = vpack.c.b16 %v1074, %v1070
        %v1115 = vpack.c.b16 %v1075, %v1071
        %v1116 = vpack.c.b16 %v1080, %v1076
        %v1117 = vpack.c.b16 %v1081, %v1077
        %v1118 = vpack.c.b16 %v1082, %v1078
        %v1119 = vpack.c.b16 %v1083, %v1079
        %v1120 = vpack.c.b16 %v1088, %v1084
        %v1121 = vpack.c.b16 %v1089, %v1085
        %v1122 = vpack.c.b16 %v1090, %v1086
        %v1123 = vpack.c.b16 %v1091, %v1087
        %1156 = vmatpush.bf16.msra.mxu0 %v1120
        %1157 = vmatpush.bf16.msra.mxu0 %v1116
        %1158 = vmatpush.bf16.msra.mxu0 %v1112
        %1159 = vmatpush.bf16.msra.mxu0 %v1108
        %1160 = vmatpush.bf16.msra.mxu0 %v1104
        %1161 = vmatpush.bf16.msra.mxu0 %v1100
        %1162 = vmatpush.bf16.msra.mxu0 %v1096
        %1163 = vmatpush.bf16.msra.mxu0 %v1092
        %1164 = vmatmul.bf16.gmra.mxu0 %v994
        %v1165 = vpop.f32.mrf.mxu0
        %v1166 = vadd.f32 %v956, %v1165
        %v1167 = vpop.f32.mrf.mxu0
        %1168 = vdwg.mxu0
        %1169 = vmatpush.bf16.msra.mxu0 %v1121
        %1170 = vmatpush.bf16.msra.mxu0 %v1117
        %1171 = vmatpush.bf16.msra.mxu0 %v1113
        %1172 = vmatpush.bf16.msra.mxu0 %v1109
        %1173 = vmatpush.bf16.msra.mxu0 %v1105
        %1174 = vmatpush.bf16.msra.mxu0 %v1101
        %1175 = vmatpush.bf16.msra.mxu0 %v1097
        %1176 = vmatpush.bf16.msra.mxu0 %v1093
        %1177 = vmatmul.bf16.gmra.mxu0 %v994
        %v1178 = vpop.f32.mrf.mxu0
        %v1179 = vadd.f32 %v957, %v1178
        %v1180 = vpop.f32.mrf.mxu0
        %1181 = vdwg.mxu0
        %1182 = vmatpush.bf16.msra.mxu0 %v1122
        %1183 = vmatpush.bf16.msra.mxu0 %v1118
        %1184 = vmatpush.bf16.msra.mxu0 %v1114
        %1185 = vmatpush.bf16.msra.mxu0 %v1110
        %1186 = vmatpush.bf16.msra.mxu0 %v1106
        %1187 = vmatpush.bf16.msra.mxu0 %v1102
        %1188 = vmatpush.bf16.msra.mxu0 %v1098
        %1189 = vmatpush.bf16.msra.mxu0 %v1094
        %1190 = vmatmul.bf16.gmra.mxu0 %v994
        %v1191 = vpop.f32.mrf.mxu0
        %v1192 = vadd.f32 %v958, %v1191
        %v1193 = vpop.f32.mrf.mxu0
        %1194 = vdwg.mxu0
        %1195 = vmatpush.bf16.msra.mxu0 %v1123
        %1196 = vmatpush.bf16.msra.mxu0 %v1119
        %1197 = vmatpush.bf16.msra.mxu0 %v1115
        %1198 = vmatpush.bf16.msra.mxu0 %v1111
        %1199 = vmatpush.bf16.msra.mxu0 %v1107
        %1200 = vmatpush.bf16.msra.mxu0 %v1103
        %1201 = vmatpush.bf16.msra.mxu0 %v1099
        %1202 = vmatpush.bf16.msra.mxu0 %v1095
        %1203 = vmatmul.bf16.gmra.mxu0 %v994
        %v1204 = vpop.f32.mrf.mxu0
        %v1205 = vadd.f32 %v959, %v1204
        %v1206 = vpop.f32.mrf.mxu0
        %1207 = vdwg.mxu0
        %1208 = vst [vmem:[%s520] sm:$0xff] %v1166
        %1209 = vst [vmem:[%s520 + $0x8] sm:$0xff] %v1179
        %1210 = vst [vmem:[%s520 + $0x10] sm:$0xff] %v1192
        %1211 = vst [vmem:[%s520 + $0x18] sm:$0xff] %v1205
        %v1212 = vpack.c.bf16 %v1166, %v1166
        %v1213 = vpack.c.bf16 %v1179, %v1179
        %v1214 = vpack.c.bf16 %v1192, %v1192
        %v1215 = vpack.c.bf16 %v1205, %v1205
        %v1216 = vld [vmem:[#allocation2] sm:$0xff]
        %v1217 = vld [vmem:[#allocation2 + $0x8] sm:$0xff]
        %v1218 = vld [vmem:[#allocation2 + $0x10] sm:$0xff]
        %v1219 = vld [vmem:[#allocation2 + $0x18] sm:$0xff]
        %v1220 = vld [vmem:[#allocation2 + $0x20] sm:$0xff]
        %v1221 = vld [vmem:[#allocation2 + $0x28] sm:$0xff]
        %v1222 = vld [vmem:[#allocation2 + $0x30] sm:$0xff]
        %v1223 = vld [vmem:[#allocation2 + $0x38] sm:$0xff]
        %v1224 = vld [vmem:[#allocation2 + $0x40] sm:$0xff]
        %v1225 = vld [vmem:[#allocation2 + $0x48] sm:$0xff]
        %v1226 = vld [vmem:[#allocation2 + $0x50] sm:$0xff]
        %v1227 = vld [vmem:[#allocation2 + $0x58] sm:$0xff]
        %v1228 = vld [vmem:[#allocation2 + $0x60] sm:$0xff]
        %v1229 = vld [vmem:[#allocation2 + $0x68] sm:$0xff]
        %v1230 = vld [vmem:[#allocation2 + $0x70] sm:$0xff]
        %v1231 = vld [vmem:[#allocation2 + $0x78] sm:$0xff]
        %v1232 = vld [vmem:[#allocation2 + $0x80] sm:$0xff]
        %v1233 = vld [vmem:[#allocation2 + $0x88] sm:$0xff]
        %v1234 = vld [vmem:[#allocation2 + $0x90] sm:$0xff]
        %v1235 = vld [vmem:[#allocation2 + $0x98] sm:$0xff]
        %v1236 = vld [vmem:[#allocation2 + $0xa0] sm:$0xff]
        %v1237 = vld [vmem:[#allocation2 + $0xa8] sm:$0xff]
        %v1238 = vld [vmem:[#allocation2 + $0xb0] sm:$0xff]
        %v1239 = vld [vmem:[#allocation2 + $0xb8] sm:$0xff]
        %v1240 = vld [vmem:[#allocation2 + $0xc0] sm:$0xff]
        %v1241 = vld [vmem:[#allocation2 + $0xc8] sm:$0xff]
        %v1242 = vld [vmem:[#allocation2 + $0xd0] sm:$0xff]
        %v1243 = vld [vmem:[#allocation2 + $0xd8] sm:$0xff]
        %v1244 = vld [vmem:[#allocation2 + $0xe0] sm:$0xff]
        %v1245 = vld [vmem:[#allocation2 + $0xe8] sm:$0xff]
        %v1246 = vld [vmem:[#allocation2 + $0xf0] sm:$0xff]
        %v1247 = vld [vmem:[#allocation2 + $0xf8] sm:$0xff]
        %v1248 = vld [vmem:[#allocation2 + $0x100] sm:$0xff]
        %v1249 = vld [vmem:[#allocation2 + $0x108] sm:$0xff]
        %v1250 = vld [vmem:[#allocation2 + $0x110] sm:$0xff]
        %v1251 = vld [vmem:[#allocation2 + $0x118] sm:$0xff]
        %v1252 = vld [vmem:[#allocation2 + $0x120] sm:$0xff]
        %v1253 = vld [vmem:[#allocation2 + $0x128] sm:$0xff]
        %v1254 = vld [vmem:[#allocation2 + $0x130] sm:$0xff]
        %v1255 = vld [vmem:[#allocation2 + $0x138] sm:$0xff]
        %v1256 = vld [vmem:[#allocation2 + $0x140] sm:$0xff]
        %v1257 = vld [vmem:[#allocation2 + $0x148] sm:$0xff]
        %v1258 = vld [vmem:[#allocation2 + $0x150] sm:$0xff]
        %v1259 = vld [vmem:[#allocation2 + $0x158] sm:$0xff]
        %v1260 = vld [vmem:[#allocation2 + $0x160] sm:$0xff]
        %v1261 = vld [vmem:[#allocation2 + $0x168] sm:$0xff]
        %v1262 = vld [vmem:[#allocation2 + $0x170] sm:$0xff]
        %v1263 = vld [vmem:[#allocation2 + $0x178] sm:$0xff]
        %v1264 = vld [vmem:[#allocation2 + $0x180] sm:$0xff]
        %v1265 = vld [vmem:[#allocation2 + $0x188] sm:$0xff]
        %v1266 = vld [vmem:[#allocation2 + $0x190] sm:$0xff]
        %v1267 = vld [vmem:[#allocation2 + $0x198] sm:$0xff]
        %v1268 = vld [vmem:[#allocation2 + $0x1a0] sm:$0xff]
        %v1269 = vld [vmem:[#allocation2 + $0x1a8] sm:$0xff]
        %v1270 = vld [vmem:[#allocation2 + $0x1b0] sm:$0xff]
        %v1271 = vld [vmem:[#allocation2 + $0x1b8] sm:$0xff]
        %v1272 = vld [vmem:[#allocation2 + $0x1c0] sm:$0xff]
        %v1273 = vld [vmem:[#allocation2 + $0x1c8] sm:$0xff]
        %v1274 = vld [vmem:[#allocation2 + $0x1d0] sm:$0xff]
        %v1275 = vld [vmem:[#allocation2 + $0x1d8] sm:$0xff]
        %v1276 = vld [vmem:[#allocation2 + $0x1e0] sm:$0xff]
        %v1277 = vld [vmem:[#allocation2 + $0x1e8] sm:$0xff]
        %v1278 = vld [vmem:[#allocation2 + $0x1f0] sm:$0xff]
        %v1279 = vld [vmem:[#allocation2 + $0x1f8] sm:$0xff]
        %v1280 = vld [vmem:[#allocation2 + $0x200] sm:$0xff]
        %v1281 = vld [vmem:[#allocation2 + $0x208] sm:$0xff]
        %v1282 = vld [vmem:[#allocation2 + $0x210] sm:$0xff]
        %v1283 = vld [vmem:[#allocation2 + $0x218] sm:$0xff]
        %v1284 = vld [vmem:[#allocation2 + $0x220] sm:$0xff]
        %v1285 = vld [vmem:[#allocation2 + $0x228] sm:$0xff]
        %v1286 = vld [vmem:[#allocation2 + $0x230] sm:$0xff]
        %v1287 = vld [vmem:[#allocation2 + $0x238] sm:$0xff]
        %v1288 = vld [vmem:[#allocation2 + $0x240] sm:$0xff]
        %v1289 = vld [vmem:[#allocation2 + $0x248] sm:$0xff]
        %v1290 = vld [vmem:[#allocation2 + $0x250] sm:$0xff]
        %v1291 = vld [vmem:[#allocation2 + $0x258] sm:$0xff]
        %v1292 = vld [vmem:[#allocation2 + $0x260] sm:$0xff]
        %v1293 = vld [vmem:[#allocation2 + $0x268] sm:$0xff]
        %v1294 = vld [vmem:[#allocation2 + $0x270] sm:$0xff]
        %v1295 = vld [vmem:[#allocation2 + $0x278] sm:$0xff]
        %v1296 = vld [vmem:[#allocation2 + $0x280] sm:$0xff]
        %v1297 = vld [vmem:[#allocation2 + $0x288] sm:$0xff]
        %v1298 = vld [vmem:[#allocation2 + $0x290] sm:$0xff]
        %v1299 = vld [vmem:[#allocation2 + $0x298] sm:$0xff]
        %v1300 = vld [vmem:[#allocation2 + $0x2a0] sm:$0xff]
        %v1301 = vld [vmem:[#allocation2 + $0x2a8] sm:$0xff]
        %v1302 = vld [vmem:[#allocation2 + $0x2b0] sm:$0xff]
        %v1303 = vld [vmem:[#allocation2 + $0x2b8] sm:$0xff]
        %v1304 = vld [vmem:[#allocation2 + $0x2c0] sm:$0xff]
        %v1305 = vld [vmem:[#allocation2 + $0x2c8] sm:$0xff]
        %v1306 = vld [vmem:[#allocation2 + $0x2d0] sm:$0xff]
        %v1307 = vld [vmem:[#allocation2 + $0x2d8] sm:$0xff]
        %v1308 = vld [vmem:[#allocation2 + $0x2e0] sm:$0xff]
        %v1309 = vld [vmem:[#allocation2 + $0x2e8] sm:$0xff]
        %v1310 = vld [vmem:[#allocation2 + $0x2f0] sm:$0xff]
        %v1311 = vld [vmem:[#allocation2 + $0x2f8] sm:$0xff]
        %v1312 = vld [vmem:[#allocation2 + $0x300] sm:$0xff]
        %v1313 = vld [vmem:[#allocation2 + $0x308] sm:$0xff]
        %v1314 = vld [vmem:[#allocation2 + $0x310] sm:$0xff]
        %v1315 = vld [vmem:[#allocation2 + $0x318] sm:$0xff]
        %v1316 = vld [vmem:[#allocation2 + $0x320] sm:$0xff]
        %v1317 = vld [vmem:[#allocation2 + $0x328] sm:$0xff]
        %v1318 = vld [vmem:[#allocation2 + $0x330] sm:$0xff]
        %v1319 = vld [vmem:[#allocation2 + $0x338] sm:$0xff]
        %v1320 = vld [vmem:[#allocation2 + $0x340] sm:$0xff]
        %v1321 = vld [vmem:[#allocation2 + $0x348] sm:$0xff]
        %v1322 = vld [vmem:[#allocation2 + $0x350] sm:$0xff]
        %v1323 = vld [vmem:[#allocation2 + $0x358] sm:$0xff]
        %v1324 = vld [vmem:[#allocation2 + $0x360] sm:$0xff]
        %v1325 = vld [vmem:[#allocation2 + $0x368] sm:$0xff]
        %v1326 = vld [vmem:[#allocation2 + $0x370] sm:$0xff]
        %v1327 = vld [vmem:[#allocation2 + $0x378] sm:$0xff]
        %v1328 = vld [vmem:[#allocation2 + $0x380] sm:$0xff]
        %v1329 = vld [vmem:[#allocation2 + $0x388] sm:$0xff]
        %v1330 = vld [vmem:[#allocation2 + $0x390] sm:$0xff]
        %v1331 = vld [vmem:[#allocation2 + $0x398] sm:$0xff]
        %v1332 = vld [vmem:[#allocation2 + $0x3a0] sm:$0xff]
        %v1333 = vld [vmem:[#allocation2 + $0x3a8] sm:$0xff]
        %v1334 = vld [vmem:[#allocation2 + $0x3b0] sm:$0xff]
        %v1335 = vld [vmem:[#allocation2 + $0x3b8] sm:$0xff]
        %v1336 = vld [vmem:[#allocation2 + $0x3c0] sm:$0xff]
        %v1337 = vld [vmem:[#allocation2 + $0x3c8] sm:$0xff]
        %v1338 = vld [vmem:[#allocation2 + $0x3d0] sm:$0xff]
        %v1339 = vld [vmem:[#allocation2 + $0x3d8] sm:$0xff]
        %v1340 = vld [vmem:[#allocation2 + $0x3e0] sm:$0xff]
        %v1341 = vld [vmem:[#allocation2 + $0x3e8] sm:$0xff]
        %v1342 = vld [vmem:[#allocation2 + $0x3f0] sm:$0xff]
        %v1343 = vld [vmem:[#allocation2 + $0x3f8] sm:$0xff]
        %v1344 = vld [vmem:[#allocation2 + $0x400] sm:$0xff]
        %v1345 = vld [vmem:[#allocation2 + $0x408] sm:$0xff]
        %v1346 = vld [vmem:[#allocation2 + $0x410] sm:$0xff]
        %v1347 = vld [vmem:[#allocation2 + $0x418] sm:$0xff]
        %v1348 = vld [vmem:[#allocation2 + $0x420] sm:$0xff]
        %v1349 = vld [vmem:[#allocation2 + $0x428] sm:$0xff]
        %v1350 = vld [vmem:[#allocation2 + $0x430] sm:$0xff]
        %v1351 = vld [vmem:[#allocation2 + $0x438] sm:$0xff]
        %v1352 = vld [vmem:[#allocation2 + $0x440] sm:$0xff]
        %v1353 = vld [vmem:[#allocation2 + $0x448] sm:$0xff]
        %v1354 = vld [vmem:[#allocation2 + $0x450] sm:$0xff]
        %v1355 = vld [vmem:[#allocation2 + $0x458] sm:$0xff]
        %v1356 = vld [vmem:[#allocation2 + $0x460] sm:$0xff]
        %v1357 = vld [vmem:[#allocation2 + $0x468] sm:$0xff]
        %v1358 = vld [vmem:[#allocation2 + $0x470] sm:$0xff]
        %v1359 = vld [vmem:[#allocation2 + $0x478] sm:$0xff]
        %v1360 = vld [vmem:[#allocation2 + $0x480] sm:$0xff]
        %v1361 = vld [vmem:[#allocation2 + $0x488] sm:$0xff]
        %v1362 = vld [vmem:[#allocation2 + $0x490] sm:$0xff]
        %v1363 = vld [vmem:[#allocation2 + $0x498] sm:$0xff]
        %v1364 = vld [vmem:[#allocation2 + $0x4a0] sm:$0xff]
        %v1365 = vld [vmem:[#allocation2 + $0x4a8] sm:$0xff]
        %v1366 = vld [vmem:[#allocation2 + $0x4b0] sm:$0xff]
        %v1367 = vld [vmem:[#allocation2 + $0x4b8] sm:$0xff]
        %v1368 = vld [vmem:[#allocation2 + $0x4c0] sm:$0xff]
        %v1369 = vld [vmem:[#allocation2 + $0x4c8] sm:$0xff]
        %v1370 = vld [vmem:[#allocation2 + $0x4d0] sm:$0xff]
        %v1371 = vld [vmem:[#allocation2 + $0x4d8] sm:$0xff]
        %v1372 = vld [vmem:[#allocation2 + $0x4e0] sm:$0xff]
        %v1373 = vld [vmem:[#allocation2 + $0x4e8] sm:$0xff]
        %v1374 = vld [vmem:[#allocation2 + $0x4f0] sm:$0xff]
        %v1375 = vld [vmem:[#allocation2 + $0x4f8] sm:$0xff]
        %v1376 = vld [vmem:[#allocation2 + $0x500] sm:$0xff]
        %v1377 = vld [vmem:[#allocation2 + $0x508] sm:$0xff]
        %v1378 = vld [vmem:[#allocation2 + $0x510] sm:$0xff]
        %v1379 = vld [vmem:[#allocation2 + $0x518] sm:$0xff]
        %v1380 = vld [vmem:[#allocation2 + $0x520] sm:$0xff]
        %v1381 = vld [vmem:[#allocation2 + $0x528] sm:$0xff]
        %v1382 = vld [vmem:[#allocation2 + $0x530] sm:$0xff]
        %v1383 = vld [vmem:[#allocation2 + $0x538] sm:$0xff]
        %v1384 = vld [vmem:[#allocation2 + $0x540] sm:$0xff]
        %v1385 = vld [vmem:[#allocation2 + $0x548] sm:$0xff]
        %v1386 = vld [vmem:[#allocation2 + $0x550] sm:$0xff]
        %v1387 = vld [vmem:[#allocation2 + $0x558] sm:$0xff]
        %v1388 = vld [vmem:[#allocation2 + $0x560] sm:$0xff]
        %v1389 = vld [vmem:[#allocation2 + $0x568] sm:$0xff]
        %v1390 = vld [vmem:[#allocation2 + $0x570] sm:$0xff]
        %v1391 = vld [vmem:[#allocation2 + $0x578] sm:$0xff]
        %v1392 = vld [vmem:[#allocation2 + $0x580] sm:$0xff]
        %v1393 = vld [vmem:[#allocation2 + $0x588] sm:$0xff]
        %v1394 = vld [vmem:[#allocation2 + $0x590] sm:$0xff]
        %v1395 = vld [vmem:[#allocation2 + $0x598] sm:$0xff]
        %v1396 = vld [vmem:[#allocation2 + $0x5a0] sm:$0xff]
        %v1397 = vld [vmem:[#allocation2 + $0x5a8] sm:$0xff]
        %v1398 = vld [vmem:[#allocation2 + $0x5b0] sm:$0xff]
        %v1399 = vld [vmem:[#allocation2 + $0x5b8] sm:$0xff]
        %v1400 = vld [vmem:[#allocation2 + $0x5c0] sm:$0xff]
        %v1401 = vld [vmem:[#allocation2 + $0x5c8] sm:$0xff]
        %v1402 = vld [vmem:[#allocation2 + $0x5d0] sm:$0xff]
        %v1403 = vld [vmem:[#allocation2 + $0x5d8] sm:$0xff]
        %v1404 = vld [vmem:[#allocation2 + $0x5e0] sm:$0xff]
        %v1405 = vld [vmem:[#allocation2 + $0x5e8] sm:$0xff]
        %v1406 = vld [vmem:[#allocation2 + $0x5f0] sm:$0xff]
        %v1407 = vld [vmem:[#allocation2 + $0x5f8] sm:$0xff]
        %v1408 = vld [vmem:[#allocation2 + $0x600] sm:$0xff]
        %v1409 = vld [vmem:[#allocation2 + $0x608] sm:$0xff]
        %v1410 = vld [vmem:[#allocation2 + $0x610] sm:$0xff]
        %v1411 = vld [vmem:[#allocation2 + $0x618] sm:$0xff]
        %v1412 = vld [vmem:[#allocation2 + $0x620] sm:$0xff]
        %v1413 = vld [vmem:[#allocation2 + $0x628] sm:$0xff]
        %v1414 = vld [vmem:[#allocation2 + $0x630] sm:$0xff]
        %v1415 = vld [vmem:[#allocation2 + $0x638] sm:$0xff]
        %v1416 = vld [vmem:[#allocation2 + $0x640] sm:$0xff]
        %v1417 = vld [vmem:[#allocation2 + $0x648] sm:$0xff]
        %v1418 = vld [vmem:[#allocation2 + $0x650] sm:$0xff]
        %v1419 = vld [vmem:[#allocation2 + $0x658] sm:$0xff]
        %v1420 = vld [vmem:[#allocation2 + $0x660] sm:$0xff]
        %v1421 = vld [vmem:[#allocation2 + $0x668] sm:$0xff]
        %v1422 = vld [vmem:[#allocation2 + $0x670] sm:$0xff]
        %v1423 = vld [vmem:[#allocation2 + $0x678] sm:$0xff]
        %v1424 = vld [vmem:[#allocation2 + $0x680] sm:$0xff]
        %v1425 = vld [vmem:[#allocation2 + $0x688] sm:$0xff]
        %v1426 = vld [vmem:[#allocation2 + $0x690] sm:$0xff]
        %v1427 = vld [vmem:[#allocation2 + $0x698] sm:$0xff]
        %v1428 = vld [vmem:[#allocation2 + $0x6a0] sm:$0xff]
        %v1429 = vld [vmem:[#allocation2 + $0x6a8] sm:$0xff]
        %v1430 = vld [vmem:[#allocation2 + $0x6b0] sm:$0xff]
        %v1431 = vld [vmem:[#allocation2 + $0x6b8] sm:$0xff]
        %v1432 = vld [vmem:[#allocation2 + $0x6c0] sm:$0xff]
        %v1433 = vld [vmem:[#allocation2 + $0x6c8] sm:$0xff]
        %v1434 = vld [vmem:[#allocation2 + $0x6d0] sm:$0xff]
        %v1435 = vld [vmem:[#allocation2 + $0x6d8] sm:$0xff]
        %v1436 = vld [vmem:[#allocation2 + $0x6e0] sm:$0xff]
        %v1437 = vld [vmem:[#allocation2 + $0x6e8] sm:$0xff]
        %v1438 = vld [vmem:[#allocation2 + $0x6f0] sm:$0xff]
        %v1439 = vld [vmem:[#allocation2 + $0x6f8] sm:$0xff]
        %v1440 = vld [vmem:[#allocation2 + $0x700] sm:$0xff]
        %v1441 = vld [vmem:[#allocation2 + $0x708] sm:$0xff]
        %v1442 = vld [vmem:[#allocation2 + $0x710] sm:$0xff]
        %v1443 = vld [vmem:[#allocation2 + $0x718] sm:$0xff]
        %v1444 = vld [vmem:[#allocation2 + $0x720] sm:$0xff]
        %v1445 = vld [vmem:[#allocation2 + $0x728] sm:$0xff]
        %v1446 = vld [vmem:[#allocation2 + $0x730] sm:$0xff]
        %v1447 = vld [vmem:[#allocation2 + $0x738] sm:$0xff]
        %v1448 = vld [vmem:[#allocation2 + $0x740] sm:$0xff]
        %v1449 = vld [vmem:[#allocation2 + $0x748] sm:$0xff]
        %v1450 = vld [vmem:[#allocation2 + $0x750] sm:$0xff]
        %v1451 = vld [vmem:[#allocation2 + $0x758] sm:$0xff]
        %v1452 = vld [vmem:[#allocation2 + $0x760] sm:$0xff]
        %v1453 = vld [vmem:[#allocation2 + $0x768] sm:$0xff]
        %v1454 = vld [vmem:[#allocation2 + $0x770] sm:$0xff]
        %v1455 = vld [vmem:[#allocation2 + $0x778] sm:$0xff]
        %v1456 = vld [vmem:[#allocation2 + $0x780] sm:$0xff]
        %v1457 = vld [vmem:[#allocation2 + $0x788] sm:$0xff]
        %v1458 = vld [vmem:[#allocation2 + $0x790] sm:$0xff]
        %v1459 = vld [vmem:[#allocation2 + $0x798] sm:$0xff]
        %v1460 = vld [vmem:[#allocation2 + $0x7a0] sm:$0xff]
        %v1461 = vld [vmem:[#allocation2 + $0x7a8] sm:$0xff]
        %v1462 = vld [vmem:[#allocation2 + $0x7b0] sm:$0xff]
        %v1463 = vld [vmem:[#allocation2 + $0x7b8] sm:$0xff]
        %v1464 = vld [vmem:[#allocation2 + $0x7c0] sm:$0xff]
        %v1465 = vld [vmem:[#allocation2 + $0x7c8] sm:$0xff]
        %v1466 = vld [vmem:[#allocation2 + $0x7d0] sm:$0xff]
        %v1467 = vld [vmem:[#allocation2 + $0x7d8] sm:$0xff]
        %v1468 = vld [vmem:[#allocation2 + $0x7e0] sm:$0xff]
        %v1469 = vld [vmem:[#allocation2 + $0x7e8] sm:$0xff]
        %v1470 = vld [vmem:[#allocation2 + $0x7f0] sm:$0xff]
        %v1471 = vld [vmem:[#allocation2 + $0x7f8] sm:$0xff]
        %v1472 = vld [vmem:[%s9] sm:$0xff]
        %v1474 = vperm.slane %v1472, 0
        %v1475 = vperm.slane %v1472, 1
        %v1476 = vperm.slane %v1472, 2
        %v1477 = vperm.slane %v1472, 3
        %v1478 = vperm.slane %v1472, 4
        %v1479 = vperm.slane %v1472, 5
        %v1480 = vperm.slane %v1472, 6
        %v1481 = vperm.slane %v1472, 7
        %v1746 = vunpack.c.l.b16 %v1216
        %v1747 = vunpack.c.h.b16 %v1216
        %v1748 = vunpack.c.l.b16 %v1217
        %v1749 = vunpack.c.h.b16 %v1217
        %v1750 = vunpack.c.l.b16 %v1218
        %v1751 = vunpack.c.h.b16 %v1218
        %v1752 = vunpack.c.l.b16 %v1219
        %v1753 = vunpack.c.h.b16 %v1219
        %v1754 = vunpack.c.l.b16 %v1220
        %v1755 = vunpack.c.h.b16 %v1220
        %v1756 = vunpack.c.l.b16 %v1221
        %v1757 = vunpack.c.h.b16 %v1221
        %v1758 = vunpack.c.l.b16 %v1222
        %v1759 = vunpack.c.h.b16 %v1222
        %v1760 = vunpack.c.l.b16 %v1223
        %v1761 = vunpack.c.h.b16 %v1223
        %v1762 = vunpack.c.l.b16 %v1224
        %v1763 = vunpack.c.h.b16 %v1224
        %v1764 = vunpack.c.l.b16 %v1225
        %v1765 = vunpack.c.h.b16 %v1225
        %v1766 = vunpack.c.l.b16 %v1226
        %v1767 = vunpack.c.h.b16 %v1226
        %v1768 = vunpack.c.l.b16 %v1227
        %v1769 = vunpack.c.h.b16 %v1227
        %v1770 = vunpack.c.l.b16 %v1228
        %v1771 = vunpack.c.h.b16 %v1228
        %v1772 = vunpack.c.l.b16 %v1229
        %v1773 = vunpack.c.h.b16 %v1229
        %v1774 = vunpack.c.l.b16 %v1230
        %v1775 = vunpack.c.h.b16 %v1230
        %v1776 = vunpack.c.l.b16 %v1231
        %v1777 = vunpack.c.h.b16 %v1231
        %v1778 = vunpack.c.l.b16 %v1232
        %v1779 = vunpack.c.h.b16 %v1232
        %v1780 = vunpack.c.l.b16 %v1233
        %v1781 = vunpack.c.h.b16 %v1233
        %v1782 = vunpack.c.l.b16 %v1234
        %v1783 = vunpack.c.h.b16 %v1234
        %v1784 = vunpack.c.l.b16 %v1235
        %v1785 = vunpack.c.h.b16 %v1235
        %v1786 = vunpack.c.l.b16 %v1236
        %v1787 = vunpack.c.h.b16 %v1236
        %v1788 = vunpack.c.l.b16 %v1237
        %v1789 = vunpack.c.h.b16 %v1237
        %v1790 = vunpack.c.l.b16 %v1238
        %v1791 = vunpack.c.h.b16 %v1238
        %v1792 = vunpack.c.l.b16 %v1239
        %v1793 = vunpack.c.h.b16 %v1239
        %v1794 = vunpack.c.l.b16 %v1240
        %v1795 = vunpack.c.h.b16 %v1240
        %v1796 = vunpack.c.l.b16 %v1241
        %v1797 = vunpack.c.h.b16 %v1241
        %v1798 = vunpack.c.l.b16 %v1242
        %v1799 = vunpack.c.h.b16 %v1242
        %v1800 = vunpack.c.l.b16 %v1243
        %v1801 = vunpack.c.h.b16 %v1243
        %v1802 = vunpack.c.l.b16 %v1244
        %v1803 = vunpack.c.h.b16 %v1244
        %v1804 = vunpack.c.l.b16 %v1245
        %v1805 = vunpack.c.h.b16 %v1245
        %v1806 = vunpack.c.l.b16 %v1246
        %v1807 = vunpack.c.h.b16 %v1246
        %v1808 = vunpack.c.l.b16 %v1247
        %v1809 = vunpack.c.h.b16 %v1247
        %v1810 = vunpack.c.l.b16 %v1248
        %v1811 = vunpack.c.h.b16 %v1248
        %v1812 = vunpack.c.l.b16 %v1249
        %v1813 = vunpack.c.h.b16 %v1249
        %v1814 = vunpack.c.l.b16 %v1250
        %v1815 = vunpack.c.h.b16 %v1250
        %v1816 = vunpack.c.l.b16 %v1251
        %v1817 = vunpack.c.h.b16 %v1251
        %v1818 = vunpack.c.l.b16 %v1252
        %v1819 = vunpack.c.h.b16 %v1252
        %v1820 = vunpack.c.l.b16 %v1253
        %v1821 = vunpack.c.h.b16 %v1253
        %v1822 = vunpack.c.l.b16 %v1254
        %v1823 = vunpack.c.h.b16 %v1254
        %v1824 = vunpack.c.l.b16 %v1255
        %v1825 = vunpack.c.h.b16 %v1255
        %v1826 = vunpack.c.l.b16 %v1256
        %v1827 = vunpack.c.h.b16 %v1256
        %v1828 = vunpack.c.l.b16 %v1257
        %v1829 = vunpack.c.h.b16 %v1257
        %v1830 = vunpack.c.l.b16 %v1258
        %v1831 = vunpack.c.h.b16 %v1258
        %v1832 = vunpack.c.l.b16 %v1259
        %v1833 = vunpack.c.h.b16 %v1259
        %v1834 = vunpack.c.l.b16 %v1260
        %v1835 = vunpack.c.h.b16 %v1260
        %v1836 = vunpack.c.l.b16 %v1261
        %v1837 = vunpack.c.h.b16 %v1261
        %v1838 = vunpack.c.l.b16 %v1262
        %v1839 = vunpack.c.h.b16 %v1262
        %v1840 = vunpack.c.l.b16 %v1263
        %v1841 = vunpack.c.h.b16 %v1263
        %v1842 = vunpack.c.l.b16 %v1264
        %v1843 = vunpack.c.h.b16 %v1264
        %v1844 = vunpack.c.l.b16 %v1265
        %v1845 = vunpack.c.h.b16 %v1265
        %v1846 = vunpack.c.l.b16 %v1266
        %v1847 = vunpack.c.h.b16 %v1266
        %v1848 = vunpack.c.l.b16 %v1267
        %v1849 = vunpack.c.h.b16 %v1267
        %v1850 = vunpack.c.l.b16 %v1268
        %v1851 = vunpack.c.h.b16 %v1268
        %v1852 = vunpack.c.l.b16 %v1269
        %v1853 = vunpack.c.h.b16 %v1269
        %v1854 = vunpack.c.l.b16 %v1270
        %v1855 = vunpack.c.h.b16 %v1270
        %v1856 = vunpack.c.l.b16 %v1271
        %v1857 = vunpack.c.h.b16 %v1271
        %v1858 = vunpack.c.l.b16 %v1272
        %v1859 = vunpack.c.h.b16 %v1272
        %v1860 = vunpack.c.l.b16 %v1273
        %v1861 = vunpack.c.h.b16 %v1273
        %v1862 = vunpack.c.l.b16 %v1274
        %v1863 = vunpack.c.h.b16 %v1274
        %v1864 = vunpack.c.l.b16 %v1275
        %v1865 = vunpack.c.h.b16 %v1275
        %v1866 = vunpack.c.l.b16 %v1276
        %v1867 = vunpack.c.h.b16 %v1276
        %v1868 = vunpack.c.l.b16 %v1277
        %v1869 = vunpack.c.h.b16 %v1277
        %v1870 = vunpack.c.l.b16 %v1278
        %v1871 = vunpack.c.h.b16 %v1278
        %v1872 = vunpack.c.l.b16 %v1279
        %v1873 = vunpack.c.h.b16 %v1279
        %v1874 = vunpack.c.l.b16 %v1280
        %v1875 = vunpack.c.h.b16 %v1280
        %v1876 = vunpack.c.l.b16 %v1281
        %v1877 = vunpack.c.h.b16 %v1281
        %v1878 = vunpack.c.l.b16 %v1282
        %v1879 = vunpack.c.h.b16 %v1282
        %v1880 = vunpack.c.l.b16 %v1283
        %v1881 = vunpack.c.h.b16 %v1283
        %v1882 = vunpack.c.l.b16 %v1284
        %v1883 = vunpack.c.h.b16 %v1284
        %v1884 = vunpack.c.l.b16 %v1285
        %v1885 = vunpack.c.h.b16 %v1285
        %v1886 = vunpack.c.l.b16 %v1286
        %v1887 = vunpack.c.h.b16 %v1286
        %v1888 = vunpack.c.l.b16 %v1287
        %v1889 = vunpack.c.h.b16 %v1287
        %v1890 = vunpack.c.l.b16 %v1288
        %v1891 = vunpack.c.h.b16 %v1288
        %v1892 = vunpack.c.l.b16 %v1289
        %v1893 = vunpack.c.h.b16 %v1289
        %v1894 = vunpack.c.l.b16 %v1290
        %v1895 = vunpack.c.h.b16 %v1290
        %v1896 = vunpack.c.l.b16 %v1291
        %v1897 = vunpack.c.h.b16 %v1291
        %v1898 = vunpack.c.l.b16 %v1292
        %v1899 = vunpack.c.h.b16 %v1292
        %v1900 = vunpack.c.l.b16 %v1293
        %v1901 = vunpack.c.h.b16 %v1293
        %v1902 = vunpack.c.l.b16 %v1294
        %v1903 = vunpack.c.h.b16 %v1294
        %v1904 = vunpack.c.l.b16 %v1295
        %v1905 = vunpack.c.h.b16 %v1295
        %v1906 = vunpack.c.l.b16 %v1296
        %v1907 = vunpack.c.h.b16 %v1296
        %v1908 = vunpack.c.l.b16 %v1297
        %v1909 = vunpack.c.h.b16 %v1297
        %v1910 = vunpack.c.l.b16 %v1298
        %v1911 = vunpack.c.h.b16 %v1298
        %v1912 = vunpack.c.l.b16 %v1299
        %v1913 = vunpack.c.h.b16 %v1299
        %v1914 = vunpack.c.l.b16 %v1300
        %v1915 = vunpack.c.h.b16 %v1300
        %v1916 = vunpack.c.l.b16 %v1301
        %v1917 = vunpack.c.h.b16 %v1301
        %v1918 = vunpack.c.l.b16 %v1302
        %v1919 = vunpack.c.h.b16 %v1302
        %v1920 = vunpack.c.l.b16 %v1303
        %v1921 = vunpack.c.h.b16 %v1303
        %v1922 = vunpack.c.l.b16 %v1304
        %v1923 = vunpack.c.h.b16 %v1304
        %v1924 = vunpack.c.l.b16 %v1305
        %v1925 = vunpack.c.h.b16 %v1305
        %v1926 = vunpack.c.l.b16 %v1306
        %v1927 = vunpack.c.h.b16 %v1306
        %v1928 = vunpack.c.l.b16 %v1307
        %v1929 = vunpack.c.h.b16 %v1307
        %v1930 = vunpack.c.l.b16 %v1308
        %v1931 = vunpack.c.h.b16 %v1308
        %v1932 = vunpack.c.l.b16 %v1309
        %v1933 = vunpack.c.h.b16 %v1309
        %v1934 = vunpack.c.l.b16 %v1310
        %v1935 = vunpack.c.h.b16 %v1310
        %v1936 = vunpack.c.l.b16 %v1311
        %v1937 = vunpack.c.h.b16 %v1311
        %v1938 = vunpack.c.l.b16 %v1312
        %v1939 = vunpack.c.h.b16 %v1312
        %v1940 = vunpack.c.l.b16 %v1313
        %v1941 = vunpack.c.h.b16 %v1313
        %v1942 = vunpack.c.l.b16 %v1314
        %v1943 = vunpack.c.h.b16 %v1314
        %v1944 = vunpack.c.l.b16 %v1315
        %v1945 = vunpack.c.h.b16 %v1315
        %v1946 = vunpack.c.l.b16 %v1316
        %v1947 = vunpack.c.h.b16 %v1316
        %v1948 = vunpack.c.l.b16 %v1317
        %v1949 = vunpack.c.h.b16 %v1317
        %v1950 = vunpack.c.l.b16 %v1318
        %v1951 = vunpack.c.h.b16 %v1318
        %v1952 = vunpack.c.l.b16 %v1319
        %v1953 = vunpack.c.h.b16 %v1319
        %v1954 = vunpack.c.l.b16 %v1320
        %v1955 = vunpack.c.h.b16 %v1320
        %v1956 = vunpack.c.l.b16 %v1321
        %v1957 = vunpack.c.h.b16 %v1321
        %v1958 = vunpack.c.l.b16 %v1322
        %v1959 = vunpack.c.h.b16 %v1322
        %v1960 = vunpack.c.l.b16 %v1323
        %v1961 = vunpack.c.h.b16 %v1323
        %v1962 = vunpack.c.l.b16 %v1324
        %v1963 = vunpack.c.h.b16 %v1324
        %v1964 = vunpack.c.l.b16 %v1325
        %v1965 = vunpack.c.h.b16 %v1325
        %v1966 = vunpack.c.l.b16 %v1326
        %v1967 = vunpack.c.h.b16 %v1326
        %v1968 = vunpack.c.l.b16 %v1327
        %v1969 = vunpack.c.h.b16 %v1327
        %v1970 = vunpack.c.l.b16 %v1328
        %v1971 = vunpack.c.h.b16 %v1328
        %v1972 = vunpack.c.l.b16 %v1329
        %v1973 = vunpack.c.h.b16 %v1329
        %v1974 = vunpack.c.l.b16 %v1330
        %v1975 = vunpack.c.h.b16 %v1330
        %v1976 = vunpack.c.l.b16 %v1331
        %v1977 = vunpack.c.h.b16 %v1331
        %v1978 = vunpack.c.l.b16 %v1332
        %v1979 = vunpack.c.h.b16 %v1332
        %v1980 = vunpack.c.l.b16 %v1333
        %v1981 = vunpack.c.h.b16 %v1333
        %v1982 = vunpack.c.l.b16 %v1334
        %v1983 = vunpack.c.h.b16 %v1334
        %v1984 = vunpack.c.l.b16 %v1335
        %v1985 = vunpack.c.h.b16 %v1335
        %v1986 = vunpack.c.l.b16 %v1336
        %v1987 = vunpack.c.h.b16 %v1336
        %v1988 = vunpack.c.l.b16 %v1337
        %v1989 = vunpack.c.h.b16 %v1337
        %v1990 = vunpack.c.l.b16 %v1338
        %v1991 = vunpack.c.h.b16 %v1338
        %v1992 = vunpack.c.l.b16 %v1339
        %v1993 = vunpack.c.h.b16 %v1339
        %v1994 = vunpack.c.l.b16 %v1340
        %v1995 = vunpack.c.h.b16 %v1340
        %v1996 = vunpack.c.l.b16 %v1341
        %v1997 = vunpack.c.h.b16 %v1341
        %v1998 = vunpack.c.l.b16 %v1342
        %v1999 = vunpack.c.h.b16 %v1342
        %v2000 = vunpack.c.l.b16 %v1343
        %v2001 = vunpack.c.h.b16 %v1343
        %v2002 = vunpack.c.l.b16 %v1344
        %v2003 = vunpack.c.h.b16 %v1344
        %v2004 = vunpack.c.l.b16 %v1345
        %v2005 = vunpack.c.h.b16 %v1345
        %v2006 = vunpack.c.l.b16 %v1346
        %v2007 = vunpack.c.h.b16 %v1346
        %v2008 = vunpack.c.l.b16 %v1347
        %v2009 = vunpack.c.h.b16 %v1347
        %v2010 = vunpack.c.l.b16 %v1348
        %v2011 = vunpack.c.h.b16 %v1348
        %v2012 = vunpack.c.l.b16 %v1349
        %v2013 = vunpack.c.h.b16 %v1349
        %v2014 = vunpack.c.l.b16 %v1350
        %v2015 = vunpack.c.h.b16 %v1350
        %v2016 = vunpack.c.l.b16 %v1351
        %v2017 = vunpack.c.h.b16 %v1351
        %v2018 = vunpack.c.l.b16 %v1352
        %v2019 = vunpack.c.h.b16 %v1352
        %v2020 = vunpack.c.l.b16 %v1353
        %v2021 = vunpack.c.h.b16 %v1353
        %v2022 = vunpack.c.l.b16 %v1354
        %v2023 = vunpack.c.h.b16 %v1354
        %v2024 = vunpack.c.l.b16 %v1355
        %v2025 = vunpack.c.h.b16 %v1355
        %v2026 = vunpack.c.l.b16 %v1356
        %v2027 = vunpack.c.h.b16 %v1356
        %v2028 = vunpack.c.l.b16 %v1357
        %v2029 = vunpack.c.h.b16 %v1357
        %v2030 = vunpack.c.l.b16 %v1358
        %v2031 = vunpack.c.h.b16 %v1358
        %v2032 = vunpack.c.l.b16 %v1359
        %v2033 = vunpack.c.h.b16 %v1359
        %v2034 = vunpack.c.l.b16 %v1360
        %v2035 = vunpack.c.h.b16 %v1360
        %v2036 = vunpack.c.l.b16 %v1361
        %v2037 = vunpack.c.h.b16 %v1361
        %v2038 = vunpack.c.l.b16 %v1362
        %v2039 = vunpack.c.h.b16 %v1362
        %v2040 = vunpack.c.l.b16 %v1363
        %v2041 = vunpack.c.h.b16 %v1363
        %v2042 = vunpack.c.l.b16 %v1364
        %v2043 = vunpack.c.h.b16 %v1364
        %v2044 = vunpack.c.l.b16 %v1365
        %v2045 = vunpack.c.h.b16 %v1365
        %v2046 = vunpack.c.l.b16 %v1366
        %v2047 = vunpack.c.h.b16 %v1366
        %v2048 = vunpack.c.l.b16 %v1367
        %v2049 = vunpack.c.h.b16 %v1367
        %v2050 = vunpack.c.l.b16 %v1368
        %v2051 = vunpack.c.h.b16 %v1368
        %v2052 = vunpack.c.l.b16 %v1369
        %v2053 = vunpack.c.h.b16 %v1369
        %v2054 = vunpack.c.l.b16 %v1370
        %v2055 = vunpack.c.h.b16 %v1370
        %v2056 = vunpack.c.l.b16 %v1371
        %v2057 = vunpack.c.h.b16 %v1371
        %v2058 = vunpack.c.l.b16 %v1372
        %v2059 = vunpack.c.h.b16 %v1372
        %v2060 = vunpack.c.l.b16 %v1373
        %v2061 = vunpack.c.h.b16 %v1373
        %v2062 = vunpack.c.l.b16 %v1374
        %v2063 = vunpack.c.h.b16 %v1374
        %v2064 = vunpack.c.l.b16 %v1375
        %v2065 = vunpack.c.h.b16 %v1375
        %v2066 = vunpack.c.l.b16 %v1376
        %v2067 = vunpack.c.h.b16 %v1376
        %v2068 = vunpack.c.l.b16 %v1377
        %v2069 = vunpack.c.h.b16 %v1377
        %v2070 = vunpack.c.l.b16 %v1378
        %v2071 = vunpack.c.h.b16 %v1378
        %v2072 = vunpack.c.l.b16 %v1379
        %v2073 = vunpack.c.h.b16 %v1379
        %v2074 = vunpack.c.l.b16 %v1380
        %v2075 = vunpack.c.h.b16 %v1380
        %v2076 = vunpack.c.l.b16 %v1381
        %v2077 = vunpack.c.h.b16 %v1381
        %v2078 = vunpack.c.l.b16 %v1382
        %v2079 = vunpack.c.h.b16 %v1382
        %v2080 = vunpack.c.l.b16 %v1383
        %v2081 = vunpack.c.h.b16 %v1383
        %v2082 = vunpack.c.l.b16 %v1384
        %v2083 = vunpack.c.h.b16 %v1384
        %v2084 = vunpack.c.l.b16 %v1385
        %v2085 = vunpack.c.h.b16 %v1385
        %v2086 = vunpack.c.l.b16 %v1386
        %v2087 = vunpack.c.h.b16 %v1386
        %v2088 = vunpack.c.l.b16 %v1387
        %v2089 = vunpack.c.h.b16 %v1387
        %v2090 = vunpack.c.l.b16 %v1388
        %v2091 = vunpack.c.h.b16 %v1388
        %v2092 = vunpack.c.l.b16 %v1389
        %v2093 = vunpack.c.h.b16 %v1389
        %v2094 = vunpack.c.l.b16 %v1390
        %v2095 = vunpack.c.h.b16 %v1390
        %v2096 = vunpack.c.l.b16 %v1391
        %v2097 = vunpack.c.h.b16 %v1391
        %v2098 = vunpack.c.l.b16 %v1392
        %v2099 = vunpack.c.h.b16 %v1392
        %v2100 = vunpack.c.l.b16 %v1393
        %v2101 = vunpack.c.h.b16 %v1393
        %v2102 = vunpack.c.l.b16 %v1394
        %v2103 = vunpack.c.h.b16 %v1394
        %v2104 = vunpack.c.l.b16 %v1395
        %v2105 = vunpack.c.h.b16 %v1395
        %v2106 = vunpack.c.l.b16 %v1396
        %v2107 = vunpack.c.h.b16 %v1396
        %v2108 = vunpack.c.l.b16 %v1397
        %v2109 = vunpack.c.h.b16 %v1397
        %v2110 = vunpack.c.l.b16 %v1398
        %v2111 = vunpack.c.h.b16 %v1398
        %v2112 = vunpack.c.l.b16 %v1399
        %v2113 = vunpack.c.h.b16 %v1399
        %v2114 = vunpack.c.l.b16 %v1400
        %v2115 = vunpack.c.h.b16 %v1400
        %v2116 = vunpack.c.l.b16 %v1401
        %v2117 = vunpack.c.h.b16 %v1401
        %v2118 = vunpack.c.l.b16 %v1402
        %v2119 = vunpack.c.h.b16 %v1402
        %v2120 = vunpack.c.l.b16 %v1403
        %v2121 = vunpack.c.h.b16 %v1403
        %v2122 = vunpack.c.l.b16 %v1404
        %v2123 = vunpack.c.h.b16 %v1404
        %v2124 = vunpack.c.l.b16 %v1405
        %v2125 = vunpack.c.h.b16 %v1405
        %v2126 = vunpack.c.l.b16 %v1406
        %v2127 = vunpack.c.h.b16 %v1406
        %v2128 = vunpack.c.l.b16 %v1407
        %v2129 = vunpack.c.h.b16 %v1407
        %v2130 = vunpack.c.l.b16 %v1408
        %v2131 = vunpack.c.h.b16 %v1408
        %v2132 = vunpack.c.l.b16 %v1409
        %v2133 = vunpack.c.h.b16 %v1409
        %v2134 = vunpack.c.l.b16 %v1410
        %v2135 = vunpack.c.h.b16 %v1410
        %v2136 = vunpack.c.l.b16 %v1411
        %v2137 = vunpack.c.h.b16 %v1411
        %v2138 = vunpack.c.l.b16 %v1412
        %v2139 = vunpack.c.h.b16 %v1412
        %v2140 = vunpack.c.l.b16 %v1413
        %v2141 = vunpack.c.h.b16 %v1413
        %v2142 = vunpack.c.l.b16 %v1414
        %v2143 = vunpack.c.h.b16 %v1414
        %v2144 = vunpack.c.l.b16 %v1415
        %v2145 = vunpack.c.h.b16 %v1415
        %v2146 = vunpack.c.l.b16 %v1416
        %v2147 = vunpack.c.h.b16 %v1416
        %v2148 = vunpack.c.l.b16 %v1417
        %v2149 = vunpack.c.h.b16 %v1417
        %v2150 = vunpack.c.l.b16 %v1418
        %v2151 = vunpack.c.h.b16 %v1418
        %v2152 = vunpack.c.l.b16 %v1419
        %v2153 = vunpack.c.h.b16 %v1419
        %v2154 = vunpack.c.l.b16 %v1420
        %v2155 = vunpack.c.h.b16 %v1420
        %v2156 = vunpack.c.l.b16 %v1421
        %v2157 = vunpack.c.h.b16 %v1421
        %v2158 = vunpack.c.l.b16 %v1422
        %v2159 = vunpack.c.h.b16 %v1422
        %v2160 = vunpack.c.l.b16 %v1423
        %v2161 = vunpack.c.h.b16 %v1423
        %v2162 = vunpack.c.l.b16 %v1424
        %v2163 = vunpack.c.h.b16 %v1424
        %v2164 = vunpack.c.l.b16 %v1425
        %v2165 = vunpack.c.h.b16 %v1425
        %v2166 = vunpack.c.l.b16 %v1426
        %v2167 = vunpack.c.h.b16 %v1426
        %v2168 = vunpack.c.l.b16 %v1427
        %v2169 = vunpack.c.h.b16 %v1427
        %v2170 = vunpack.c.l.b16 %v1428
        %v2171 = vunpack.c.h.b16 %v1428
        %v2172 = vunpack.c.l.b16 %v1429
        %v2173 = vunpack.c.h.b16 %v1429
        %v2174 = vunpack.c.l.b16 %v1430
        %v2175 = vunpack.c.h.b16 %v1430
        %v2176 = vunpack.c.l.b16 %v1431
        %v2177 = vunpack.c.h.b16 %v1431
        %v2178 = vunpack.c.l.b16 %v1432
        %v2179 = vunpack.c.h.b16 %v1432
        %v2180 = vunpack.c.l.b16 %v1433
        %v2181 = vunpack.c.h.b16 %v1433
        %v2182 = vunpack.c.l.b16 %v1434
        %v2183 = vunpack.c.h.b16 %v1434
        %v2184 = vunpack.c.l.b16 %v1435
        %v2185 = vunpack.c.h.b16 %v1435
        %v2186 = vunpack.c.l.b16 %v1436
        %v2187 = vunpack.c.h.b16 %v1436
        %v2188 = vunpack.c.l.b16 %v1437
        %v2189 = vunpack.c.h.b16 %v1437
        %v2190 = vunpack.c.l.b16 %v1438
        %v2191 = vunpack.c.h.b16 %v1438
        %v2192 = vunpack.c.l.b16 %v1439
        %v2193 = vunpack.c.h.b16 %v1439
        %v2194 = vunpack.c.l.b16 %v1440
        %v2195 = vunpack.c.h.b16 %v1440
        %v2196 = vunpack.c.l.b16 %v1441
        %v2197 = vunpack.c.h.b16 %v1441
        %v2198 = vunpack.c.l.b16 %v1442
        %v2199 = vunpack.c.h.b16 %v1442
        %v2200 = vunpack.c.l.b16 %v1443
        %v2201 = vunpack.c.h.b16 %v1443
        %v2202 = vunpack.c.l.b16 %v1444
        %v2203 = vunpack.c.h.b16 %v1444
        %v2204 = vunpack.c.l.b16 %v1445
        %v2205 = vunpack.c.h.b16 %v1445
        %v2206 = vunpack.c.l.b16 %v1446
        %v2207 = vunpack.c.h.b16 %v1446
        %v2208 = vunpack.c.l.b16 %v1447
        %v2209 = vunpack.c.h.b16 %v1447
        %v2210 = vunpack.c.l.b16 %v1448
        %v2211 = vunpack.c.h.b16 %v1448
        %v2212 = vunpack.c.l.b16 %v1449
        %v2213 = vunpack.c.h.b16 %v1449
        %v2214 = vunpack.c.l.b16 %v1450
        %v2215 = vunpack.c.h.b16 %v1450
        %v2216 = vunpack.c.l.b16 %v1451
        %v2217 = vunpack.c.h.b16 %v1451
        %v2218 = vunpack.c.l.b16 %v1452
        %v2219 = vunpack.c.h.b16 %v1452
        %v2220 = vunpack.c.l.b16 %v1453
        %v2221 = vunpack.c.h.b16 %v1453
        %v2222 = vunpack.c.l.b16 %v1454
        %v2223 = vunpack.c.h.b16 %v1454
        %v2224 = vunpack.c.l.b16 %v1455
        %v2225 = vunpack.c.h.b16 %v1455
        %v2226 = vunpack.c.l.b16 %v1456
        %v2227 = vunpack.c.h.b16 %v1456
        %v2228 = vunpack.c.l.b16 %v1457
        %v2229 = vunpack.c.h.b16 %v1457
        %v2230 = vunpack.c.l.b16 %v1458
        %v2231 = vunpack.c.h.b16 %v1458
        %v2232 = vunpack.c.l.b16 %v1459
        %v2233 = vunpack.c.h.b16 %v1459
        %v2234 = vunpack.c.l.b16 %v1460
        %v2235 = vunpack.c.h.b16 %v1460
        %v2236 = vunpack.c.l.b16 %v1461
        %v2237 = vunpack.c.h.b16 %v1461
        %v2238 = vunpack.c.l.b16 %v1462
        %v2239 = vunpack.c.h.b16 %v1462
        %v2240 = vunpack.c.l.b16 %v1463
        %v2241 = vunpack.c.h.b16 %v1463
        %v2242 = vunpack.c.l.b16 %v1464
        %v2243 = vunpack.c.h.b16 %v1464
        %v2244 = vunpack.c.l.b16 %v1465
        %v2245 = vunpack.c.h.b16 %v1465
        %v2246 = vunpack.c.l.b16 %v1466
        %v2247 = vunpack.c.h.b16 %v1466
        %v2248 = vunpack.c.l.b16 %v1467
        %v2249 = vunpack.c.h.b16 %v1467
        %v2250 = vunpack.c.l.b16 %v1468
        %v2251 = vunpack.c.h.b16 %v1468
        %v2252 = vunpack.c.l.b16 %v1469
        %v2253 = vunpack.c.h.b16 %v1469
        %v2254 = vunpack.c.l.b16 %v1470
        %v2255 = vunpack.c.h.b16 %v1470
        %v2256 = vunpack.c.l.b16 %v1471
        %v2257 = vunpack.c.h.b16 %v1471
        %v2258 = vpack.c.b16 %v1754, %v1746
        %v2259 = vpack.c.b16 %v1755, %v1747
        %v2260 = vpack.c.b16 %v1756, %v1748
        %v2261 = vpack.c.b16 %v1757, %v1749
        %v2262 = vpack.c.b16 %v1758, %v1750
        %v2263 = vpack.c.b16 %v1759, %v1751
        %v2264 = vpack.c.b16 %v1760, %v1752
        %v2265 = vpack.c.b16 %v1761, %v1753
        %v2266 = vpack.c.b16 %v1770, %v1762
        %v2267 = vpack.c.b16 %v1771, %v1763
        %v2268 = vpack.c.b16 %v1772, %v1764
        %v2269 = vpack.c.b16 %v1773, %v1765
        %v2270 = vpack.c.b16 %v1774, %v1766
        %v2271 = vpack.c.b16 %v1775, %v1767
        %v2272 = vpack.c.b16 %v1776, %v1768
        %v2273 = vpack.c.b16 %v1777, %v1769
        %v2274 = vpack.c.b16 %v1786, %v1778
        %v2275 = vpack.c.b16 %v1787, %v1779
        %v2276 = vpack.c.b16 %v1788, %v1780
        %v2277 = vpack.c.b16 %v1789, %v1781
        %v2278 = vpack.c.b16 %v1790, %v1782
        %v2279 = vpack.c.b16 %v1791, %v1783
        %v2280 = vpack.c.b16 %v1792, %v1784
        %v2281 = vpack.c.b16 %v1793, %v1785
        %v2282 = vpack.c.b16 %v1802, %v1794
        %v2283 = vpack.c.b16 %v1803, %v1795
        %v2284 = vpack.c.b16 %v1804, %v1796
        %v2285 = vpack.c.b16 %v1805, %v1797
        %v2286 = vpack.c.b16 %v1806, %v1798
        %v2287 = vpack.c.b16 %v1807, %v1799
        %v2288 = vpack.c.b16 %v1808, %v1800
        %v2289 = vpack.c.b16 %v1809, %v1801
        %v2290 = vpack.c.b16 %v1818, %v1810
        %v2291 = vpack.c.b16 %v1819, %v1811
        %v2292 = vpack.c.b16 %v1820, %v1812
        %v2293 = vpack.c.b16 %v1821, %v1813
        %v2294 = vpack.c.b16 %v1822, %v1814
        %v2295 = vpack.c.b16 %v1823, %v1815
        %v2296 = vpack.c.b16 %v1824, %v1816
        %v2297 = vpack.c.b16 %v1825, %v1817
        %v2298 = vpack.c.b16 %v1834, %v1826
        %v2299 = vpack.c.b16 %v1835, %v1827
        %v2300 = vpack.c.b16 %v1836, %v1828
        %v2301 = vpack.c.b16 %v1837, %v1829
        %v2302 = vpack.c.b16 %v1838, %v1830
        %v2303 = vpack.c.b16 %v1839, %v1831
        %v2304 = vpack.c.b16 %v1840, %v1832
        %v2305 = vpack.c.b16 %v1841, %v1833
        %v2306 = vpack.c.b16 %v1850, %v1842
        %v2307 = vpack.c.b16 %v1851, %v1843
        %v2308 = vpack.c.b16 %v1852, %v1844
        %v2309 = vpack.c.b16 %v1853, %v1845
        %v2310 = vpack.c.b16 %v1854, %v1846
        %v2311 = vpack.c.b16 %v1855, %v1847
        %v2312 = vpack.c.b16 %v1856, %v1848
        %v2313 = vpack.c.b16 %v1857, %v1849
        %v2314 = vpack.c.b16 %v1866, %v1858
        %v2315 = vpack.c.b16 %v1867, %v1859
        %v2316 = vpack.c.b16 %v1868, %v1860
        %v2317 = vpack.c.b16 %v1869, %v1861
        %v2318 = vpack.c.b16 %v1870, %v1862
        %v2319 = vpack.c.b16 %v1871, %v1863
        %v2320 = vpack.c.b16 %v1872, %v1864
        %v2321 = vpack.c.b16 %v1873, %v1865
        %v2322 = vpack.c.b16 %v1882, %v1874
        %v2323 = vpack.c.b16 %v1883, %v1875
        %v2324 = vpack.c.b16 %v1884, %v1876
        %v2325 = vpack.c.b16 %v1885, %v1877
        %v2326 = vpack.c.b16 %v1886, %v1878
        %v2327 = vpack.c.b16 %v1887, %v1879
        %v2328 = vpack.c.b16 %v1888, %v1880
        %v2329 = vpack.c.b16 %v1889, %v1881
        %v2330 = vpack.c.b16 %v1898, %v1890
        %v2331 = vpack.c.b16 %v1899, %v1891
        %v2332 = vpack.c.b16 %v1900, %v1892
        %v2333 = vpack.c.b16 %v1901, %v1893
        %v2334 = vpack.c.b16 %v1902, %v1894
        %v2335 = vpack.c.b16 %v1903, %v1895
        %v2336 = vpack.c.b16 %v1904, %v1896
        %v2337 = vpack.c.b16 %v1905, %v1897
        %v2338 = vpack.c.b16 %v1914, %v1906
        %v2339 = vpack.c.b16 %v1915, %v1907
        %v2340 = vpack.c.b16 %v1916, %v1908
        %v2341 = vpack.c.b16 %v1917, %v1909
        %v2342 = vpack.c.b16 %v1918, %v1910
        %v2343 = vpack.c.b16 %v1919, %v1911
        %v2344 = vpack.c.b16 %v1920, %v1912
        %v2345 = vpack.c.b16 %v1921, %v1913
        %v2346 = vpack.c.b16 %v1930, %v1922
        %v2347 = vpack.c.b16 %v1931, %v1923
        %v2348 = vpack.c.b16 %v1932, %v1924
        %v2349 = vpack.c.b16 %v1933, %v1925
        %v2350 = vpack.c.b16 %v1934, %v1926
        %v2351 = vpack.c.b16 %v1935, %v1927
        %v2352 = vpack.c.b16 %v1936, %v1928
        %v2353 = vpack.c.b16 %v1937, %v1929
        %v2354 = vpack.c.b16 %v1946, %v1938
        %v2355 = vpack.c.b16 %v1947, %v1939
        %v2356 = vpack.c.b16 %v1948, %v1940
        %v2357 = vpack.c.b16 %v1949, %v1941
        %v2358 = vpack.c.b16 %v1950, %v1942
        %v2359 = vpack.c.b16 %v1951, %v1943
        %v2360 = vpack.c.b16 %v1952, %v1944
        %v2361 = vpack.c.b16 %v1953, %v1945
        %v2362 = vpack.c.b16 %v1962, %v1954
        %v2363 = vpack.c.b16 %v1963, %v1955
        %v2364 = vpack.c.b16 %v1964, %v1956
        %v2365 = vpack.c.b16 %v1965, %v1957
        %v2366 = vpack.c.b16 %v1966, %v1958
        %v2367 = vpack.c.b16 %v1967, %v1959
        %v2368 = vpack.c.b16 %v1968, %v1960
        %v2369 = vpack.c.b16 %v1969, %v1961
        %v2370 = vpack.c.b16 %v1978, %v1970
        %v2371 = vpack.c.b16 %v1979, %v1971
        %v2372 = vpack.c.b16 %v1980, %v1972
        %v2373 = vpack.c.b16 %v1981, %v1973
        %v2374 = vpack.c.b16 %v1982, %v1974
        %v2375 = vpack.c.b16 %v1983, %v1975
        %v2376 = vpack.c.b16 %v1984, %v1976
        %v2377 = vpack.c.b16 %v1985, %v1977
        %v2378 = vpack.c.b16 %v1994, %v1986
        %v2379 = vpack.c.b16 %v1995, %v1987
        %v2380 = vpack.c.b16 %v1996, %v1988
        %v2381 = vpack.c.b16 %v1997, %v1989
        %v2382 = vpack.c.b16 %v1998, %v1990
        %v2383 = vpack.c.b16 %v1999, %v1991
        %v2384 = vpack.c.b16 %v2000, %v1992
        %v2385 = vpack.c.b16 %v2001, %v1993
        %v2386 = vpack.c.b16 %v2010, %v2002
        %v2387 = vpack.c.b16 %v2011, %v2003
        %v2388 = vpack.c.b16 %v2012, %v2004
        %v2389 = vpack.c.b16 %v2013, %v2005
        %v2390 = vpack.c.b16 %v2014, %v2006
        %v2391 = vpack.c.b16 %v2015, %v2007
        %v2392 = vpack.c.b16 %v2016, %v2008
        %v2393 = vpack.c.b16 %v2017, %v2009
        %v2394 = vpack.c.b16 %v2026, %v2018
        %v2395 = vpack.c.b16 %v2027, %v2019
        %v2396 = vpack.c.b16 %v2028, %v2020
        %v2397 = vpack.c.b16 %v2029, %v2021
        %v2398 = vpack.c.b16 %v2030, %v2022
        %v2399 = vpack.c.b16 %v2031, %v2023
        %v2400 = vpack.c.b16 %v2032, %v2024
        %v2401 = vpack.c.b16 %v2033, %v2025
        %v2402 = vpack.c.b16 %v2042, %v2034
        %v2403 = vpack.c.b16 %v2043, %v2035
        %v2404 = vpack.c.b16 %v2044, %v2036
        %v2405 = vpack.c.b16 %v2045, %v2037
        %v2406 = vpack.c.b16 %v2046, %v2038
        %v2407 = vpack.c.b16 %v2047, %v2039
        %v2408 = vpack.c.b16 %v2048, %v2040
        %v2409 = vpack.c.b16 %v2049, %v2041
        %v2410 = vpack.c.b16 %v2058, %v2050
        %v2411 = vpack.c.b16 %v2059, %v2051
        %v2412 = vpack.c.b16 %v2060, %v2052
        %v2413 = vpack.c.b16 %v2061, %v2053
        %v2414 = vpack.c.b16 %v2062, %v2054
        %v2415 = vpack.c.b16 %v2063, %v2055
        %v2416 = vpack.c.b16 %v2064, %v2056
        %v2417 = vpack.c.b16 %v2065, %v2057
        %v2418 = vpack.c.b16 %v2074, %v2066
        %v2419 = vpack.c.b16 %v2075, %v2067
        %v2420 = vpack.c.b16 %v2076, %v2068
        %v2421 = vpack.c.b16 %v2077, %v2069
        %v2422 = vpack.c.b16 %v2078, %v2070
        %v2423 = vpack.c.b16 %v2079, %v2071
        %v2424 = vpack.c.b16 %v2080, %v2072
        %v2425 = vpack.c.b16 %v2081, %v2073
        %v2426 = vpack.c.b16 %v2090, %v2082
        %v2427 = vpack.c.b16 %v2091, %v2083
        %v2428 = vpack.c.b16 %v2092, %v2084
        %v2429 = vpack.c.b16 %v2093, %v2085
        %v2430 = vpack.c.b16 %v2094, %v2086
        %v2431 = vpack.c.b16 %v2095, %v2087
        %v2432 = vpack.c.b16 %v2096, %v2088
        %v2433 = vpack.c.b16 %v2097, %v2089
        %v2434 = vpack.c.b16 %v2106, %v2098
        %v2435 = vpack.c.b16 %v2107, %v2099
        %v2436 = vpack.c.b16 %v2108, %v2100
        %v2437 = vpack.c.b16 %v2109, %v2101
        %v2438 = vpack.c.b16 %v2110, %v2102
        %v2439 = vpack.c.b16 %v2111, %v2103
        %v2440 = vpack.c.b16 %v2112, %v2104
        %v2441 = vpack.c.b16 %v2113, %v2105
        %v2442 = vpack.c.b16 %v2122, %v2114
        %v2443 = vpack.c.b16 %v2123, %v2115
        %v2444 = vpack.c.b16 %v2124, %v2116
        %v2445 = vpack.c.b16 %v2125, %v2117
        %v2446 = vpack.c.b16 %v2126, %v2118
        %v2447 = vpack.c.b16 %v2127, %v2119
        %v2448 = vpack.c.b16 %v2128, %v2120
        %v2449 = vpack.c.b16 %v2129, %v2121
        %v2450 = vpack.c.b16 %v2138, %v2130
        %v2451 = vpack.c.b16 %v2139, %v2131
        %v2452 = vpack.c.b16 %v2140, %v2132
        %v2453 = vpack.c.b16 %v2141, %v2133
        %v2454 = vpack.c.b16 %v2142, %v2134
        %v2455 = vpack.c.b16 %v2143, %v2135
        %v2456 = vpack.c.b16 %v2144, %v2136
        %v2457 = vpack.c.b16 %v2145, %v2137
        %v2458 = vpack.c.b16 %v2154, %v2146
        %v2459 = vpack.c.b16 %v2155, %v2147
        %v2460 = vpack.c.b16 %v2156, %v2148
        %v2461 = vpack.c.b16 %v2157, %v2149
        %v2462 = vpack.c.b16 %v2158, %v2150
        %v2463 = vpack.c.b16 %v2159, %v2151
        %v2464 = vpack.c.b16 %v2160, %v2152
        %v2465 = vpack.c.b16 %v2161, %v2153
        %v2466 = vpack.c.b16 %v2170, %v2162
        %v2467 = vpack.c.b16 %v2171, %v2163
        %v2468 = vpack.c.b16 %v2172, %v2164
        %v2469 = vpack.c.b16 %v2173, %v2165
        %v2470 = vpack.c.b16 %v2174, %v2166
        %v2471 = vpack.c.b16 %v2175, %v2167
        %v2472 = vpack.c.b16 %v2176, %v2168
        %v2473 = vpack.c.b16 %v2177, %v2169
        %v2474 = vpack.c.b16 %v2186, %v2178
        %v2475 = vpack.c.b16 %v2187, %v2179
        %v2476 = vpack.c.b16 %v2188, %v2180
        %v2477 = vpack.c.b16 %v2189, %v2181
        %v2478 = vpack.c.b16 %v2190, %v2182
        %v2479 = vpack.c.b16 %v2191, %v2183
        %v2480 = vpack.c.b16 %v2192, %v2184
        %v2481 = vpack.c.b16 %v2193, %v2185
        %v2482 = vpack.c.b16 %v2202, %v2194
        %v2483 = vpack.c.b16 %v2203, %v2195
        %v2484 = vpack.c.b16 %v2204, %v2196
        %v2485 = vpack.c.b16 %v2205, %v2197
        %v2486 = vpack.c.b16 %v2206, %v2198
        %v2487 = vpack.c.b16 %v2207, %v2199
        %v2488 = vpack.c.b16 %v2208, %v2200
        %v2489 = vpack.c.b16 %v2209, %v2201
        %v2490 = vpack.c.b16 %v2218, %v2210
        %v2491 = vpack.c.b16 %v2219, %v2211
        %v2492 = vpack.c.b16 %v2220, %v2212
        %v2493 = vpack.c.b16 %v2221, %v2213
        %v2494 = vpack.c.b16 %v2222, %v2214
        %v2495 = vpack.c.b16 %v2223, %v2215
        %v2496 = vpack.c.b16 %v2224, %v2216
        %v2497 = vpack.c.b16 %v2225, %v2217
        %v2498 = vpack.c.b16 %v2234, %v2226
        %v2499 = vpack.c.b16 %v2235, %v2227
        %v2500 = vpack.c.b16 %v2236, %v2228
        %v2501 = vpack.c.b16 %v2237, %v2229
        %v2502 = vpack.c.b16 %v2238, %v2230
        %v2503 = vpack.c.b16 %v2239, %v2231
        %v2504 = vpack.c.b16 %v2240, %v2232
        %v2505 = vpack.c.b16 %v2241, %v2233
        %v2506 = vpack.c.b16 %v2250, %v2242
        %v2507 = vpack.c.b16 %v2251, %v2243
        %v2508 = vpack.c.b16 %v2252, %v2244
        %v2509 = vpack.c.b16 %v2253, %v2245
        %v2510 = vpack.c.b16 %v2254, %v2246
        %v2511 = vpack.c.b16 %v2255, %v2247
        %v2512 = vpack.c.b16 %v2256, %v2248
        %v2513 = vpack.c.b16 %v2257, %v2249
        %2770 = vmatpush.bf16.msra.mxu0 %v2314
        %2771 = vmatpush.bf16.msra.mxu0 %v2306
        %2772 = vmatpush.bf16.msra.mxu0 %v2298
        %2773 = vmatpush.bf16.msra.mxu0 %v2290
        %2774 = vmatpush.bf16.msra.mxu0 %v2282
        %2775 = vmatpush.bf16.msra.mxu0 %v2274
        %2776 = vmatpush.bf16.msra.mxu0 %v2266
        %2777 = vmatpush.bf16.msra.mxu0 %v2258
        %2778 = vmatmul.bf16.gmra.mxu0 %v1212
        %v2779 = vpop.f32.mrf.mxu0
        %v2780 = vadd.f32 %v1474, %v2779
        %v2781 = vpop.f32.mrf.mxu0
        %2782 = vdwg.mxu0
        %2783 = vmatpush.bf16.msra.mxu0 %v2378
        %2784 = vmatpush.bf16.msra.mxu0 %v2370
        %2785 = vmatpush.bf16.msra.mxu0 %v2362
        %2786 = vmatpush.bf16.msra.mxu0 %v2354
        %2787 = vmatpush.bf16.msra.mxu0 %v2346
        %2788 = vmatpush.bf16.msra.mxu0 %v2338
        %2789 = vmatpush.bf16.msra.mxu0 %v2330
        %2790 = vmatpush.bf16.msra.mxu0 %v2322
        %2791 = vmatmul.bf16.gmra.mxu0 %v1213
        %v2792 = vpop.f32.mrf.mxu0
        %v2793 = vadd.f32 %v2780, %v2792
        %v2794 = vpop.f32.mrf.mxu0
        %2795 = vdwg.mxu0
        %2796 = vmatpush.bf16.msra.mxu0 %v2442
        %2797 = vmatpush.bf16.msra.mxu0 %v2434
        %2798 = vmatpush.bf16.msra.mxu0 %v2426
        %2799 = vmatpush.bf16.msra.mxu0 %v2418
        %2800 = vmatpush.bf16.msra.mxu0 %v2410
        %2801 = vmatpush.bf16.msra.mxu0 %v2402
        %2802 = vmatpush.bf16.msra.mxu0 %v2394
        %2803 = vmatpush.bf16.msra.mxu0 %v2386
        %2804 = vmatmul.bf16.gmra.mxu0 %v1214
        %v2805 = vpop.f32.mrf.mxu0
        %v2806 = vadd.f32 %v2793, %v2805
        %v2807 = vpop.f32.mrf.mxu0
        %2808 = vdwg.mxu0
        %2809 = vmatpush.bf16.msra.mxu0 %v2506
        %2810 = vmatpush.bf16.msra.mxu0 %v2498
        %2811 = vmatpush.bf16.msra.mxu0 %v2490
        %2812 = vmatpush.bf16.msra.mxu0 %v2482
        %2813 = vmatpush.bf16.msra.mxu0 %v2474
        %2814 = vmatpush.bf16.msra.mxu0 %v2466
        %2815 = vmatpush.bf16.msra.mxu0 %v2458
        %2816 = vmatpush.bf16.msra.mxu0 %v2450
        %2817 = vmatmul.bf16.gmra.mxu0 %v1215
        %v2818 = vpop.f32.mrf.mxu0
        %v2819 = vadd.f32 %v2806, %v2818
        %v2820 = vpop.f32.mrf.mxu0
        %2821 = vdwg.mxu0
        %2822 = vmatpush.bf16.msra.mxu0 %v2315
        %2823 = vmatpush.bf16.msra.mxu0 %v2307
        %2824 = vmatpush.bf16.msra.mxu0 %v2299
        %2825 = vmatpush.bf16.msra.mxu0 %v2291
        %2826 = vmatpush.bf16.msra.mxu0 %v2283
        %2827 = vmatpush.bf16.msra.mxu0 %v2275
        %2828 = vmatpush.bf16.msra.mxu0 %v2267
        %2829 = vmatpush.bf16.msra.mxu0 %v2259
        %2830 = vmatmul.bf16.gmra.mxu0 %v1212
        %v2831 = vpop.f32.mrf.mxu0
        %v2832 = vadd.f32 %v1475, %v2831
        %v2833 = vpop.f32.mrf.mxu0
        %2834 = vdwg.mxu0
        %2835 = vmatpush.bf16.msra.mxu0 %v2379
        %2836 = vmatpush.bf16.msra.mxu0 %v2371
        %2837 = vmatpush.bf16.msra.mxu0 %v2363
        %2838 = vmatpush.bf16.msra.mxu0 %v2355
        %2839 = vmatpush.bf16.msra.mxu0 %v2347
        %2840 = vmatpush.bf16.msra.mxu0 %v2339
        %2841 = vmatpush.bf16.msra.mxu0 %v2331
        %2842 = vmatpush.bf16.msra.mxu0 %v2323
        %2843 = vmatmul.bf16.gmra.mxu0 %v1213
        %v2844 = vpop.f32.mrf.mxu0
        %v2845 = vadd.f32 %v2832, %v2844
        %v2846 = vpop.f32.mrf.mxu0
        %2847 = vdwg.mxu0
        %2848 = vmatpush.bf16.msra.mxu0 %v2443
        %2849 = vmatpush.bf16.msra.mxu0 %v2435
        %2850 = vmatpush.bf16.msra.mxu0 %v2427
        %2851 = vmatpush.bf16.msra.mxu0 %v2419
        %2852 = vmatpush.bf16.msra.mxu0 %v2411
        %2853 = vmatpush.bf16.msra.mxu0 %v2403
        %2854 = vmatpush.bf16.msra.mxu0 %v2395
        %2855 = vmatpush.bf16.msra.mxu0 %v2387
        %2856 = vmatmul.bf16.gmra.mxu0 %v1214
        %v2857 = vpop.f32.mrf.mxu0
        %v2858 = vadd.f32 %v2845, %v2857
        %v2859 = vpop.f32.mrf.mxu0
        %2860 = vdwg.mxu0
        %2861 = vmatpush.bf16.msra.mxu0 %v2507
        %2862 = vmatpush.bf16.msra.mxu0 %v2499
        %2863 = vmatpush.bf16.msra.mxu0 %v2491
        %2864 = vmatpush.bf16.msra.mxu0 %v2483
        %2865 = vmatpush.bf16.msra.mxu0 %v2475
        %2866 = vmatpush.bf16.msra.mxu0 %v2467
        %2867 = vmatpush.bf16.msra.mxu0 %v2459
        %2868 = vmatpush.bf16.msra.mxu0 %v2451
        %2869 = vmatmul.bf16.gmra.mxu0 %v1215
        %v2870 = vpop.f32.mrf.mxu0
        %v2871 = vadd.f32 %v2858, %v2870
        %v2872 = vpop.f32.mrf.mxu0
        %2873 = vdwg.mxu0
        %2874 = vmatpush.bf16.msra.mxu0 %v2316
        %2875 = vmatpush.bf16.msra.mxu0 %v2308
        %2876 = vmatpush.bf16.msra.mxu0 %v2300
        %2877 = vmatpush.bf16.msra.mxu0 %v2292
        %2878 = vmatpush.bf16.msra.mxu0 %v2284
        %2879 = vmatpush.bf16.msra.mxu0 %v2276
        %2880 = vmatpush.bf16.msra.mxu0 %v2268
        %2881 = vmatpush.bf16.msra.mxu0 %v2260
        %2882 = vmatmul.bf16.gmra.mxu0 %v1212
        %v2883 = vpop.f32.mrf.mxu0
        %v2884 = vadd.f32 %v1476, %v2883
        %v2885 = vpop.f32.mrf.mxu0
        %2886 = vdwg.mxu0
        %2887 = vmatpush.bf16.msra.mxu0 %v2380
        %2888 = vmatpush.bf16.msra.mxu0 %v2372
        %2889 = vmatpush.bf16.msra.mxu0 %v2364
        %2890 = vmatpush.bf16.msra.mxu0 %v2356
        %2891 = vmatpush.bf16.msra.mxu0 %v2348
        %2892 = vmatpush.bf16.msra.mxu0 %v2340
        %2893 = vmatpush.bf16.msra.mxu0 %v2332
        %2894 = vmatpush.bf16.msra.mxu0 %v2324
        %2895 = vmatmul.bf16.gmra.mxu0 %v1213
        %v2896 = vpop.f32.mrf.mxu0
        %v2897 = vadd.f32 %v2884, %v2896
        %v2898 = vpop.f32.mrf.mxu0
        %2899 = vdwg.mxu0
        %2900 = vmatpush.bf16.msra.mxu0 %v2444
        %2901 = vmatpush.bf16.msra.mxu0 %v2436
        %2902 = vmatpush.bf16.msra.mxu0 %v2428
        %2903 = vmatpush.bf16.msra.mxu0 %v2420
        %2904 = vmatpush.bf16.msra.mxu0 %v2412
        %2905 = vmatpush.bf16.msra.mxu0 %v2404
        %2906 = vmatpush.bf16.msra.mxu0 %v2396
        %2907 = vmatpush.bf16.msra.mxu0 %v2388
        %2908 = vmatmul.bf16.gmra.mxu0 %v1214
        %v2909 = vpop.f32.mrf.mxu0
        %v2910 = vadd.f32 %v2897, %v2909
        %v2911 = vpop.f32.mrf.mxu0
        %2912 = vdwg.mxu0
        %2913 = vmatpush.bf16.msra.mxu0 %v2508
        %2914 = vmatpush.bf16.msra.mxu0 %v2500
        %2915 = vmatpush.bf16.msra.mxu0 %v2492
        %2916 = vmatpush.bf16.msra.mxu0 %v2484
        %2917 = vmatpush.bf16.msra.mxu0 %v2476
        %2918 = vmatpush.bf16.msra.mxu0 %v2468
        %2919 = vmatpush.bf16.msra.mxu0 %v2460
        %2920 = vmatpush.bf16.msra.mxu0 %v2452
        %2921 = vmatmul.bf16.gmra.mxu0 %v1215
        %v2922 = vpop.f32.mrf.mxu0
        %v2923 = vadd.f32 %v2910, %v2922
        %v2924 = vpop.f32.mrf.mxu0
        %2925 = vdwg.mxu0
        %2926 = vmatpush.bf16.msra.mxu0 %v2317
        %2927 = vmatpush.bf16.msra.mxu0 %v2309
        %2928 = vmatpush.bf16.msra.mxu0 %v2301
        %2929 = vmatpush.bf16.msra.mxu0 %v2293
        %2930 = vmatpush.bf16.msra.mxu0 %v2285
        %2931 = vmatpush.bf16.msra.mxu0 %v2277
        %2932 = vmatpush.bf16.msra.mxu0 %v2269
        %2933 = vmatpush.bf16.msra.mxu0 %v2261
        %2934 = vmatmul.bf16.gmra.mxu0 %v1212
        %v2935 = vpop.f32.mrf.mxu0
        %v2936 = vadd.f32 %v1477, %v2935
        %v2937 = vpop.f32.mrf.mxu0
        %2938 = vdwg.mxu0
        %2939 = vmatpush.bf16.msra.mxu0 %v2381
        %2940 = vmatpush.bf16.msra.mxu0 %v2373
        %2941 = vmatpush.bf16.msra.mxu0 %v2365
        %2942 = vmatpush.bf16.msra.mxu0 %v2357
        %2943 = vmatpush.bf16.msra.mxu0 %v2349
        %2944 = vmatpush.bf16.msra.mxu0 %v2341
        %2945 = vmatpush.bf16.msra.mxu0 %v2333
        %2946 = vmatpush.bf16.msra.mxu0 %v2325
        %2947 = vmatmul.bf16.gmra.mxu0 %v1213
        %v2948 = vpop.f32.mrf.mxu0
        %v2949 = vadd.f32 %v2936, %v2948
        %v2950 = vpop.f32.mrf.mxu0
        %2951 = vdwg.mxu0
        %2952 = vmatpush.bf16.msra.mxu0 %v2445
        %2953 = vmatpush.bf16.msra.mxu0 %v2437
        %2954 = vmatpush.bf16.msra.mxu0 %v2429
        %2955 = vmatpush.bf16.msra.mxu0 %v2421
        %2956 = vmatpush.bf16.msra.mxu0 %v2413
        %2957 = vmatpush.bf16.msra.mxu0 %v2405
        %2958 = vmatpush.bf16.msra.mxu0 %v2397
        %2959 = vmatpush.bf16.msra.mxu0 %v2389
        %2960 = vmatmul.bf16.gmra.mxu0 %v1214
        %v2961 = vpop.f32.mrf.mxu0
        %v2962 = vadd.f32 %v2949, %v2961
        %v2963 = vpop.f32.mrf.mxu0
        %2964 = vdwg.mxu0
        %2965 = vmatpush.bf16.msra.mxu0 %v2509
        %2966 = vmatpush.bf16.msra.mxu0 %v2501
        %2967 = vmatpush.bf16.msra.mxu0 %v2493
        %2968 = vmatpush.bf16.msra.mxu0 %v2485
        %2969 = vmatpush.bf16.msra.mxu0 %v2477
        %2970 = vmatpush.bf16.msra.mxu0 %v2469
        %2971 = vmatpush.bf16.msra.mxu0 %v2461
        %2972 = vmatpush.bf16.msra.mxu0 %v2453
        %2973 = vmatmul.bf16.gmra.mxu0 %v1215
        %v2974 = vpop.f32.mrf.mxu0
        %v2975 = vadd.f32 %v2962, %v2974
        %v2976 = vpop.f32.mrf.mxu0
        %2977 = vdwg.mxu0
        %2978 = vmatpush.bf16.msra.mxu0 %v2318
        %2979 = vmatpush.bf16.msra.mxu0 %v2310
        %2980 = vmatpush.bf16.msra.mxu0 %v2302
        %2981 = vmatpush.bf16.msra.mxu0 %v2294
        %2982 = vmatpush.bf16.msra.mxu0 %v2286
        %2983 = vmatpush.bf16.msra.mxu0 %v2278
        %2984 = vmatpush.bf16.msra.mxu0 %v2270
        %2985 = vmatpush.bf16.msra.mxu0 %v2262
        %2986 = vmatmul.bf16.gmra.mxu0 %v1212
        %v2987 = vpop.f32.mrf.mxu0
        %v2988 = vadd.f32 %v1478, %v2987
        %v2989 = vpop.f32.mrf.mxu0
        %2990 = vdwg.mxu0
        %2991 = vmatpush.bf16.msra.mxu0 %v2382
        %2992 = vmatpush.bf16.msra.mxu0 %v2374
        %2993 = vmatpush.bf16.msra.mxu0 %v2366
        %2994 = vmatpush.bf16.msra.mxu0 %v2358
        %2995 = vmatpush.bf16.msra.mxu0 %v2350
        %2996 = vmatpush.bf16.msra.mxu0 %v2342
        %2997 = vmatpush.bf16.msra.mxu0 %v2334
        %2998 = vmatpush.bf16.msra.mxu0 %v2326
        %2999 = vmatmul.bf16.gmra.mxu0 %v1213
        %v3000 = vpop.f32.mrf.mxu0
        %v3001 = vadd.f32 %v2988, %v3000
        %v3002 = vpop.f32.mrf.mxu0
        %3003 = vdwg.mxu0
        %3004 = vmatpush.bf16.msra.mxu0 %v2446
        %3005 = vmatpush.bf16.msra.mxu0 %v2438
        %3006 = vmatpush.bf16.msra.mxu0 %v2430
        %3007 = vmatpush.bf16.msra.mxu0 %v2422
        %3008 = vmatpush.bf16.msra.mxu0 %v2414
        %3009 = vmatpush.bf16.msra.mxu0 %v2406
        %3010 = vmatpush.bf16.msra.mxu0 %v2398
        %3011 = vmatpush.bf16.msra.mxu0 %v2390
        %3012 = vmatmul.bf16.gmra.mxu0 %v1214
        %v3013 = vpop.f32.mrf.mxu0
        %v3014 = vadd.f32 %v3001, %v3013
        %v3015 = vpop.f32.mrf.mxu0
        %3016 = vdwg.mxu0
        %3017 = vmatpush.bf16.msra.mxu0 %v2510
        %3018 = vmatpush.bf16.msra.mxu0 %v2502
        %3019 = vmatpush.bf16.msra.mxu0 %v2494
        %3020 = vmatpush.bf16.msra.mxu0 %v2486
        %3021 = vmatpush.bf16.msra.mxu0 %v2478
        %3022 = vmatpush.bf16.msra.mxu0 %v2470
        %3023 = vmatpush.bf16.msra.mxu0 %v2462
        %3024 = vmatpush.bf16.msra.mxu0 %v2454
        %3025 = vmatmul.bf16.gmra.mxu0 %v1215
        %v3026 = vpop.f32.mrf.mxu0
        %v3027 = vadd.f32 %v3014, %v3026
        %v3028 = vpop.f32.mrf.mxu0
        %3029 = vdwg.mxu0
        %3030 = vmatpush.bf16.msra.mxu0 %v2319
        %3031 = vmatpush.bf16.msra.mxu0 %v2311
        %3032 = vmatpush.bf16.msra.mxu0 %v2303
        %3033 = vmatpush.bf16.msra.mxu0 %v2295
        %3034 = vmatpush.bf16.msra.mxu0 %v2287
        %3035 = vmatpush.bf16.msra.mxu0 %v2279
        %3036 = vmatpush.bf16.msra.mxu0 %v2271
        %3037 = vmatpush.bf16.msra.mxu0 %v2263
        %3038 = vmatmul.bf16.gmra.mxu0 %v1212
        %v3039 = vpop.f32.mrf.mxu0
        %v3040 = vadd.f32 %v1479, %v3039
        %v3041 = vpop.f32.mrf.mxu0
        %3042 = vdwg.mxu0
        %3043 = vmatpush.bf16.msra.mxu0 %v2383
        %3044 = vmatpush.bf16.msra.mxu0 %v2375
        %3045 = vmatpush.bf16.msra.mxu0 %v2367
        %3046 = vmatpush.bf16.msra.mxu0 %v2359
        %3047 = vmatpush.bf16.msra.mxu0 %v2351
        %3048 = vmatpush.bf16.msra.mxu0 %v2343
        %3049 = vmatpush.bf16.msra.mxu0 %v2335
        %3050 = vmatpush.bf16.msra.mxu0 %v2327
        %3051 = vmatmul.bf16.gmra.mxu0 %v1213
        %v3052 = vpop.f32.mrf.mxu0
        %v3053 = vadd.f32 %v3040, %v3052
        %v3054 = vpop.f32.mrf.mxu0
        %3055 = vdwg.mxu0
        %3056 = vmatpush.bf16.msra.mxu0 %v2447
        %3057 = vmatpush.bf16.msra.mxu0 %v2439
        %3058 = vmatpush.bf16.msra.mxu0 %v2431
        %3059 = vmatpush.bf16.msra.mxu0 %v2423
        %3060 = vmatpush.bf16.msra.mxu0 %v2415
        %3061 = vmatpush.bf16.msra.mxu0 %v2407
        %3062 = vmatpush.bf16.msra.mxu0 %v2399
        %3063 = vmatpush.bf16.msra.mxu0 %v2391
        %3064 = vmatmul.bf16.gmra.mxu0 %v1214
        %v3065 = vpop.f32.mrf.mxu0
        %v3066 = vadd.f32 %v3053, %v3065
        %v3067 = vpop.f32.mrf.mxu0
        %3068 = vdwg.mxu0
        %3069 = vmatpush.bf16.msra.mxu0 %v2511
        %3070 = vmatpush.bf16.msra.mxu0 %v2503
        %3071 = vmatpush.bf16.msra.mxu0 %v2495
        %3072 = vmatpush.bf16.msra.mxu0 %v2487
        %3073 = vmatpush.bf16.msra.mxu0 %v2479
        %3074 = vmatpush.bf16.msra.mxu0 %v2471
        %3075 = vmatpush.bf16.msra.mxu0 %v2463
        %3076 = vmatpush.bf16.msra.mxu0 %v2455
        %3077 = vmatmul.bf16.gmra.mxu0 %v1215
        %v3078 = vpop.f32.mrf.mxu0
        %v3079 = vadd.f32 %v3066, %v3078
        %v3080 = vpop.f32.mrf.mxu0
        %3081 = vdwg.mxu0
        %3082 = vmatpush.bf16.msra.mxu0 %v2320
        %3083 = vmatpush.bf16.msra.mxu0 %v2312
        %3084 = vmatpush.bf16.msra.mxu0 %v2304
        %3085 = vmatpush.bf16.msra.mxu0 %v2296
        %3086 = vmatpush.bf16.msra.mxu0 %v2288
        %3087 = vmatpush.bf16.msra.mxu0 %v2280
        %3088 = vmatpush.bf16.msra.mxu0 %v2272
        %3089 = vmatpush.bf16.msra.mxu0 %v2264
        %3090 = vmatmul.bf16.gmra.mxu0 %v1212
        %v3091 = vpop.f32.mrf.mxu0
        %v3092 = vadd.f32 %v1480, %v3091
        %v3093 = vpop.f32.mrf.mxu0
        %3094 = vdwg.mxu0
        %3095 = vmatpush.bf16.msra.mxu0 %v2384
        %3096 = vmatpush.bf16.msra.mxu0 %v2376
        %3097 = vmatpush.bf16.msra.mxu0 %v2368
        %3098 = vmatpush.bf16.msra.mxu0 %v2360
        %3099 = vmatpush.bf16.msra.mxu0 %v2352
        %3100 = vmatpush.bf16.msra.mxu0 %v2344
        %3101 = vmatpush.bf16.msra.mxu0 %v2336
        %3102 = vmatpush.bf16.msra.mxu0 %v2328
        %3103 = vmatmul.bf16.gmra.mxu0 %v1213
        %v3104 = vpop.f32.mrf.mxu0
        %v3105 = vadd.f32 %v3092, %v3104
        %v3106 = vpop.f32.mrf.mxu0
        %3107 = vdwg.mxu0
        %3108 = vmatpush.bf16.msra.mxu0 %v2448
        %3109 = vmatpush.bf16.msra.mxu0 %v2440
        %3110 = vmatpush.bf16.msra.mxu0 %v2432
        %3111 = vmatpush.bf16.msra.mxu0 %v2424
        %3112 = vmatpush.bf16.msra.mxu0 %v2416
        %3113 = vmatpush.bf16.msra.mxu0 %v2408
        %3114 = vmatpush.bf16.msra.mxu0 %v2400
        %3115 = vmatpush.bf16.msra.mxu0 %v2392
        %3116 = vmatmul.bf16.gmra.mxu0 %v1214
        %v3117 = vpop.f32.mrf.mxu0
        %v3118 = vadd.f32 %v3105, %v3117
        %v3119 = vpop.f32.mrf.mxu0
        %3120 = vdwg.mxu0
        %3121 = vmatpush.bf16.msra.mxu0 %v2512
        %3122 = vmatpush.bf16.msra.mxu0 %v2504
        %3123 = vmatpush.bf16.msra.mxu0 %v2496
        %3124 = vmatpush.bf16.msra.mxu0 %v2488
        %3125 = vmatpush.bf16.msra.mxu0 %v2480
        %3126 = vmatpush.bf16.msra.mxu0 %v2472
        %3127 = vmatpush.bf16.msra.mxu0 %v2464
        %3128 = vmatpush.bf16.msra.mxu0 %v2456
        %3129 = vmatmul.bf16.gmra.mxu0 %v1215
        %v3130 = vpop.f32.mrf.mxu0
        %v3131 = vadd.f32 %v3118, %v3130
        %v3132 = vpop.f32.mrf.mxu0
        %3133 = vdwg.mxu0
        %3134 = vmatpush.bf16.msra.mxu0 %v2321
        %3135 = vmatpush.bf16.msra.mxu0 %v2313
        %3136 = vmatpush.bf16.msra.mxu0 %v2305
        %3137 = vmatpush.bf16.msra.mxu0 %v2297
        %3138 = vmatpush.bf16.msra.mxu0 %v2289
        %3139 = vmatpush.bf16.msra.mxu0 %v2281
        %3140 = vmatpush.bf16.msra.mxu0 %v2273
        %3141 = vmatpush.bf16.msra.mxu0 %v2265
        %3142 = vmatmul.bf16.gmra.mxu0 %v1212
        %v3143 = vpop.f32.mrf.mxu0
        %v3144 = vadd.f32 %v1481, %v3143
        %v3145 = vpop.f32.mrf.mxu0
        %3146 = vdwg.mxu0
        %3147 = vmatpush.bf16.msra.mxu0 %v2385
        %3148 = vmatpush.bf16.msra.mxu0 %v2377
        %3149 = vmatpush.bf16.msra.mxu0 %v2369
        %3150 = vmatpush.bf16.msra.mxu0 %v2361
        %3151 = vmatpush.bf16.msra.mxu0 %v2353
        %3152 = vmatpush.bf16.msra.mxu0 %v2345
        %3153 = vmatpush.bf16.msra.mxu0 %v2337
        %3154 = vmatpush.bf16.msra.mxu0 %v2329
        %3155 = vmatmul.bf16.gmra.mxu0 %v1213
        %v3156 = vpop.f32.mrf.mxu0
        %v3157 = vadd.f32 %v3144, %v3156
        %v3158 = vpop.f32.mrf.mxu0
        %3159 = vdwg.mxu0
        %3160 = vmatpush.bf16.msra.mxu0 %v2449
        %3161 = vmatpush.bf16.msra.mxu0 %v2441
        %3162 = vmatpush.bf16.msra.mxu0 %v2433
        %3163 = vmatpush.bf16.msra.mxu0 %v2425
        %3164 = vmatpush.bf16.msra.mxu0 %v2417
        %3165 = vmatpush.bf16.msra.mxu0 %v2409
        %3166 = vmatpush.bf16.msra.mxu0 %v2401
        %3167 = vmatpush.bf16.msra.mxu0 %v2393
        %3168 = vmatmul.bf16.gmra.mxu0 %v1214
        %v3169 = vpop.f32.mrf.mxu0
        %v3170 = vadd.f32 %v3157, %v3169
        %v3171 = vpop.f32.mrf.mxu0
        %3172 = vdwg.mxu0
        %3173 = vmatpush.bf16.msra.mxu0 %v2513
        %3174 = vmatpush.bf16.msra.mxu0 %v2505
        %3175 = vmatpush.bf16.msra.mxu0 %v2497
        %3176 = vmatpush.bf16.msra.mxu0 %v2489
        %3177 = vmatpush.bf16.msra.mxu0 %v2481
        %3178 = vmatpush.bf16.msra.mxu0 %v2473
        %3179 = vmatpush.bf16.msra.mxu0 %v2465
        %3180 = vmatpush.bf16.msra.mxu0 %v2457
        %3181 = vmatmul.bf16.gmra.mxu0 %v1215
        %v3182 = vpop.f32.mrf.mxu0
        %v3183 = vadd.f32 %v3170, %v3182
        %v3184 = vpop.f32.mrf.mxu0
        %3185 = vdwg.mxu0
        %v3186 = vmax.f32 %v2819, 0.0
        %v3187 = vmax.f32 %v2871, 0.0
        %v3188 = vmax.f32 %v2923, 0.0
        %v3189 = vmax.f32 %v2975, 0.0
        %v3190 = vmax.f32 %v3027, 0.0
        %v3191 = vmax.f32 %v3079, 0.0
        %v3192 = vmax.f32 %v3131, 0.0
        %v3193 = vmax.f32 %v3183, 0.0
        %v3194 = vpack.c.bf16 %v3186, %v3186
        %v3195 = vpack.c.bf16 %v3187, %v3187
        %v3196 = vpack.c.bf16 %v3188, %v3188
        %v3197 = vpack.c.bf16 %v3189, %v3189
        %v3198 = vpack.c.bf16 %v3190, %v3190
        %v3199 = vpack.c.bf16 %v3191, %v3191
        %v3200 = vpack.c.bf16 %v3192, %v3192
        %v3201 = vpack.c.bf16 %v3193, %v3193
        %v3202 = vld [vmem:[%s10] sm:$0xff]
        %v3203 = vld [vmem:[%s10 + $0x8] sm:$0xff]
        %v3204 = vld [vmem:[%s10 + $0x10] sm:$0xff]
        %v3205 = vld [vmem:[%s10 + $0x18] sm:$0xff]
        %v3206 = vld [vmem:[%s10 + $0x20] sm:$0xff]
        %v3207 = vld [vmem:[%s10 + $0x28] sm:$0xff]
        %v3208 = vld [vmem:[%s10 + $0x30] sm:$0xff]
        %v3209 = vld [vmem:[%s10 + $0x38] sm:$0xff]
        %v3210 = vld [vmem:[%s10 + $0x40] sm:$0xff]
        %v3211 = vld [vmem:[%s10 + $0x48] sm:$0xff]
        %v3212 = vld [vmem:[%s10 + $0x50] sm:$0xff]
        %v3213 = vld [vmem:[%s10 + $0x58] sm:$0xff]
        %v3214 = vld [vmem:[%s10 + $0x60] sm:$0xff]
        %v3215 = vld [vmem:[%s10 + $0x68] sm:$0xff]
        %v3216 = vld [vmem:[%s10 + $0x70] sm:$0xff]
        %v3217 = vld [vmem:[%s10 + $0x78] sm:$0xff]
        %v3218 = vld [vmem:[%s10 + $0x80] sm:$0xff]
        %v3219 = vld [vmem:[%s10 + $0x88] sm:$0xff]
        %v3220 = vld [vmem:[%s10 + $0x90] sm:$0xff]
        %v3221 = vld [vmem:[%s10 + $0x98] sm:$0xff]
        %v3222 = vld [vmem:[%s10 + $0xa0] sm:$0xff]
        %v3223 = vld [vmem:[%s10 + $0xa8] sm:$0xff]
        %v3224 = vld [vmem:[%s10 + $0xb0] sm:$0xff]
        %v3225 = vld [vmem:[%s10 + $0xb8] sm:$0xff]
        %v3226 = vld [vmem:[%s10 + $0xc0] sm:$0xff]
        %v3227 = vld [vmem:[%s10 + $0xc8] sm:$0xff]
        %v3228 = vld [vmem:[%s10 + $0xd0] sm:$0xff]
        %v3229 = vld [vmem:[%s10 + $0xd8] sm:$0xff]
        %v3230 = vld [vmem:[%s10 + $0xe0] sm:$0xff]
        %v3231 = vld [vmem:[%s10 + $0xe8] sm:$0xff]
        %v3232 = vld [vmem:[%s10 + $0xf0] sm:$0xff]
        %v3233 = vld [vmem:[%s10 + $0xf8] sm:$0xff]
        %v3234 = vld [vmem:[%s10 + $0x100] sm:$0xff]
        %v3235 = vld [vmem:[%s10 + $0x108] sm:$0xff]
        %v3236 = vld [vmem:[%s10 + $0x110] sm:$0xff]
        %v3237 = vld [vmem:[%s10 + $0x118] sm:$0xff]
        %v3238 = vld [vmem:[%s10 + $0x120] sm:$0xff]
        %v3239 = vld [vmem:[%s10 + $0x128] sm:$0xff]
        %v3240 = vld [vmem:[%s10 + $0x130] sm:$0xff]
        %v3241 = vld [vmem:[%s10 + $0x138] sm:$0xff]
        %v3242 = vld [vmem:[%s10 + $0x140] sm:$0xff]
        %v3243 = vld [vmem:[%s10 + $0x148] sm:$0xff]
        %v3244 = vld [vmem:[%s10 + $0x150] sm:$0xff]
        %v3245 = vld [vmem:[%s10 + $0x158] sm:$0xff]
        %v3246 = vld [vmem:[%s10 + $0x160] sm:$0xff]
        %v3247 = vld [vmem:[%s10 + $0x168] sm:$0xff]
        %v3248 = vld [vmem:[%s10 + $0x170] sm:$0xff]
        %v3249 = vld [vmem:[%s10 + $0x178] sm:$0xff]
        %v3250 = vld [vmem:[%s10 + $0x180] sm:$0xff]
        %v3251 = vld [vmem:[%s10 + $0x188] sm:$0xff]
        %v3252 = vld [vmem:[%s10 + $0x190] sm:$0xff]
        %v3253 = vld [vmem:[%s10 + $0x198] sm:$0xff]
        %v3254 = vld [vmem:[%s10 + $0x1a0] sm:$0xff]
        %v3255 = vld [vmem:[%s10 + $0x1a8] sm:$0xff]
        %v3256 = vld [vmem:[%s10 + $0x1b0] sm:$0xff]
        %v3257 = vld [vmem:[%s10 + $0x1b8] sm:$0xff]
        %v3258 = vld [vmem:[%s10 + $0x1c0] sm:$0xff]
        %v3259 = vld [vmem:[%s10 + $0x1c8] sm:$0xff]
        %v3260 = vld [vmem:[%s10 + $0x1d0] sm:$0xff]
        %v3261 = vld [vmem:[%s10 + $0x1d8] sm:$0xff]
        %v3262 = vld [vmem:[%s10 + $0x1e0] sm:$0xff]
        %v3263 = vld [vmem:[%s10 + $0x1e8] sm:$0xff]
        %v3264 = vld [vmem:[%s10 + $0x1f0] sm:$0xff]
        %v3265 = vld [vmem:[%s10 + $0x1f8] sm:$0xff]
        %v3266 = vld [vmem:[%s10 + $0x200] sm:$0xff]
        %v3267 = vld [vmem:[%s10 + $0x208] sm:$0xff]
        %v3268 = vld [vmem:[%s10 + $0x210] sm:$0xff]
        %v3269 = vld [vmem:[%s10 + $0x218] sm:$0xff]
        %v3270 = vld [vmem:[%s10 + $0x220] sm:$0xff]
        %v3271 = vld [vmem:[%s10 + $0x228] sm:$0xff]
        %v3272 = vld [vmem:[%s10 + $0x230] sm:$0xff]
        %v3273 = vld [vmem:[%s10 + $0x238] sm:$0xff]
        %v3274 = vld [vmem:[%s10 + $0x240] sm:$0xff]
        %v3275 = vld [vmem:[%s10 + $0x248] sm:$0xff]
        %v3276 = vld [vmem:[%s10 + $0x250] sm:$0xff]
        %v3277 = vld [vmem:[%s10 + $0x258] sm:$0xff]
        %v3278 = vld [vmem:[%s10 + $0x260] sm:$0xff]
        %v3279 = vld [vmem:[%s10 + $0x268] sm:$0xff]
        %v3280 = vld [vmem:[%s10 + $0x270] sm:$0xff]
        %v3281 = vld [vmem:[%s10 + $0x278] sm:$0xff]
        %v3282 = vld [vmem:[%s10 + $0x280] sm:$0xff]
        %v3283 = vld [vmem:[%s10 + $0x288] sm:$0xff]
        %v3284 = vld [vmem:[%s10 + $0x290] sm:$0xff]
        %v3285 = vld [vmem:[%s10 + $0x298] sm:$0xff]
        %v3286 = vld [vmem:[%s10 + $0x2a0] sm:$0xff]
        %v3287 = vld [vmem:[%s10 + $0x2a8] sm:$0xff]
        %v3288 = vld [vmem:[%s10 + $0x2b0] sm:$0xff]
        %v3289 = vld [vmem:[%s10 + $0x2b8] sm:$0xff]
        %v3290 = vld [vmem:[%s10 + $0x2c0] sm:$0xff]
        %v3291 = vld [vmem:[%s10 + $0x2c8] sm:$0xff]
        %v3292 = vld [vmem:[%s10 + $0x2d0] sm:$0xff]
        %v3293 = vld [vmem:[%s10 + $0x2d8] sm:$0xff]
        %v3294 = vld [vmem:[%s10 + $0x2e0] sm:$0xff]
        %v3295 = vld [vmem:[%s10 + $0x2e8] sm:$0xff]
        %v3296 = vld [vmem:[%s10 + $0x2f0] sm:$0xff]
        %v3297 = vld [vmem:[%s10 + $0x2f8] sm:$0xff]
        %v3298 = vld [vmem:[%s10 + $0x300] sm:$0xff]
        %v3299 = vld [vmem:[%s10 + $0x308] sm:$0xff]
        %v3300 = vld [vmem:[%s10 + $0x310] sm:$0xff]
        %v3301 = vld [vmem:[%s10 + $0x318] sm:$0xff]
        %v3302 = vld [vmem:[%s10 + $0x320] sm:$0xff]
        %v3303 = vld [vmem:[%s10 + $0x328] sm:$0xff]
        %v3304 = vld [vmem:[%s10 + $0x330] sm:$0xff]
        %v3305 = vld [vmem:[%s10 + $0x338] sm:$0xff]
        %v3306 = vld [vmem:[%s10 + $0x340] sm:$0xff]
        %v3307 = vld [vmem:[%s10 + $0x348] sm:$0xff]
        %v3308 = vld [vmem:[%s10 + $0x350] sm:$0xff]
        %v3309 = vld [vmem:[%s10 + $0x358] sm:$0xff]
        %v3310 = vld [vmem:[%s10 + $0x360] sm:$0xff]
        %v3311 = vld [vmem:[%s10 + $0x368] sm:$0xff]
        %v3312 = vld [vmem:[%s10 + $0x370] sm:$0xff]
        %v3313 = vld [vmem:[%s10 + $0x378] sm:$0xff]
        %v3314 = vld [vmem:[%s10 + $0x380] sm:$0xff]
        %v3315 = vld [vmem:[%s10 + $0x388] sm:$0xff]
        %v3316 = vld [vmem:[%s10 + $0x390] sm:$0xff]
        %v3317 = vld [vmem:[%s10 + $0x398] sm:$0xff]
        %v3318 = vld [vmem:[%s10 + $0x3a0] sm:$0xff]
        %v3319 = vld [vmem:[%s10 + $0x3a8] sm:$0xff]
        %v3320 = vld [vmem:[%s10 + $0x3b0] sm:$0xff]
        %v3321 = vld [vmem:[%s10 + $0x3b8] sm:$0xff]
        %v3322 = vld [vmem:[%s10 + $0x3c0] sm:$0xff]
        %v3323 = vld [vmem:[%s10 + $0x3c8] sm:$0xff]
        %v3324 = vld [vmem:[%s10 + $0x3d0] sm:$0xff]
        %v3325 = vld [vmem:[%s10 + $0x3d8] sm:$0xff]
        %v3326 = vld [vmem:[%s10 + $0x3e0] sm:$0xff]
        %v3327 = vld [vmem:[%s10 + $0x3e8] sm:$0xff]
        %v3328 = vld [vmem:[%s10 + $0x3f0] sm:$0xff]
        %v3329 = vld [vmem:[%s10 + $0x3f8] sm:$0xff]
        %v3330 = vld [vmem:[%s10 + $0x400] sm:$0xff]
        %v3331 = vld [vmem:[%s10 + $0x408] sm:$0xff]
        %v3332 = vld [vmem:[%s10 + $0x410] sm:$0xff]
        %v3333 = vld [vmem:[%s10 + $0x418] sm:$0xff]
        %v3334 = vld [vmem:[%s10 + $0x420] sm:$0xff]
        %v3335 = vld [vmem:[%s10 + $0x428] sm:$0xff]
        %v3336 = vld [vmem:[%s10 + $0x430] sm:$0xff]
        %v3337 = vld [vmem:[%s10 + $0x438] sm:$0xff]
        %v3338 = vld [vmem:[%s10 + $0x440] sm:$0xff]
        %v3339 = vld [vmem:[%s10 + $0x448] sm:$0xff]
        %v3340 = vld [vmem:[%s10 + $0x450] sm:$0xff]
        %v3341 = vld [vmem:[%s10 + $0x458] sm:$0xff]
        %v3342 = vld [vmem:[%s10 + $0x460] sm:$0xff]
        %v3343 = vld [vmem:[%s10 + $0x468] sm:$0xff]
        %v3344 = vld [vmem:[%s10 + $0x470] sm:$0xff]
        %v3345 = vld [vmem:[%s10 + $0x478] sm:$0xff]
        %v3346 = vld [vmem:[%s10 + $0x480] sm:$0xff]
        %v3347 = vld [vmem:[%s10 + $0x488] sm:$0xff]
        %v3348 = vld [vmem:[%s10 + $0x490] sm:$0xff]
        %v3349 = vld [vmem:[%s10 + $0x498] sm:$0xff]
        %v3350 = vld [vmem:[%s10 + $0x4a0] sm:$0xff]
        %v3351 = vld [vmem:[%s10 + $0x4a8] sm:$0xff]
        %v3352 = vld [vmem:[%s10 + $0x4b0] sm:$0xff]
        %v3353 = vld [vmem:[%s10 + $0x4b8] sm:$0xff]
        %v3354 = vld [vmem:[%s10 + $0x4c0] sm:$0xff]
        %v3355 = vld [vmem:[%s10 + $0x4c8] sm:$0xff]
        %v3356 = vld [vmem:[%s10 + $0x4d0] sm:$0xff]
        %v3357 = vld [vmem:[%s10 + $0x4d8] sm:$0xff]
        %v3358 = vld [vmem:[%s10 + $0x4e0] sm:$0xff]
        %v3359 = vld [vmem:[%s10 + $0x4e8] sm:$0xff]
        %v3360 = vld [vmem:[%s10 + $0x4f0] sm:$0xff]
        %v3361 = vld [vmem:[%s10 + $0x4f8] sm:$0xff]
        %v3362 = vld [vmem:[%s10 + $0x500] sm:$0xff]
        %v3363 = vld [vmem:[%s10 + $0x508] sm:$0xff]
        %v3364 = vld [vmem:[%s10 + $0x510] sm:$0xff]
        %v3365 = vld [vmem:[%s10 + $0x518] sm:$0xff]
        %v3366 = vld [vmem:[%s10 + $0x520] sm:$0xff]
        %v3367 = vld [vmem:[%s10 + $0x528] sm:$0xff]
        %v3368 = vld [vmem:[%s10 + $0x530] sm:$0xff]
        %v3369 = vld [vmem:[%s10 + $0x538] sm:$0xff]
        %v3370 = vld [vmem:[%s10 + $0x540] sm:$0xff]
        %v3371 = vld [vmem:[%s10 + $0x548] sm:$0xff]
        %v3372 = vld [vmem:[%s10 + $0x550] sm:$0xff]
        %v3373 = vld [vmem:[%s10 + $0x558] sm:$0xff]
        %v3374 = vld [vmem:[%s10 + $0x560] sm:$0xff]
        %v3375 = vld [vmem:[%s10 + $0x568] sm:$0xff]
        %v3376 = vld [vmem:[%s10 + $0x570] sm:$0xff]
        %v3377 = vld [vmem:[%s10 + $0x578] sm:$0xff]
        %v3378 = vld [vmem:[%s10 + $0x580] sm:$0xff]
        %v3379 = vld [vmem:[%s10 + $0x588] sm:$0xff]
        %v3380 = vld [vmem:[%s10 + $0x590] sm:$0xff]
        %v3381 = vld [vmem:[%s10 + $0x598] sm:$0xff]
        %v3382 = vld [vmem:[%s10 + $0x5a0] sm:$0xff]
        %v3383 = vld [vmem:[%s10 + $0x5a8] sm:$0xff]
        %v3384 = vld [vmem:[%s10 + $0x5b0] sm:$0xff]
        %v3385 = vld [vmem:[%s10 + $0x5b8] sm:$0xff]
        %v3386 = vld [vmem:[%s10 + $0x5c0] sm:$0xff]
        %v3387 = vld [vmem:[%s10 + $0x5c8] sm:$0xff]
        %v3388 = vld [vmem:[%s10 + $0x5d0] sm:$0xff]
        %v3389 = vld [vmem:[%s10 + $0x5d8] sm:$0xff]
        %v3390 = vld [vmem:[%s10 + $0x5e0] sm:$0xff]
        %v3391 = vld [vmem:[%s10 + $0x5e8] sm:$0xff]
        %v3392 = vld [vmem:[%s10 + $0x5f0] sm:$0xff]
        %v3393 = vld [vmem:[%s10 + $0x5f8] sm:$0xff]
        %v3394 = vld [vmem:[%s10 + $0x600] sm:$0xff]
        %v3395 = vld [vmem:[%s10 + $0x608] sm:$0xff]
        %v3396 = vld [vmem:[%s10 + $0x610] sm:$0xff]
        %v3397 = vld [vmem:[%s10 + $0x618] sm:$0xff]
        %v3398 = vld [vmem:[%s10 + $0x620] sm:$0xff]
        %v3399 = vld [vmem:[%s10 + $0x628] sm:$0xff]
        %v3400 = vld [vmem:[%s10 + $0x630] sm:$0xff]
        %v3401 = vld [vmem:[%s10 + $0x638] sm:$0xff]
        %v3402 = vld [vmem:[%s10 + $0x640] sm:$0xff]
        %v3403 = vld [vmem:[%s10 + $0x648] sm:$0xff]
        %v3404 = vld [vmem:[%s10 + $0x650] sm:$0xff]
        %v3405 = vld [vmem:[%s10 + $0x658] sm:$0xff]
        %v3406 = vld [vmem:[%s10 + $0x660] sm:$0xff]
        %v3407 = vld [vmem:[%s10 + $0x668] sm:$0xff]
        %v3408 = vld [vmem:[%s10 + $0x670] sm:$0xff]
        %v3409 = vld [vmem:[%s10 + $0x678] sm:$0xff]
        %v3410 = vld [vmem:[%s10 + $0x680] sm:$0xff]
        %v3411 = vld [vmem:[%s10 + $0x688] sm:$0xff]
        %v3412 = vld [vmem:[%s10 + $0x690] sm:$0xff]
        %v3413 = vld [vmem:[%s10 + $0x698] sm:$0xff]
        %v3414 = vld [vmem:[%s10 + $0x6a0] sm:$0xff]
        %v3415 = vld [vmem:[%s10 + $0x6a8] sm:$0xff]
        %v3416 = vld [vmem:[%s10 + $0x6b0] sm:$0xff]
        %v3417 = vld [vmem:[%s10 + $0x6b8] sm:$0xff]
        %v3418 = vld [vmem:[%s10 + $0x6c0] sm:$0xff]
        %v3419 = vld [vmem:[%s10 + $0x6c8] sm:$0xff]
        %v3420 = vld [vmem:[%s10 + $0x6d0] sm:$0xff]
        %v3421 = vld [vmem:[%s10 + $0x6d8] sm:$0xff]
        %v3422 = vld [vmem:[%s10 + $0x6e0] sm:$0xff]
        %v3423 = vld [vmem:[%s10 + $0x6e8] sm:$0xff]
        %v3424 = vld [vmem:[%s10 + $0x6f0] sm:$0xff]
        %v3425 = vld [vmem:[%s10 + $0x6f8] sm:$0xff]
        %v3426 = vld [vmem:[%s10 + $0x700] sm:$0xff]
        %v3427 = vld [vmem:[%s10 + $0x708] sm:$0xff]
        %v3428 = vld [vmem:[%s10 + $0x710] sm:$0xff]
        %v3429 = vld [vmem:[%s10 + $0x718] sm:$0xff]
        %v3430 = vld [vmem:[%s10 + $0x720] sm:$0xff]
        %v3431 = vld [vmem:[%s10 + $0x728] sm:$0xff]
        %v3432 = vld [vmem:[%s10 + $0x730] sm:$0xff]
        %v3433 = vld [vmem:[%s10 + $0x738] sm:$0xff]
        %v3434 = vld [vmem:[%s10 + $0x740] sm:$0xff]
        %v3435 = vld [vmem:[%s10 + $0x748] sm:$0xff]
        %v3436 = vld [vmem:[%s10 + $0x750] sm:$0xff]
        %v3437 = vld [vmem:[%s10 + $0x758] sm:$0xff]
        %v3438 = vld [vmem:[%s10 + $0x760] sm:$0xff]
        %v3439 = vld [vmem:[%s10 + $0x768] sm:$0xff]
        %v3440 = vld [vmem:[%s10 + $0x770] sm:$0xff]
        %v3441 = vld [vmem:[%s10 + $0x778] sm:$0xff]
        %v3442 = vld [vmem:[%s10 + $0x780] sm:$0xff]
        %v3443 = vld [vmem:[%s10 + $0x788] sm:$0xff]
        %v3444 = vld [vmem:[%s10 + $0x790] sm:$0xff]
        %v3445 = vld [vmem:[%s10 + $0x798] sm:$0xff]
        %v3446 = vld [vmem:[%s10 + $0x7a0] sm:$0xff]
        %v3447 = vld [vmem:[%s10 + $0x7a8] sm:$0xff]
        %v3448 = vld [vmem:[%s10 + $0x7b0] sm:$0xff]
        %v3449 = vld [vmem:[%s10 + $0x7b8] sm:$0xff]
        %v3450 = vld [vmem:[%s10 + $0x7c0] sm:$0xff]
        %v3451 = vld [vmem:[%s10 + $0x7c8] sm:$0xff]
        %v3452 = vld [vmem:[%s10 + $0x7d0] sm:$0xff]
        %v3453 = vld [vmem:[%s10 + $0x7d8] sm:$0xff]
        %v3454 = vld [vmem:[%s10 + $0x7e0] sm:$0xff]
        %v3455 = vld [vmem:[%s10 + $0x7e8] sm:$0xff]
        %v3456 = vld [vmem:[%s10 + $0x7f0] sm:$0xff]
        %v3457 = vld [vmem:[%s10 + $0x7f8] sm:$0xff]
        %v3458 = vld [vmem:[%s10 + $0x800] sm:$0xff]
        %v3459 = vld [vmem:[%s10 + $0x808] sm:$0xff]
        %v3460 = vld [vmem:[%s10 + $0x810] sm:$0xff]
        %v3461 = vld [vmem:[%s10 + $0x818] sm:$0xff]
        %v3462 = vld [vmem:[%s10 + $0x820] sm:$0xff]
        %v3463 = vld [vmem:[%s10 + $0x828] sm:$0xff]
        %v3464 = vld [vmem:[%s10 + $0x830] sm:$0xff]
        %v3465 = vld [vmem:[%s10 + $0x838] sm:$0xff]
        %v3466 = vld [vmem:[%s10 + $0x840] sm:$0xff]
        %v3467 = vld [vmem:[%s10 + $0x848] sm:$0xff]
        %v3468 = vld [vmem:[%s10 + $0x850] sm:$0xff]
        %v3469 = vld [vmem:[%s10 + $0x858] sm:$0xff]
        %v3470 = vld [vmem:[%s10 + $0x860] sm:$0xff]
        %v3471 = vld [vmem:[%s10 + $0x868] sm:$0xff]
        %v3472 = vld [vmem:[%s10 + $0x870] sm:$0xff]
        %v3473 = vld [vmem:[%s10 + $0x878] sm:$0xff]
        %v3474 = vld [vmem:[%s10 + $0x880] sm:$0xff]
        %v3475 = vld [vmem:[%s10 + $0x888] sm:$0xff]
        %v3476 = vld [vmem:[%s10 + $0x890] sm:$0xff]
        %v3477 = vld [vmem:[%s10 + $0x898] sm:$0xff]
        %v3478 = vld [vmem:[%s10 + $0x8a0] sm:$0xff]
        %v3479 = vld [vmem:[%s10 + $0x8a8] sm:$0xff]
        %v3480 = vld [vmem:[%s10 + $0x8b0] sm:$0xff]
        %v3481 = vld [vmem:[%s10 + $0x8b8] sm:$0xff]
        %v3482 = vld [vmem:[%s10 + $0x8c0] sm:$0xff]
        %v3483 = vld [vmem:[%s10 + $0x8c8] sm:$0xff]
        %v3484 = vld [vmem:[%s10 + $0x8d0] sm:$0xff]
        %v3485 = vld [vmem:[%s10 + $0x8d8] sm:$0xff]
        %v3486 = vld [vmem:[%s10 + $0x8e0] sm:$0xff]
        %v3487 = vld [vmem:[%s10 + $0x8e8] sm:$0xff]
        %v3488 = vld [vmem:[%s10 + $0x8f0] sm:$0xff]
        %v3489 = vld [vmem:[%s10 + $0x8f8] sm:$0xff]
        %v3490 = vld [vmem:[%s10 + $0x900] sm:$0xff]
        %v3491 = vld [vmem:[%s10 + $0x908] sm:$0xff]
        %v3492 = vld [vmem:[%s10 + $0x910] sm:$0xff]
        %v3493 = vld [vmem:[%s10 + $0x918] sm:$0xff]
        %v3494 = vld [vmem:[%s10 + $0x920] sm:$0xff]
        %v3495 = vld [vmem:[%s10 + $0x928] sm:$0xff]
        %v3496 = vld [vmem:[%s10 + $0x930] sm:$0xff]
        %v3497 = vld [vmem:[%s10 + $0x938] sm:$0xff]
        %v3498 = vld [vmem:[%s10 + $0x940] sm:$0xff]
        %v3499 = vld [vmem:[%s10 + $0x948] sm:$0xff]
        %v3500 = vld [vmem:[%s10 + $0x950] sm:$0xff]
        %v3501 = vld [vmem:[%s10 + $0x958] sm:$0xff]
        %v3502 = vld [vmem:[%s10 + $0x960] sm:$0xff]
        %v3503 = vld [vmem:[%s10 + $0x968] sm:$0xff]
        %v3504 = vld [vmem:[%s10 + $0x970] sm:$0xff]
        %v3505 = vld [vmem:[%s10 + $0x978] sm:$0xff]
        %v3506 = vld [vmem:[%s10 + $0x980] sm:$0xff]
        %v3507 = vld [vmem:[%s10 + $0x988] sm:$0xff]
        %v3508 = vld [vmem:[%s10 + $0x990] sm:$0xff]
        %v3509 = vld [vmem:[%s10 + $0x998] sm:$0xff]
        %v3510 = vld [vmem:[%s10 + $0x9a0] sm:$0xff]
        %v3511 = vld [vmem:[%s10 + $0x9a8] sm:$0xff]
        %v3512 = vld [vmem:[%s10 + $0x9b0] sm:$0xff]
        %v3513 = vld [vmem:[%s10 + $0x9b8] sm:$0xff]
        %v3514 = vld [vmem:[%s10 + $0x9c0] sm:$0xff]
        %v3515 = vld [vmem:[%s10 + $0x9c8] sm:$0xff]
        %v3516 = vld [vmem:[%s10 + $0x9d0] sm:$0xff]
        %v3517 = vld [vmem:[%s10 + $0x9d8] sm:$0xff]
        %v3518 = vld [vmem:[%s10 + $0x9e0] sm:$0xff]
        %v3519 = vld [vmem:[%s10 + $0x9e8] sm:$0xff]
        %v3520 = vld [vmem:[%s10 + $0x9f0] sm:$0xff]
        %v3521 = vld [vmem:[%s10 + $0x9f8] sm:$0xff]
        %v3522 = vld [vmem:[%s10 + $0xa00] sm:$0xff]
        %v3523 = vld [vmem:[%s10 + $0xa08] sm:$0xff]
        %v3524 = vld [vmem:[%s10 + $0xa10] sm:$0xff]
        %v3525 = vld [vmem:[%s10 + $0xa18] sm:$0xff]
        %v3526 = vld [vmem:[%s10 + $0xa20] sm:$0xff]
        %v3527 = vld [vmem:[%s10 + $0xa28] sm:$0xff]
        %v3528 = vld [vmem:[%s10 + $0xa30] sm:$0xff]
        %v3529 = vld [vmem:[%s10 + $0xa38] sm:$0xff]
        %v3530 = vld [vmem:[%s10 + $0xa40] sm:$0xff]
        %v3531 = vld [vmem:[%s10 + $0xa48] sm:$0xff]
        %v3532 = vld [vmem:[%s10 + $0xa50] sm:$0xff]
        %v3533 = vld [vmem:[%s10 + $0xa58] sm:$0xff]
        %v3534 = vld [vmem:[%s10 + $0xa60] sm:$0xff]
        %v3535 = vld [vmem:[%s10 + $0xa68] sm:$0xff]
        %v3536 = vld [vmem:[%s10 + $0xa70] sm:$0xff]
        %v3537 = vld [vmem:[%s10 + $0xa78] sm:$0xff]
        %v3538 = vld [vmem:[%s10 + $0xa80] sm:$0xff]
        %v3539 = vld [vmem:[%s10 + $0xa88] sm:$0xff]
        %v3540 = vld [vmem:[%s10 + $0xa90] sm:$0xff]
        %v3541 = vld [vmem:[%s10 + $0xa98] sm:$0xff]
        %v3542 = vld [vmem:[%s10 + $0xaa0] sm:$0xff]
        %v3543 = vld [vmem:[%s10 + $0xaa8] sm:$0xff]
        %v3544 = vld [vmem:[%s10 + $0xab0] sm:$0xff]
        %v3545 = vld [vmem:[%s10 + $0xab8] sm:$0xff]
        %v3546 = vld [vmem:[%s10 + $0xac0] sm:$0xff]
        %v3547 = vld [vmem:[%s10 + $0xac8] sm:$0xff]
        %v3548 = vld [vmem:[%s10 + $0xad0] sm:$0xff]
        %v3549 = vld [vmem:[%s10 + $0xad8] sm:$0xff]
        %v3550 = vld [vmem:[%s10 + $0xae0] sm:$0xff]
        %v3551 = vld [vmem:[%s10 + $0xae8] sm:$0xff]
        %v3552 = vld [vmem:[%s10 + $0xaf0] sm:$0xff]
        %v3553 = vld [vmem:[%s10 + $0xaf8] sm:$0xff]
        %v3554 = vld [vmem:[%s10 + $0xb00] sm:$0xff]
        %v3555 = vld [vmem:[%s10 + $0xb08] sm:$0xff]
        %v3556 = vld [vmem:[%s10 + $0xb10] sm:$0xff]
        %v3557 = vld [vmem:[%s10 + $0xb18] sm:$0xff]
        %v3558 = vld [vmem:[%s10 + $0xb20] sm:$0xff]
        %v3559 = vld [vmem:[%s10 + $0xb28] sm:$0xff]
        %v3560 = vld [vmem:[%s10 + $0xb30] sm:$0xff]
        %v3561 = vld [vmem:[%s10 + $0xb38] sm:$0xff]
        %v3562 = vld [vmem:[%s10 + $0xb40] sm:$0xff]
        %v3563 = vld [vmem:[%s10 + $0xb48] sm:$0xff]
        %v3564 = vld [vmem:[%s10 + $0xb50] sm:$0xff]
        %v3565 = vld [vmem:[%s10 + $0xb58] sm:$0xff]
        %v3566 = vld [vmem:[%s10 + $0xb60] sm:$0xff]
        %v3567 = vld [vmem:[%s10 + $0xb68] sm:$0xff]
        %v3568 = vld [vmem:[%s10 + $0xb70] sm:$0xff]
        %v3569 = vld [vmem:[%s10 + $0xb78] sm:$0xff]
        %v3570 = vld [vmem:[%s10 + $0xb80] sm:$0xff]
        %v3571 = vld [vmem:[%s10 + $0xb88] sm:$0xff]
        %v3572 = vld [vmem:[%s10 + $0xb90] sm:$0xff]
        %v3573 = vld [vmem:[%s10 + $0xb98] sm:$0xff]
        %v3574 = vld [vmem:[%s10 + $0xba0] sm:$0xff]
        %v3575 = vld [vmem:[%s10 + $0xba8] sm:$0xff]
        %v3576 = vld [vmem:[%s10 + $0xbb0] sm:$0xff]
        %v3577 = vld [vmem:[%s10 + $0xbb8] sm:$0xff]
        %v3578 = vld [vmem:[%s10 + $0xbc0] sm:$0xff]
        %v3579 = vld [vmem:[%s10 + $0xbc8] sm:$0xff]
        %v3580 = vld [vmem:[%s10 + $0xbd0] sm:$0xff]
        %v3581 = vld [vmem:[%s10 + $0xbd8] sm:$0xff]
        %v3582 = vld [vmem:[%s10 + $0xbe0] sm:$0xff]
        %v3583 = vld [vmem:[%s10 + $0xbe8] sm:$0xff]
        %v3584 = vld [vmem:[%s10 + $0xbf0] sm:$0xff]
        %v3585 = vld [vmem:[%s10 + $0xbf8] sm:$0xff]
        %v3586 = vld [vmem:[%s11] sm:$0x3f]
        %v3588 = vperm.slane %v3586, 0
        %v3589 = vperm.slane %v3586, 1
        %v3590 = vperm.slane %v3586, 2
        %v3591 = vperm.slane %v3586, 3
        %v3592 = vperm.slane %v3586, 4
        %v3593 = vperm.slane %v3586, 5
        %v3984 = vunpack.c.l.b16 %v3202
        %v3985 = vunpack.c.h.b16 %v3202
        %v3986 = vunpack.c.l.b16 %v3203
        %v3987 = vunpack.c.h.b16 %v3203
        %v3988 = vunpack.c.l.b16 %v3204
        %v3989 = vunpack.c.h.b16 %v3204
        %v3990 = vunpack.c.l.b16 %v3205
        %v3991 = vunpack.c.h.b16 %v3205
        %v3992 = vunpack.c.l.b16 %v3206
        %v3993 = vunpack.c.h.b16 %v3206
        %v3994 = vunpack.c.l.b16 %v3207
        %v3995 = vunpack.c.h.b16 %v3207
        %v3996 = vunpack.c.l.b16 %v3208
        %v3997 = vunpack.c.h.b16 %v3208
        %v3998 = vunpack.c.l.b16 %v3209
        %v3999 = vunpack.c.h.b16 %v3209
        %v4000 = vunpack.c.l.b16 %v3210
        %v4001 = vunpack.c.h.b16 %v3210
        %v4002 = vunpack.c.l.b16 %v3211
        %v4003 = vunpack.c.h.b16 %v3211
        %v4004 = vunpack.c.l.b16 %v3212
        %v4005 = vunpack.c.h.b16 %v3212
        %v4006 = vunpack.c.l.b16 %v3213
        %v4007 = vunpack.c.h.b16 %v3213
        %v4008 = vunpack.c.l.b16 %v3214
        %v4009 = vunpack.c.h.b16 %v3214
        %v4010 = vunpack.c.l.b16 %v3215
        %v4011 = vunpack.c.h.b16 %v3215
        %v4012 = vunpack.c.l.b16 %v3216
        %v4013 = vunpack.c.h.b16 %v3216
        %v4014 = vunpack.c.l.b16 %v3217
        %v4015 = vunpack.c.h.b16 %v3217
        %v4016 = vunpack.c.l.b16 %v3218
        %v4017 = vunpack.c.h.b16 %v3218
        %v4018 = vunpack.c.l.b16 %v3219
        %v4019 = vunpack.c.h.b16 %v3219
        %v4020 = vunpack.c.l.b16 %v3220
        %v4021 = vunpack.c.h.b16 %v3220
        %v4022 = vunpack.c.l.b16 %v3221
        %v4023 = vunpack.c.h.b16 %v3221
        %v4024 = vunpack.c.l.b16 %v3222
        %v4025 = vunpack.c.h.b16 %v3222
        %v4026 = vunpack.c.l.b16 %v3223
        %v4027 = vunpack.c.h.b16 %v3223
        %v4028 = vunpack.c.l.b16 %v3224
        %v4029 = vunpack.c.h.b16 %v3224
        %v4030 = vunpack.c.l.b16 %v3225
        %v4031 = vunpack.c.h.b16 %v3225
        %v4032 = vunpack.c.l.b16 %v3226
        %v4033 = vunpack.c.h.b16 %v3226
        %v4034 = vunpack.c.l.b16 %v3227
        %v4035 = vunpack.c.h.b16 %v3227
        %v4036 = vunpack.c.l.b16 %v3228
        %v4037 = vunpack.c.h.b16 %v3228
        %v4038 = vunpack.c.l.b16 %v3229
        %v4039 = vunpack.c.h.b16 %v3229
        %v4040 = vunpack.c.l.b16 %v3230
        %v4041 = vunpack.c.h.b16 %v3230
        %v4042 = vunpack.c.l.b16 %v3231
        %v4043 = vunpack.c.h.b16 %v3231
        %v4044 = vunpack.c.l.b16 %v3232
        %v4045 = vunpack.c.h.b16 %v3232
        %v4046 = vunpack.c.l.b16 %v3233
        %v4047 = vunpack.c.h.b16 %v3233
        %v4048 = vunpack.c.l.b16 %v3234
        %v4049 = vunpack.c.h.b16 %v3234
        %v4050 = vunpack.c.l.b16 %v3235
        %v4051 = vunpack.c.h.b16 %v3235
        %v4052 = vunpack.c.l.b16 %v3236
        %v4053 = vunpack.c.h.b16 %v3236
        %v4054 = vunpack.c.l.b16 %v3237
        %v4055 = vunpack.c.h.b16 %v3237
        %v4056 = vunpack.c.l.b16 %v3238
        %v4057 = vunpack.c.h.b16 %v3238
        %v4058 = vunpack.c.l.b16 %v3239
        %v4059 = vunpack.c.h.b16 %v3239
        %v4060 = vunpack.c.l.b16 %v3240
        %v4061 = vunpack.c.h.b16 %v3240
        %v4062 = vunpack.c.l.b16 %v3241
        %v4063 = vunpack.c.h.b16 %v3241
        %v4064 = vunpack.c.l.b16 %v3242
        %v4065 = vunpack.c.h.b16 %v3242
        %v4066 = vunpack.c.l.b16 %v3243
        %v4067 = vunpack.c.h.b16 %v3243
        %v4068 = vunpack.c.l.b16 %v3244
        %v4069 = vunpack.c.h.b16 %v3244
        %v4070 = vunpack.c.l.b16 %v3245
        %v4071 = vunpack.c.h.b16 %v3245
        %v4072 = vunpack.c.l.b16 %v3246
        %v4073 = vunpack.c.h.b16 %v3246
        %v4074 = vunpack.c.l.b16 %v3247
        %v4075 = vunpack.c.h.b16 %v3247
        %v4076 = vunpack.c.l.b16 %v3248
        %v4077 = vunpack.c.h.b16 %v3248
        %v4078 = vunpack.c.l.b16 %v3249
        %v4079 = vunpack.c.h.b16 %v3249
        %v4080 = vunpack.c.l.b16 %v3250
        %v4081 = vunpack.c.h.b16 %v3250
        %v4082 = vunpack.c.l.b16 %v3251
        %v4083 = vunpack.c.h.b16 %v3251
        %v4084 = vunpack.c.l.b16 %v3252
        %v4085 = vunpack.c.h.b16 %v3252
        %v4086 = vunpack.c.l.b16 %v3253
        %v4087 = vunpack.c.h.b16 %v3253
        %v4088 = vunpack.c.l.b16 %v3254
        %v4089 = vunpack.c.h.b16 %v3254
        %v4090 = vunpack.c.l.b16 %v3255
        %v4091 = vunpack.c.h.b16 %v3255
        %v4092 = vunpack.c.l.b16 %v3256
        %v4093 = vunpack.c.h.b16 %v3256
        %v4094 = vunpack.c.l.b16 %v3257
        %v4095 = vunpack.c.h.b16 %v3257
        %v4096 = vunpack.c.l.b16 %v3258
        %v4097 = vunpack.c.h.b16 %v3258
        %v4098 = vunpack.c.l.b16 %v3259
        %v4099 = vunpack.c.h.b16 %v3259
        %v4100 = vunpack.c.l.b16 %v3260
        %v4101 = vunpack.c.h.b16 %v3260
        %v4102 = vunpack.c.l.b16 %v3261
        %v4103 = vunpack.c.h.b16 %v3261
        %v4104 = vunpack.c.l.b16 %v3262
        %v4105 = vunpack.c.h.b16 %v3262
        %v4106 = vunpack.c.l.b16 %v3263
        %v4107 = vunpack.c.h.b16 %v3263
        %v4108 = vunpack.c.l.b16 %v3264
        %v4109 = vunpack.c.h.b16 %v3264
        %v4110 = vunpack.c.l.b16 %v3265
        %v4111 = vunpack.c.h.b16 %v3265
        %v4112 = vunpack.c.l.b16 %v3266
        %v4113 = vunpack.c.h.b16 %v3266
        %v4114 = vunpack.c.l.b16 %v3267
        %v4115 = vunpack.c.h.b16 %v3267
        %v4116 = vunpack.c.l.b16 %v3268
        %v4117 = vunpack.c.h.b16 %v3268
        %v4118 = vunpack.c.l.b16 %v3269
        %v4119 = vunpack.c.h.b16 %v3269
        %v4120 = vunpack.c.l.b16 %v3270
        %v4121 = vunpack.c.h.b16 %v3270
        %v4122 = vunpack.c.l.b16 %v3271
        %v4123 = vunpack.c.h.b16 %v3271
        %v4124 = vunpack.c.l.b16 %v3272
        %v4125 = vunpack.c.h.b16 %v3272
        %v4126 = vunpack.c.l.b16 %v3273
        %v4127 = vunpack.c.h.b16 %v3273
        %v4128 = vunpack.c.l.b16 %v3274
        %v4129 = vunpack.c.h.b16 %v3274
        %v4130 = vunpack.c.l.b16 %v3275
        %v4131 = vunpack.c.h.b16 %v3275
        %v4132 = vunpack.c.l.b16 %v3276
        %v4133 = vunpack.c.h.b16 %v3276
        %v4134 = vunpack.c.l.b16 %v3277
        %v4135 = vunpack.c.h.b16 %v3277
        %v4136 = vunpack.c.l.b16 %v3278
        %v4137 = vunpack.c.h.b16 %v3278
        %v4138 = vunpack.c.l.b16 %v3279
        %v4139 = vunpack.c.h.b16 %v3279
        %v4140 = vunpack.c.l.b16 %v3280
        %v4141 = vunpack.c.h.b16 %v3280
        %v4142 = vunpack.c.l.b16 %v3281
        %v4143 = vunpack.c.h.b16 %v3281
        %v4144 = vunpack.c.l.b16 %v3282
        %v4145 = vunpack.c.h.b16 %v3282
        %v4146 = vunpack.c.l.b16 %v3283
        %v4147 = vunpack.c.h.b16 %v3283
        %v4148 = vunpack.c.l.b16 %v3284
        %v4149 = vunpack.c.h.b16 %v3284
        %v4150 = vunpack.c.l.b16 %v3285
        %v4151 = vunpack.c.h.b16 %v3285
        %v4152 = vunpack.c.l.b16 %v3286
        %v4153 = vunpack.c.h.b16 %v3286
        %v4154 = vunpack.c.l.b16 %v3287
        %v4155 = vunpack.c.h.b16 %v3287
        %v4156 = vunpack.c.l.b16 %v3288
        %v4157 = vunpack.c.h.b16 %v3288
        %v4158 = vunpack.c.l.b16 %v3289
        %v4159 = vunpack.c.h.b16 %v3289
        %v4160 = vunpack.c.l.b16 %v3290
        %v4161 = vunpack.c.h.b16 %v3290
        %v4162 = vunpack.c.l.b16 %v3291
        %v4163 = vunpack.c.h.b16 %v3291
        %v4164 = vunpack.c.l.b16 %v3292
        %v4165 = vunpack.c.h.b16 %v3292
        %v4166 = vunpack.c.l.b16 %v3293
        %v4167 = vunpack.c.h.b16 %v3293
        %v4168 = vunpack.c.l.b16 %v3294
        %v4169 = vunpack.c.h.b16 %v3294
        %v4170 = vunpack.c.l.b16 %v3295
        %v4171 = vunpack.c.h.b16 %v3295
        %v4172 = vunpack.c.l.b16 %v3296
        %v4173 = vunpack.c.h.b16 %v3296
        %v4174 = vunpack.c.l.b16 %v3297
        %v4175 = vunpack.c.h.b16 %v3297
        %v4176 = vunpack.c.l.b16 %v3298
        %v4177 = vunpack.c.h.b16 %v3298
        %v4178 = vunpack.c.l.b16 %v3299
        %v4179 = vunpack.c.h.b16 %v3299
        %v4180 = vunpack.c.l.b16 %v3300
        %v4181 = vunpack.c.h.b16 %v3300
        %v4182 = vunpack.c.l.b16 %v3301
        %v4183 = vunpack.c.h.b16 %v3301
        %v4184 = vunpack.c.l.b16 %v3302
        %v4185 = vunpack.c.h.b16 %v3302
        %v4186 = vunpack.c.l.b16 %v3303
        %v4187 = vunpack.c.h.b16 %v3303
        %v4188 = vunpack.c.l.b16 %v3304
        %v4189 = vunpack.c.h.b16 %v3304
        %v4190 = vunpack.c.l.b16 %v3305
        %v4191 = vunpack.c.h.b16 %v3305
        %v4192 = vunpack.c.l.b16 %v3306
        %v4193 = vunpack.c.h.b16 %v3306
        %v4194 = vunpack.c.l.b16 %v3307
        %v4195 = vunpack.c.h.b16 %v3307
        %v4196 = vunpack.c.l.b16 %v3308
        %v4197 = vunpack.c.h.b16 %v3308
        %v4198 = vunpack.c.l.b16 %v3309
        %v4199 = vunpack.c.h.b16 %v3309
        %v4200 = vunpack.c.l.b16 %v3310
        %v4201 = vunpack.c.h.b16 %v3310
        %v4202 = vunpack.c.l.b16 %v3311
        %v4203 = vunpack.c.h.b16 %v3311
        %v4204 = vunpack.c.l.b16 %v3312
        %v4205 = vunpack.c.h.b16 %v3312
        %v4206 = vunpack.c.l.b16 %v3313
        %v4207 = vunpack.c.h.b16 %v3313
        %v4208 = vunpack.c.l.b16 %v3314
        %v4209 = vunpack.c.h.b16 %v3314
        %v4210 = vunpack.c.l.b16 %v3315
        %v4211 = vunpack.c.h.b16 %v3315
        %v4212 = vunpack.c.l.b16 %v3316
        %v4213 = vunpack.c.h.b16 %v3316
        %v4214 = vunpack.c.l.b16 %v3317
        %v4215 = vunpack.c.h.b16 %v3317
        %v4216 = vunpack.c.l.b16 %v3318
        %v4217 = vunpack.c.h.b16 %v3318
        %v4218 = vunpack.c.l.b16 %v3319
        %v4219 = vunpack.c.h.b16 %v3319
        %v4220 = vunpack.c.l.b16 %v3320
        %v4221 = vunpack.c.h.b16 %v3320
        %v4222 = vunpack.c.l.b16 %v3321
        %v4223 = vunpack.c.h.b16 %v3321
        %v4224 = vunpack.c.l.b16 %v3322
        %v4225 = vunpack.c.h.b16 %v3322
        %v4226 = vunpack.c.l.b16 %v3323
        %v4227 = vunpack.c.h.b16 %v3323
        %v4228 = vunpack.c.l.b16 %v3324
        %v4229 = vunpack.c.h.b16 %v3324
        %v4230 = vunpack.c.l.b16 %v3325
        %v4231 = vunpack.c.h.b16 %v3325
        %v4232 = vunpack.c.l.b16 %v3326
        %v4233 = vunpack.c.h.b16 %v3326
        %v4234 = vunpack.c.l.b16 %v3327
        %v4235 = vunpack.c.h.b16 %v3327
        %v4236 = vunpack.c.l.b16 %v3328
        %v4237 = vunpack.c.h.b16 %v3328
        %v4238 = vunpack.c.l.b16 %v3329
        %v4239 = vunpack.c.h.b16 %v3329
        %v4240 = vunpack.c.l.b16 %v3330
        %v4241 = vunpack.c.h.b16 %v3330
        %v4242 = vunpack.c.l.b16 %v3331
        %v4243 = vunpack.c.h.b16 %v3331
        %v4244 = vunpack.c.l.b16 %v3332
        %v4245 = vunpack.c.h.b16 %v3332
        %v4246 = vunpack.c.l.b16 %v3333
        %v4247 = vunpack.c.h.b16 %v3333
        %v4248 = vunpack.c.l.b16 %v3334
        %v4249 = vunpack.c.h.b16 %v3334
        %v4250 = vunpack.c.l.b16 %v3335
        %v4251 = vunpack.c.h.b16 %v3335
        %v4252 = vunpack.c.l.b16 %v3336
        %v4253 = vunpack.c.h.b16 %v3336
        %v4254 = vunpack.c.l.b16 %v3337
        %v4255 = vunpack.c.h.b16 %v3337
        %v4256 = vunpack.c.l.b16 %v3338
        %v4257 = vunpack.c.h.b16 %v3338
        %v4258 = vunpack.c.l.b16 %v3339
        %v4259 = vunpack.c.h.b16 %v3339
        %v4260 = vunpack.c.l.b16 %v3340
        %v4261 = vunpack.c.h.b16 %v3340
        %v4262 = vunpack.c.l.b16 %v3341
        %v4263 = vunpack.c.h.b16 %v3341
        %v4264 = vunpack.c.l.b16 %v3342
        %v4265 = vunpack.c.h.b16 %v3342
        %v4266 = vunpack.c.l.b16 %v3343
        %v4267 = vunpack.c.h.b16 %v3343
        %v4268 = vunpack.c.l.b16 %v3344
        %v4269 = vunpack.c.h.b16 %v3344
        %v4270 = vunpack.c.l.b16 %v3345
        %v4271 = vunpack.c.h.b16 %v3345
        %v4272 = vunpack.c.l.b16 %v3346
        %v4273 = vunpack.c.h.b16 %v3346
        %v4274 = vunpack.c.l.b16 %v3347
        %v4275 = vunpack.c.h.b16 %v3347
        %v4276 = vunpack.c.l.b16 %v3348
        %v4277 = vunpack.c.h.b16 %v3348
        %v4278 = vunpack.c.l.b16 %v3349
        %v4279 = vunpack.c.h.b16 %v3349
        %v4280 = vunpack.c.l.b16 %v3350
        %v4281 = vunpack.c.h.b16 %v3350
        %v4282 = vunpack.c.l.b16 %v3351
        %v4283 = vunpack.c.h.b16 %v3351
        %v4284 = vunpack.c.l.b16 %v3352
        %v4285 = vunpack.c.h.b16 %v3352
        %v4286 = vunpack.c.l.b16 %v3353
        %v4287 = vunpack.c.h.b16 %v3353
        %v4288 = vunpack.c.l.b16 %v3354
        %v4289 = vunpack.c.h.b16 %v3354
        %v4290 = vunpack.c.l.b16 %v3355
        %v4291 = vunpack.c.h.b16 %v3355
        %v4292 = vunpack.c.l.b16 %v3356
        %v4293 = vunpack.c.h.b16 %v3356
        %v4294 = vunpack.c.l.b16 %v3357
        %v4295 = vunpack.c.h.b16 %v3357
        %v4296 = vunpack.c.l.b16 %v3358
        %v4297 = vunpack.c.h.b16 %v3358
        %v4298 = vunpack.c.l.b16 %v3359
        %v4299 = vunpack.c.h.b16 %v3359
        %v4300 = vunpack.c.l.b16 %v3360
        %v4301 = vunpack.c.h.b16 %v3360
        %v4302 = vunpack.c.l.b16 %v3361
        %v4303 = vunpack.c.h.b16 %v3361
        %v4304 = vunpack.c.l.b16 %v3362
        %v4305 = vunpack.c.h.b16 %v3362
        %v4306 = vunpack.c.l.b16 %v3363
        %v4307 = vunpack.c.h.b16 %v3363
        %v4308 = vunpack.c.l.b16 %v3364
        %v4309 = vunpack.c.h.b16 %v3364
        %v4310 = vunpack.c.l.b16 %v3365
        %v4311 = vunpack.c.h.b16 %v3365
        %v4312 = vunpack.c.l.b16 %v3366
        %v4313 = vunpack.c.h.b16 %v3366
        %v4314 = vunpack.c.l.b16 %v3367
        %v4315 = vunpack.c.h.b16 %v3367
        %v4316 = vunpack.c.l.b16 %v3368
        %v4317 = vunpack.c.h.b16 %v3368
        %v4318 = vunpack.c.l.b16 %v3369
        %v4319 = vunpack.c.h.b16 %v3369
        %v4320 = vunpack.c.l.b16 %v3370
        %v4321 = vunpack.c.h.b16 %v3370
        %v4322 = vunpack.c.l.b16 %v3371
        %v4323 = vunpack.c.h.b16 %v3371
        %v4324 = vunpack.c.l.b16 %v3372
        %v4325 = vunpack.c.h.b16 %v3372
        %v4326 = vunpack.c.l.b16 %v3373
        %v4327 = vunpack.c.h.b16 %v3373
        %v4328 = vunpack.c.l.b16 %v3374
        %v4329 = vunpack.c.h.b16 %v3374
        %v4330 = vunpack.c.l.b16 %v3375
        %v4331 = vunpack.c.h.b16 %v3375
        %v4332 = vunpack.c.l.b16 %v3376
        %v4333 = vunpack.c.h.b16 %v3376
        %v4334 = vunpack.c.l.b16 %v3377
        %v4335 = vunpack.c.h.b16 %v3377
        %v4336 = vunpack.c.l.b16 %v3378
        %v4337 = vunpack.c.h.b16 %v3378
        %v4338 = vunpack.c.l.b16 %v3379
        %v4339 = vunpack.c.h.b16 %v3379
        %v4340 = vunpack.c.l.b16 %v3380
        %v4341 = vunpack.c.h.b16 %v3380
        %v4342 = vunpack.c.l.b16 %v3381
        %v4343 = vunpack.c.h.b16 %v3381
        %v4344 = vunpack.c.l.b16 %v3382
        %v4345 = vunpack.c.h.b16 %v3382
        %v4346 = vunpack.c.l.b16 %v3383
        %v4347 = vunpack.c.h.b16 %v3383
        %v4348 = vunpack.c.l.b16 %v3384
        %v4349 = vunpack.c.h.b16 %v3384
        %v4350 = vunpack.c.l.b16 %v3385
        %v4351 = vunpack.c.h.b16 %v3385
        %v4352 = vunpack.c.l.b16 %v3386
        %v4353 = vunpack.c.h.b16 %v3386
        %v4354 = vunpack.c.l.b16 %v3387
        %v4355 = vunpack.c.h.b16 %v3387
        %v4356 = vunpack.c.l.b16 %v3388
        %v4357 = vunpack.c.h.b16 %v3388
        %v4358 = vunpack.c.l.b16 %v3389
        %v4359 = vunpack.c.h.b16 %v3389
        %v4360 = vunpack.c.l.b16 %v3390
        %v4361 = vunpack.c.h.b16 %v3390
        %v4362 = vunpack.c.l.b16 %v3391
        %v4363 = vunpack.c.h.b16 %v3391
        %v4364 = vunpack.c.l.b16 %v3392
        %v4365 = vunpack.c.h.b16 %v3392
        %v4366 = vunpack.c.l.b16 %v3393
        %v4367 = vunpack.c.h.b16 %v3393
        %v4368 = vunpack.c.l.b16 %v3394
        %v4369 = vunpack.c.h.b16 %v3394
        %v4370 = vunpack.c.l.b16 %v3395
        %v4371 = vunpack.c.h.b16 %v3395
        %v4372 = vunpack.c.l.b16 %v3396
        %v4373 = vunpack.c.h.b16 %v3396
        %v4374 = vunpack.c.l.b16 %v3397
        %v4375 = vunpack.c.h.b16 %v3397
        %v4376 = vunpack.c.l.b16 %v3398
        %v4377 = vunpack.c.h.b16 %v3398
        %v4378 = vunpack.c.l.b16 %v3399
        %v4379 = vunpack.c.h.b16 %v3399
        %v4380 = vunpack.c.l.b16 %v3400
        %v4381 = vunpack.c.h.b16 %v3400
        %v4382 = vunpack.c.l.b16 %v3401
        %v4383 = vunpack.c.h.b16 %v3401
        %v4384 = vunpack.c.l.b16 %v3402
        %v4385 = vunpack.c.h.b16 %v3402
        %v4386 = vunpack.c.l.b16 %v3403
        %v4387 = vunpack.c.h.b16 %v3403
        %v4388 = vunpack.c.l.b16 %v3404
        %v4389 = vunpack.c.h.b16 %v3404
        %v4390 = vunpack.c.l.b16 %v3405
        %v4391 = vunpack.c.h.b16 %v3405
        %v4392 = vunpack.c.l.b16 %v3406
        %v4393 = vunpack.c.h.b16 %v3406
        %v4394 = vunpack.c.l.b16 %v3407
        %v4395 = vunpack.c.h.b16 %v3407
        %v4396 = vunpack.c.l.b16 %v3408
        %v4397 = vunpack.c.h.b16 %v3408
        %v4398 = vunpack.c.l.b16 %v3409
        %v4399 = vunpack.c.h.b16 %v3409
        %v4400 = vunpack.c.l.b16 %v3410
        %v4401 = vunpack.c.h.b16 %v3410
        %v4402 = vunpack.c.l.b16 %v3411
        %v4403 = vunpack.c.h.b16 %v3411
        %v4404 = vunpack.c.l.b16 %v3412
        %v4405 = vunpack.c.h.b16 %v3412
        %v4406 = vunpack.c.l.b16 %v3413
        %v4407 = vunpack.c.h.b16 %v3413
        %v4408 = vunpack.c.l.b16 %v3414
        %v4409 = vunpack.c.h.b16 %v3414
        %v4410 = vunpack.c.l.b16 %v3415
        %v4411 = vunpack.c.h.b16 %v3415
        %v4412 = vunpack.c.l.b16 %v3416
        %v4413 = vunpack.c.h.b16 %v3416
        %v4414 = vunpack.c.l.b16 %v3417
        %v4415 = vunpack.c.h.b16 %v3417
        %v4416 = vunpack.c.l.b16 %v3418
        %v4417 = vunpack.c.h.b16 %v3418
        %v4418 = vunpack.c.l.b16 %v3419
        %v4419 = vunpack.c.h.b16 %v3419
        %v4420 = vunpack.c.l.b16 %v3420
        %v4421 = vunpack.c.h.b16 %v3420
        %v4422 = vunpack.c.l.b16 %v3421
        %v4423 = vunpack.c.h.b16 %v3421
        %v4424 = vunpack.c.l.b16 %v3422
        %v4425 = vunpack.c.h.b16 %v3422
        %v4426 = vunpack.c.l.b16 %v3423
        %v4427 = vunpack.c.h.b16 %v3423
        %v4428 = vunpack.c.l.b16 %v3424
        %v4429 = vunpack.c.h.b16 %v3424
        %v4430 = vunpack.c.l.b16 %v3425
        %v4431 = vunpack.c.h.b16 %v3425
        %v4432 = vunpack.c.l.b16 %v3426
        %v4433 = vunpack.c.h.b16 %v3426
        %v4434 = vunpack.c.l.b16 %v3427
        %v4435 = vunpack.c.h.b16 %v3427
        %v4436 = vunpack.c.l.b16 %v3428
        %v4437 = vunpack.c.h.b16 %v3428
        %v4438 = vunpack.c.l.b16 %v3429
        %v4439 = vunpack.c.h.b16 %v3429
        %v4440 = vunpack.c.l.b16 %v3430
        %v4441 = vunpack.c.h.b16 %v3430
        %v4442 = vunpack.c.l.b16 %v3431
        %v4443 = vunpack.c.h.b16 %v3431
        %v4444 = vunpack.c.l.b16 %v3432
        %v4445 = vunpack.c.h.b16 %v3432
        %v4446 = vunpack.c.l.b16 %v3433
        %v4447 = vunpack.c.h.b16 %v3433
        %v4448 = vunpack.c.l.b16 %v3434
        %v4449 = vunpack.c.h.b16 %v3434
        %v4450 = vunpack.c.l.b16 %v3435
        %v4451 = vunpack.c.h.b16 %v3435
        %v4452 = vunpack.c.l.b16 %v3436
        %v4453 = vunpack.c.h.b16 %v3436
        %v4454 = vunpack.c.l.b16 %v3437
        %v4455 = vunpack.c.h.b16 %v3437
        %v4456 = vunpack.c.l.b16 %v3438
        %v4457 = vunpack.c.h.b16 %v3438
        %v4458 = vunpack.c.l.b16 %v3439
        %v4459 = vunpack.c.h.b16 %v3439
        %v4460 = vunpack.c.l.b16 %v3440
        %v4461 = vunpack.c.h.b16 %v3440
        %v4462 = vunpack.c.l.b16 %v3441
        %v4463 = vunpack.c.h.b16 %v3441
        %v4464 = vunpack.c.l.b16 %v3442
        %v4465 = vunpack.c.h.b16 %v3442
        %v4466 = vunpack.c.l.b16 %v3443
        %v4467 = vunpack.c.h.b16 %v3443
        %v4468 = vunpack.c.l.b16 %v3444
        %v4469 = vunpack.c.h.b16 %v3444
        %v4470 = vunpack.c.l.b16 %v3445
        %v4471 = vunpack.c.h.b16 %v3445
        %v4472 = vunpack.c.l.b16 %v3446
        %v4473 = vunpack.c.h.b16 %v3446
        %v4474 = vunpack.c.l.b16 %v3447
        %v4475 = vunpack.c.h.b16 %v3447
        %v4476 = vunpack.c.l.b16 %v3448
        %v4477 = vunpack.c.h.b16 %v3448
        %v4478 = vunpack.c.l.b16 %v3449
        %v4479 = vunpack.c.h.b16 %v3449
        %v4480 = vunpack.c.l.b16 %v3450
        %v4481 = vunpack.c.h.b16 %v3450
        %v4482 = vunpack.c.l.b16 %v3451
        %v4483 = vunpack.c.h.b16 %v3451
        %v4484 = vunpack.c.l.b16 %v3452
        %v4485 = vunpack.c.h.b16 %v3452
        %v4486 = vunpack.c.l.b16 %v3453
        %v4487 = vunpack.c.h.b16 %v3453
        %v4488 = vunpack.c.l.b16 %v3454
        %v4489 = vunpack.c.h.b16 %v3454
        %v4490 = vunpack.c.l.b16 %v3455
        %v4491 = vunpack.c.h.b16 %v3455
        %v4492 = vunpack.c.l.b16 %v3456
        %v4493 = vunpack.c.h.b16 %v3456
        %v4494 = vunpack.c.l.b16 %v3457
        %v4495 = vunpack.c.h.b16 %v3457
        %v4496 = vunpack.c.l.b16 %v3458
        %v4497 = vunpack.c.h.b16 %v3458
        %v4498 = vunpack.c.l.b16 %v3459
        %v4499 = vunpack.c.h.b16 %v3459
        %v4500 = vunpack.c.l.b16 %v3460
        %v4501 = vunpack.c.h.b16 %v3460
        %v4502 = vunpack.c.l.b16 %v3461
        %v4503 = vunpack.c.h.b16 %v3461
        %v4504 = vunpack.c.l.b16 %v3462
        %v4505 = vunpack.c.h.b16 %v3462
        %v4506 = vunpack.c.l.b16 %v3463
        %v4507 = vunpack.c.h.b16 %v3463
        %v4508 = vunpack.c.l.b16 %v3464
        %v4509 = vunpack.c.h.b16 %v3464
        %v4510 = vunpack.c.l.b16 %v3465
        %v4511 = vunpack.c.h.b16 %v3465
        %v4512 = vunpack.c.l.b16 %v3466
        %v4513 = vunpack.c.h.b16 %v3466
        %v4514 = vunpack.c.l.b16 %v3467
        %v4515 = vunpack.c.h.b16 %v3467
        %v4516 = vunpack.c.l.b16 %v3468
        %v4517 = vunpack.c.h.b16 %v3468
        %v4518 = vunpack.c.l.b16 %v3469
        %v4519 = vunpack.c.h.b16 %v3469
        %v4520 = vunpack.c.l.b16 %v3470
        %v4521 = vunpack.c.h.b16 %v3470
        %v4522 = vunpack.c.l.b16 %v3471
        %v4523 = vunpack.c.h.b16 %v3471
        %v4524 = vunpack.c.l.b16 %v3472
        %v4525 = vunpack.c.h.b16 %v3472
        %v4526 = vunpack.c.l.b16 %v3473
        %v4527 = vunpack.c.h.b16 %v3473
        %v4528 = vunpack.c.l.b16 %v3474
        %v4529 = vunpack.c.h.b16 %v3474
        %v4530 = vunpack.c.l.b16 %v3475
        %v4531 = vunpack.c.h.b16 %v3475
        %v4532 = vunpack.c.l.b16 %v3476
        %v4533 = vunpack.c.h.b16 %v3476
        %v4534 = vunpack.c.l.b16 %v3477
        %v4535 = vunpack.c.h.b16 %v3477
        %v4536 = vunpack.c.l.b16 %v3478
        %v4537 = vunpack.c.h.b16 %v3478
        %v4538 = vunpack.c.l.b16 %v3479
        %v4539 = vunpack.c.h.b16 %v3479
        %v4540 = vunpack.c.l.b16 %v3480
        %v4541 = vunpack.c.h.b16 %v3480
        %v4542 = vunpack.c.l.b16 %v3481
        %v4543 = vunpack.c.h.b16 %v3481
        %v4544 = vunpack.c.l.b16 %v3482
        %v4545 = vunpack.c.h.b16 %v3482
        %v4546 = vunpack.c.l.b16 %v3483
        %v4547 = vunpack.c.h.b16 %v3483
        %v4548 = vunpack.c.l.b16 %v3484
        %v4549 = vunpack.c.h.b16 %v3484
        %v4550 = vunpack.c.l.b16 %v3485
        %v4551 = vunpack.c.h.b16 %v3485
        %v4552 = vunpack.c.l.b16 %v3486
        %v4553 = vunpack.c.h.b16 %v3486
        %v4554 = vunpack.c.l.b16 %v3487
        %v4555 = vunpack.c.h.b16 %v3487
        %v4556 = vunpack.c.l.b16 %v3488
        %v4557 = vunpack.c.h.b16 %v3488
        %v4558 = vunpack.c.l.b16 %v3489
        %v4559 = vunpack.c.h.b16 %v3489
        %v4560 = vunpack.c.l.b16 %v3490
        %v4561 = vunpack.c.h.b16 %v3490
        %v4562 = vunpack.c.l.b16 %v3491
        %v4563 = vunpack.c.h.b16 %v3491
        %v4564 = vunpack.c.l.b16 %v3492
        %v4565 = vunpack.c.h.b16 %v3492
        %v4566 = vunpack.c.l.b16 %v3493
        %v4567 = vunpack.c.h.b16 %v3493
        %v4568 = vunpack.c.l.b16 %v3494
        %v4569 = vunpack.c.h.b16 %v3494
        %v4570 = vunpack.c.l.b16 %v3495
        %v4571 = vunpack.c.h.b16 %v3495
        %v4572 = vunpack.c.l.b16 %v3496
        %v4573 = vunpack.c.h.b16 %v3496
        %v4574 = vunpack.c.l.b16 %v3497
        %v4575 = vunpack.c.h.b16 %v3497
        %v4576 = vunpack.c.l.b16 %v3498
        %v4577 = vunpack.c.h.b16 %v3498
        %v4578 = vunpack.c.l.b16 %v3499
        %v4579 = vunpack.c.h.b16 %v3499
        %v4580 = vunpack.c.l.b16 %v3500
        %v4581 = vunpack.c.h.b16 %v3500
        %v4582 = vunpack.c.l.b16 %v3501
        %v4583 = vunpack.c.h.b16 %v3501
        %v4584 = vunpack.c.l.b16 %v3502
        %v4585 = vunpack.c.h.b16 %v3502
        %v4586 = vunpack.c.l.b16 %v3503
        %v4587 = vunpack.c.h.b16 %v3503
        %v4588 = vunpack.c.l.b16 %v3504
        %v4589 = vunpack.c.h.b16 %v3504
        %v4590 = vunpack.c.l.b16 %v3505
        %v4591 = vunpack.c.h.b16 %v3505
        %v4592 = vunpack.c.l.b16 %v3506
        %v4593 = vunpack.c.h.b16 %v3506
        %v4594 = vunpack.c.l.b16 %v3507
        %v4595 = vunpack.c.h.b16 %v3507
        %v4596 = vunpack.c.l.b16 %v3508
        %v4597 = vunpack.c.h.b16 %v3508
        %v4598 = vunpack.c.l.b16 %v3509
        %v4599 = vunpack.c.h.b16 %v3509
        %v4600 = vunpack.c.l.b16 %v3510
        %v4601 = vunpack.c.h.b16 %v3510
        %v4602 = vunpack.c.l.b16 %v3511
        %v4603 = vunpack.c.h.b16 %v3511
        %v4604 = vunpack.c.l.b16 %v3512
        %v4605 = vunpack.c.h.b16 %v3512
        %v4606 = vunpack.c.l.b16 %v3513
        %v4607 = vunpack.c.h.b16 %v3513
        %v4608 = vunpack.c.l.b16 %v3514
        %v4609 = vunpack.c.h.b16 %v3514
        %v4610 = vunpack.c.l.b16 %v3515
        %v4611 = vunpack.c.h.b16 %v3515
        %v4612 = vunpack.c.l.b16 %v3516
        %v4613 = vunpack.c.h.b16 %v3516
        %v4614 = vunpack.c.l.b16 %v3517
        %v4615 = vunpack.c.h.b16 %v3517
        %v4616 = vunpack.c.l.b16 %v3518
        %v4617 = vunpack.c.h.b16 %v3518
        %v4618 = vunpack.c.l.b16 %v3519
        %v4619 = vunpack.c.h.b16 %v3519
        %v4620 = vunpack.c.l.b16 %v3520
        %v4621 = vunpack.c.h.b16 %v3520
        %v4622 = vunpack.c.l.b16 %v3521
        %v4623 = vunpack.c.h.b16 %v3521
        %v4624 = vunpack.c.l.b16 %v3522
        %v4625 = vunpack.c.h.b16 %v3522
        %v4626 = vunpack.c.l.b16 %v3523
        %v4627 = vunpack.c.h.b16 %v3523
        %v4628 = vunpack.c.l.b16 %v3524
        %v4629 = vunpack.c.h.b16 %v3524
        %v4630 = vunpack.c.l.b16 %v3525
        %v4631 = vunpack.c.h.b16 %v3525
        %v4632 = vunpack.c.l.b16 %v3526
        %v4633 = vunpack.c.h.b16 %v3526
        %v4634 = vunpack.c.l.b16 %v3527
        %v4635 = vunpack.c.h.b16 %v3527
        %v4636 = vunpack.c.l.b16 %v3528
        %v4637 = vunpack.c.h.b16 %v3528
        %v4638 = vunpack.c.l.b16 %v3529
        %v4639 = vunpack.c.h.b16 %v3529
        %v4640 = vunpack.c.l.b16 %v3530
        %v4641 = vunpack.c.h.b16 %v3530
        %v4642 = vunpack.c.l.b16 %v3531
        %v4643 = vunpack.c.h.b16 %v3531
        %v4644 = vunpack.c.l.b16 %v3532
        %v4645 = vunpack.c.h.b16 %v3532
        %v4646 = vunpack.c.l.b16 %v3533
        %v4647 = vunpack.c.h.b16 %v3533
        %v4648 = vunpack.c.l.b16 %v3534
        %v4649 = vunpack.c.h.b16 %v3534
        %v4650 = vunpack.c.l.b16 %v3535
        %v4651 = vunpack.c.h.b16 %v3535
        %v4652 = vunpack.c.l.b16 %v3536
        %v4653 = vunpack.c.h.b16 %v3536
        %v4654 = vunpack.c.l.b16 %v3537
        %v4655 = vunpack.c.h.b16 %v3537
        %v4656 = vunpack.c.l.b16 %v3538
        %v4657 = vunpack.c.h.b16 %v3538
        %v4658 = vunpack.c.l.b16 %v3539
        %v4659 = vunpack.c.h.b16 %v3539
        %v4660 = vunpack.c.l.b16 %v3540
        %v4661 = vunpack.c.h.b16 %v3540
        %v4662 = vunpack.c.l.b16 %v3541
        %v4663 = vunpack.c.h.b16 %v3541
        %v4664 = vunpack.c.l.b16 %v3542
        %v4665 = vunpack.c.h.b16 %v3542
        %v4666 = vunpack.c.l.b16 %v3543
        %v4667 = vunpack.c.h.b16 %v3543
        %v4668 = vunpack.c.l.b16 %v3544
        %v4669 = vunpack.c.h.b16 %v3544
        %v4670 = vunpack.c.l.b16 %v3545
        %v4671 = vunpack.c.h.b16 %v3545
        %v4672 = vunpack.c.l.b16 %v3546
        %v4673 = vunpack.c.h.b16 %v3546
        %v4674 = vunpack.c.l.b16 %v3547
        %v4675 = vunpack.c.h.b16 %v3547
        %v4676 = vunpack.c.l.b16 %v3548
        %v4677 = vunpack.c.h.b16 %v3548
        %v4678 = vunpack.c.l.b16 %v3549
        %v4679 = vunpack.c.h.b16 %v3549
        %v4680 = vunpack.c.l.b16 %v3550
        %v4681 = vunpack.c.h.b16 %v3550
        %v4682 = vunpack.c.l.b16 %v3551
        %v4683 = vunpack.c.h.b16 %v3551
        %v4684 = vunpack.c.l.b16 %v3552
        %v4685 = vunpack.c.h.b16 %v3552
        %v4686 = vunpack.c.l.b16 %v3553
        %v4687 = vunpack.c.h.b16 %v3553
        %v4688 = vunpack.c.l.b16 %v3554
        %v4689 = vunpack.c.h.b16 %v3554
        %v4690 = vunpack.c.l.b16 %v3555
        %v4691 = vunpack.c.h.b16 %v3555
        %v4692 = vunpack.c.l.b16 %v3556
        %v4693 = vunpack.c.h.b16 %v3556
        %v4694 = vunpack.c.l.b16 %v3557
        %v4695 = vunpack.c.h.b16 %v3557
        %v4696 = vunpack.c.l.b16 %v3558
        %v4697 = vunpack.c.h.b16 %v3558
        %v4698 = vunpack.c.l.b16 %v3559
        %v4699 = vunpack.c.h.b16 %v3559
        %v4700 = vunpack.c.l.b16 %v3560
        %v4701 = vunpack.c.h.b16 %v3560
        %v4702 = vunpack.c.l.b16 %v3561
        %v4703 = vunpack.c.h.b16 %v3561
        %v4704 = vunpack.c.l.b16 %v3562
        %v4705 = vunpack.c.h.b16 %v3562
        %v4706 = vunpack.c.l.b16 %v3563
        %v4707 = vunpack.c.h.b16 %v3563
        %v4708 = vunpack.c.l.b16 %v3564
        %v4709 = vunpack.c.h.b16 %v3564
        %v4710 = vunpack.c.l.b16 %v3565
        %v4711 = vunpack.c.h.b16 %v3565
        %v4712 = vunpack.c.l.b16 %v3566
        %v4713 = vunpack.c.h.b16 %v3566
        %v4714 = vunpack.c.l.b16 %v3567
        %v4715 = vunpack.c.h.b16 %v3567
        %v4716 = vunpack.c.l.b16 %v3568
        %v4717 = vunpack.c.h.b16 %v3568
        %v4718 = vunpack.c.l.b16 %v3569
        %v4719 = vunpack.c.h.b16 %v3569
        %v4720 = vunpack.c.l.b16 %v3570
        %v4721 = vunpack.c.h.b16 %v3570
        %v4722 = vunpack.c.l.b16 %v3571
        %v4723 = vunpack.c.h.b16 %v3571
        %v4724 = vunpack.c.l.b16 %v3572
        %v4725 = vunpack.c.h.b16 %v3572
        %v4726 = vunpack.c.l.b16 %v3573
        %v4727 = vunpack.c.h.b16 %v3573
        %v4728 = vunpack.c.l.b16 %v3574
        %v4729 = vunpack.c.h.b16 %v3574
        %v4730 = vunpack.c.l.b16 %v3575
        %v4731 = vunpack.c.h.b16 %v3575
        %v4732 = vunpack.c.l.b16 %v3576
        %v4733 = vunpack.c.h.b16 %v3576
        %v4734 = vunpack.c.l.b16 %v3577
        %v4735 = vunpack.c.h.b16 %v3577
        %v4736 = vunpack.c.l.b16 %v3578
        %v4737 = vunpack.c.h.b16 %v3578
        %v4738 = vunpack.c.l.b16 %v3579
        %v4739 = vunpack.c.h.b16 %v3579
        %v4740 = vunpack.c.l.b16 %v3580
        %v4741 = vunpack.c.h.b16 %v3580
        %v4742 = vunpack.c.l.b16 %v3581
        %v4743 = vunpack.c.h.b16 %v3581
        %v4744 = vunpack.c.l.b16 %v3582
        %v4745 = vunpack.c.h.b16 %v3582
        %v4746 = vunpack.c.l.b16 %v3583
        %v4747 = vunpack.c.h.b16 %v3583
        %v4748 = vunpack.c.l.b16 %v3584
        %v4749 = vunpack.c.h.b16 %v3584
        %v4750 = vunpack.c.l.b16 %v3585
        %v4751 = vunpack.c.h.b16 %v3585
        %v4752 = vpack.c.b16 %v3990, %v3984
        %v4753 = vpack.c.b16 %v3991, %v3985
        %v4754 = vpack.c.b16 %v3992, %v3986
        %v4755 = vpack.c.b16 %v3993, %v3987
        %v4756 = vpack.c.b16 %v3994, %v3988
        %v4757 = vpack.c.b16 %v3995, %v3989
        %v4758 = vpack.c.b16 %v4002, %v3996
        %v4759 = vpack.c.b16 %v4003, %v3997
        %v4760 = vpack.c.b16 %v4004, %v3998
        %v4761 = vpack.c.b16 %v4005, %v3999
        %v4762 = vpack.c.b16 %v4006, %v4000
        %v4763 = vpack.c.b16 %v4007, %v4001
        %v4764 = vpack.c.b16 %v4014, %v4008
        %v4765 = vpack.c.b16 %v4015, %v4009
        %v4766 = vpack.c.b16 %v4016, %v4010
        %v4767 = vpack.c.b16 %v4017, %v4011
        %v4768 = vpack.c.b16 %v4018, %v4012
        %v4769 = vpack.c.b16 %v4019, %v4013
        %v4770 = vpack.c.b16 %v4026, %v4020
        %v4771 = vpack.c.b16 %v4027, %v4021
        %v4772 = vpack.c.b16 %v4028, %v4022
        %v4773 = vpack.c.b16 %v4029, %v4023
        %v4774 = vpack.c.b16 %v4030, %v4024
        %v4775 = vpack.c.b16 %v4031, %v4025
        %v4776 = vpack.c.b16 %v4038, %v4032
        %v4777 = vpack.c.b16 %v4039, %v4033
        %v4778 = vpack.c.b16 %v4040, %v4034
        %v4779 = vpack.c.b16 %v4041, %v4035
        %v4780 = vpack.c.b16 %v4042, %v4036
        %v4781 = vpack.c.b16 %v4043, %v4037
        %v4782 = vpack.c.b16 %v4050, %v4044
        %v4783 = vpack.c.b16 %v4051, %v4045
        %v4784 = vpack.c.b16 %v4052, %v4046
        %v4785 = vpack.c.b16 %v4053, %v4047
        %v4786 = vpack.c.b16 %v4054, %v4048
        %v4787 = vpack.c.b16 %v4055, %v4049
        %v4788 = vpack.c.b16 %v4062, %v4056
        %v4789 = vpack.c.b16 %v4063, %v4057
        %v4790 = vpack.c.b16 %v4064, %v4058
        %v4791 = vpack.c.b16 %v4065, %v4059
        %v4792 = vpack.c.b16 %v4066, %v4060
        %v4793 = vpack.c.b16 %v4067, %v4061
        %v4794 = vpack.c.b16 %v4074, %v4068
        %v4795 = vpack.c.b16 %v4075, %v4069
        %v4796 = vpack.c.b16 %v4076, %v4070
        %v4797 = vpack.c.b16 %v4077, %v4071
        %v4798 = vpack.c.b16 %v4078, %v4072
        %v4799 = vpack.c.b16 %v4079, %v4073
        %v4800 = vpack.c.b16 %v4086, %v4080
        %v4801 = vpack.c.b16 %v4087, %v4081
        %v4802 = vpack.c.b16 %v4088, %v4082
        %v4803 = vpack.c.b16 %v4089, %v4083
        %v4804 = vpack.c.b16 %v4090, %v4084
        %v4805 = vpack.c.b16 %v4091, %v4085
        %v4806 = vpack.c.b16 %v4098, %v4092
        %v4807 = vpack.c.b16 %v4099, %v4093
        %v4808 = vpack.c.b16 %v4100, %v4094
        %v4809 = vpack.c.b16 %v4101, %v4095
        %v4810 = vpack.c.b16 %v4102, %v4096
        %v4811 = vpack.c.b16 %v4103, %v4097
        %v4812 = vpack.c.b16 %v4110, %v4104
        %v4813 = vpack.c.b16 %v4111, %v4105
        %v4814 = vpack.c.b16 %v4112, %v4106
        %v4815 = vpack.c.b16 %v4113, %v4107
        %v4816 = vpack.c.b16 %v4114, %v4108
        %v4817 = vpack.c.b16 %v4115, %v4109
        %v4818 = vpack.c.b16 %v4122, %v4116
        %v4819 = vpack.c.b16 %v4123, %v4117
        %v4820 = vpack.c.b16 %v4124, %v4118
        %v4821 = vpack.c.b16 %v4125, %v4119
        %v4822 = vpack.c.b16 %v4126, %v4120
        %v4823 = vpack.c.b16 %v4127, %v4121
        %v4824 = vpack.c.b16 %v4134, %v4128
        %v4825 = vpack.c.b16 %v4135, %v4129
        %v4826 = vpack.c.b16 %v4136, %v4130
        %v4827 = vpack.c.b16 %v4137, %v4131
        %v4828 = vpack.c.b16 %v4138, %v4132
        %v4829 = vpack.c.b16 %v4139, %v4133
        %v4830 = vpack.c.b16 %v4146, %v4140
        %v4831 = vpack.c.b16 %v4147, %v4141
        %v4832 = vpack.c.b16 %v4148, %v4142
        %v4833 = vpack.c.b16 %v4149, %v4143
        %v4834 = vpack.c.b16 %v4150, %v4144
        %v4835 = vpack.c.b16 %v4151, %v4145
        %v4836 = vpack.c.b16 %v4158, %v4152
        %v4837 = vpack.c.b16 %v4159, %v4153
        %v4838 = vpack.c.b16 %v4160, %v4154
        %v4839 = vpack.c.b16 %v4161, %v4155
        %v4840 = vpack.c.b16 %v4162, %v4156
        %v4841 = vpack.c.b16 %v4163, %v4157
        %v4842 = vpack.c.b16 %v4170, %v4164
        %v4843 = vpack.c.b16 %v4171, %v4165
        %v4844 = vpack.c.b16 %v4172, %v4166
        %v4845 = vpack.c.b16 %v4173, %v4167
        %v4846 = vpack.c.b16 %v4174, %v4168
        %v4847 = vpack.c.b16 %v4175, %v4169
        %v4848 = vpack.c.b16 %v4182, %v4176
        %v4849 = vpack.c.b16 %v4183, %v4177
        %v4850 = vpack.c.b16 %v4184, %v4178
        %v4851 = vpack.c.b16 %v4185, %v4179
        %v4852 = vpack.c.b16 %v4186, %v4180
        %v4853 = vpack.c.b16 %v4187, %v4181
        %v4854 = vpack.c.b16 %v4194, %v4188
        %v4855 = vpack.c.b16 %v4195, %v4189
        %v4856 = vpack.c.b16 %v4196, %v4190
        %v4857 = vpack.c.b16 %v4197, %v4191
        %v4858 = vpack.c.b16 %v4198, %v4192
        %v4859 = vpack.c.b16 %v4199, %v4193
        %v4860 = vpack.c.b16 %v4206, %v4200
        %v4861 = vpack.c.b16 %v4207, %v4201
        %v4862 = vpack.c.b16 %v4208, %v4202
        %v4863 = vpack.c.b16 %v4209, %v4203
        %v4864 = vpack.c.b16 %v4210, %v4204
        %v4865 = vpack.c.b16 %v4211, %v4205
        %v4866 = vpack.c.b16 %v4218, %v4212
        %v4867 = vpack.c.b16 %v4219, %v4213
        %v4868 = vpack.c.b16 %v4220, %v4214
        %v4869 = vpack.c.b16 %v4221, %v4215
        %v4870 = vpack.c.b16 %v4222, %v4216
        %v4871 = vpack.c.b16 %v4223, %v4217
        %v4872 = vpack.c.b16 %v4230, %v4224
        %v4873 = vpack.c.b16 %v4231, %v4225
        %v4874 = vpack.c.b16 %v4232, %v4226
        %v4875 = vpack.c.b16 %v4233, %v4227
        %v4876 = vpack.c.b16 %v4234, %v4228
        %v4877 = vpack.c.b16 %v4235, %v4229
        %v4878 = vpack.c.b16 %v4242, %v4236
        %v4879 = vpack.c.b16 %v4243, %v4237
        %v4880 = vpack.c.b16 %v4244, %v4238
        %v4881 = vpack.c.b16 %v4245, %v4239
        %v4882 = vpack.c.b16 %v4246, %v4240
        %v4883 = vpack.c.b16 %v4247, %v4241
        %v4884 = vpack.c.b16 %v4254, %v4248
        %v4885 = vpack.c.b16 %v4255, %v4249
        %v4886 = vpack.c.b16 %v4256, %v4250
        %v4887 = vpack.c.b16 %v4257, %v4251
        %v4888 = vpack.c.b16 %v4258, %v4252
        %v4889 = vpack.c.b16 %v4259, %v4253
        %v4890 = vpack.c.b16 %v4266, %v4260
        %v4891 = vpack.c.b16 %v4267, %v4261
        %v4892 = vpack.c.b16 %v4268, %v4262
        %v4893 = vpack.c.b16 %v4269, %v4263
        %v4894 = vpack.c.b16 %v4270, %v4264
        %v4895 = vpack.c.b16 %v4271, %v4265
        %v4896 = vpack.c.b16 %v4278, %v4272
        %v4897 = vpack.c.b16 %v4279, %v4273
        %v4898 = vpack.c.b16 %v4280, %v4274
        %v4899 = vpack.c.b16 %v4281, %v4275
        %v4900 = vpack.c.b16 %v4282, %v4276
        %v4901 = vpack.c.b16 %v4283, %v4277
        %v4902 = vpack.c.b16 %v4290, %v4284
        %v4903 = vpack.c.b16 %v4291, %v4285
        %v4904 = vpack.c.b16 %v4292, %v4286
        %v4905 = vpack.c.b16 %v4293, %v4287
        %v4906 = vpack.c.b16 %v4294, %v4288
        %v4907 = vpack.c.b16 %v4295, %v4289
        %v4908 = vpack.c.b16 %v4302, %v4296
        %v4909 = vpack.c.b16 %v4303, %v4297
        %v4910 = vpack.c.b16 %v4304, %v4298
        %v4911 = vpack.c.b16 %v4305, %v4299
        %v4912 = vpack.c.b16 %v4306, %v4300
        %v4913 = vpack.c.b16 %v4307, %v4301
        %v4914 = vpack.c.b16 %v4314, %v4308
        %v4915 = vpack.c.b16 %v4315, %v4309
        %v4916 = vpack.c.b16 %v4316, %v4310
        %v4917 = vpack.c.b16 %v4317, %v4311
        %v4918 = vpack.c.b16 %v4318, %v4312
        %v4919 = vpack.c.b16 %v4319, %v4313
        %v4920 = vpack.c.b16 %v4326, %v4320
        %v4921 = vpack.c.b16 %v4327, %v4321
        %v4922 = vpack.c.b16 %v4328, %v4322
        %v4923 = vpack.c.b16 %v4329, %v4323
        %v4924 = vpack.c.b16 %v4330, %v4324
        %v4925 = vpack.c.b16 %v4331, %v4325
        %v4926 = vpack.c.b16 %v4338, %v4332
        %v4927 = vpack.c.b16 %v4339, %v4333
        %v4928 = vpack.c.b16 %v4340, %v4334
        %v4929 = vpack.c.b16 %v4341, %v4335
        %v4930 = vpack.c.b16 %v4342, %v4336
        %v4931 = vpack.c.b16 %v4343, %v4337
        %v4932 = vpack.c.b16 %v4350, %v4344
        %v4933 = vpack.c.b16 %v4351, %v4345
        %v4934 = vpack.c.b16 %v4352, %v4346
        %v4935 = vpack.c.b16 %v4353, %v4347
        %v4936 = vpack.c.b16 %v4354, %v4348
        %v4937 = vpack.c.b16 %v4355, %v4349
        %v4938 = vpack.c.b16 %v4362, %v4356
        %v4939 = vpack.c.b16 %v4363, %v4357
        %v4940 = vpack.c.b16 %v4364, %v4358
        %v4941 = vpack.c.b16 %v4365, %v4359
        %v4942 = vpack.c.b16 %v4366, %v4360
        %v4943 = vpack.c.b16 %v4367, %v4361
        %v4944 = vpack.c.b16 %v4374, %v4368
        %v4945 = vpack.c.b16 %v4375, %v4369
        %v4946 = vpack.c.b16 %v4376, %v4370
        %v4947 = vpack.c.b16 %v4377, %v4371
        %v4948 = vpack.c.b16 %v4378, %v4372
        %v4949 = vpack.c.b16 %v4379, %v4373
        %v4950 = vpack.c.b16 %v4386, %v4380
        %v4951 = vpack.c.b16 %v4387, %v4381
        %v4952 = vpack.c.b16 %v4388, %v4382
        %v4953 = vpack.c.b16 %v4389, %v4383
        %v4954 = vpack.c.b16 %v4390, %v4384
        %v4955 = vpack.c.b16 %v4391, %v4385
        %v4956 = vpack.c.b16 %v4398, %v4392
        %v4957 = vpack.c.b16 %v4399, %v4393
        %v4958 = vpack.c.b16 %v4400, %v4394
        %v4959 = vpack.c.b16 %v4401, %v4395
        %v4960 = vpack.c.b16 %v4402, %v4396
        %v4961 = vpack.c.b16 %v4403, %v4397
        %v4962 = vpack.c.b16 %v4410, %v4404
        %v4963 = vpack.c.b16 %v4411, %v4405
        %v4964 = vpack.c.b16 %v4412, %v4406
        %v4965 = vpack.c.b16 %v4413, %v4407
        %v4966 = vpack.c.b16 %v4414, %v4408
        %v4967 = vpack.c.b16 %v4415, %v4409
        %v4968 = vpack.c.b16 %v4422, %v4416
        %v4969 = vpack.c.b16 %v4423, %v4417
        %v4970 = vpack.c.b16 %v4424, %v4418
        %v4971 = vpack.c.b16 %v4425, %v4419
        %v4972 = vpack.c.b16 %v4426, %v4420
        %v4973 = vpack.c.b16 %v4427, %v4421
        %v4974 = vpack.c.b16 %v4434, %v4428
        %v4975 = vpack.c.b16 %v4435, %v4429
        %v4976 = vpack.c.b16 %v4436, %v4430
        %v4977 = vpack.c.b16 %v4437, %v4431
        %v4978 = vpack.c.b16 %v4438, %v4432
        %v4979 = vpack.c.b16 %v4439, %v4433
        %v4980 = vpack.c.b16 %v4446, %v4440
        %v4981 = vpack.c.b16 %v4447, %v4441
        %v4982 = vpack.c.b16 %v4448, %v4442
        %v4983 = vpack.c.b16 %v4449, %v4443
        %v4984 = vpack.c.b16 %v4450, %v4444
        %v4985 = vpack.c.b16 %v4451, %v4445
        %v4986 = vpack.c.b16 %v4458, %v4452
        %v4987 = vpack.c.b16 %v4459, %v4453
        %v4988 = vpack.c.b16 %v4460, %v4454
        %v4989 = vpack.c.b16 %v4461, %v4455
        %v4990 = vpack.c.b16 %v4462, %v4456
        %v4991 = vpack.c.b16 %v4463, %v4457
        %v4992 = vpack.c.b16 %v4470, %v4464
        %v4993 = vpack.c.b16 %v4471, %v4465
        %v4994 = vpack.c.b16 %v4472, %v4466
        %v4995 = vpack.c.b16 %v4473, %v4467
        %v4996 = vpack.c.b16 %v4474, %v4468
        %v4997 = vpack.c.b16 %v4475, %v4469
        %v4998 = vpack.c.b16 %v4482, %v4476
        %v4999 = vpack.c.b16 %v4483, %v4477
        %v5000 = vpack.c.b16 %v4484, %v4478
        %v5001 = vpack.c.b16 %v4485, %v4479
        %v5002 = vpack.c.b16 %v4486, %v4480
        %v5003 = vpack.c.b16 %v4487, %v4481
        %v5004 = vpack.c.b16 %v4494, %v4488
        %v5005 = vpack.c.b16 %v4495, %v4489
        %v5006 = vpack.c.b16 %v4496, %v4490
        %v5007 = vpack.c.b16 %v4497, %v4491
        %v5008 = vpack.c.b16 %v4498, %v4492
        %v5009 = vpack.c.b16 %v4499, %v4493
        %v5010 = vpack.c.b16 %v4506, %v4500
        %v5011 = vpack.c.b16 %v4507, %v4501
        %v5012 = vpack.c.b16 %v4508, %v4502
        %v5013 = vpack.c.b16 %v4509, %v4503
        %v5014 = vpack.c.b16 %v4510, %v4504
        %v5015 = vpack.c.b16 %v4511, %v4505
        %v5016 = vpack.c.b16 %v4518, %v4512
        %v5017 = vpack.c.b16 %v4519, %v4513
        %v5018 = vpack.c.b16 %v4520, %v4514
        %v5019 = vpack.c.b16 %v4521, %v4515
        %v5020 = vpack.c.b16 %v4522, %v4516
        %v5021 = vpack.c.b16 %v4523, %v4517
        %v5022 = vpack.c.b16 %v4530, %v4524
        %v5023 = vpack.c.b16 %v4531, %v4525
        %v5024 = vpack.c.b16 %v4532, %v4526
        %v5025 = vpack.c.b16 %v4533, %v4527
        %v5026 = vpack.c.b16 %v4534, %v4528
        %v5027 = vpack.c.b16 %v4535, %v4529
        %v5028 = vpack.c.b16 %v4542, %v4536
        %v5029 = vpack.c.b16 %v4543, %v4537
        %v5030 = vpack.c.b16 %v4544, %v4538
        %v5031 = vpack.c.b16 %v4545, %v4539
        %v5032 = vpack.c.b16 %v4546, %v4540
        %v5033 = vpack.c.b16 %v4547, %v4541
        %v5034 = vpack.c.b16 %v4554, %v4548
        %v5035 = vpack.c.b16 %v4555, %v4549
        %v5036 = vpack.c.b16 %v4556, %v4550
        %v5037 = vpack.c.b16 %v4557, %v4551
        %v5038 = vpack.c.b16 %v4558, %v4552
        %v5039 = vpack.c.b16 %v4559, %v4553
        %v5040 = vpack.c.b16 %v4566, %v4560
        %v5041 = vpack.c.b16 %v4567, %v4561
        %v5042 = vpack.c.b16 %v4568, %v4562
        %v5043 = vpack.c.b16 %v4569, %v4563
        %v5044 = vpack.c.b16 %v4570, %v4564
        %v5045 = vpack.c.b16 %v4571, %v4565
        %v5046 = vpack.c.b16 %v4578, %v4572
        %v5047 = vpack.c.b16 %v4579, %v4573
        %v5048 = vpack.c.b16 %v4580, %v4574
        %v5049 = vpack.c.b16 %v4581, %v4575
        %v5050 = vpack.c.b16 %v4582, %v4576
        %v5051 = vpack.c.b16 %v4583, %v4577
        %v5052 = vpack.c.b16 %v4590, %v4584
        %v5053 = vpack.c.b16 %v4591, %v4585
        %v5054 = vpack.c.b16 %v4592, %v4586
        %v5055 = vpack.c.b16 %v4593, %v4587
        %v5056 = vpack.c.b16 %v4594, %v4588
        %v5057 = vpack.c.b16 %v4595, %v4589
        %v5058 = vpack.c.b16 %v4602, %v4596
        %v5059 = vpack.c.b16 %v4603, %v4597
        %v5060 = vpack.c.b16 %v4604, %v4598
        %v5061 = vpack.c.b16 %v4605, %v4599
        %v5062 = vpack.c.b16 %v4606, %v4600
        %v5063 = vpack.c.b16 %v4607, %v4601
        %v5064 = vpack.c.b16 %v4614, %v4608
        %v5065 = vpack.c.b16 %v4615, %v4609
        %v5066 = vpack.c.b16 %v4616, %v4610
        %v5067 = vpack.c.b16 %v4617, %v4611
        %v5068 = vpack.c.b16 %v4618, %v4612
        %v5069 = vpack.c.b16 %v4619, %v4613
        %v5070 = vpack.c.b16 %v4626, %v4620
        %v5071 = vpack.c.b16 %v4627, %v4621
        %v5072 = vpack.c.b16 %v4628, %v4622
        %v5073 = vpack.c.b16 %v4629, %v4623
        %v5074 = vpack.c.b16 %v4630, %v4624
        %v5075 = vpack.c.b16 %v4631, %v4625
        %v5076 = vpack.c.b16 %v4638, %v4632
        %v5077 = vpack.c.b16 %v4639, %v4633
        %v5078 = vpack.c.b16 %v4640, %v4634
        %v5079 = vpack.c.b16 %v4641, %v4635
        %v5080 = vpack.c.b16 %v4642, %v4636
        %v5081 = vpack.c.b16 %v4643, %v4637
        %v5082 = vpack.c.b16 %v4650, %v4644
        %v5083 = vpack.c.b16 %v4651, %v4645
        %v5084 = vpack.c.b16 %v4652, %v4646
        %v5085 = vpack.c.b16 %v4653, %v4647
        %v5086 = vpack.c.b16 %v4654, %v4648
        %v5087 = vpack.c.b16 %v4655, %v4649
        %v5088 = vpack.c.b16 %v4662, %v4656
        %v5089 = vpack.c.b16 %v4663, %v4657
        %v5090 = vpack.c.b16 %v4664, %v4658
        %v5091 = vpack.c.b16 %v4665, %v4659
        %v5092 = vpack.c.b16 %v4666, %v4660
        %v5093 = vpack.c.b16 %v4667, %v4661
        %v5094 = vpack.c.b16 %v4674, %v4668
        %v5095 = vpack.c.b16 %v4675, %v4669
        %v5096 = vpack.c.b16 %v4676, %v4670
        %v5097 = vpack.c.b16 %v4677, %v4671
        %v5098 = vpack.c.b16 %v4678, %v4672
        %v5099 = vpack.c.b16 %v4679, %v4673
        %v5100 = vpack.c.b16 %v4686, %v4680
        %v5101 = vpack.c.b16 %v4687, %v4681
        %v5102 = vpack.c.b16 %v4688, %v4682
        %v5103 = vpack.c.b16 %v4689, %v4683
        %v5104 = vpack.c.b16 %v4690, %v4684
        %v5105 = vpack.c.b16 %v4691, %v4685
        %v5106 = vpack.c.b16 %v4698, %v4692
        %v5107 = vpack.c.b16 %v4699, %v4693
        %v5108 = vpack.c.b16 %v4700, %v4694
        %v5109 = vpack.c.b16 %v4701, %v4695
        %v5110 = vpack.c.b16 %v4702, %v4696
        %v5111 = vpack.c.b16 %v4703, %v4697
        %v5112 = vpack.c.b16 %v4710, %v4704
        %v5113 = vpack.c.b16 %v4711, %v4705
        %v5114 = vpack.c.b16 %v4712, %v4706
        %v5115 = vpack.c.b16 %v4713, %v4707
        %v5116 = vpack.c.b16 %v4714, %v4708
        %v5117 = vpack.c.b16 %v4715, %v4709
        %v5118 = vpack.c.b16 %v4722, %v4716
        %v5119 = vpack.c.b16 %v4723, %v4717
        %v5120 = vpack.c.b16 %v4724, %v4718
        %v5121 = vpack.c.b16 %v4725, %v4719
        %v5122 = vpack.c.b16 %v4726, %v4720
        %v5123 = vpack.c.b16 %v4727, %v4721
        %v5124 = vpack.c.b16 %v4734, %v4728
        %v5125 = vpack.c.b16 %v4735, %v4729
        %v5126 = vpack.c.b16 %v4736, %v4730
        %v5127 = vpack.c.b16 %v4737, %v4731
        %v5128 = vpack.c.b16 %v4738, %v4732
        %v5129 = vpack.c.b16 %v4739, %v4733
        %v5130 = vpack.c.b16 %v4746, %v4740
        %v5131 = vpack.c.b16 %v4747, %v4741
        %v5132 = vpack.c.b16 %v4748, %v4742
        %v5133 = vpack.c.b16 %v4749, %v4743
        %v5134 = vpack.c.b16 %v4750, %v4744
        %v5135 = vpack.c.b16 %v4751, %v4745
        %5520 = vmatpush.bf16.msra.mxu0 %v4794
        %5521 = vmatpush.bf16.msra.mxu0 %v4788
        %5522 = vmatpush.bf16.msra.mxu0 %v4782
        %5523 = vmatpush.bf16.msra.mxu0 %v4776
        %5524 = vmatpush.bf16.msra.mxu0 %v4770
        %5525 = vmatpush.bf16.msra.mxu0 %v4764
        %5526 = vmatpush.bf16.msra.mxu0 %v4758
        %5527 = vmatpush.bf16.msra.mxu0 %v4752
        %5528 = vmatmul.bf16.gmra.mxu0 %v3194
        %v5529 = vpop.f32.mrf.mxu0
        %v5530 = vadd.f32 %v3588, %v5529
        %v5531 = vpop.f32.mrf.mxu0
        %5532 = vdwg.mxu0
        %5533 = vmatpush.bf16.msra.mxu0 %v4842
        %5534 = vmatpush.bf16.msra.mxu0 %v4836
        %5535 = vmatpush.bf16.msra.mxu0 %v4830
        %5536 = vmatpush.bf16.msra.mxu0 %v4824
        %5537 = vmatpush.bf16.msra.mxu0 %v4818
        %5538 = vmatpush.bf16.msra.mxu0 %v4812
        %5539 = vmatpush.bf16.msra.mxu0 %v4806
        %5540 = vmatpush.bf16.msra.mxu0 %v4800
        %5541 = vmatmul.bf16.gmra.mxu0 %v3195
        %v5542 = vpop.f32.mrf.mxu0
        %v5543 = vadd.f32 %v5530, %v5542
        %v5544 = vpop.f32.mrf.mxu0
        %5545 = vdwg.mxu0
        %5546 = vmatpush.bf16.msra.mxu0 %v4890
        %5547 = vmatpush.bf16.msra.mxu0 %v4884
        %5548 = vmatpush.bf16.msra.mxu0 %v4878
        %5549 = vmatpush.bf16.msra.mxu0 %v4872
        %5550 = vmatpush.bf16.msra.mxu0 %v4866
        %5551 = vmatpush.bf16.msra.mxu0 %v4860
        %5552 = vmatpush.bf16.msra.mxu0 %v4854
        %5553 = vmatpush.bf16.msra.mxu0 %v4848
        %5554 = vmatmul.bf16.gmra.mxu0 %v3196
        %v5555 = vpop.f32.mrf.mxu0
        %v5556 = vadd.f32 %v5543, %v5555
        %v5557 = vpop.f32.mrf.mxu0
        %5558 = vdwg.mxu0
        %5559 = vmatpush.bf16.msra.mxu0 %v4938
        %5560 = vmatpush.bf16.msra.mxu0 %v4932
        %5561 = vmatpush.bf16.msra.mxu0 %v4926
        %5562 = vmatpush.bf16.msra.mxu0 %v4920
        %5563 = vmatpush.bf16.msra.mxu0 %v4914
        %5564 = vmatpush.bf16.msra.mxu0 %v4908
        %5565 = vmatpush.bf16.msra.mxu0 %v4902
        %5566 = vmatpush.bf16.msra.mxu0 %v4896
        %5567 = vmatmul.bf16.gmra.mxu0 %v3197
        %v5568 = vpop.f32.mrf.mxu0
        %v5569 = vadd.f32 %v5556, %v5568
        %v5570 = vpop.f32.mrf.mxu0
        %5571 = vdwg.mxu0
        %5572 = vmatpush.bf16.msra.mxu0 %v4986
        %5573 = vmatpush.bf16.msra.mxu0 %v4980
        %5574 = vmatpush.bf16.msra.mxu0 %v4974
        %5575 = vmatpush.bf16.msra.mxu0 %v4968
        %5576 = vmatpush.bf16.msra.mxu0 %v4962
        %5577 = vmatpush.bf16.msra.mxu0 %v4956
        %5578 = vmatpush.bf16.msra.mxu0 %v4950
        %5579 = vmatpush.bf16.msra.mxu0 %v4944
        %5580 = vmatmul.bf16.gmra.mxu0 %v3198
        %v5581 = vpop.f32.mrf.mxu0
        %v5582 = vadd.f32 %v5569, %v5581
        %v5583 = vpop.f32.mrf.mxu0
        %5584 = vdwg.mxu0
        %5585 = vmatpush.bf16.msra.mxu0 %v5034
        %5586 = vmatpush.bf16.msra.mxu0 %v5028
        %5587 = vmatpush.bf16.msra.mxu0 %v5022
        %5588 = vmatpush.bf16.msra.mxu0 %v5016
        %5589 = vmatpush.bf16.msra.mxu0 %v5010
        %5590 = vmatpush.bf16.msra.mxu0 %v5004
        %5591 = vmatpush.bf16.msra.mxu0 %v4998
        %5592 = vmatpush.bf16.msra.mxu0 %v4992
        %5593 = vmatmul.bf16.gmra.mxu0 %v3199
        %v5594 = vpop.f32.mrf.mxu0
        %v5595 = vadd.f32 %v5582, %v5594
        %v5596 = vpop.f32.mrf.mxu0
        %5597 = vdwg.mxu0
        %5598 = vmatpush.bf16.msra.mxu0 %v5082
        %5599 = vmatpush.bf16.msra.mxu0 %v5076
        %5600 = vmatpush.bf16.msra.mxu0 %v5070
        %5601 = vmatpush.bf16.msra.mxu0 %v5064
        %5602 = vmatpush.bf16.msra.mxu0 %v5058
        %5603 = vmatpush.bf16.msra.mxu0 %v5052
        %5604 = vmatpush.bf16.msra.mxu0 %v5046
        %5605 = vmatpush.bf16.msra.mxu0 %v5040
        %5606 = vmatmul.bf16.gmra.mxu0 %v3200
        %v5607 = vpop.f32.mrf.mxu0
        %v5608 = vadd.f32 %v5595, %v5607
        %v5609 = vpop.f32.mrf.mxu0
        %5610 = vdwg.mxu0
        %5611 = vmatpush.bf16.msra.mxu0 %v5130
        %5612 = vmatpush.bf16.msra.mxu0 %v5124
        %5613 = vmatpush.bf16.msra.mxu0 %v5118
        %5614 = vmatpush.bf16.msra.mxu0 %v5112
        %5615 = vmatpush.bf16.msra.mxu0 %v5106
        %5616 = vmatpush.bf16.msra.mxu0 %v5100
        %5617 = vmatpush.bf16.msra.mxu0 %v5094
        %5618 = vmatpush.bf16.msra.mxu0 %v5088
        %5619 = vmatmul.bf16.gmra.mxu0 %v3201
        %v5620 = vpop.f32.mrf.mxu0
        %v5621 = vadd.f32 %v5608, %v5620
        %v5622 = vpop.f32.mrf.mxu0
        %5623 = vdwg.mxu0
        %5624 = vmatpush.bf16.msra.mxu0 %v4795
        %5625 = vmatpush.bf16.msra.mxu0 %v4789
        %5626 = vmatpush.bf16.msra.mxu0 %v4783
        %5627 = vmatpush.bf16.msra.mxu0 %v4777
        %5628 = vmatpush.bf16.msra.mxu0 %v4771
        %5629 = vmatpush.bf16.msra.mxu0 %v4765
        %5630 = vmatpush.bf16.msra.mxu0 %v4759
        %5631 = vmatpush.bf16.msra.mxu0 %v4753
        %5632 = vmatmul.bf16.gmra.mxu0 %v3194
        %v5633 = vpop.f32.mrf.mxu0
        %v5634 = vadd.f32 %v3589, %v5633
        %v5635 = vpop.f32.mrf.mxu0
        %5636 = vdwg.mxu0
        %5637 = vmatpush.bf16.msra.mxu0 %v4843
        %5638 = vmatpush.bf16.msra.mxu0 %v4837
        %5639 = vmatpush.bf16.msra.mxu0 %v4831
        %5640 = vmatpush.bf16.msra.mxu0 %v4825
        %5641 = vmatpush.bf16.msra.mxu0 %v4819
        %5642 = vmatpush.bf16.msra.mxu0 %v4813
        %5643 = vmatpush.bf16.msra.mxu0 %v4807
        %5644 = vmatpush.bf16.msra.mxu0 %v4801
        %5645 = vmatmul.bf16.gmra.mxu0 %v3195
        %v5646 = vpop.f32.mrf.mxu0
        %v5647 = vadd.f32 %v5634, %v5646
        %v5648 = vpop.f32.mrf.mxu0
        %5649 = vdwg.mxu0
        %5650 = vmatpush.bf16.msra.mxu0 %v4891
        %5651 = vmatpush.bf16.msra.mxu0 %v4885
        %5652 = vmatpush.bf16.msra.mxu0 %v4879
        %5653 = vmatpush.bf16.msra.mxu0 %v4873
        %5654 = vmatpush.bf16.msra.mxu0 %v4867
        %5655 = vmatpush.bf16.msra.mxu0 %v4861
        %5656 = vmatpush.bf16.msra.mxu0 %v4855
        %5657 = vmatpush.bf16.msra.mxu0 %v4849
        %5658 = vmatmul.bf16.gmra.mxu0 %v3196
        %v5659 = vpop.f32.mrf.mxu0
        %v5660 = vadd.f32 %v5647, %v5659
        %v5661 = vpop.f32.mrf.mxu0
        %5662 = vdwg.mxu0
        %5663 = vmatpush.bf16.msra.mxu0 %v4939
        %5664 = vmatpush.bf16.msra.mxu0 %v4933
        %5665 = vmatpush.bf16.msra.mxu0 %v4927
        %5666 = vmatpush.bf16.msra.mxu0 %v4921
        %5667 = vmatpush.bf16.msra.mxu0 %v4915
        %5668 = vmatpush.bf16.msra.mxu0 %v4909
        %5669 = vmatpush.bf16.msra.mxu0 %v4903
        %5670 = vmatpush.bf16.msra.mxu0 %v4897
        %5671 = vmatmul.bf16.gmra.mxu0 %v3197
        %v5672 = vpop.f32.mrf.mxu0
        %v5673 = vadd.f32 %v5660, %v5672
        %v5674 = vpop.f32.mrf.mxu0
        %5675 = vdwg.mxu0
        %5676 = vmatpush.bf16.msra.mxu0 %v4987
        %5677 = vmatpush.bf16.msra.mxu0 %v4981
        %5678 = vmatpush.bf16.msra.mxu0 %v4975
        %5679 = vmatpush.bf16.msra.mxu0 %v4969
        %5680 = vmatpush.bf16.msra.mxu0 %v4963
        %5681 = vmatpush.bf16.msra.mxu0 %v4957
        %5682 = vmatpush.bf16.msra.mxu0 %v4951
        %5683 = vmatpush.bf16.msra.mxu0 %v4945
        %5684 = vmatmul.bf16.gmra.mxu0 %v3198
        %v5685 = vpop.f32.mrf.mxu0
        %v5686 = vadd.f32 %v5673, %v5685
        %v5687 = vpop.f32.mrf.mxu0
        %5688 = vdwg.mxu0
        %5689 = vmatpush.bf16.msra.mxu0 %v5035
        %5690 = vmatpush.bf16.msra.mxu0 %v5029
        %5691 = vmatpush.bf16.msra.mxu0 %v5023
        %5692 = vmatpush.bf16.msra.mxu0 %v5017
        %5693 = vmatpush.bf16.msra.mxu0 %v5011
        %5694 = vmatpush.bf16.msra.mxu0 %v5005
        %5695 = vmatpush.bf16.msra.mxu0 %v4999
        %5696 = vmatpush.bf16.msra.mxu0 %v4993
        %5697 = vmatmul.bf16.gmra.mxu0 %v3199
        %v5698 = vpop.f32.mrf.mxu0
        %v5699 = vadd.f32 %v5686, %v5698
        %v5700 = vpop.f32.mrf.mxu0
        %5701 = vdwg.mxu0
        %5702 = vmatpush.bf16.msra.mxu0 %v5083
        %5703 = vmatpush.bf16.msra.mxu0 %v5077
        %5704 = vmatpush.bf16.msra.mxu0 %v5071
        %5705 = vmatpush.bf16.msra.mxu0 %v5065
        %5706 = vmatpush.bf16.msra.mxu0 %v5059
        %5707 = vmatpush.bf16.msra.mxu0 %v5053
        %5708 = vmatpush.bf16.msra.mxu0 %v5047
        %5709 = vmatpush.bf16.msra.mxu0 %v5041
        %5710 = vmatmul.bf16.gmra.mxu0 %v3200
        %v5711 = vpop.f32.mrf.mxu0
        %v5712 = vadd.f32 %v5699, %v5711
        %v5713 = vpop.f32.mrf.mxu0
        %5714 = vdwg.mxu0
        %5715 = vmatpush.bf16.msra.mxu0 %v5131
        %5716 = vmatpush.bf16.msra.mxu0 %v5125
        %5717 = vmatpush.bf16.msra.mxu0 %v5119
        %5718 = vmatpush.bf16.msra.mxu0 %v5113
        %5719 = vmatpush.bf16.msra.mxu0 %v5107
        %5720 = vmatpush.bf16.msra.mxu0 %v5101
        %5721 = vmatpush.bf16.msra.mxu0 %v5095
        %5722 = vmatpush.bf16.msra.mxu0 %v5089
        %5723 = vmatmul.bf16.gmra.mxu0 %v3201
        %v5724 = vpop.f32.mrf.mxu0
        %v5725 = vadd.f32 %v5712, %v5724
        %v5726 = vpop.f32.mrf.mxu0
        %5727 = vdwg.mxu0
        %5728 = vmatpush.bf16.msra.mxu0 %v4796
        %5729 = vmatpush.bf16.msra.mxu0 %v4790
        %5730 = vmatpush.bf16.msra.mxu0 %v4784
        %5731 = vmatpush.bf16.msra.mxu0 %v4778
        %5732 = vmatpush.bf16.msra.mxu0 %v4772
        %5733 = vmatpush.bf16.msra.mxu0 %v4766
        %5734 = vmatpush.bf16.msra.mxu0 %v4760
        %5735 = vmatpush.bf16.msra.mxu0 %v4754
        %5736 = vmatmul.bf16.gmra.mxu0 %v3194
        %v5737 = vpop.f32.mrf.mxu0
        %v5738 = vadd.f32 %v3590, %v5737
        %v5739 = vpop.f32.mrf.mxu0
        %5740 = vdwg.mxu0
        %5741 = vmatpush.bf16.msra.mxu0 %v4844
        %5742 = vmatpush.bf16.msra.mxu0 %v4838
        %5743 = vmatpush.bf16.msra.mxu0 %v4832
        %5744 = vmatpush.bf16.msra.mxu0 %v4826
        %5745 = vmatpush.bf16.msra.mxu0 %v4820
        %5746 = vmatpush.bf16.msra.mxu0 %v4814
        %5747 = vmatpush.bf16.msra.mxu0 %v4808
        %5748 = vmatpush.bf16.msra.mxu0 %v4802
        %5749 = vmatmul.bf16.gmra.mxu0 %v3195
        %v5750 = vpop.f32.mrf.mxu0
        %v5751 = vadd.f32 %v5738, %v5750
        %v5752 = vpop.f32.mrf.mxu0
        %5753 = vdwg.mxu0
        %5754 = vmatpush.bf16.msra.mxu0 %v4892
        %5755 = vmatpush.bf16.msra.mxu0 %v4886
        %5756 = vmatpush.bf16.msra.mxu0 %v4880
        %5757 = vmatpush.bf16.msra.mxu0 %v4874
        %5758 = vmatpush.bf16.msra.mxu0 %v4868
        %5759 = vmatpush.bf16.msra.mxu0 %v4862
        %5760 = vmatpush.bf16.msra.mxu0 %v4856
        %5761 = vmatpush.bf16.msra.mxu0 %v4850
        %5762 = vmatmul.bf16.gmra.mxu0 %v3196
        %v5763 = vpop.f32.mrf.mxu0
        %v5764 = vadd.f32 %v5751, %v5763
        %v5765 = vpop.f32.mrf.mxu0
        %5766 = vdwg.mxu0
        %5767 = vmatpush.bf16.msra.mxu0 %v4940
        %5768 = vmatpush.bf16.msra.mxu0 %v4934
        %5769 = vmatpush.bf16.msra.mxu0 %v4928
        %5770 = vmatpush.bf16.msra.mxu0 %v4922
        %5771 = vmatpush.bf16.msra.mxu0 %v4916
        %5772 = vmatpush.bf16.msra.mxu0 %v4910
        %5773 = vmatpush.bf16.msra.mxu0 %v4904
        %5774 = vmatpush.bf16.msra.mxu0 %v4898
        %5775 = vmatmul.bf16.gmra.mxu0 %v3197
        %v5776 = vpop.f32.mrf.mxu0
        %v5777 = vadd.f32 %v5764, %v5776
        %v5778 = vpop.f32.mrf.mxu0
        %5779 = vdwg.mxu0
        %5780 = vmatpush.bf16.msra.mxu0 %v4988
        %5781 = vmatpush.bf16.msra.mxu0 %v4982
        %5782 = vmatpush.bf16.msra.mxu0 %v4976
        %5783 = vmatpush.bf16.msra.mxu0 %v4970
        %5784 = vmatpush.bf16.msra.mxu0 %v4964
        %5785 = vmatpush.bf16.msra.mxu0 %v4958
        %5786 = vmatpush.bf16.msra.mxu0 %v4952
        %5787 = vmatpush.bf16.msra.mxu0 %v4946
        %5788 = vmatmul.bf16.gmra.mxu0 %v3198
        %v5789 = vpop.f32.mrf.mxu0
        %v5790 = vadd.f32 %v5777, %v5789
        %v5791 = vpop.f32.mrf.mxu0
        %5792 = vdwg.mxu0
        %5793 = vmatpush.bf16.msra.mxu0 %v5036
        %5794 = vmatpush.bf16.msra.mxu0 %v5030
        %5795 = vmatpush.bf16.msra.mxu0 %v5024
        %5796 = vmatpush.bf16.msra.mxu0 %v5018
        %5797 = vmatpush.bf16.msra.mxu0 %v5012
        %5798 = vmatpush.bf16.msra.mxu0 %v5006
        %5799 = vmatpush.bf16.msra.mxu0 %v5000
        %5800 = vmatpush.bf16.msra.mxu0 %v4994
        %5801 = vmatmul.bf16.gmra.mxu0 %v3199
        %v5802 = vpop.f32.mrf.mxu0
        %v5803 = vadd.f32 %v5790, %v5802
        %v5804 = vpop.f32.mrf.mxu0
        %5805 = vdwg.mxu0
        %5806 = vmatpush.bf16.msra.mxu0 %v5084
        %5807 = vmatpush.bf16.msra.mxu0 %v5078
        %5808 = vmatpush.bf16.msra.mxu0 %v5072
        %5809 = vmatpush.bf16.msra.mxu0 %v5066
        %5810 = vmatpush.bf16.msra.mxu0 %v5060
        %5811 = vmatpush.bf16.msra.mxu0 %v5054
        %5812 = vmatpush.bf16.msra.mxu0 %v5048
        %5813 = vmatpush.bf16.msra.mxu0 %v5042
        %5814 = vmatmul.bf16.gmra.mxu0 %v3200
        %v5815 = vpop.f32.mrf.mxu0
        %v5816 = vadd.f32 %v5803, %v5815
        %v5817 = vpop.f32.mrf.mxu0
        %5818 = vdwg.mxu0
        %5819 = vmatpush.bf16.msra.mxu0 %v5132
        %5820 = vmatpush.bf16.msra.mxu0 %v5126
        %5821 = vmatpush.bf16.msra.mxu0 %v5120
        %5822 = vmatpush.bf16.msra.mxu0 %v5114
        %5823 = vmatpush.bf16.msra.mxu0 %v5108
        %5824 = vmatpush.bf16.msra.mxu0 %v5102
        %5825 = vmatpush.bf16.msra.mxu0 %v5096
        %5826 = vmatpush.bf16.msra.mxu0 %v5090
        %5827 = vmatmul.bf16.gmra.mxu0 %v3201
        %v5828 = vpop.f32.mrf.mxu0
        %v5829 = vadd.f32 %v5816, %v5828
        %v5830 = vpop.f32.mrf.mxu0
        %5831 = vdwg.mxu0
        %5832 = vmatpush.bf16.msra.mxu0 %v4797
        %5833 = vmatpush.bf16.msra.mxu0 %v4791
        %5834 = vmatpush.bf16.msra.mxu0 %v4785
        %5835 = vmatpush.bf16.msra.mxu0 %v4779
        %5836 = vmatpush.bf16.msra.mxu0 %v4773
        %5837 = vmatpush.bf16.msra.mxu0 %v4767
        %5838 = vmatpush.bf16.msra.mxu0 %v4761
        %5839 = vmatpush.bf16.msra.mxu0 %v4755
        %5840 = vmatmul.bf16.gmra.mxu0 %v3194
        %v5841 = vpop.f32.mrf.mxu0
        %v5842 = vadd.f32 %v3591, %v5841
        %v5843 = vpop.f32.mrf.mxu0
        %5844 = vdwg.mxu0
        %5845 = vmatpush.bf16.msra.mxu0 %v4845
        %5846 = vmatpush.bf16.msra.mxu0 %v4839
        %5847 = vmatpush.bf16.msra.mxu0 %v4833
        %5848 = vmatpush.bf16.msra.mxu0 %v4827
        %5849 = vmatpush.bf16.msra.mxu0 %v4821
        %5850 = vmatpush.bf16.msra.mxu0 %v4815
        %5851 = vmatpush.bf16.msra.mxu0 %v4809
        %5852 = vmatpush.bf16.msra.mxu0 %v4803
        %5853 = vmatmul.bf16.gmra.mxu0 %v3195
        %v5854 = vpop.f32.mrf.mxu0
        %v5855 = vadd.f32 %v5842, %v5854
        %v5856 = vpop.f32.mrf.mxu0
        %5857 = vdwg.mxu0
        %5858 = vmatpush.bf16.msra.mxu0 %v4893
        %5859 = vmatpush.bf16.msra.mxu0 %v4887
        %5860 = vmatpush.bf16.msra.mxu0 %v4881
        %5861 = vmatpush.bf16.msra.mxu0 %v4875
        %5862 = vmatpush.bf16.msra.mxu0 %v4869
        %5863 = vmatpush.bf16.msra.mxu0 %v4863
        %5864 = vmatpush.bf16.msra.mxu0 %v4857
        %5865 = vmatpush.bf16.msra.mxu0 %v4851
        %5866 = vmatmul.bf16.gmra.mxu0 %v3196
        %v5867 = vpop.f32.mrf.mxu0
        %v5868 = vadd.f32 %v5855, %v5867
        %v5869 = vpop.f32.mrf.mxu0
        %5870 = vdwg.mxu0
        %5871 = vmatpush.bf16.msra.mxu0 %v4941
        %5872 = vmatpush.bf16.msra.mxu0 %v4935
        %5873 = vmatpush.bf16.msra.mxu0 %v4929
        %5874 = vmatpush.bf16.msra.mxu0 %v4923
        %5875 = vmatpush.bf16.msra.mxu0 %v4917
        %5876 = vmatpush.bf16.msra.mxu0 %v4911
        %5877 = vmatpush.bf16.msra.mxu0 %v4905
        %5878 = vmatpush.bf16.msra.mxu0 %v4899
        %5879 = vmatmul.bf16.gmra.mxu0 %v3197
        %v5880 = vpop.f32.mrf.mxu0
        %v5881 = vadd.f32 %v5868, %v5880
        %v5882 = vpop.f32.mrf.mxu0
        %5883 = vdwg.mxu0
        %5884 = vmatpush.bf16.msra.mxu0 %v4989
        %5885 = vmatpush.bf16.msra.mxu0 %v4983
        %5886 = vmatpush.bf16.msra.mxu0 %v4977
        %5887 = vmatpush.bf16.msra.mxu0 %v4971
        %5888 = vmatpush.bf16.msra.mxu0 %v4965
        %5889 = vmatpush.bf16.msra.mxu0 %v4959
        %5890 = vmatpush.bf16.msra.mxu0 %v4953
        %5891 = vmatpush.bf16.msra.mxu0 %v4947
        %5892 = vmatmul.bf16.gmra.mxu0 %v3198
        %v5893 = vpop.f32.mrf.mxu0
        %v5894 = vadd.f32 %v5881, %v5893
        %v5895 = vpop.f32.mrf.mxu0
        %5896 = vdwg.mxu0
        %5897 = vmatpush.bf16.msra.mxu0 %v5037
        %5898 = vmatpush.bf16.msra.mxu0 %v5031
        %5899 = vmatpush.bf16.msra.mxu0 %v5025
        %5900 = vmatpush.bf16.msra.mxu0 %v5019
        %5901 = vmatpush.bf16.msra.mxu0 %v5013
        %5902 = vmatpush.bf16.msra.mxu0 %v5007
        %5903 = vmatpush.bf16.msra.mxu0 %v5001
        %5904 = vmatpush.bf16.msra.mxu0 %v4995
        %5905 = vmatmul.bf16.gmra.mxu0 %v3199
        %v5906 = vpop.f32.mrf.mxu0
        %v5907 = vadd.f32 %v5894, %v5906
        %v5908 = vpop.f32.mrf.mxu0
        %5909 = vdwg.mxu0
        %5910 = vmatpush.bf16.msra.mxu0 %v5085
        %5911 = vmatpush.bf16.msra.mxu0 %v5079
        %5912 = vmatpush.bf16.msra.mxu0 %v5073
        %5913 = vmatpush.bf16.msra.mxu0 %v5067
        %5914 = vmatpush.bf16.msra.mxu0 %v5061
        %5915 = vmatpush.bf16.msra.mxu0 %v5055
        %5916 = vmatpush.bf16.msra.mxu0 %v5049
        %5917 = vmatpush.bf16.msra.mxu0 %v5043
        %5918 = vmatmul.bf16.gmra.mxu0 %v3200
        %v5919 = vpop.f32.mrf.mxu0
        %v5920 = vadd.f32 %v5907, %v5919
        %v5921 = vpop.f32.mrf.mxu0
        %5922 = vdwg.mxu0
        %5923 = vmatpush.bf16.msra.mxu0 %v5133
        %5924 = vmatpush.bf16.msra.mxu0 %v5127
        %5925 = vmatpush.bf16.msra.mxu0 %v5121
        %5926 = vmatpush.bf16.msra.mxu0 %v5115
        %5927 = vmatpush.bf16.msra.mxu0 %v5109
        %5928 = vmatpush.bf16.msra.mxu0 %v5103
        %5929 = vmatpush.bf16.msra.mxu0 %v5097
        %5930 = vmatpush.bf16.msra.mxu0 %v5091
        %5931 = vmatmul.bf16.gmra.mxu0 %v3201
        %v5932 = vpop.f32.mrf.mxu0
        %v5933 = vadd.f32 %v5920, %v5932
        %v5934 = vpop.f32.mrf.mxu0
        %5935 = vdwg.mxu0
        %5936 = vmatpush.bf16.msra.mxu0 %v4798
        %5937 = vmatpush.bf16.msra.mxu0 %v4792
        %5938 = vmatpush.bf16.msra.mxu0 %v4786
        %5939 = vmatpush.bf16.msra.mxu0 %v4780
        %5940 = vmatpush.bf16.msra.mxu0 %v4774
        %5941 = vmatpush.bf16.msra.mxu0 %v4768
        %5942 = vmatpush.bf16.msra.mxu0 %v4762
        %5943 = vmatpush.bf16.msra.mxu0 %v4756
        %5944 = vmatmul.bf16.gmra.mxu0 %v3194
        %v5945 = vpop.f32.mrf.mxu0
        %v5946 = vadd.f32 %v3592, %v5945
        %v5947 = vpop.f32.mrf.mxu0
        %5948 = vdwg.mxu0
        %5949 = vmatpush.bf16.msra.mxu0 %v4846
        %5950 = vmatpush.bf16.msra.mxu0 %v4840
        %5951 = vmatpush.bf16.msra.mxu0 %v4834
        %5952 = vmatpush.bf16.msra.mxu0 %v4828
        %5953 = vmatpush.bf16.msra.mxu0 %v4822
        %5954 = vmatpush.bf16.msra.mxu0 %v4816
        %5955 = vmatpush.bf16.msra.mxu0 %v4810
        %5956 = vmatpush.bf16.msra.mxu0 %v4804
        %5957 = vmatmul.bf16.gmra.mxu0 %v3195
        %v5958 = vpop.f32.mrf.mxu0
        %v5959 = vadd.f32 %v5946, %v5958
        %v5960 = vpop.f32.mrf.mxu0
        %5961 = vdwg.mxu0
        %5962 = vmatpush.bf16.msra.mxu0 %v4894
        %5963 = vmatpush.bf16.msra.mxu0 %v4888
        %5964 = vmatpush.bf16.msra.mxu0 %v4882
        %5965 = vmatpush.bf16.msra.mxu0 %v4876
        %5966 = vmatpush.bf16.msra.mxu0 %v4870
        %5967 = vmatpush.bf16.msra.mxu0 %v4864
        %5968 = vmatpush.bf16.msra.mxu0 %v4858
        %5969 = vmatpush.bf16.msra.mxu0 %v4852
        %5970 = vmatmul.bf16.gmra.mxu0 %v3196
        %v5971 = vpop.f32.mrf.mxu0
        %v5972 = vadd.f32 %v5959, %v5971
        %v5973 = vpop.f32.mrf.mxu0
        %5974 = vdwg.mxu0
        %5975 = vmatpush.bf16.msra.mxu0 %v4942
        %5976 = vmatpush.bf16.msra.mxu0 %v4936
        %5977 = vmatpush.bf16.msra.mxu0 %v4930
        %5978 = vmatpush.bf16.msra.mxu0 %v4924
        %5979 = vmatpush.bf16.msra.mxu0 %v4918
        %5980 = vmatpush.bf16.msra.mxu0 %v4912
        %5981 = vmatpush.bf16.msra.mxu0 %v4906
        %5982 = vmatpush.bf16.msra.mxu0 %v4900
        %5983 = vmatmul.bf16.gmra.mxu0 %v3197
        %v5984 = vpop.f32.mrf.mxu0
        %v5985 = vadd.f32 %v5972, %v5984
        %v5986 = vpop.f32.mrf.mxu0
        %5987 = vdwg.mxu0
        %5988 = vmatpush.bf16.msra.mxu0 %v4990
        %5989 = vmatpush.bf16.msra.mxu0 %v4984
        %5990 = vmatpush.bf16.msra.mxu0 %v4978
        %5991 = vmatpush.bf16.msra.mxu0 %v4972
        %5992 = vmatpush.bf16.msra.mxu0 %v4966
        %5993 = vmatpush.bf16.msra.mxu0 %v4960
        %5994 = vmatpush.bf16.msra.mxu0 %v4954
        %5995 = vmatpush.bf16.msra.mxu0 %v4948
        %5996 = vmatmul.bf16.gmra.mxu0 %v3198
        %v5997 = vpop.f32.mrf.mxu0
        %v5998 = vadd.f32 %v5985, %v5997
        %v5999 = vpop.f32.mrf.mxu0
        %6000 = vdwg.mxu0
        %6001 = vmatpush.bf16.msra.mxu0 %v5038
        %6002 = vmatpush.bf16.msra.mxu0 %v5032
        %6003 = vmatpush.bf16.msra.mxu0 %v5026
        %6004 = vmatpush.bf16.msra.mxu0 %v5020
        %6005 = vmatpush.bf16.msra.mxu0 %v5014
        %6006 = vmatpush.bf16.msra.mxu0 %v5008
        %6007 = vmatpush.bf16.msra.mxu0 %v5002
        %6008 = vmatpush.bf16.msra.mxu0 %v4996
        %6009 = vmatmul.bf16.gmra.mxu0 %v3199
        %v6010 = vpop.f32.mrf.mxu0
        %v6011 = vadd.f32 %v5998, %v6010
        %v6012 = vpop.f32.mrf.mxu0
        %6013 = vdwg.mxu0
        %6014 = vmatpush.bf16.msra.mxu0 %v5086
        %6015 = vmatpush.bf16.msra.mxu0 %v5080
        %6016 = vmatpush.bf16.msra.mxu0 %v5074
        %6017 = vmatpush.bf16.msra.mxu0 %v5068
        %6018 = vmatpush.bf16.msra.mxu0 %v5062
        %6019 = vmatpush.bf16.msra.mxu0 %v5056
        %6020 = vmatpush.bf16.msra.mxu0 %v5050
        %6021 = vmatpush.bf16.msra.mxu0 %v5044
        %6022 = vmatmul.bf16.gmra.mxu0 %v3200
        %v6023 = vpop.f32.mrf.mxu0
        %v6024 = vadd.f32 %v6011, %v6023
        %v6025 = vpop.f32.mrf.mxu0
        %6026 = vdwg.mxu0
        %6027 = vmatpush.bf16.msra.mxu0 %v5134
        %6028 = vmatpush.bf16.msra.mxu0 %v5128
        %6029 = vmatpush.bf16.msra.mxu0 %v5122
        %6030 = vmatpush.bf16.msra.mxu0 %v5116
        %6031 = vmatpush.bf16.msra.mxu0 %v5110
        %6032 = vmatpush.bf16.msra.mxu0 %v5104
        %6033 = vmatpush.bf16.msra.mxu0 %v5098
        %6034 = vmatpush.bf16.msra.mxu0 %v5092
        %6035 = vmatmul.bf16.gmra.mxu0 %v3201
        %v6036 = vpop.f32.mrf.mxu0
        %v6037 = vadd.f32 %v6024, %v6036
        %v6038 = vpop.f32.mrf.mxu0
        %6039 = vdwg.mxu0
        %6040 = vmatpush.bf16.msra.mxu0 %v4799
        %6041 = vmatpush.bf16.msra.mxu0 %v4793
        %6042 = vmatpush.bf16.msra.mxu0 %v4787
        %6043 = vmatpush.bf16.msra.mxu0 %v4781
        %6044 = vmatpush.bf16.msra.mxu0 %v4775
        %6045 = vmatpush.bf16.msra.mxu0 %v4769
        %6046 = vmatpush.bf16.msra.mxu0 %v4763
        %6047 = vmatpush.bf16.msra.mxu0 %v4757
        %6048 = vmatmul.bf16.gmra.mxu0 %v3194
        %v6049 = vpop.f32.mrf.mxu0
        %v6050 = vadd.f32 %v3593, %v6049
        %v6051 = vpop.f32.mrf.mxu0
        %6052 = vdwg.mxu0
        %6053 = vmatpush.bf16.msra.mxu0 %v4847
        %6054 = vmatpush.bf16.msra.mxu0 %v4841
        %6055 = vmatpush.bf16.msra.mxu0 %v4835
        %6056 = vmatpush.bf16.msra.mxu0 %v4829
        %6057 = vmatpush.bf16.msra.mxu0 %v4823
        %6058 = vmatpush.bf16.msra.mxu0 %v4817
        %6059 = vmatpush.bf16.msra.mxu0 %v4811
        %6060 = vmatpush.bf16.msra.mxu0 %v4805
        %6061 = vmatmul.bf16.gmra.mxu0 %v3195
        %v6062 = vpop.f32.mrf.mxu0
        %v6063 = vadd.f32 %v6050, %v6062
        %v6064 = vpop.f32.mrf.mxu0
        %6065 = vdwg.mxu0
        %6066 = vmatpush.bf16.msra.mxu0 %v4895
        %6067 = vmatpush.bf16.msra.mxu0 %v4889
        %6068 = vmatpush.bf16.msra.mxu0 %v4883
        %6069 = vmatpush.bf16.msra.mxu0 %v4877
        %6070 = vmatpush.bf16.msra.mxu0 %v4871
        %6071 = vmatpush.bf16.msra.mxu0 %v4865
        %6072 = vmatpush.bf16.msra.mxu0 %v4859
        %6073 = vmatpush.bf16.msra.mxu0 %v4853
        %6074 = vmatmul.bf16.gmra.mxu0 %v3196
        %v6075 = vpop.f32.mrf.mxu0
        %v6076 = vadd.f32 %v6063, %v6075
        %v6077 = vpop.f32.mrf.mxu0
        %6078 = vdwg.mxu0
        %6079 = vmatpush.bf16.msra.mxu0 %v4943
        %6080 = vmatpush.bf16.msra.mxu0 %v4937
        %6081 = vmatpush.bf16.msra.mxu0 %v4931
        %6082 = vmatpush.bf16.msra.mxu0 %v4925
        %6083 = vmatpush.bf16.msra.mxu0 %v4919
        %6084 = vmatpush.bf16.msra.mxu0 %v4913
        %6085 = vmatpush.bf16.msra.mxu0 %v4907
        %6086 = vmatpush.bf16.msra.mxu0 %v4901
        %6087 = vmatmul.bf16.gmra.mxu0 %v3197
        %v6088 = vpop.f32.mrf.mxu0
        %v6089 = vadd.f32 %v6076, %v6088
        %v6090 = vpop.f32.mrf.mxu0
        %6091 = vdwg.mxu0
        %6092 = vmatpush.bf16.msra.mxu0 %v4991
        %6093 = vmatpush.bf16.msra.mxu0 %v4985
        %6094 = vmatpush.bf16.msra.mxu0 %v4979
        %6095 = vmatpush.bf16.msra.mxu0 %v4973
        %6096 = vmatpush.bf16.msra.mxu0 %v4967
        %6097 = vmatpush.bf16.msra.mxu0 %v4961
        %6098 = vmatpush.bf16.msra.mxu0 %v4955
        %6099 = vmatpush.bf16.msra.mxu0 %v4949
        %6100 = vmatmul.bf16.gmra.mxu0 %v3198
        %v6101 = vpop.f32.mrf.mxu0
        %v6102 = vadd.f32 %v6089, %v6101
        %v6103 = vpop.f32.mrf.mxu0
        %6104 = vdwg.mxu0
        %6105 = vmatpush.bf16.msra.mxu0 %v5039
        %6106 = vmatpush.bf16.msra.mxu0 %v5033
        %6107 = vmatpush.bf16.msra.mxu0 %v5027
        %6108 = vmatpush.bf16.msra.mxu0 %v5021
        %6109 = vmatpush.bf16.msra.mxu0 %v5015
        %6110 = vmatpush.bf16.msra.mxu0 %v5009
        %6111 = vmatpush.bf16.msra.mxu0 %v5003
        %6112 = vmatpush.bf16.msra.mxu0 %v4997
        %6113 = vmatmul.bf16.gmra.mxu0 %v3199
        %v6114 = vpop.f32.mrf.mxu0
        %v6115 = vadd.f32 %v6102, %v6114
        %v6116 = vpop.f32.mrf.mxu0
        %6117 = vdwg.mxu0
        %6118 = vmatpush.bf16.msra.mxu0 %v5087
        %6119 = vmatpush.bf16.msra.mxu0 %v5081
        %6120 = vmatpush.bf16.msra.mxu0 %v5075
        %6121 = vmatpush.bf16.msra.mxu0 %v5069
        %6122 = vmatpush.bf16.msra.mxu0 %v5063
        %6123 = vmatpush.bf16.msra.mxu0 %v5057
        %6124 = vmatpush.bf16.msra.mxu0 %v5051
        %6125 = vmatpush.bf16.msra.mxu0 %v5045
        %6126 = vmatmul.bf16.gmra.mxu0 %v3200
        %v6127 = vpop.f32.mrf.mxu0
        %v6128 = vadd.f32 %v6115, %v6127
        %v6129 = vpop.f32.mrf.mxu0
        %6130 = vdwg.mxu0
        %6131 = vmatpush.bf16.msra.mxu0 %v5135
        %6132 = vmatpush.bf16.msra.mxu0 %v5129
        %6133 = vmatpush.bf16.msra.mxu0 %v5123
        %6134 = vmatpush.bf16.msra.mxu0 %v5117
        %6135 = vmatpush.bf16.msra.mxu0 %v5111
        %6136 = vmatpush.bf16.msra.mxu0 %v5105
        %6137 = vmatpush.bf16.msra.mxu0 %v5099
        %6138 = vmatpush.bf16.msra.mxu0 %v5093
        %6139 = vmatmul.bf16.gmra.mxu0 %v3201
        %v6140 = vpop.f32.mrf.mxu0
        %v6141 = vadd.f32 %v6128, %v6140
        %v6142 = vpop.f32.mrf.mxu0
        %6143 = vdwg.mxu0
        %v6144 = vxor.u32 %v5621, 2147483648
        %v6145 = vxor.u32 %v5725, 2147483648
        %v6146 = vxor.u32 %v5829, 2147483648
        %v6147 = vxor.u32 %v5933, 2147483648
        %v6148 = vxor.u32 %v6037, 2147483648
        %v6149 = vxor.u32 %v6141, 2147483648
        %v6150 = vmul.f32 %v6144, 1.442695
        %v6151 = vpow.pop %v6150
        %v6152 = vmul.f32 %v6145, 1.442695
        %v6153 = vpow.pop %v6152
        %v6154 = vmul.f32 %v6146, 1.442695
        %v6155 = vpow.pop %v6154
        %v6156 = vmul.f32 %v6147, 1.442695
        %v6157 = vpow.pop %v6156
        %v6158 = vmul.f32 %v6148, 1.442695
        %v6159 = vpow.pop %v6158
        %v6160 = vmul.f32 %v6149, 1.442695
        %v6161 = vpow.pop %v6160
        %v6162 = vadd.f32 %v6151, 1.0
        %v6163 = vadd.f32 %v6153, 1.0
        %v6164 = vadd.f32 %v6155, 1.0
        %v6165 = vadd.f32 %v6157, 1.0
        %v6166 = vadd.f32 %v6159, 1.0
        %v6167 = vadd.f32 %v6161, 1.0
        %v6168 = vrcp.pop %v6162
        %v6169 = vmul.f32 %v6162, %v6168
        %v6170 = vsub.f32 1.0, %v6169
        %v6171 = vmul.f32 %v6168, %v6170
        %v6172 = vadd.f32 %v6168, %v6171
        %vm6173 = vweird.f32 %v6162
        %vm6174 = vweird.f32 %v6168
        %vm6175 = vmor %vm6173, %vm6174
        %v6176 = vsel %vm6175, %v6168, %v6172
        %v6177 = vand.u32 2147483647, %v6162
        %vm6178 = vcmp.eq.f32.partialorder %v6177, 8.507059e+37
        %v6179 = vand.u32 %v6162, 2147483648
        %v6180 = vor.u32 1.1754944e-38, %v6179
        %v6181 = vsel %vm6178, %v6180, %v6176
        %v6182 = vmul.f32 1.0, %v6181
        %v6183 = vrcp.pop %v6163
        %v6184 = vmul.f32 %v6163, %v6183
        %v6185 = vsub.f32 1.0, %v6184
        %v6186 = vmul.f32 %v6183, %v6185
        %v6187 = vadd.f32 %v6183, %v6186
        %vm6188 = vweird.f32 %v6163
        %vm6189 = vweird.f32 %v6183
        %vm6190 = vmor %vm6188, %vm6189
        %v6191 = vsel %vm6190, %v6183, %v6187
        %v6192 = vand.u32 2147483647, %v6163
        %vm6193 = vcmp.eq.f32.partialorder %v6192, 8.507059e+37
        %v6194 = vand.u32 %v6163, 2147483648
        %v6195 = vor.u32 1.1754944e-38, %v6194
        %v6196 = vsel %vm6193, %v6195, %v6191
        %v6197 = vmul.f32 1.0, %v6196
        %v6198 = vrcp.pop %v6164
        %v6199 = vmul.f32 %v6164, %v6198
        %v6200 = vsub.f32 1.0, %v6199
        %v6201 = vmul.f32 %v6198, %v6200
        %v6202 = vadd.f32 %v6198, %v6201
        %vm6203 = vweird.f32 %v6164
        %vm6204 = vweird.f32 %v6198
        %vm6205 = vmor %vm6203, %vm6204
        %v6206 = vsel %vm6205, %v6198, %v6202
        %v6207 = vand.u32 2147483647, %v6164
        %vm6208 = vcmp.eq.f32.partialorder %v6207, 8.507059e+37
        %v6209 = vand.u32 %v6164, 2147483648
        %v6210 = vor.u32 1.1754944e-38, %v6209
        %v6211 = vsel %vm6208, %v6210, %v6206
        %v6212 = vmul.f32 1.0, %v6211
        %v6213 = vrcp.pop %v6165
        %v6214 = vmul.f32 %v6165, %v6213
        %v6215 = vsub.f32 1.0, %v6214
        %v6216 = vmul.f32 %v6213, %v6215
        %v6217 = vadd.f32 %v6213, %v6216
        %vm6218 = vweird.f32 %v6165
        %vm6219 = vweird.f32 %v6213
        %vm6220 = vmor %vm6218, %vm6219
        %v6221 = vsel %vm6220, %v6213, %v6217
        %v6222 = vand.u32 2147483647, %v6165
        %vm6223 = vcmp.eq.f32.partialorder %v6222, 8.507059e+37
        %v6224 = vand.u32 %v6165, 2147483648
        %v6225 = vor.u32 1.1754944e-38, %v6224
        %v6226 = vsel %vm6223, %v6225, %v6221
        %v6227 = vmul.f32 1.0, %v6226
        %v6228 = vrcp.pop %v6166
        %v6229 = vmul.f32 %v6166, %v6228
        %v6230 = vsub.f32 1.0, %v6229
        %v6231 = vmul.f32 %v6228, %v6230
        %v6232 = vadd.f32 %v6228, %v6231
        %vm6233 = vweird.f32 %v6166
        %vm6234 = vweird.f32 %v6228
        %vm6235 = vmor %vm6233, %vm6234
        %v6236 = vsel %vm6235, %v6228, %v6232
        %v6237 = vand.u32 2147483647, %v6166
        %vm6238 = vcmp.eq.f32.partialorder %v6237, 8.507059e+37
        %v6239 = vand.u32 %v6166, 2147483648
        %v6240 = vor.u32 1.1754944e-38, %v6239
        %v6241 = vsel %vm6238, %v6240, %v6236
        %v6242 = vmul.f32 1.0, %v6241
        %v6243 = vrcp.pop %v6167
        %v6244 = vmul.f32 %v6167, %v6243
        %v6245 = vsub.f32 1.0, %v6244
        %v6246 = vmul.f32 %v6243, %v6245
        %v6247 = vadd.f32 %v6243, %v6246
        %vm6248 = vweird.f32 %v6167
        %vm6249 = vweird.f32 %v6243
        %vm6250 = vmor %vm6248, %vm6249
        %v6251 = vsel %vm6250, %v6243, %v6247
        %v6252 = vand.u32 2147483647, %v6167
        %vm6253 = vcmp.eq.f32.partialorder %v6252, 8.507059e+37
        %v6254 = vand.u32 %v6167, 2147483648
        %v6255 = vor.u32 1.1754944e-38, %v6254
        %v6256 = vsel %vm6253, %v6255, %v6251
        %v6257 = vmul.f32 1.0, %v6256
        %6258 = vst [vmem:[%s525] sm:$0xff] %v6182
        %6259 = vst [vmem:[%s525 + $0x8] sm:$0xff] %v6197
        %6260 = vst [vmem:[%s525 + $0x10] sm:$0xff] %v6212
        %6261 = vst [vmem:[%s525 + $0x18] sm:$0xff] %v6227
        %6262 = vst [vmem:[%s525 + $0x20] sm:$0xff] %v6242
        %6263 = vst [vmem:[%s525 + $0x28] sm:$0xff] %v6257
        %v6264 = vld [vmem:[%s515] sm:$0xff]
        %v6265 = vld [vmem:[%s515 + $0x8] sm:$0xff]
        %v6266 = vsub.f32 %v6264, %v6182
        %v6267 = vsub.f32 %v6265, %v6197
        %v6268 = vand.u32 2147483647, %v6266
        %v6269 = vand.u32 2147483647, %v6267
        %v6270 = vadd.f32 %v6268, %v6269
        %6271 = vadd.xlane.f32.xlu0 %v6270
        %v6272 = vpop.xlane.xlu0 %6271
        %v6273 = vrot.slane %v6272, 4
        %v6274 = vadd.f32 %v6272, %v6273
        %v6275 = vrot.slane %v6274, 2
        %v6276 = vadd.f32 %v6274, %v6275
        %v6277 = vrot.slane %v6276, 1
        %v6278 = vadd.f32 %v6276, %v6277
        %s6279 = vtos %v6278
        %v6280 = vsub.f32 %v6264, %v6212
        %v6281 = vsub.f32 %v6265, %v6227
        %v6282 = vand.u32 2147483647, %v6280
        %v6283 = vand.u32 2147483647, %v6281
        %v6284 = vadd.f32 %v6282, %v6283
        %6285 = vadd.xlane.f32.xlu0 %v6284
        %v6286 = vpop.xlane.xlu0 %6285
        %v6287 = vrot.slane %v6286, 4
        %v6288 = vadd.f32 %v6286, %v6287
        %v6289 = vrot.slane %v6288, 2
        %v6290 = vadd.f32 %v6288, %v6289
        %v6291 = vrot.slane %v6290, 1
        %v6292 = vadd.f32 %v6290, %v6291
        %s6293 = vtos %v6292
        %s6294 = sadd.f32 %s6279, %s6293
        %v6295 = vsub.f32 %v6264, %v6242
        %v6296 = vsub.f32 %v6265, %v6257
        %v6297 = vand.u32 2147483647, %v6295
        %v6298 = vand.u32 2147483647, %v6296
        %v6299 = vadd.f32 %v6297, %v6298
        %6300 = vadd.xlane.f32.xlu0 %v6299
        %v6301 = vpop.xlane.xlu0 %6300
        %v6302 = vrot.slane %v6301, 4
        %v6303 = vadd.f32 %v6301, %v6302
        %v6304 = vrot.slane %v6303, 2
        %v6305 = vadd.f32 %v6303, %v6304
        %v6306 = vrot.slane %v6305, 1
        %v6307 = vadd.f32 %v6305, %v6306
        %s6308 = vtos %v6307
        %s6309 = sadd.f32 %s6294, %s6308
        %v6310 = vstv %s6309
        %6311 = vst [vmem:[%s529] sm:$0xff] %v6310
        %p6312 = scmp.lt.s32.totalorder %s27, 1
        %s6313 = scalar_select %p6312, %s27, 1
        %s6314 = smul.addr %s6313, 4
        %s6315 = smul.addr %s6314, 8
        %s6316 = scalar_lea.vmem %s12, %s6315
        %p6317 = scmp.lt.s32.totalorder %s27, 1
        %s6318 = scalar_select %p6317, %s27, 1
        %s6319 = smul.addr %s6318, 6
        %s6320 = smul.addr %s6319, 8
        %s6321 = scalar_lea.vmem %s13, %s6320
        %p6322 = scmp.lt.s32.totalorder %s27, 1
        %s6323 = scalar_select %p6322, %s27, 1
        %s6324 = smul.addr %s6323, 8
        %s6325 = scalar_lea.vmem %s14, %s6324
        // Predicated region
        $region73: #{condition_encoder_forward.2} parent=67 // pred_check
          %p6326 = pneg %p307
        $region74: #{condition_encoder_forward.2} parent=67 // pred_check_branch
          %6328 = sbr.rel (%p6326) target = $region76
        $region75: #{condition_encoder_forward.2} parent=67 // pred_region
          _
        $region76: #{condition_encoder_forward.2} parent=67 // pred_fallthru
          _
        // Predicated region
        $region77: #{condition_encoder_forward.2} parent=67 // pred_check
          %p6329 = pneg %p333
        $region78: #{condition_encoder_forward.2} parent=67 // pred_check_branch
          %6331 = sbr.rel (%p6329) target = $region80
        $region79: #{condition_encoder_forward.2} parent=67 // pred_region
          _
        $region80: #{condition_encoder_forward.2} parent=67 // pred_fallthru
          _
        // Predicated region
        $region81: #{condition_encoder_forward.2} parent=67 // pred_check
          %p6332 = pneg %p359
        $region82: #{condition_encoder_forward.2} parent=67 // pred_check_branch
          %6334 = sbr.rel (%p6332) target = $region84
        $region83: #{condition_encoder_forward.2} parent=67 // pred_region
          _
        $region84: #{condition_encoder_forward.2} parent=67 // pred_fallthru
          _
      $region68: #{condition_encoder_forward.2} parent=5 // pred_fallthru
        _
      %p6335 = scmp.le.s32.totalorder 2, %s22
      // Predicated region
      $region85: #{condition_encoder_forward.2} parent=5 // pred_check
        %p6336 = pneg %p6335
      $region86: #{condition_encoder_forward.2} parent=5 // pred_check_branch
        %6338 = sbr.rel (%p6336) target = $region88
      $region87: #{condition_encoder_forward.2} parent=5 // pred_region
        %s6339 = ssub.s32 %s22, 2
        // Predicated region
        $region89: #{condition_encoder_forward.2} parent=87 // pred_check
          %p6340 = pneg %p313
        $region90: #{condition_encoder_forward.2} parent=87 // pred_check_branch
          %6342 = sbr.rel (%p6340) target = $region92
        $region91: #{condition_encoder_forward.2} parent=87 // pred_region
          %p6343 = scmp.lt.s32.totalorder %s28, 1
          %s6344 = scalar_select %p6343, %s28, 1
          %s6345 = smul.addr %s6344, 4
          %s6346 = smul.addr %s6345, 8
          %s6347 = scalar_lea.vmem %s12, %s6346
        $region92: #{condition_encoder_forward.2} parent=87 // pred_fallthru
          _
        // Predicated region
        $region93: #{condition_encoder_forward.2} parent=87 // pred_check
          %p6348 = pneg %p339
        $region94: #{condition_encoder_forward.2} parent=87 // pred_check_branch
          %6350 = sbr.rel (%p6348) target = $region96
        $region95: #{condition_encoder_forward.2} parent=87 // pred_region
          %p6351 = scmp.lt.s32.totalorder %s28, 1
          %s6352 = scalar_select %p6351, %s28, 1
          %s6353 = smul.addr %s6352, 6
          %s6354 = smul.addr %s6353, 8
          %s6355 = scalar_lea.vmem %s13, %s6354
        $region96: #{condition_encoder_forward.2} parent=87 // pred_fallthru
          _
        // Predicated region
        $region97: #{condition_encoder_forward.2} parent=87 // pred_check
          %p6356 = pneg %p365
        $region98: #{condition_encoder_forward.2} parent=87 // pred_check_branch
          %6358 = sbr.rel (%p6356) target = $region100
        $region99: #{condition_encoder_forward.2} parent=87 // pred_region
          %p6359 = scmp.lt.s32.totalorder %s28, 1
          %s6360 = scalar_select %p6359, %s28, 1
          %s6361 = smul.addr %s6360, 8
          %s6362 = scalar_lea.vmem %s14, %s6361
        $region100: #{condition_encoder_forward.2} parent=87 // pred_fallthru
          _
      $region88: #{condition_encoder_forward.2} parent=5 // pred_fallthru
        _
    $region6: #{condition_encoder_forward.2} parent=1 // loop_footer
      %s26 = sadd.s32 1, %s22
    $region7: #{condition_encoder_forward.2} parent=1 // loop_footer_branch
      %21 = sbr.rel target = $region3
    $region8: #{condition_encoder_forward.2} parent=1 // loop_exit
      _
    %6363 = vsyncpa [#allocation3], 1
    %s6364 = scalar_lea.sflag [#allocation3], 1
    %6365 = vsyncpa %s6364, 1

</llo_original>
